<compile_context>
chip_gen: v7x
topology: tpu7x:2x2x1
jax: 0.10.0
libtpu: 0.0.40
codegen_flags: <defaults>
</compile_context>

<pallas_src>
import functools

import jax
import jax.numpy as jnp
from jax import lax
from jax.experimental import pallas as pl
from jax.experimental.pallas import tpu as pltpu

K3 = 3                                # kernel size per spatial dim (3, 3, 3)
_VMEM_LIMIT = 32 * 1024 * 1024        # safe on v5e/v6e (128 MiB) and v7x (64 MiB)


def _round_up(x, m):
    return (x + m - 1) // m * m


def _pick_row_tile(n_pad):
    """Largest row tile <= 512 giving >= 2 grid blocks (pipelining + v7x
    megacore sharding). n_pad is always a multiple of 128."""
    for tn in (512, 256, 128):
        if n_pad % tn == 0 and n_pad // tn >= 2:
            return tn
    return min(n_pad, 512) if n_pad % 128 == 0 else n_pad


# ----------------------------------------------------------------------------
# Pallas kernel 1: input-conv gates for ALL timesteps as one big matmul.
#   xcol: (TM, 27*Cin) bf16   wx: (27*Cin, 4*Ch) bf16   b: (1, 4*Ch) f32
#   out : (TM, 4*Ch) f32   (= im2col(x) @ Wx + b, f32 accumulation)
# ----------------------------------------------------------------------------
def _xgates_kernel(xcol_ref, wx_ref, b_ref, out_ref):
    acc = jnp.dot(xcol_ref[...], wx_ref[...], preferred_element_type=jnp.float32)
    out_ref[...] = acc + b_ref[...]          # (1, 4*Ch) broadcasts over rows


# ----------------------------------------------------------------------------
# Pallas kernel 2: one recurrent ConvLSTM cell step on a block of rows.
#   xg  : (TN, 4*Ch)  f32   precomputed input-conv gates (bias included)
#   hcol: (TN, 27*Ch) bf16  im2col patches of previous hidden state
#   c   : (TN, Ch)    f32   previous cell state
#   wh  : (27*Ch, 4*Ch) bf16 hidden-conv weights
# Output: (TN, 2*Ch) f32 = [h_next | c_next]  (packed for denser stores)
# ----------------------------------------------------------------------------
def _cell_kernel(xg_ref, hcol_ref, c_ref, wh_ref, hc_out_ref, *, Ch):
    acc = xg_ref[...] + jnp.dot(hcol_ref[...], wh_ref[...],
                                preferred_element_type=jnp.float32)
    i = jax.nn.sigmoid(acc[:, 0 * Ch:1 * Ch])
    f = jax.nn.sigmoid(acc[:, 1 * Ch:2 * Ch])
    o = jax.nn.sigmoid(acc[:, 2 * Ch:3 * Ch])
    g = jnp.tanh(acc[:, 3 * Ch:4 * Ch])
    c_next = f * c_ref[...] + i * g
    h_next = o * jnp.tanh(c_next)
    hc_out_ref[...] = jnp.concatenate([h_next, c_next], axis=-1)


# ----------------------------------------------------------------------------
# JAX glue: im2col for a 3x3x3 "same"-padded conv, channels-last input.
# Column order = ((kd*3+kh)*3+kw)*C + c  (matches the weight reshape below).
# ----------------------------------------------------------------------------
def im2col_3d(x):
    B, D, H, W, C = x.shape
    xp = jnp.pad(x, ((0, 0), (1, 1), (1, 1), (1, 1), (0, 0)))
    cols = []
    for kd in range(K3):
        for kh in range(K3):
            for kw in range(K3):
                cols.append(xp[:, kd:kd + D, kh:kh + H, kw:kw + W, :])
    return jnp.concatenate(cols, axis=-1).reshape(B * D * H * W, 27 * C)


# ----------------------------------------------------------------------------
# Stage 1: hoisted input-conv gates for all timesteps (one large matmul).
# x_tbdhwc: (T, B, D, H, W, Cin) f32 -> (T, N, 4*Ch) f32 with N = B*D*H*W.
# ----------------------------------------------------------------------------
def _input_gates_all_steps(x_tbdhwc, wx_bf16, b_f32):
    T, B, D, H, W, Cin = x_tbdhwc.shape
    Kx = 27 * Cin
    Gout = wx_bf16.shape[1]                    # 4*Ch
    N = B * D * H * W
    M = T * N

    xcol = im2col_3d(x_tbdhwc.reshape(T * B, D, H, W, Cin)).astype(jnp.bfloat16)
    M_pad = _round_up(M, 128)
    if M_pad != M:
        xcol = jnp.pad(xcol, ((0, M_pad - M), (0, 0)))
    TM = _pick_row_tile(M_pad)

    out = pl.pallas_call(
        _xgates_kernel,
        out_shape=jax.ShapeDtypeStruct((M_pad, Gout), jnp.float32),
        grid=(M_pad // TM,),
        in_specs=[
            pl.BlockSpec((TM, Kx), lambda i: (i, 0)),
            pl.BlockSpec((Kx, Gout), lambda i: (0, 0)),
            pl.BlockSpec((1, Gout), lambda i: (0, 0)),
        ],
        out_specs=pl.BlockSpec((TM, Gout), lambda i: (i, 0)),
        compiler_params=pltpu.CompilerParams(
            dimension_semantics=("parallel",),
            vmem_limit_bytes=_VMEM_LIMIT),
    )(xcol, wx_bf16, b_f32)
    return out[:M].reshape(T, N, Gout)


# ----------------------------------------------------------------------------
# Stage 2: one ConvLSTM layer (recurrent time loop via lax.scan).
# ----------------------------------------------------------------------------
def _run_layer(x_tbdhwc, wx_bf16, wh_bf16, b_f32, Ch):
    T, B, D, H, W, _ = x_tbdhwc.shape
    N = B * D * H * W
    Kh = 27 * Ch
    N_pad = _round_up(N, 128)
    TN = _pick_row_tile(N_pad)

    # Input conv for all timesteps at once (non-recurrent -> hoisted).
    xg = _input_gates_all_steps(x_tbdhwc, wx_bf16, b_f32)      # (T, N, 4*Ch) f32
    if N_pad != N:
        xg = jnp.pad(xg, ((0, 0), (0, N_pad - N), (0, 0)))

    cell = pl.pallas_call(
        functools.partial(_cell_kernel, Ch=Ch),
        out_shape=jax.ShapeDtypeStruct((N_pad, 2 * Ch), jnp.float32),
        grid=(N_pad // TN,),
        in_specs=[
            pl.BlockSpec((TN, 4 * Ch), lambda i: (i, 0)),
            pl.BlockSpec((TN, Kh), lambda i: (i, 0)),
            pl.BlockSpec((TN, Ch), lambda i: (i, 0)),
            pl.BlockSpec((Kh, 4 * Ch), lambda i: (0, 0)),
        ],
        out_specs=pl.BlockSpec((TN, 2 * Ch), lambda i: (i, 0)),
        compiler_params=pltpu.CompilerParams(
            dimension_semantics=("parallel",),
            vmem_limit_bytes=_VMEM_LIMIT),
    )

    h0 = jnp.zeros((B, D, H, W, Ch), jnp.float32)
    c0 = jnp.zeros((N_pad, Ch), jnp.float32)

    def step(carry, xg_t):
        h, c = carry
        hcol = im2col_3d(h).astype(jnp.bfloat16)        # (N, 27*Ch) bf16 stream
        if N_pad != N:
            hcol = jnp.pad(hcol, ((0, N_pad - N), (0, 0)))
        hc = cell(xg_t, hcol, c, wh_bf16)               # (N_pad, 2*Ch) f32
        h_next = hc[:N, :Ch].reshape(B, D, H, W, Ch)
        c_next = hc[:, Ch:]
        return (h_next, c_next), h_next

    (h_last, c_last), hs = lax.scan(step, (h0, c0), xg)
    c_last = c_last[:N].reshape(B, D, H, W, Ch)
    return hs, h_last, c_last                           # hs: (T, B, D, H, W, Ch)


# ----------------------------------------------------------------------------
# Full ConvLSTM_3D forward (num_layers layers), PyTorch layout at the boundary.
# ----------------------------------------------------------------------------
@functools.partial(jax.jit, static_argnames=("hidden_dims", "return_all_layers"))
def convlstm3d_forward(x_btcdhw, torch_params, hidden_dims,
                       return_all_layers=False):
    B, T, Cin, D, H, W = x_btcdhw.shape
    # (B,T,C,D,H,W) -> (T,B,D,H,W,C): channels-last for the kernels.
    cur = jnp.transpose(x_btcdhw, (1, 0, 3, 4, 5, 2)).astype(jnp.float32)

    layer_outputs, last_states = [], []
    in_dim = Cin
    for l, (weight, bias) in enumerate(torch_params):
        Ch = hidden_dims[l]
        # PyTorch Conv3d weight: (4*Ch, in_dim + Ch, 3, 3, 3). Split into the
        # part acting on the input / hidden state and reshape into im2col
        # matmul form (27*I, 4*Ch), matching the im2col column ordering.
        wx = jnp.transpose(weight[:, :in_dim], (2, 3, 4, 1, 0)).reshape(
            27 * in_dim, 4 * Ch).astype(jnp.bfloat16)
        wh = jnp.transpose(weight[:, in_dim:], (2, 3, 4, 1, 0)).reshape(
            27 * Ch, 4 * Ch).astype(jnp.bfloat16)
        b2 = bias.reshape(1, 4 * Ch).astype(jnp.float32)

        hs, h_last, c_last = _run_layer(cur, wx, wh, b2, Ch)
        cur = hs                                         # next layer input
        layer_outputs.append(hs)
        last_states.append((h_last, c_last))
        in_dim = Ch

    if not return_all_layers:
        layer_outputs = layer_outputs[-1:]
        last_states = last_states[-1:]

    # Back to PyTorch layouts: (B, T, C, D, H, W) and (B, C, D, H, W).
    layer_outputs = [jnp.transpose(o, (1, 0, 5, 2, 3, 4)) for o in layer_outputs]
    last_states = [(jnp.transpose(hh, (0, 4, 1, 2, 3)),
                    jnp.transpose(cc, (0, 4, 1, 2, 3)))
                   for hh, cc in last_states]
    return layer_outputs, last_states


# ----------------------------------------------------------------------------
# Pure-JAX reference (mirrors the PyTorch module exactly, NCDHW conv, f32).
# ----------------------------------------------------------------------------
@functools.partial(jax.jit, static_argnames=("hidden_dims", "return_all_layers"))
def ref_forward(x_btcdhw, torch_params, hidden_dims, return_all_layers=False):
    B, T, Cin, D, H, W = x_btcdhw.shape
    cur = x_btcdhw.astype(jnp.float32)
    layer_outputs, last_states = [], []
    for l, (weight, bias) in enumerate(torch_params):
        Ch = hidden_dims[l]
        h = jnp.zeros((B, Ch, D, H, W), jnp.float32)
        c = jnp.zeros_like(h)
        outs = []
        for t in range(T):
            combined = jnp.concatenate([cur[:, t], h], axis=1)
            conv = lax.conv_general_dilated(
                combined, weight, (1, 1, 1), [(1, 1), (1, 1), (1, 1)],
                dimension_numbers=('NCDHW', 'OIDHW', 'NCDHW'))
            conv = conv + bias[None, :, None, None, None]
            cc_i, cc_f, cc_o, cc_g = jnp.split(conv, 4, axis=1)
            i = jax.nn.sigmoid(cc_i)
            f = jax.nn.sigmoid(cc_f)
            o = jax.nn.sigmoid(cc_o)
            g = jnp.tanh(cc_g)
            c = f * c + i * g
            h = o * jnp.tanh(c)
            outs.append(h)
        layer_out = jnp.stack(outs, axis=1)
        cur = layer_out
        layer_outputs.append(layer_out)
        last_states.append((h, c))
    if not return_all_layers:
        layer_outputs = layer_outputs[-1:]
        last_states = last_states[-1:]
    return layer_outputs, last_states


if __name__ == "__main__":
    key = jax.random.PRNGKey(0)
    # Small shapes consistent with the module: (B, T, C, D, H, W)
    B, T, Cin, D, H, W = 2, 8, 4, 4, 8, 8
    num_layers = 2
    hidden_dims = (32, 32)

    k_x, *layer_keys = jax.random.split(key, num_layers + 1)
    x = jax.random.normal(k_x, (B, T, Cin, D, H, W), jnp.float32)

    # Deterministic parameter init (PyTorch Conv3d-style uniform bounds).
    torch_params = []
    in_dim = Cin
    for l in range(num_layers):
        Ch = hidden_dims[l]
        kw_, kb_ = jax.random.split(layer_keys[l])
        fan_in = (in_dim + Ch) * K3 * K3 * K3
        bound = 1.0 / float(fan_in) ** 0.5
        weight = jax.random.uniform(
            kw_, (4 * Ch, in_dim + Ch, K3, K3, K3), jnp.float32, -bound, bound)
        bias = jax.random.uniform(kb_, (4 * Ch,), jnp.float32, -bound, bound)
        torch_params.append((weight, bias))
        in_dim = Ch
    torch_params = tuple(torch_params)

    layer_outs, last_states = convlstm3d_forward(
        x, torch_params, hidden_dims=hidden_dims)
    layer_outs = jax.block_until_ready(layer_outs)
    last_states = jax.block_until_ready(last_states)

    ref_outs, ref_states = ref_forward(x, torch_params, hidden_dims=hidden_dims)
    ref_outs = jax.block_until_ready(ref_outs)

    # bf16 MXU operands => loosened tolerance vs the f32 reference.
    assert jnp.allclose(layer_outs[0], ref_outs[0], atol=5e-2, rtol=5e-2)
    assert jnp.allclose(last_states[0][0], ref_states[0][0], atol=5e-2, rtol=5e-2)
    assert jnp.allclose(last_states[0][1], ref_states[0][1], atol=5e-2, rtol=5e-2)

    print("KERNEL_OK")
</pallas_src>

<mosaic_0001>
module attributes {stable_mosaic.version = 11 : i64} {
  func.func @_xgates_kernel(%arg0: i32, %arg1: memref<512x108xbf16, #tpu.memory_space<vmem>>, %arg2: memref<108x128xbf16, #tpu.memory_space<vmem>>, %arg3: memref<1x128xf32, #tpu.memory_space<vmem>>, %arg4: memref<512x128xf32, #tpu.memory_space<vmem>>) attributes {dimension_semantics = [#tpu.dimension_semantics<parallel>], iteration_bounds = array<i64: 8>, scalar_prefetch = 0 : i64, scratch_operands = 0 : i64, tpu.core_type = #tpu.core_type<tc>, window_params = [{transform_indices = @transform_0, window_bounds = array<i64: 512, 108>}, {pipeline_mode = #tpu.pipeline_mode<synchronous>, transform_indices = @transform_1, window_bounds = array<i64: 108, 128>}, {pipeline_mode = #tpu.pipeline_mode<synchronous>, transform_indices = @transform_2, window_bounds = array<i64: 1, 128>}, {transform_indices = @transform_3, window_bounds = array<i64: 512, 128>}]} {
    %c0 = arith.constant 0 : index
    %c0_0 = arith.constant 0 : index
    %0 = vector.load %arg1[%c0, %c0_0] : memref<512x108xbf16, #tpu.memory_space<vmem>>, vector<512x108xbf16>
    %c0_1 = arith.constant 0 : index
    %c0_2 = arith.constant 0 : index
    %1 = vector.load %arg2[%c0_1, %c0_2] : memref<108x128xbf16, #tpu.memory_space<vmem>>, vector<108x128xbf16>
    %cst = arith.constant dense<0.000000e+00> : vector<512x128xf32>
    %2 = tpu.matmul %0, %1, %cst {dimension_numbers = #tpu.dot_dimension_numbers<[1], [0], [0], [1], [0, 0, 1, 1], [], []>} : vector<512x108xbf16>, vector<108x128xbf16>, vector<512x128xf32> -> vector<512x128xf32>
    %c0_3 = arith.constant 0 : index
    %c0_4 = arith.constant 0 : index
    %3 = vector.load %arg3[%c0_3, %c0_4] : memref<1x128xf32, #tpu.memory_space<vmem>>, vector<1x128xf32>
    %4 = vector.broadcast %3 : vector<1x128xf32> to vector<512x128xf32>
    %5 = arith.addf %2, %4 : vector<512x128xf32>
    %c0_5 = arith.constant 0 : index
    %c0_6 = arith.constant 0 : index
    %6 = vector.load %arg4[%c0_5, %c0_6] : memref<512x128xf32, #tpu.memory_space<vmem>>, vector<512x128xf32>
    tpu.vector_store %arg4[%c0_5, %c0_6], %5 {strides = array<i32>} : memref<512x128xf32, #tpu.memory_space<vmem>>, vector<512x128xf32>,
    return
  }
  func.func @transform_0(%arg0: i32) -> (i32, i32) {
    %c0_i32 = arith.constant 0 : i32
    %c0_i32_0 = arith.constant 0 : i32
    return %arg0, %c0_i32 : i32, i32
  }
  func.func @transform_1(%arg0: i32) -> (i32, i32) {
    %c0_i32 = arith.constant 0 : i32
    %c0_i32_0 = arith.constant 0 : i32
    %c0_i32_1 = arith.constant 0 : i32
    return %c0_i32, %c0_i32_0 : i32, i32
  }
  func.func @transform_2(%arg0: i32) -> (i32, i32) {
    %c0_i32 = arith.constant 0 : i32
    %c0_i32_0 = arith.constant 0 : i32
    %c0_i32_1 = arith.constant 0 : i32
    return %c0_i32, %c0_i32_0 : i32, i32
  }
  func.func @transform_3(%arg0: i32) -> (i32, i32) {
    %c0_i32 = arith.constant 0 : i32
    %c0_i32_0 = arith.constant 0 : i32
    return %arg0, %c0_i32 : i32, i32
  }
}

module attributes {stable_mosaic.version = 11 : i64} {
  func.func @_cell_kernel(%arg0: i32, %arg1: memref<256x128xf32, #tpu.memory_space<vmem>>, %arg2: memref<256x864xbf16, #tpu.memory_space<vmem>>, %arg3: memref<256x32xf32, #tpu.memory_space<vmem>>, %arg4: memref<864x128xbf16, #tpu.memory_space<vmem>>, %arg5: memref<256x64xf32, #tpu.memory_space<vmem>>) attributes {dimension_semantics = [#tpu.dimension_semantics<parallel>], iteration_bounds = array<i64: 2>, scalar_prefetch = 0 : i64, scratch_operands = 0 : i64, tpu.core_type = #tpu.core_type<tc>, window_params = [{transform_indices = @transform_0, window_bounds = array<i64: 256, 128>}, {transform_indices = @transform_1, window_bounds = array<i64: 256, 864>}, {transform_indices = @transform_2, window_bounds = array<i64: 256, 32>}, {pipeline_mode = #tpu.pipeline_mode<synchronous>, transform_indices = @transform_3, window_bounds = array<i64: 864, 128>}, {transform_indices = @transform_4, window_bounds = array<i64: 256, 64>}]} {
    %c0 = arith.constant 0 : index
    %c0_0 = arith.constant 0 : index
    %0 = vector.load %arg1[%c0, %c0_0] : memref<256x128xf32, #tpu.memory_space<vmem>>, vector<256x128xf32>
    %c0_1 = arith.constant 0 : index
    %c0_2 = arith.constant 0 : index
    %1 = vector.load %arg2[%c0_1, %c0_2] : memref<256x864xbf16, #tpu.memory_space<vmem>>, vector<256x864xbf16>
    %c0_3 = arith.constant 0 : index
    %c0_4 = arith.constant 0 : index
    %2 = vector.load %arg4[%c0_3, %c0_4] : memref<864x128xbf16, #tpu.memory_space<vmem>>, vector<864x128xbf16>
    %cst = arith.constant dense<0.000000e+00> : vector<256x128xf32>
    %3 = tpu.matmul %1, %2, %cst {dimension_numbers = #tpu.dot_dimension_numbers<[1], [0], [0], [1], [0, 0, 1, 1], [], []>} : vector<256x864xbf16>, vector<864x128xbf16>, vector<256x128xf32> -> vector<256x128xf32>
    %4 = arith.addf %0, %3 : vector<256x128xf32>
    %5 = vector.extract_strided_slice %4 {offsets = [0, 0], sizes = [256, 32], strides = [1, 1]} : vector<256x128xf32> to vector<256x32xf32>
    %6 = arith.negf %5 : vector<256x32xf32>
    %7 = math.exp %6 : vector<256x32xf32>
    %cst_5 = arith.constant 1.000000e+00 : f32
    %8 = vector.broadcast %cst_5 : f32 to vector<256x32xf32>
    %9 = arith.addf %8, %7 : vector<256x32xf32>
    %10 = arith.divf %8, %9 : vector<256x32xf32>
    %11 = vector.extract_strided_slice %4 {offsets = [0, 32], sizes = [256, 32], strides = [1, 1]} : vector<256x128xf32> to vector<256x32xf32>
    %12 = arith.negf %11 : vector<256x32xf32>
    %13 = math.exp %12 : vector<256x32xf32>
    %cst_6 = arith.constant 1.000000e+00 : f32
    %14 = vector.broadcast %cst_6 : f32 to vector<256x32xf32>
    %15 = arith.addf %14, %13 : vector<256x32xf32>
    %16 = arith.divf %14, %15 : vector<256x32xf32>
    %17 = vector.extract_strided_slice %4 {offsets = [0, 64], sizes = [256, 32], strides = [1, 1]} : vector<256x128xf32> to vector<256x32xf32>
    %18 = arith.negf %17 : vector<256x32xf32>
    %19 = math.exp %18 : vector<256x32xf32>
    %cst_7 = arith.constant 1.000000e+00 : f32
    %20 = vector.broadcast %cst_7 : f32 to vector<256x32xf32>
    %21 = arith.addf %20, %19 : vector<256x32xf32>
    %22 = arith.divf %20, %21 : vector<256x32xf32>
    %23 = vector.extract_strided_slice %4 {offsets = [0, 96], sizes = [256, 32], strides = [1, 1]} : vector<256x128xf32> to vector<256x32xf32>
    %24 = math.tanh %23 : vector<256x32xf32>
    %c0_8 = arith.constant 0 : index
    %c0_9 = arith.constant 0 : index
    %25 = vector.load %arg3[%c0_8, %c0_9] : memref<256x32xf32, #tpu.memory_space<vmem>>, vector<256x32xf32>
    %26 = arith.mulf %16, %25 : vector<256x32xf32>
    %27 = arith.mulf %10, %24 : vector<256x32xf32>
    %28 = arith.addf %26, %27 : vector<256x32xf32>
    %29 = math.tanh %28 : vector<256x32xf32>
    %30 = arith.mulf %22, %29 : vector<256x32xf32>
    %31 = tpu.concatenate %30, %28 in 1 : vector<256x32xf32>, vector<256x32xf32> -> vector<256x64xf32>
    %c0_10 = arith.constant 0 : index
    %c0_11 = arith.constant 0 : index
    %32 = vector.load %arg5[%c0_10, %c0_11] : memref<256x64xf32, #tpu.memory_space<vmem>>, vector<256x64xf32>
    tpu.vector_store %arg5[%c0_10, %c0_11], %31 {strides = array<i32>} : memref<256x64xf32, #tpu.memory_space<vmem>>, vector<256x64xf32>,
    return
  }
  func.func @transform_0(%arg0: i32) -> (i32, i32) {
    %c0_i32 = arith.constant 0 : i32
    %c0_i32_0 = arith.constant 0 : i32
    return %arg0, %c0_i32 : i32, i32
  }
  func.func @transform_1(%arg0: i32) -> (i32, i32) {
    %c0_i32 = arith.constant 0 : i32
    %c0_i32_0 = arith.constant 0 : i32
    return %arg0, %c0_i32 : i32, i32
  }
  func.func @transform_2(%arg0: i32) -> (i32, i32) {
    %c0_i32 = arith.constant 0 : i32
    %c0_i32_0 = arith.constant 0 : i32
    return %arg0, %c0_i32 : i32, i32
  }
  func.func @transform_3(%arg0: i32) -> (i32, i32) {
    %c0_i32 = arith.constant 0 : i32
    %c0_i32_0 = arith.constant 0 : i32
    %c0_i32_1 = arith.constant 0 : i32
    return %c0_i32, %c0_i32_0 : i32, i32
  }
  func.func @transform_4(%arg0: i32) -> (i32, i32) {
    %c0_i32 = arith.constant 0 : i32
    %c0_i32_0 = arith.constant 0 : i32
    return %arg0, %c0_i32 : i32, i32
  }
}

module attributes {stable_mosaic.version = 11 : i64} {
  func.func @_xgates_kernel(%arg0: i32, %arg1: memref<512x864xbf16, #tpu.memory_space<vmem>>, %arg2: memref<864x128xbf16, #tpu.memory_space<vmem>>, %arg3: memref<1x128xf32, #tpu.memory_space<vmem>>, %arg4: memref<512x128xf32, #tpu.memory_space<vmem>>) attributes {dimension_semantics = [#tpu.dimension_semantics<parallel>], iteration_bounds = array<i64: 8>, scalar_prefetch = 0 : i64, scratch_operands = 0 : i64, tpu.core_type = #tpu.core_type<tc>, window_params = [{transform_indices = @transform_0, window_bounds = array<i64: 512, 864>}, {pipeline_mode = #tpu.pipeline_mode<synchronous>, transform_indices = @transform_1, window_bounds = array<i64: 864, 128>}, {pipeline_mode = #tpu.pipeline_mode<synchronous>, transform_indices = @transform_2, window_bounds = array<i64: 1, 128>}, {transform_indices = @transform_3, window_bounds = array<i64: 512, 128>}]} {
    %c0 = arith.constant 0 : index
    %c0_0 = arith.constant 0 : index
    %0 = vector.load %arg1[%c0, %c0_0] : memref<512x864xbf16, #tpu.memory_space<vmem>>, vector<512x864xbf16>
    %c0_1 = arith.constant 0 : index
    %c0_2 = arith.constant 0 : index
    %1 = vector.load %arg2[%c0_1, %c0_2] : memref<864x128xbf16, #tpu.memory_space<vmem>>, vector<864x128xbf16>
    %cst = arith.constant dense<0.000000e+00> : vector<512x128xf32>
    %2 = tpu.matmul %0, %1, %cst {dimension_numbers = #tpu.dot_dimension_numbers<[1], [0], [0], [1], [0, 0, 1, 1], [], []>} : vector<512x864xbf16>, vector<864x128xbf16>, vector<512x128xf32> -> vector<512x128xf32>
    %c0_3 = arith.constant 0 : index
    %c0_4 = arith.constant 0 : index
    %3 = vector.load %arg3[%c0_3, %c0_4] : memref<1x128xf32, #tpu.memory_space<vmem>>, vector<1x128xf32>
    %4 = vector.broadcast %3 : vector<1x128xf32> to vector<512x128xf32>
    %5 = arith.addf %2, %4 : vector<512x128xf32>
    %c0_5 = arith.constant 0 : index
    %c0_6 = arith.constant 0 : index
    %6 = vector.load %arg4[%c0_5, %c0_6] : memref<512x128xf32, #tpu.memory_space<vmem>>, vector<512x128xf32>
    tpu.vector_store %arg4[%c0_5, %c0_6], %5 {strides = array<i32>} : memref<512x128xf32, #tpu.memory_space<vmem>>, vector<512x128xf32>,
    return
  }
  func.func @transform_0(%arg0: i32) -> (i32, i32) {
    %c0_i32 = arith.constant 0 : i32
    %c0_i32_0 = arith.constant 0 : i32
    return %arg0, %c0_i32 : i32, i32
  }
  func.func @transform_1(%arg0: i32) -> (i32, i32) {
    %c0_i32 = arith.constant 0 : i32
    %c0_i32_0 = arith.constant 0 : i32
    %c0_i32_1 = arith.constant 0 : i32
    return %c0_i32, %c0_i32_0 : i32, i32
  }
  func.func @transform_2(%arg0: i32) -> (i32, i32) {
    %c0_i32 = arith.constant 0 : i32
    %c0_i32_0 = arith.constant 0 : i32
    %c0_i32_1 = arith.constant 0 : i32
    return %c0_i32, %c0_i32_0 : i32, i32
  }
  func.func @transform_3(%arg0: i32) -> (i32, i32) {
    %c0_i32 = arith.constant 0 : i32
    %c0_i32_0 = arith.constant 0 : i32
    return %arg0, %c0_i32 : i32, i32
  }
}

</mosaic_0001>

<llo_original>
// kernel: convlstm3d_forward.2
$region0: #{convlstm3d_forward.2}
  #allocation0 [shape = 'u32[]', space=smem, size = 0x4, offset = 0x4, fixed_abs, tag = 'smem constant byte address 0x4 - core index']
  #allocation1 [shape = 'u32[144,128]{1,0:T(1,128)}', space=vmem, size = 0x12000, scoped, tag = 'internal scratch']
  %s0 = inlined_call_operand.vmem [shape: bf16[4096,108], index: 0, kind: input, shape index: {}]
  %s1 = inlined_call_operand.vmem [shape: bf16[108,128], index: 1, kind: input, shape index: {}]
  %s2 = inlined_call_operand.vmem [shape: f32[1,128], index: 2, kind: input, shape index: {}]
  %s3 = inlined_call_operand.vmem [shape: f32[4096,128], index: 3, kind: output, shape index: {}]
  %s4 = sld [smem:[#allocation0]]
  $region45: #{convlstm3d_forward.2} parent=0
    _
  %s6 = ssub.s32 1, %s4
  %s7 = scalar_select 0, %s6, %s4
  loop: start=0, step=1, limit=10
  $region2: #{convlstm3d_forward.2} parent=0 // loop_pre_header
    _
  $region3: #{convlstm3d_forward.2} parent=0 // loop_header
    %s9 = sphi 0, %s13
    %p10 = scmp.ge.s32.totalorder %s9, 10
    %s19 = sphi 0, %s21
    %s22 = sphi 0, %s19
    %s23 = sphi 0, %s22
    %s39 = sphi 0, %s23
    %s43 = sphi 0, %s43
    %s45 = sphi 0, %s43
    %s46 = sphi 0, %s45
    %s60 = sphi 0, %s46
    %s64 = sphi 0, %s64
    %s66 = sphi 0, %s64
    %s67 = sphi 0, %s66
    %s81 = sphi 0, %s67
    %s87 = sphi 0, %s89
    %s90 = sphi 0, %s87
    %s91 = sphi 0, %s90
    %s107 = sphi 0, %s91
  $region4: #{convlstm3d_forward.2} parent=0 // loop_header_branch
    %12 = sbr.rel (%p10) target = $region8
  $region5: #{convlstm3d_forward.2} parent=0 // loop_body
    %s14 = ssub.s32 %s9, 1
    %s15 = ssub.s32 %s9, 2
    %s16 = sadd.s32 %s9, 1
    %s17 = ssub.s32 %s9, %s16
    %p18 = scmp.eq.s32.totalorder %s17, 0
    %s20 = sadd.s32 %s19, 1
    %s21 = scalar_select %p18, %s19, %s20
    %p24 = pneg %p18
    %p25 = scmp.eq.s32.totalorder %s9, 7
    %p26 = por %p24, %p25
    %p27 = scmp.ne.s32.totalorder %s19, %s22
    %p28 = scmp.eq.s32.totalorder %s9, 0
    %p29 = por %p27, %p28
    %p30 = scmp.ne.s32.totalorder %s19, %s22
    %p31 = scmp.eq.s32.totalorder %s14, 7
    %p32 = por %p30, %p31
    %p33 = scmp.ne.s32.totalorder %s22, %s23
    %p34 = scmp.eq.s32.totalorder %s14, 0
    %p35 = por %p33, %p34
    %p36 = scmp.ne.s32.totalorder %s22, %s23
    %p37 = scmp.eq.s32.totalorder %s15, 7
    %p38 = por %p36, %p37
    %p40 = scmp.ne.s32.totalorder %s23, %s39
    %p41 = scmp.eq.s32.totalorder %s15, 0
    %p42 = por %p40, %p41
    %s44 = sadd.s32 %s43, 1
    %p47 = scmp.eq.s32.totalorder %s9, 7
    %p48 = scmp.ne.s32.totalorder %s43, %s45
    %p49 = scmp.eq.s32.totalorder %s9, 0
    %p50 = por %p48, %p49
    %p51 = scmp.ne.s32.totalorder %s43, %s45
    %p52 = scmp.eq.s32.totalorder %s14, 7
    %p53 = por %p51, %p52
    %p54 = scmp.ne.s32.totalorder %s45, %s46
    %p55 = scmp.eq.s32.totalorder %s14, 0
    %p56 = por %p54, %p55
    %p57 = scmp.ne.s32.totalorder %s45, %s46
    %p58 = scmp.eq.s32.totalorder %s15, 7
    %p59 = por %p57, %p58
    %p61 = scmp.ne.s32.totalorder %s46, %s60
    %p62 = scmp.eq.s32.totalorder %s15, 0
    %p63 = por %p61, %p62
    %s65 = sadd.s32 %s64, 1
    %p68 = scmp.eq.s32.totalorder %s9, 7
    %p69 = scmp.ne.s32.totalorder %s64, %s66
    %p70 = scmp.eq.s32.totalorder %s9, 0
    %p71 = por %p69, %p70
    %p72 = scmp.ne.s32.totalorder %s64, %s66
    %p73 = scmp.eq.s32.totalorder %s14, 7
    %p74 = por %p72, %p73
    %p75 = scmp.ne.s32.totalorder %s66, %s67
    %p76 = scmp.eq.s32.totalorder %s14, 0
    %p77 = por %p75, %p76
    %p78 = scmp.ne.s32.totalorder %s66, %s67
    %p79 = scmp.eq.s32.totalorder %s15, 7
    %p80 = por %p78, %p79
    %p82 = scmp.ne.s32.totalorder %s67, %s81
    %p83 = scmp.eq.s32.totalorder %s15, 0
    %p84 = por %p82, %p83
    %s85 = ssub.s32 %s9, %s16
    %p86 = scmp.eq.s32.totalorder %s85, 0
    %s88 = sadd.s32 %s87, 1
    %s89 = scalar_select %p86, %s87, %s88
    %p92 = pneg %p86
    %p93 = scmp.eq.s32.totalorder %s9, 7
    %p94 = por %p92, %p93
    %p95 = scmp.ne.s32.totalorder %s87, %s90
    %p96 = scmp.eq.s32.totalorder %s9, 0
    %p97 = por %p95, %p96
    %p98 = scmp.ne.s32.totalorder %s87, %s90
    %p99 = scmp.eq.s32.totalorder %s14, 7
    %p100 = por %p98, %p99
    %p101 = scmp.ne.s32.totalorder %s90, %s91
    %p102 = scmp.eq.s32.totalorder %s14, 0
    %p103 = por %p101, %p102
    %p104 = scmp.ne.s32.totalorder %s90, %s91
    %p105 = scmp.eq.s32.totalorder %s15, 7
    %p106 = por %p104, %p105
    %p108 = scmp.ne.s32.totalorder %s91, %s107
    %p109 = scmp.eq.s32.totalorder %s15, 0
    %p110 = por %p108, %p109
    %p111 = scmp.le.s32.totalorder 1, %s9
    %p112 = scmp.lt.s32.totalorder %s9, 9
    %p113 = pnand %p111, %p112
    %p114 = pneg %p113
    // Predicated region
    $region9: #{convlstm3d_forward.2} parent=5 // pred_check
      _
    $region10: #{convlstm3d_forward.2} parent=5 // pred_check_branch
      %116 = sbr.rel (%p113) target = $region12
    $region11: #{convlstm3d_forward.2} parent=5 // pred_region
      %s117 = ssub.s32 %s9, 1
      // Predicated region
      $region13: #{convlstm3d_forward.2} parent=11 // pred_check
        %p118 = pneg %p56
      $region14: #{convlstm3d_forward.2} parent=11 // pred_check_branch
        %120 = sbr.rel (%p118) target = $region16
      $region15: #{convlstm3d_forward.2} parent=11 // pred_region
        _
      $region16: #{convlstm3d_forward.2} parent=11 // pred_fallthru
        _
      // Predicated region
      $region17: #{convlstm3d_forward.2} parent=11 // pred_check
        %p121 = pneg %p77
      $region18: #{convlstm3d_forward.2} parent=11 // pred_check_branch
        %123 = sbr.rel (%p121) target = $region20
      $region19: #{convlstm3d_forward.2} parent=11 // pred_region
        _
      $region20: #{convlstm3d_forward.2} parent=11 // pred_fallthru
        _
    $region12: #{convlstm3d_forward.2} parent=5 // pred_fallthru
      _
    %p124 = scmp.lt.s32.totalorder %s9, 8
    // Predicated region
    $region21: #{convlstm3d_forward.2} parent=5 // pred_check
      %p125 = pneg %p124
    $region22: #{convlstm3d_forward.2} parent=5 // pred_check_branch
      %127 = sbr.rel (%p125) target = $region24
    $region23: #{convlstm3d_forward.2} parent=5 // pred_region
      // Predicated region
      $region25: #{convlstm3d_forward.2} parent=23 // pred_check
        %p128 = pneg %p29
      $region26: #{convlstm3d_forward.2} parent=23 // pred_check_branch
        %130 = sbr.rel (%p128) target = $region28
      $region27: #{convlstm3d_forward.2} parent=23 // pred_region
        %s131 = smul.u32 64, %s9
        %p132 = scmp.lt.s32.totalorder %s131, 511
        %s133 = scalar_select %p132, %s131, 511
        %s134 = smul.addr %s133, 4
        %s135 = scalar_lea.vmem %s0, %s134
        %s136 = smul.u32 64, %s9
      $region28: #{convlstm3d_forward.2} parent=23 // pred_fallthru
        _
    $region24: #{convlstm3d_forward.2} parent=5 // pred_fallthru
      _
    %p137 = scmp.le.s32.totalorder 1, %s9
    %p138 = scmp.lt.s32.totalorder %s9, 9
    %p139 = pnand %p137, %p138
    %p140 = pneg %p139
    // Predicated region
    $region29: #{convlstm3d_forward.2} parent=5 // pred_check
      _
    $region30: #{convlstm3d_forward.2} parent=5 // pred_check_branch
      %142 = sbr.rel (%p139) target = $region32
    $region31: #{convlstm3d_forward.2} parent=5 // pred_region
      %s143 = ssub.s32 %s9, 1
      %s144 = smul.u32 64, %s14
      %p145 = scmp.lt.s32.totalorder %s144, 511
      %s146 = scalar_select %p145, %s144, 511
      %s147 = smul.addr %s146, 4
      %s148 = scalar_lea.vmem %s0, %s147
      %p149 = pneg %p35
      %p150 = pneg %p32
      %p151 = pneg %p56
      %p152 = pneg %p53
      %p153 = pneg %p77
      %p154 = pneg %p74
      %p155 = pneg %p103
      %p156 = pneg %p100
      %s157 = smul.u32 64, %s14
      %p158 = scmp.lt.s32.totalorder %s157, 511
      %s159 = scalar_select %p158, %s157, 511
      %s160 = smul.addr %s159, 8
      %s161 = scalar_lea.vmem %s3, %s160
      %s162 = smul.u32 64, %s14
      %p163 = scmp.lt.s32.totalorder %s162, 511
      %s164 = scalar_select %p163, %s162, 511
      %s165 = smul.addr %s164, 4
      %s166 = scalar_lea.vmem %s0, %s165
      %s167 = smul.u32 64, %s14
      %s168 = smul.u32 64, %s14
      %p169 = scmp.lt.s32.totalorder %s168, 511
      %s170 = scalar_select %p169, %s168, 511
      %s171 = smul.addr %s170, 8
      %s172 = scalar_lea.vmem %s3, %s171
      %s173 = smul.u32 64, %s14
      %v175 = vld [vmem:[%s166] sm:$0xf]
      %v176 = vld [vmem:[%s166 + $0x4] sm:$0xf]
      %v177 = vld [vmem:[%s166 + $0x8] sm:$0xf]
      %v178 = vld [vmem:[%s166 + $0xc] sm:$0xf]
      %v179 = vld [vmem:[%s166 + $0x10] sm:$0xf]
      %v180 = vld [vmem:[%s166 + $0x14] sm:$0xf]
      %v181 = vld [vmem:[%s166 + $0x18] sm:$0xf]
      %v182 = vld [vmem:[%s166 + $0x1c] sm:$0xf]
      %v183 = vld [vmem:[%s166 + $0x20] sm:$0xf]
      %v184 = vld [vmem:[%s166 + $0x24] sm:$0xf]
      %v185 = vld [vmem:[%s166 + $0x28] sm:$0xf]
      %v186 = vld [vmem:[%s166 + $0x2c] sm:$0xf]
      %v187 = vld [vmem:[%s166 + $0x30] sm:$0xf]
      %v188 = vld [vmem:[%s166 + $0x34] sm:$0xf]
      %v189 = vld [vmem:[%s166 + $0x38] sm:$0xf]
      %v190 = vld [vmem:[%s166 + $0x3c] sm:$0xf]
      %v191 = vld [vmem:[%s166 + $0x40] sm:$0xf]
      %v192 = vld [vmem:[%s166 + $0x44] sm:$0xf]
      %v193 = vld [vmem:[%s166 + $0x48] sm:$0xf]
      %v194 = vld [vmem:[%s166 + $0x4c] sm:$0xf]
      %v195 = vld [vmem:[%s166 + $0x50] sm:$0xf]
      %v196 = vld [vmem:[%s166 + $0x54] sm:$0xf]
      %v197 = vld [vmem:[%s166 + $0x58] sm:$0xf]
      %v198 = vld [vmem:[%s166 + $0x5c] sm:$0xf]
      %v199 = vld [vmem:[%s166 + $0x60] sm:$0xf]
      %v200 = vld [vmem:[%s166 + $0x64] sm:$0xf]
      %v201 = vld [vmem:[%s166 + $0x68] sm:$0xf]
      %v202 = vld [vmem:[%s166 + $0x6c] sm:$0xf]
      %v203 = vld [vmem:[%s166 + $0x70] sm:$0xf]
      %v204 = vld [vmem:[%s166 + $0x74] sm:$0xf]
      %v205 = vld [vmem:[%s166 + $0x78] sm:$0xf]
      %v206 = vld [vmem:[%s166 + $0x7c] sm:$0xf]
      %v207 = vld [vmem:[%s166 + $0x80] sm:$0xf]
      %v208 = vld [vmem:[%s166 + $0x84] sm:$0xf]
      %v209 = vld [vmem:[%s166 + $0x88] sm:$0xf]
      %v210 = vld [vmem:[%s166 + $0x8c] sm:$0xf]
      %v211 = vld [vmem:[%s166 + $0x90] sm:$0xf]
      %v212 = vld [vmem:[%s166 + $0x94] sm:$0xf]
      %v213 = vld [vmem:[%s166 + $0x98] sm:$0xf]
      %v214 = vld [vmem:[%s166 + $0x9c] sm:$0xf]
      %v215 = vld [vmem:[%s166 + $0xa0] sm:$0xf]
      %v216 = vld [vmem:[%s166 + $0xa4] sm:$0xf]
      %v217 = vld [vmem:[%s166 + $0xa8] sm:$0xf]
      %v218 = vld [vmem:[%s166 + $0xac] sm:$0xf]
      %v219 = vld [vmem:[%s166 + $0xb0] sm:$0xf]
      %v220 = vld [vmem:[%s166 + $0xb4] sm:$0xf]
      %v221 = vld [vmem:[%s166 + $0xb8] sm:$0xf]
      %v222 = vld [vmem:[%s166 + $0xbc] sm:$0xf]
      %v223 = vld [vmem:[%s166 + $0xc0] sm:$0xf]
      %v224 = vld [vmem:[%s166 + $0xc4] sm:$0xf]
      %v225 = vld [vmem:[%s166 + $0xc8] sm:$0xf]
      %v226 = vld [vmem:[%s166 + $0xcc] sm:$0xf]
      %v227 = vld [vmem:[%s166 + $0xd0] sm:$0xf]
      %v228 = vld [vmem:[%s166 + $0xd4] sm:$0xf]
      %v229 = vld [vmem:[%s166 + $0xd8] sm:$0xf]
      %v230 = vld [vmem:[%s166 + $0xdc] sm:$0xf]
      %v231 = vld [vmem:[%s166 + $0xe0] sm:$0xf]
      %v232 = vld [vmem:[%s166 + $0xe4] sm:$0xf]
      %v233 = vld [vmem:[%s166 + $0xe8] sm:$0xf]
      %v234 = vld [vmem:[%s166 + $0xec] sm:$0xf]
      %v235 = vld [vmem:[%s166 + $0xf0] sm:$0xf]
      %v236 = vld [vmem:[%s166 + $0xf4] sm:$0xf]
      %v237 = vld [vmem:[%s166 + $0xf8] sm:$0xf]
      %v238 = vld [vmem:[%s166 + $0xfc] sm:$0xf]
      %v239 = vld [vmem:[%s1] sm:$0xf]
      %v240 = vld [vmem:[%s1 + $0x4] sm:$0xf]
      %v241 = vld [vmem:[%s1 + $0x8] sm:$0xf]
      %v242 = vld [vmem:[%s1 + $0xc] sm:$0xf]
      %v243 = vld [vmem:[%s1 + $0x10] sm:$0xf]
      %v244 = vld [vmem:[%s1 + $0x14] sm:$0xf]
      %v245 = vld [vmem:[%s1 + $0x18] sm:$0xf]
      %v246 = vld [vmem:[%s1 + $0x1c] sm:$0xf]
      %v247 = vld [vmem:[%s1 + $0x20] sm:$0xf]
      %v248 = vld [vmem:[%s1 + $0x24] sm:$0xf]
      %v249 = vld [vmem:[%s1 + $0x28] sm:$0xf]
      %v250 = vld [vmem:[%s1 + $0x2c] sm:$0xf]
      %v251 = vld [vmem:[%s1 + $0x30] sm:$0xf]
      %v252 = vld [vmem:[%s1 + $0x34] sm:$0x3]
      %v253 = vld [vmem:[%s2] sm:$0x1]
      %v255 = vlaneseq
      %v256 = vshrl.u32 %v255, 7
      %v257 = vsub.s32 0, %v256
      %v258 = vrot.slane %v253, %v257
      %v324 = vunpack.c.l.b16 %v175
      %v325 = vunpack.c.l.b16 %v176
      %v326 = vunpack.c.l.b16 %v177
      %v327 = vunpack.c.l.b16 %v178
      %v328 = vunpack.c.l.b16 %v179
      %v329 = vunpack.c.l.b16 %v180
      %v330 = vunpack.c.l.b16 %v181
      %v331 = vunpack.c.l.b16 %v182
      %v332 = vunpack.c.l.b16 %v183
      %v333 = vunpack.c.l.b16 %v184
      %v334 = vunpack.c.l.b16 %v185
      %v335 = vunpack.c.l.b16 %v186
      %v336 = vunpack.c.l.b16 %v187
      %v337 = vunpack.c.l.b16 %v188
      %v338 = vunpack.c.l.b16 %v189
      %v339 = vunpack.c.l.b16 %v190
      %v340 = vunpack.c.l.b16 %v191
      %v341 = vunpack.c.l.b16 %v192
      %v342 = vunpack.c.l.b16 %v193
      %v343 = vunpack.c.l.b16 %v194
      %v344 = vunpack.c.l.b16 %v195
      %v345 = vunpack.c.l.b16 %v196
      %v346 = vunpack.c.l.b16 %v197
      %v347 = vunpack.c.l.b16 %v198
      %v348 = vunpack.c.l.b16 %v199
      %v349 = vunpack.c.l.b16 %v200
      %v350 = vunpack.c.l.b16 %v201
      %v351 = vunpack.c.l.b16 %v202
      %v352 = vunpack.c.l.b16 %v203
      %v353 = vunpack.c.l.b16 %v204
      %v354 = vunpack.c.l.b16 %v205
      %v355 = vunpack.c.l.b16 %v206
      %v356 = vunpack.c.l.b16 %v207
      %v357 = vunpack.c.l.b16 %v208
      %v358 = vunpack.c.l.b16 %v209
      %v359 = vunpack.c.l.b16 %v210
      %v360 = vunpack.c.l.b16 %v211
      %v361 = vunpack.c.l.b16 %v212
      %v362 = vunpack.c.l.b16 %v213
      %v363 = vunpack.c.l.b16 %v214
      %v364 = vunpack.c.l.b16 %v215
      %v365 = vunpack.c.l.b16 %v216
      %v366 = vunpack.c.l.b16 %v217
      %v367 = vunpack.c.l.b16 %v218
      %v368 = vunpack.c.l.b16 %v219
      %v369 = vunpack.c.l.b16 %v220
      %v370 = vunpack.c.l.b16 %v221
      %v371 = vunpack.c.l.b16 %v222
      %v372 = vunpack.c.l.b16 %v223
      %v373 = vunpack.c.l.b16 %v224
      %v374 = vunpack.c.l.b16 %v225
      %v375 = vunpack.c.l.b16 %v226
      %v376 = vunpack.c.l.b16 %v227
      %v377 = vunpack.c.l.b16 %v228
      %v378 = vunpack.c.l.b16 %v229
      %v379 = vunpack.c.l.b16 %v230
      %v380 = vunpack.c.l.b16 %v231
      %v381 = vunpack.c.l.b16 %v232
      %v382 = vunpack.c.l.b16 %v233
      %v383 = vunpack.c.l.b16 %v234
      %v384 = vunpack.c.l.b16 %v235
      %v385 = vunpack.c.l.b16 %v236
      %v386 = vunpack.c.l.b16 %v237
      %v387 = vunpack.c.l.b16 %v238
      %v388 = vpack.c.b16 %v325, %v324
      %v389 = vpack.c.b16 %v327, %v326
      %v390 = vpack.c.b16 %v329, %v328
      %v391 = vpack.c.b16 %v331, %v330
      %v392 = vpack.c.b16 %v333, %v332
      %v393 = vpack.c.b16 %v335, %v334
      %v394 = vpack.c.b16 %v337, %v336
      %v395 = vpack.c.b16 %v339, %v338
      %v396 = vpack.c.b16 %v341, %v340
      %v397 = vpack.c.b16 %v343, %v342
      %v398 = vpack.c.b16 %v345, %v344
      %v399 = vpack.c.b16 %v347, %v346
      %v400 = vpack.c.b16 %v349, %v348
      %v401 = vpack.c.b16 %v351, %v350
      %v402 = vpack.c.b16 %v353, %v352
      %v403 = vpack.c.b16 %v355, %v354
      %v404 = vpack.c.b16 %v357, %v356
      %v405 = vpack.c.b16 %v359, %v358
      %v406 = vpack.c.b16 %v361, %v360
      %v407 = vpack.c.b16 %v363, %v362
      %v408 = vpack.c.b16 %v365, %v364
      %v409 = vpack.c.b16 %v367, %v366
      %v410 = vpack.c.b16 %v369, %v368
      %v411 = vpack.c.b16 %v371, %v370
      %v412 = vpack.c.b16 %v373, %v372
      %v413 = vpack.c.b16 %v375, %v374
      %v414 = vpack.c.b16 %v377, %v376
      %v415 = vpack.c.b16 %v379, %v378
      %v416 = vpack.c.b16 %v381, %v380
      %v417 = vpack.c.b16 %v383, %v382
      %v418 = vpack.c.b16 %v385, %v384
      %v419 = vpack.c.b16 %v387, %v386
      %v434 = vunpack.c.l.b16 %v239
      %v435 = vunpack.c.l.b16 %v240
      %v436 = vunpack.c.l.b16 %v241
      %v437 = vunpack.c.l.b16 %v242
      %v438 = vunpack.c.l.b16 %v243
      %v439 = vunpack.c.l.b16 %v244
      %v440 = vunpack.c.l.b16 %v245
      %v441 = vunpack.c.l.b16 %v246
      %v442 = vunpack.c.l.b16 %v247
      %v443 = vunpack.c.l.b16 %v248
      %v444 = vunpack.c.l.b16 %v249
      %v445 = vunpack.c.l.b16 %v250
      %v446 = vunpack.c.l.b16 %v251
      %v447 = vunpack.c.l.b16 %v252
      %v448 = vpack.c.b16 %v435, %v434
      %v449 = vpack.c.b16 %v437, %v436
      %v450 = vpack.c.b16 %v439, %v438
      %v451 = vpack.c.b16 %v441, %v440
      %v452 = vpack.c.b16 %v443, %v442
      %v453 = vpack.c.b16 %v445, %v444
      %v454 = vpack.c.b16 %v447, %v446
      %vm461 = vcmask 883712
      %v463 = vsel %vm461, %v388, 0
      %v466 = vsel %vm461, %v389, 0
      %v469 = vsel %vm461, %v390, 0
      %v472 = vsel %vm461, %v391, 0
      %v475 = vsel %vm461, %v392, 0
      %v478 = vsel %vm461, %v393, 0
      %v481 = vsel %vm461, %v394, 0
      %v484 = vsel %vm461, %v395, 0
      %v487 = vsel %vm461, %v396, 0
      %v490 = vsel %vm461, %v397, 0
      %v493 = vsel %vm461, %v398, 0
      %v496 = vsel %vm461, %v399, 0
      %v499 = vsel %vm461, %v400, 0
      %v502 = vsel %vm461, %v401, 0
      %v505 = vsel %vm461, %v402, 0
      %v508 = vsel %vm461, %v403, 0
      %v511 = vsel %vm461, %v404, 0
      %v514 = vsel %vm461, %v405, 0
      %v517 = vsel %vm461, %v406, 0
      %v520 = vsel %vm461, %v407, 0
      %v523 = vsel %vm461, %v408, 0
      %v526 = vsel %vm461, %v409, 0
      %v529 = vsel %vm461, %v410, 0
      %v532 = vsel %vm461, %v411, 0
      %v535 = vsel %vm461, %v412, 0
      %v538 = vsel %vm461, %v413, 0
      %v541 = vsel %vm461, %v414, 0
      %v544 = vsel %vm461, %v415, 0
      %v547 = vsel %vm461, %v416, 0
      %v550 = vsel %vm461, %v417, 0
      %v553 = vsel %vm461, %v418, 0
      %v556 = vsel %vm461, %v419, 0
      %vm558 = vcmask 1045504
      %v560 = vsel %vm558, %v454, 0
      %562 = vmatprep.subr.bf16.mxu0 0
      %563 = vmatpush1.bf16.msra.mxu0 %v448
      %564 = vmatprep.subr.bf16.mxu0 0
      %565 = vmatpush1.bf16.msra.mxu0 %v449
      %566 = vmatprep.subr.bf16.mxu0 0
      %567 = vmatpush1.bf16.msra.mxu0 %v450
      %568 = vmatprep.subr.bf16.mxu0 0
      %569 = vmatpush1.bf16.msra.mxu0 %v451
      %570 = vmatprep.subr.bf16.mxu0 0
      %571 = vmatpush1.bf16.msra.mxu0 %v452
      %572 = vmatprep.subr.bf16.mxu0 0
      %573 = vmatpush1.bf16.msra.mxu0 %v453
      %574 = vmatprep.subr.bf16.mxu0 0
      %575 = vmatpush1.bf16.msra.mxu0 %v560
      %576 = vmatprep.subr.bf16.mxu0 0
      %577 = vmatpush1.bf16.msra.mxu0 0
      %578 = vmatprep.subr.bf16.mxu0 0
      %579 = vmatpush1.bf16.msra.mxu0 0
      %580 = vmatprep.subr.bf16.mxu0 0
      %581 = vmatpush1.bf16.msra.mxu0 0
      %582 = vmatprep.subr.bf16.mxu0 0
      %583 = vmatpush1.bf16.msra.mxu0 0
      %584 = vmatprep.subr.bf16.mxu0 0
      %585 = vmatpush1.bf16.msra.mxu0 0
      %586 = vmatprep.subr.bf16.mxu0 0
      %587 = vmatpush1.bf16.msra.mxu0 0
      %588 = vmatprep.subr.bf16.mxu0 0
      %589 = vmatpush1.bf16.msra.mxu0 0
      %590 = vmatprep.subr.bf16.mxu0 0
      %591 = vmatpush1.bf16.msra.mxu0 0
      %592 = vmatprep.subr.bf16.mxu0 0
      %593 = vmatpush1.bf16.msra.mxu0 0
      %594 = vmatprep.mubr.bf16.mxu0 0
      %595 = vmatmul.mubr.bf16.gmra.mrb[0].mxu0 %v463
      %v596 = vpop.f32.mrb[0].mxu0
      %v597 = vadd.f32 %v258, %v596
      %v598 = vpop.f32.mrb[0].mxu0
      %v599 = vpop.f32.mrb[0].mxu0
      %v600 = vadd.f32 %v258, %v599
      %v601 = vpop.f32.mrb[0].mxu0
      %602 = vmatprep.mubr.bf16.mxu0 0
      %603 = vmatmul.mubr.bf16.gmra.mrb[0].mxu0 %v466
      %v604 = vpop.f32.mrb[0].mxu0
      %v605 = vadd.f32 %v258, %v604
      %v606 = vpop.f32.mrb[0].mxu0
      %v607 = vpop.f32.mrb[0].mxu0
      %v608 = vadd.f32 %v258, %v607
      %v609 = vpop.f32.mrb[0].mxu0
      %610 = vmatprep.mubr.bf16.mxu0 0
      %611 = vmatmul.mubr.bf16.gmra.mrb[0].mxu0 %v469
      %v612 = vpop.f32.mrb[0].mxu0
      %v613 = vadd.f32 %v258, %v612
      %v614 = vpop.f32.mrb[0].mxu0
      %v615 = vpop.f32.mrb[0].mxu0
      %v616 = vadd.f32 %v258, %v615
      %v617 = vpop.f32.mrb[0].mxu0
      %618 = vmatprep.mubr.bf16.mxu0 0
      %619 = vmatmul.mubr.bf16.gmra.mrb[0].mxu0 %v472
      %v620 = vpop.f32.mrb[0].mxu0
      %v621 = vadd.f32 %v258, %v620
      %v622 = vpop.f32.mrb[0].mxu0
      %v623 = vpop.f32.mrb[0].mxu0
      %v624 = vadd.f32 %v258, %v623
      %v625 = vpop.f32.mrb[0].mxu0
      %626 = vmatprep.mubr.bf16.mxu0 0
      %627 = vmatmul.mubr.bf16.gmra.mrb[0].mxu0 %v475
      %v628 = vpop.f32.mrb[0].mxu0
      %v629 = vadd.f32 %v258, %v628
      %v630 = vpop.f32.mrb[0].mxu0
      %v631 = vpop.f32.mrb[0].mxu0
      %v632 = vadd.f32 %v258, %v631
      %v633 = vpop.f32.mrb[0].mxu0
      %634 = vmatprep.mubr.bf16.mxu0 0
      %635 = vmatmul.mubr.bf16.gmra.mrb[0].mxu0 %v478
      %v636 = vpop.f32.mrb[0].mxu0
      %v637 = vadd.f32 %v258, %v636
      %v638 = vpop.f32.mrb[0].mxu0
      %v639 = vpop.f32.mrb[0].mxu0
      %v640 = vadd.f32 %v258, %v639
      %v641 = vpop.f32.mrb[0].mxu0
      %642 = vmatprep.mubr.bf16.mxu0 0
      %643 = vmatmul.mubr.bf16.gmra.mrb[0].mxu0 %v481
      %v644 = vpop.f32.mrb[0].mxu0
      %v645 = vadd.f32 %v258, %v644
      %v646 = vpop.f32.mrb[0].mxu0
      %v647 = vpop.f32.mrb[0].mxu0
      %v648 = vadd.f32 %v258, %v647
      %v649 = vpop.f32.mrb[0].mxu0
      %650 = vmatprep.mubr.bf16.mxu0 0
      %651 = vmatmul.mubr.bf16.gmra.mrb[0].mxu0 %v484
      %v652 = vpop.f32.mrb[0].mxu0
      %v653 = vadd.f32 %v258, %v652
      %v654 = vpop.f32.mrb[0].mxu0
      %v655 = vpop.f32.mrb[0].mxu0
      %v656 = vadd.f32 %v258, %v655
      %v657 = vpop.f32.mrb[0].mxu0
      %658 = vmatprep.mubr.bf16.mxu0 0
      %659 = vmatmul.mubr.bf16.gmra.mrb[0].mxu0 %v487
      %v660 = vpop.f32.mrb[0].mxu0
      %v661 = vadd.f32 %v258, %v660
      %v662 = vpop.f32.mrb[0].mxu0
      %v663 = vpop.f32.mrb[0].mxu0
      %v664 = vadd.f32 %v258, %v663
      %v665 = vpop.f32.mrb[0].mxu0
      %666 = vmatprep.mubr.bf16.mxu0 0
      %667 = vmatmul.mubr.bf16.gmra.mrb[0].mxu0 %v490
      %v668 = vpop.f32.mrb[0].mxu0
      %v669 = vadd.f32 %v258, %v668
      %v670 = vpop.f32.mrb[0].mxu0
      %v671 = vpop.f32.mrb[0].mxu0
      %v672 = vadd.f32 %v258, %v671
      %v673 = vpop.f32.mrb[0].mxu0
      %674 = vmatprep.mubr.bf16.mxu0 0
      %675 = vmatmul.mubr.bf16.gmra.mrb[0].mxu0 %v493
      %v676 = vpop.f32.mrb[0].mxu0
      %v677 = vadd.f32 %v258, %v676
      %v678 = vpop.f32.mrb[0].mxu0
      %v679 = vpop.f32.mrb[0].mxu0
      %v680 = vadd.f32 %v258, %v679
      %v681 = vpop.f32.mrb[0].mxu0
      %682 = vmatprep.mubr.bf16.mxu0 0
      %683 = vmatmul.mubr.bf16.gmra.mrb[0].mxu0 %v496
      %v684 = vpop.f32.mrb[0].mxu0
      %v685 = vadd.f32 %v258, %v684
      %v686 = vpop.f32.mrb[0].mxu0
      %v687 = vpop.f32.mrb[0].mxu0
      %v688 = vadd.f32 %v258, %v687
      %v689 = vpop.f32.mrb[0].mxu0
      %690 = vmatprep.mubr.bf16.mxu0 0
      %691 = vmatmul.mubr.bf16.gmra.mrb[0].mxu0 %v499
      %v692 = vpop.f32.mrb[0].mxu0
      %v693 = vadd.f32 %v258, %v692
      %v694 = vpop.f32.mrb[0].mxu0
      %v695 = vpop.f32.mrb[0].mxu0
      %v696 = vadd.f32 %v258, %v695
      %v697 = vpop.f32.mrb[0].mxu0
      %698 = vmatprep.mubr.bf16.mxu0 0
      %699 = vmatmul.mubr.bf16.gmra.mrb[0].mxu0 %v502
      %v700 = vpop.f32.mrb[0].mxu0
      %v701 = vadd.f32 %v258, %v700
      %v702 = vpop.f32.mrb[0].mxu0
      %v703 = vpop.f32.mrb[0].mxu0
      %v704 = vadd.f32 %v258, %v703
      %v705 = vpop.f32.mrb[0].mxu0
      %706 = vmatprep.mubr.bf16.mxu0 0
      %707 = vmatmul.mubr.bf16.gmra.mrb[0].mxu0 %v505
      %v708 = vpop.f32.mrb[0].mxu0
      %v709 = vadd.f32 %v258, %v708
      %v710 = vpop.f32.mrb[0].mxu0
      %v711 = vpop.f32.mrb[0].mxu0
      %v712 = vadd.f32 %v258, %v711
      %v713 = vpop.f32.mrb[0].mxu0
      %714 = vmatprep.mubr.bf16.mxu0 0
      %715 = vmatmul.mubr.bf16.gmra.mrb[0].mxu0 %v508
      %v716 = vpop.f32.mrb[0].mxu0
      %v717 = vadd.f32 %v258, %v716
      %v718 = vpop.f32.mrb[0].mxu0
      %v719 = vpop.f32.mrb[0].mxu0
      %v720 = vadd.f32 %v258, %v719
      %v721 = vpop.f32.mrb[0].mxu0
      %722 = vmatprep.mubr.bf16.mxu0 0
      %723 = vmatmul.mubr.bf16.gmra.mrb[0].mxu0 %v511
      %v724 = vpop.f32.mrb[0].mxu0
      %v725 = vadd.f32 %v258, %v724
      %v726 = vpop.f32.mrb[0].mxu0
      %v727 = vpop.f32.mrb[0].mxu0
      %v728 = vadd.f32 %v258, %v727
      %v729 = vpop.f32.mrb[0].mxu0
      %730 = vmatprep.mubr.bf16.mxu0 0
      %731 = vmatmul.mubr.bf16.gmra.mrb[0].mxu0 %v514
      %v732 = vpop.f32.mrb[0].mxu0
      %v733 = vadd.f32 %v258, %v732
      %v734 = vpop.f32.mrb[0].mxu0
      %v735 = vpop.f32.mrb[0].mxu0
      %v736 = vadd.f32 %v258, %v735
      %v737 = vpop.f32.mrb[0].mxu0
      %738 = vmatprep.mubr.bf16.mxu0 0
      %739 = vmatmul.mubr.bf16.gmra.mrb[0].mxu0 %v517
      %v740 = vpop.f32.mrb[0].mxu0
      %v741 = vadd.f32 %v258, %v740
      %v742 = vpop.f32.mrb[0].mxu0
      %v743 = vpop.f32.mrb[0].mxu0
      %v744 = vadd.f32 %v258, %v743
      %v745 = vpop.f32.mrb[0].mxu0
      %746 = vmatprep.mubr.bf16.mxu0 0
      %747 = vmatmul.mubr.bf16.gmra.mrb[0].mxu0 %v520
      %v748 = vpop.f32.mrb[0].mxu0
      %v749 = vadd.f32 %v258, %v748
      %v750 = vpop.f32.mrb[0].mxu0
      %v751 = vpop.f32.mrb[0].mxu0
      %v752 = vadd.f32 %v258, %v751
      %v753 = vpop.f32.mrb[0].mxu0
      %754 = vmatprep.mubr.bf16.mxu0 0
      %755 = vmatmul.mubr.bf16.gmra.mrb[0].mxu0 %v523
      %v756 = vpop.f32.mrb[0].mxu0
      %v757 = vadd.f32 %v258, %v756
      %v758 = vpop.f32.mrb[0].mxu0
      %v759 = vpop.f32.mrb[0].mxu0
      %v760 = vadd.f32 %v258, %v759
      %v761 = vpop.f32.mrb[0].mxu0
      %762 = vmatprep.mubr.bf16.mxu0 0
      %763 = vmatmul.mubr.bf16.gmra.mrb[0].mxu0 %v526
      %v764 = vpop.f32.mrb[0].mxu0
      %v765 = vadd.f32 %v258, %v764
      %v766 = vpop.f32.mrb[0].mxu0
      %v767 = vpop.f32.mrb[0].mxu0
      %v768 = vadd.f32 %v258, %v767
      %v769 = vpop.f32.mrb[0].mxu0
      %770 = vmatprep.mubr.bf16.mxu0 0
      %771 = vmatmul.mubr.bf16.gmra.mrb[0].mxu0 %v529
      %v772 = vpop.f32.mrb[0].mxu0
      %v773 = vadd.f32 %v258, %v772
      %v774 = vpop.f32.mrb[0].mxu0
      %v775 = vpop.f32.mrb[0].mxu0
      %v776 = vadd.f32 %v258, %v775
      %v777 = vpop.f32.mrb[0].mxu0
      %778 = vmatprep.mubr.bf16.mxu0 0
      %779 = vmatmul.mubr.bf16.gmra.mrb[0].mxu0 %v532
      %v780 = vpop.f32.mrb[0].mxu0
      %v781 = vadd.f32 %v258, %v780
      %v782 = vpop.f32.mrb[0].mxu0
      %v783 = vpop.f32.mrb[0].mxu0
      %v784 = vadd.f32 %v258, %v783
      %v785 = vpop.f32.mrb[0].mxu0
      %786 = vmatprep.mubr.bf16.mxu0 0
      %787 = vmatmul.mubr.bf16.gmra.mrb[0].mxu0 %v535
      %v788 = vpop.f32.mrb[0].mxu0
      %v789 = vadd.f32 %v258, %v788
      %v790 = vpop.f32.mrb[0].mxu0
      %v791 = vpop.f32.mrb[0].mxu0
      %v792 = vadd.f32 %v258, %v791
      %v793 = vpop.f32.mrb[0].mxu0
      %794 = vmatprep.mubr.bf16.mxu0 0
      %795 = vmatmul.mubr.bf16.gmra.mrb[0].mxu0 %v538
      %v796 = vpop.f32.mrb[0].mxu0
      %v797 = vadd.f32 %v258, %v796
      %v798 = vpop.f32.mrb[0].mxu0
      %v799 = vpop.f32.mrb[0].mxu0
      %v800 = vadd.f32 %v258, %v799
      %v801 = vpop.f32.mrb[0].mxu0
      %802 = vmatprep.mubr.bf16.mxu0 0
      %803 = vmatmul.mubr.bf16.gmra.mrb[0].mxu0 %v541
      %v804 = vpop.f32.mrb[0].mxu0
      %v805 = vadd.f32 %v258, %v804
      %v806 = vpop.f32.mrb[0].mxu0
      %v807 = vpop.f32.mrb[0].mxu0
      %v808 = vadd.f32 %v258, %v807
      %v809 = vpop.f32.mrb[0].mxu0
      %810 = vmatprep.mubr.bf16.mxu0 0
      %811 = vmatmul.mubr.bf16.gmra.mrb[0].mxu0 %v544
      %v812 = vpop.f32.mrb[0].mxu0
      %v813 = vadd.f32 %v258, %v812
      %v814 = vpop.f32.mrb[0].mxu0
      %v815 = vpop.f32.mrb[0].mxu0
      %v816 = vadd.f32 %v258, %v815
      %v817 = vpop.f32.mrb[0].mxu0
      %818 = vmatprep.mubr.bf16.mxu0 0
      %819 = vmatmul.mubr.bf16.gmra.mrb[0].mxu0 %v547
      %v820 = vpop.f32.mrb[0].mxu0
      %v821 = vadd.f32 %v258, %v820
      %v822 = vpop.f32.mrb[0].mxu0
      %v823 = vpop.f32.mrb[0].mxu0
      %v824 = vadd.f32 %v258, %v823
      %v825 = vpop.f32.mrb[0].mxu0
      %826 = vmatprep.mubr.bf16.mxu0 0
      %827 = vmatmul.mubr.bf16.gmra.mrb[0].mxu0 %v550
      %v828 = vpop.f32.mrb[0].mxu0
      %v829 = vadd.f32 %v258, %v828
      %v830 = vpop.f32.mrb[0].mxu0
      %v831 = vpop.f32.mrb[0].mxu0
      %v832 = vadd.f32 %v258, %v831
      %v833 = vpop.f32.mrb[0].mxu0
      %834 = vmatprep.mubr.bf16.mxu0 0
      %835 = vmatmul.mubr.bf16.gmra.mrb[0].mxu0 %v553
      %v836 = vpop.f32.mrb[0].mxu0
      %v837 = vadd.f32 %v258, %v836
      %v838 = vpop.f32.mrb[0].mxu0
      %v839 = vpop.f32.mrb[0].mxu0
      %v840 = vadd.f32 %v258, %v839
      %v841 = vpop.f32.mrb[0].mxu0
      %842 = vmatprep.mubr.bf16.mxu0 0
      %843 = vmatmul.mubr.bf16.gmra.mrb[0].mxu0 %v556
      %v844 = vpop.f32.mrb[0].mxu0
      %v845 = vadd.f32 %v258, %v844
      %v846 = vpop.f32.mrb[0].mxu0
      %v847 = vpop.f32.mrb[0].mxu0
      %v848 = vadd.f32 %v258, %v847
      %v849 = vpop.f32.mrb[0].mxu0
      %850 = vdwg.mxu0
      %851 = vst [vmem:[%s172] sm:$0xff] %v597
      %852 = vst [vmem:[%s172 + $0x8] sm:$0xff] %v600
      %853 = vst [vmem:[%s172 + $0x10] sm:$0xff] %v605
      %854 = vst [vmem:[%s172 + $0x18] sm:$0xff] %v608
      %855 = vst [vmem:[%s172 + $0x20] sm:$0xff] %v613
      %856 = vst [vmem:[%s172 + $0x28] sm:$0xff] %v616
      %857 = vst [vmem:[%s172 + $0x30] sm:$0xff] %v621
      %858 = vst [vmem:[%s172 + $0x38] sm:$0xff] %v624
      %859 = vst [vmem:[%s172 + $0x40] sm:$0xff] %v629
      %860 = vst [vmem:[%s172 + $0x48] sm:$0xff] %v632
      %861 = vst [vmem:[%s172 + $0x50] sm:$0xff] %v637
      %862 = vst [vmem:[%s172 + $0x58] sm:$0xff] %v640
      %863 = vst [vmem:[%s172 + $0x60] sm:$0xff] %v645
      %864 = vst [vmem:[%s172 + $0x68] sm:$0xff] %v648
      %865 = vst [vmem:[%s172 + $0x70] sm:$0xff] %v653
      %866 = vst [vmem:[%s172 + $0x78] sm:$0xff] %v656
      %867 = vst [vmem:[%s172 + $0x80] sm:$0xff] %v661
      %868 = vst [vmem:[%s172 + $0x88] sm:$0xff] %v664
      %869 = vst [vmem:[%s172 + $0x90] sm:$0xff] %v669
      %870 = vst [vmem:[%s172 + $0x98] sm:$0xff] %v672
      %871 = vst [vmem:[%s172 + $0xa0] sm:$0xff] %v677
      %872 = vst [vmem:[%s172 + $0xa8] sm:$0xff] %v680
      %873 = vst [vmem:[%s172 + $0xb0] sm:$0xff] %v685
      %874 = vst [vmem:[%s172 + $0xb8] sm:$0xff] %v688
      %875 = vst [vmem:[%s172 + $0xc0] sm:$0xff] %v693
      %876 = vst [vmem:[%s172 + $0xc8] sm:$0xff] %v696
      %877 = vst [vmem:[%s172 + $0xd0] sm:$0xff] %v701
      %878 = vst [vmem:[%s172 + $0xd8] sm:$0xff] %v704
      %879 = vst [vmem:[%s172 + $0xe0] sm:$0xff] %v709
      %880 = vst [vmem:[%s172 + $0xe8] sm:$0xff] %v712
      %881 = vst [vmem:[%s172 + $0xf0] sm:$0xff] %v717
      %882 = vst [vmem:[%s172 + $0xf8] sm:$0xff] %v720
      %883 = vst [vmem:[%s172 + $0x100] sm:$0xff] %v725
      %884 = vst [vmem:[%s172 + $0x108] sm:$0xff] %v728
      %885 = vst [vmem:[%s172 + $0x110] sm:$0xff] %v733
      %886 = vst [vmem:[%s172 + $0x118] sm:$0xff] %v736
      %887 = vst [vmem:[%s172 + $0x120] sm:$0xff] %v741
      %888 = vst [vmem:[%s172 + $0x128] sm:$0xff] %v744
      %889 = vst [vmem:[%s172 + $0x130] sm:$0xff] %v749
      %890 = vst [vmem:[%s172 + $0x138] sm:$0xff] %v752
      %891 = vst [vmem:[%s172 + $0x140] sm:$0xff] %v757
      %892 = vst [vmem:[%s172 + $0x148] sm:$0xff] %v760
      %893 = vst [vmem:[%s172 + $0x150] sm:$0xff] %v765
      %894 = vst [vmem:[%s172 + $0x158] sm:$0xff] %v768
      %895 = vst [vmem:[%s172 + $0x160] sm:$0xff] %v773
      %896 = vst [vmem:[%s172 + $0x168] sm:$0xff] %v776
      %897 = vst [vmem:[%s172 + $0x170] sm:$0xff] %v781
      %898 = vst [vmem:[%s172 + $0x178] sm:$0xff] %v784
      %899 = vst [vmem:[%s172 + $0x180] sm:$0xff] %v789
      %900 = vst [vmem:[%s172 + $0x188] sm:$0xff] %v792
      %901 = vst [vmem:[%s172 + $0x190] sm:$0xff] %v797
      %902 = vst [vmem:[%s172 + $0x198] sm:$0xff] %v800
      %903 = vst [vmem:[%s172 + $0x1a0] sm:$0xff] %v805
      %904 = vst [vmem:[%s172 + $0x1a8] sm:$0xff] %v808
      %905 = vst [vmem:[%s172 + $0x1b0] sm:$0xff] %v813
      %906 = vst [vmem:[%s172 + $0x1b8] sm:$0xff] %v816
      %907 = vst [vmem:[%s172 + $0x1c0] sm:$0xff] %v821
      %908 = vst [vmem:[%s172 + $0x1c8] sm:$0xff] %v824
      %909 = vst [vmem:[%s172 + $0x1d0] sm:$0xff] %v829
      %910 = vst [vmem:[%s172 + $0x1d8] sm:$0xff] %v832
      %911 = vst [vmem:[%s172 + $0x1e0] sm:$0xff] %v837
      %912 = vst [vmem:[%s172 + $0x1e8] sm:$0xff] %v840
      %913 = vst [vmem:[%s172 + $0x1f0] sm:$0xff] %v845
      %914 = vst [vmem:[%s172 + $0x1f8] sm:$0xff] %v848
      %s915 = smul.u32 64, %s14
      %p916 = scmp.lt.s32.totalorder %s915, 511
      %s917 = scalar_select %p916, %s915, 511
      %s918 = smul.addr %s917, 8
      %s919 = scalar_lea.vmem %s3, %s918
      // Predicated region
      $region33: #{convlstm3d_forward.2} parent=31 // pred_check
        %p920 = pneg %p100
      $region34: #{convlstm3d_forward.2} parent=31 // pred_check_branch
        %922 = sbr.rel (%p920) target = $region36
      $region35: #{convlstm3d_forward.2} parent=31 // pred_region
        %s923 = smul.u32 64, %s14
      $region36: #{convlstm3d_forward.2} parent=31 // pred_fallthru
        _
    $region32: #{convlstm3d_forward.2} parent=5 // pred_fallthru
      _
    %p924 = scmp.le.s32.totalorder 2, %s9
    // Predicated region
    $region37: #{convlstm3d_forward.2} parent=5 // pred_check
      %p925 = pneg %p924
    $region38: #{convlstm3d_forward.2} parent=5 // pred_check_branch
      %927 = sbr.rel (%p925) target = $region40
    $region39: #{convlstm3d_forward.2} parent=5 // pred_region
      %s928 = ssub.s32 %s9, 2
      // Predicated region
      $region41: #{convlstm3d_forward.2} parent=39 // pred_check
        %p929 = pneg %p106
      $region42: #{convlstm3d_forward.2} parent=39 // pred_check_branch
        %931 = sbr.rel (%p929) target = $region44
      $region43: #{convlstm3d_forward.2} parent=39 // pred_region
        %s932 = smul.u32 64, %s15
        %p933 = scmp.lt.s32.totalorder %s932, 511
        %s934 = scalar_select %p933, %s932, 511
        %s935 = smul.addr %s934, 8
        %s936 = scalar_lea.vmem %s3, %s935
      $region44: #{convlstm3d_forward.2} parent=39 // pred_fallthru
        _
    $region40: #{convlstm3d_forward.2} parent=5 // pred_fallthru
      _
  $region6: #{convlstm3d_forward.2} parent=0 // loop_footer
    %s13 = sadd.s32 1, %s9
  $region7: #{convlstm3d_forward.2} parent=0 // loop_footer_branch
    %8 = sbr.rel target = $region3
  $region8: #{convlstm3d_forward.2} parent=0 // loop_exit
    _

// kernel: custom-call
$region0: #{custom-call}
  %s0 = inlined_call_operand.vmem [shape: bf16[8,2,4,8,8,32], index: 0, kind: output, shape index: {}]

// kernel: closed_call.20
$region0: #{closed_call.20}
  #allocation0 [shape = 'u32[]', space=smem, size = 0x4, offset = 0x4, fixed_abs, tag = 'smem constant byte address 0x4 - core index']
  #allocation1 [shape = 'u32[144,128]{1,0:T(1,128)}', space=vmem, size = 0x12000, scoped, tag = 'internal scratch']
  %s0 = inlined_call_operand.vmem [shape: f32[512,128], index: 0, kind: input, shape index: {}]
  %s1 = inlined_call_operand.vmem [shape: bf16[512,864], index: 1, kind: input, shape index: {}]
  %s2 = inlined_call_operand.vmem [shape: f32[512,32], index: 2, kind: input, shape index: {}]
  %s3 = inlined_call_operand.vmem [shape: bf16[864,128], index: 3, kind: input, shape index: {}]
  %s4 = inlined_call_operand.vmem [shape: f32[512,64], index: 4, kind: output, shape index: {}]
  %s5 = sld [smem:[#allocation0]]
  $region49: #{closed_call.20} parent=0
    _
  %s7 = ssub.s32 1, %s5
  %s8 = scalar_select 0, %s7, %s5
  loop: start=0, step=1, limit=4
  $region2: #{closed_call.20} parent=0 // loop_pre_header
    _
  $region3: #{closed_call.20} parent=0 // loop_header
    %s10 = sphi 0, %s14
    %p11 = scmp.ge.s32.totalorder %s10, 4
    %s20 = sphi 0, %s22
    %s23 = sphi 0, %s20
    %s24 = sphi 0, %s23
    %s40 = sphi 0, %s24
    %s46 = sphi 0, %s48
    %s49 = sphi 0, %s46
    %s50 = sphi 0, %s49
    %s66 = sphi 0, %s50
    %s72 = sphi 0, %s74
    %s75 = sphi 0, %s72
    %s76 = sphi 0, %s75
    %s92 = sphi 0, %s76
    %s96 = sphi 0, %s96
    %s98 = sphi 0, %s96
    %s99 = sphi 0, %s98
    %s113 = sphi 0, %s99
    %s119 = sphi 0, %s121
    %s122 = sphi 0, %s119
    %s123 = sphi 0, %s122
    %s139 = sphi 0, %s123
  $region4: #{closed_call.20} parent=0 // loop_header_branch
    %13 = sbr.rel (%p11) target = $region8
  $region5: #{closed_call.20} parent=0 // loop_body
    %s15 = ssub.s32 %s10, 1
    %s16 = ssub.s32 %s10, 2
    %s17 = sadd.s32 %s10, 1
    %s18 = ssub.s32 %s10, %s17
    %p19 = scmp.eq.s32.totalorder %s18, 0
    %s21 = sadd.s32 %s20, 1
    %s22 = scalar_select %p19, %s20, %s21
    %p25 = pneg %p19
    %p26 = scmp.eq.s32.totalorder %s10, 1
    %p27 = por %p25, %p26
    %p28 = scmp.ne.s32.totalorder %s20, %s23
    %p29 = scmp.eq.s32.totalorder %s10, 0
    %p30 = por %p28, %p29
    %p31 = scmp.ne.s32.totalorder %s20, %s23
    %p32 = scmp.eq.s32.totalorder %s15, 1
    %p33 = por %p31, %p32
    %p34 = scmp.ne.s32.totalorder %s23, %s24
    %p35 = scmp.eq.s32.totalorder %s15, 0
    %p36 = por %p34, %p35
    %p37 = scmp.ne.s32.totalorder %s23, %s24
    %p38 = scmp.eq.s32.totalorder %s16, 1
    %p39 = por %p37, %p38
    %p41 = scmp.ne.s32.totalorder %s24, %s40
    %p42 = scmp.eq.s32.totalorder %s16, 0
    %p43 = por %p41, %p42
    %s44 = ssub.s32 %s10, %s17
    %p45 = scmp.eq.s32.totalorder %s44, 0
    %s47 = sadd.s32 %s46, 1
    %s48 = scalar_select %p45, %s46, %s47
    %p51 = pneg %p45
    %p52 = scmp.eq.s32.totalorder %s10, 1
    %p53 = por %p51, %p52
    %p54 = scmp.ne.s32.totalorder %s46, %s49
    %p55 = scmp.eq.s32.totalorder %s10, 0
    %p56 = por %p54, %p55
    %p57 = scmp.ne.s32.totalorder %s46, %s49
    %p58 = scmp.eq.s32.totalorder %s15, 1
    %p59 = por %p57, %p58
    %p60 = scmp.ne.s32.totalorder %s49, %s50
    %p61 = scmp.eq.s32.totalorder %s15, 0
    %p62 = por %p60, %p61
    %p63 = scmp.ne.s32.totalorder %s49, %s50
    %p64 = scmp.eq.s32.totalorder %s16, 1
    %p65 = por %p63, %p64
    %p67 = scmp.ne.s32.totalorder %s50, %s66
    %p68 = scmp.eq.s32.totalorder %s16, 0
    %p69 = por %p67, %p68
    %s70 = ssub.s32 %s10, %s17
    %p71 = scmp.eq.s32.totalorder %s70, 0
    %s73 = sadd.s32 %s72, 1
    %s74 = scalar_select %p71, %s72, %s73
    %p77 = pneg %p71
    %p78 = scmp.eq.s32.totalorder %s10, 1
    %p79 = por %p77, %p78
    %p80 = scmp.ne.s32.totalorder %s72, %s75
    %p81 = scmp.eq.s32.totalorder %s10, 0
    %p82 = por %p80, %p81
    %p83 = scmp.ne.s32.totalorder %s72, %s75
    %p84 = scmp.eq.s32.totalorder %s15, 1
    %p85 = por %p83, %p84
    %p86 = scmp.ne.s32.totalorder %s75, %s76
    %p87 = scmp.eq.s32.totalorder %s15, 0
    %p88 = por %p86, %p87
    %p89 = scmp.ne.s32.totalorder %s75, %s76
    %p90 = scmp.eq.s32.totalorder %s16, 1
    %p91 = por %p89, %p90
    %p93 = scmp.ne.s32.totalorder %s76, %s92
    %p94 = scmp.eq.s32.totalorder %s16, 0
    %p95 = por %p93, %p94
    %s97 = sadd.s32 %s96, 1
    %p100 = scmp.eq.s32.totalorder %s10, 1
    %p101 = scmp.ne.s32.totalorder %s96, %s98
    %p102 = scmp.eq.s32.totalorder %s10, 0
    %p103 = por %p101, %p102
    %p104 = scmp.ne.s32.totalorder %s96, %s98
    %p105 = scmp.eq.s32.totalorder %s15, 1
    %p106 = por %p104, %p105
    %p107 = scmp.ne.s32.totalorder %s98, %s99
    %p108 = scmp.eq.s32.totalorder %s15, 0
    %p109 = por %p107, %p108
    %p110 = scmp.ne.s32.totalorder %s98, %s99
    %p111 = scmp.eq.s32.totalorder %s16, 1
    %p112 = por %p110, %p111
    %p114 = scmp.ne.s32.totalorder %s99, %s113
    %p115 = scmp.eq.s32.totalorder %s16, 0
    %p116 = por %p114, %p115
    %s117 = ssub.s32 %s10, %s17
    %p118 = scmp.eq.s32.totalorder %s117, 0
    %s120 = sadd.s32 %s119, 1
    %s121 = scalar_select %p118, %s119, %s120
    %p124 = pneg %p118
    %p125 = scmp.eq.s32.totalorder %s10, 1
    %p126 = por %p124, %p125
    %p127 = scmp.ne.s32.totalorder %s119, %s122
    %p128 = scmp.eq.s32.totalorder %s10, 0
    %p129 = por %p127, %p128
    %p130 = scmp.ne.s32.totalorder %s119, %s122
    %p131 = scmp.eq.s32.totalorder %s15, 1
    %p132 = por %p130, %p131
    %p133 = scmp.ne.s32.totalorder %s122, %s123
    %p134 = scmp.eq.s32.totalorder %s15, 0
    %p135 = por %p133, %p134
    %p136 = scmp.ne.s32.totalorder %s122, %s123
    %p137 = scmp.eq.s32.totalorder %s16, 1
    %p138 = por %p136, %p137
    %p140 = scmp.ne.s32.totalorder %s123, %s139
    %p141 = scmp.eq.s32.totalorder %s16, 0
    %p142 = por %p140, %p141
    %p143 = scmp.le.s32.totalorder 1, %s10
    %p144 = scmp.lt.s32.totalorder %s10, 3
    %p145 = pnand %p143, %p144
    %p146 = pneg %p145
    // Predicated region
    $region9: #{closed_call.20} parent=5 // pred_check
      _
    $region10: #{closed_call.20} parent=5 // pred_check_branch
      %148 = sbr.rel (%p145) target = $region12
    $region11: #{closed_call.20} parent=5 // pred_region
      %s149 = ssub.s32 %s10, 1
      // Predicated region
      $region13: #{closed_call.20} parent=11 // pred_check
        %p150 = pneg %p109
      $region14: #{closed_call.20} parent=11 // pred_check_branch
        %152 = sbr.rel (%p150) target = $region16
      $region15: #{closed_call.20} parent=11 // pred_region
        _
      $region16: #{closed_call.20} parent=11 // pred_fallthru
        _
    $region12: #{closed_call.20} parent=5 // pred_fallthru
      _
    %p153 = scmp.lt.s32.totalorder %s10, 2
    // Predicated region
    $region17: #{closed_call.20} parent=5 // pred_check
      %p154 = pneg %p153
    $region18: #{closed_call.20} parent=5 // pred_check_branch
      %156 = sbr.rel (%p154) target = $region20
    $region19: #{closed_call.20} parent=5 // pred_region
      // Predicated region
      $region21: #{closed_call.20} parent=19 // pred_check
        %p157 = pneg %p30
      $region22: #{closed_call.20} parent=19 // pred_check_branch
        %159 = sbr.rel (%p157) target = $region24
      $region23: #{closed_call.20} parent=19 // pred_region
        %s160 = smul.u32 32, %s10
        %p161 = scmp.lt.s32.totalorder %s160, 63
        %s162 = scalar_select %p161, %s160, 63
        %s163 = smul.addr %s162, 8
        %s164 = scalar_lea.vmem %s0, %s163
        %s165 = smul.u32 32, %s10
      $region24: #{closed_call.20} parent=19 // pred_fallthru
        _
      // Predicated region
      $region25: #{closed_call.20} parent=19 // pred_check
        %p166 = pneg %p56
      $region26: #{closed_call.20} parent=19 // pred_check_branch
        %168 = sbr.rel (%p166) target = $region28
      $region27: #{closed_call.20} parent=19 // pred_region
        %s169 = smul.u32 32, %s10
        %p170 = scmp.lt.s32.totalorder %s169, 63
        %s171 = scalar_select %p170, %s169, 63
        %s172 = smul.addr %s171, 7
        %s173 = smul.addr %s172, 4
        %s174 = scalar_lea.vmem %s1, %s173
        %s175 = smul.u32 32, %s10
      $region28: #{closed_call.20} parent=19 // pred_fallthru
        _
      // Predicated region
      $region29: #{closed_call.20} parent=19 // pred_check
        %p176 = pneg %p82
      $region30: #{closed_call.20} parent=19 // pred_check_branch
        %178 = sbr.rel (%p176) target = $region32
      $region31: #{closed_call.20} parent=19 // pred_region
        %s179 = smul.u32 32, %s10
        %p180 = scmp.lt.s32.totalorder %s179, 63
        %s181 = scalar_select %p180, %s179, 63
        %s182 = smul.addr %s181, 8
        %s183 = scalar_lea.vmem %s2, %s182
        %s184 = smul.u32 32, %s10
      $region32: #{closed_call.20} parent=19 // pred_fallthru
        _
    $region20: #{closed_call.20} parent=5 // pred_fallthru
      _
    %p185 = scmp.le.s32.totalorder 1, %s10
    %p186 = scmp.lt.s32.totalorder %s10, 3
    %p187 = pnand %p185, %p186
    %p188 = pneg %p187
    // Predicated region
    $region33: #{closed_call.20} parent=5 // pred_check
      _
    $region34: #{closed_call.20} parent=5 // pred_check_branch
      %190 = sbr.rel (%p187) target = $region36
    $region35: #{closed_call.20} parent=5 // pred_region
      %s191 = ssub.s32 %s10, 1
      %s192 = smul.u32 32, %s15
      %p193 = scmp.lt.s32.totalorder %s192, 63
      %s194 = scalar_select %p193, %s192, 63
      %s195 = smul.addr %s194, 8
      %s196 = scalar_lea.vmem %s0, %s195
      %p197 = pneg %p36
      %p198 = pneg %p33
      %s199 = smul.u32 32, %s15
      %p200 = scmp.lt.s32.totalorder %s199, 63
      %s201 = scalar_select %p200, %s199, 63
      %s202 = smul.addr %s201, 7
      %s203 = smul.addr %s202, 4
      %s204 = scalar_lea.vmem %s1, %s203
      %p205 = pneg %p62
      %p206 = pneg %p59
      %s207 = smul.u32 32, %s15
      %p208 = scmp.lt.s32.totalorder %s207, 63
      %s209 = scalar_select %p208, %s207, 63
      %s210 = smul.addr %s209, 8
      %s211 = scalar_lea.vmem %s2, %s210
      %p212 = pneg %p88
      %p213 = pneg %p85
      %p214 = pneg %p109
      %p215 = pneg %p106
      %p216 = pneg %p135
      %p217 = pneg %p132
      %s218 = smul.u32 32, %s15
      %p219 = scmp.lt.s32.totalorder %s218, 63
      %s220 = scalar_select %p219, %s218, 63
      %s221 = smul.addr %s220, 8
      %s222 = scalar_lea.vmem %s4, %s221
      %s223 = smul.u32 32, %s15
      %p224 = scmp.lt.s32.totalorder %s223, 63
      %s225 = scalar_select %p224, %s223, 63
      %s226 = smul.addr %s225, 8
      %s227 = scalar_lea.vmem %s0, %s226
      %s228 = smul.u32 32, %s15
      %s229 = smul.u32 32, %s15
      %p230 = scmp.lt.s32.totalorder %s229, 63
      %s231 = scalar_select %p230, %s229, 63
      %s232 = smul.addr %s231, 7
      %s233 = smul.addr %s232, 4
      %s234 = scalar_lea.vmem %s1, %s233
      %s235 = smul.u32 32, %s15
      %s236 = smul.u32 32, %s15
      %p237 = scmp.lt.s32.totalorder %s236, 63
      %s238 = scalar_select %p237, %s236, 63
      %s239 = smul.addr %s238, 8
      %s240 = scalar_lea.vmem %s2, %s239
      %s241 = smul.u32 32, %s15
      %s242 = smul.u32 32, %s15
      %p243 = scmp.lt.s32.totalorder %s242, 63
      %s244 = scalar_select %p243, %s242, 63
      %s245 = smul.addr %s244, 8
      %s246 = scalar_lea.vmem %s4, %s245
      %s247 = smul.u32 32, %s15
      %v249 = vld [vmem:[%s227] sm:$0xff]
      %v250 = vld [vmem:[%s227 + $0x8] sm:$0xff]
      %v251 = vld [vmem:[%s227 + $0x10] sm:$0xff]
      %v252 = vld [vmem:[%s227 + $0x18] sm:$0xff]
      %v253 = vld [vmem:[%s227 + $0x20] sm:$0xff]
      %v254 = vld [vmem:[%s227 + $0x28] sm:$0xff]
      %v255 = vld [vmem:[%s227 + $0x30] sm:$0xff]
      %v256 = vld [vmem:[%s227 + $0x38] sm:$0xff]
      %v257 = vld [vmem:[%s227 + $0x40] sm:$0xff]
      %v258 = vld [vmem:[%s227 + $0x48] sm:$0xff]
      %v259 = vld [vmem:[%s227 + $0x50] sm:$0xff]
      %v260 = vld [vmem:[%s227 + $0x58] sm:$0xff]
      %v261 = vld [vmem:[%s227 + $0x60] sm:$0xff]
      %v262 = vld [vmem:[%s227 + $0x68] sm:$0xff]
      %v263 = vld [vmem:[%s227 + $0x70] sm:$0xff]
      %v264 = vld [vmem:[%s227 + $0x78] sm:$0xff]
      %v265 = vld [vmem:[%s227 + $0x80] sm:$0xff]
      %v266 = vld [vmem:[%s227 + $0x88] sm:$0xff]
      %v267 = vld [vmem:[%s227 + $0x90] sm:$0xff]
      %v268 = vld [vmem:[%s227 + $0x98] sm:$0xff]
      %v269 = vld [vmem:[%s227 + $0xa0] sm:$0xff]
      %v270 = vld [vmem:[%s227 + $0xa8] sm:$0xff]
      %v271 = vld [vmem:[%s227 + $0xb0] sm:$0xff]
      %v272 = vld [vmem:[%s227 + $0xb8] sm:$0xff]
      %v273 = vld [vmem:[%s227 + $0xc0] sm:$0xff]
      %v274 = vld [vmem:[%s227 + $0xc8] sm:$0xff]
      %v275 = vld [vmem:[%s227 + $0xd0] sm:$0xff]
      %v276 = vld [vmem:[%s227 + $0xd8] sm:$0xff]
      %v277 = vld [vmem:[%s227 + $0xe0] sm:$0xff]
      %v278 = vld [vmem:[%s227 + $0xe8] sm:$0xff]
      %v279 = vld [vmem:[%s227 + $0xf0] sm:$0xff]
      %v280 = vld [vmem:[%s227 + $0xf8] sm:$0xff]
      %v281 = vld [vmem:[%s234] sm:$0xff]
      %v282 = vld [vmem:[%s234 + $0x8] sm:$0xff]
      %v283 = vld [vmem:[%s234 + $0x10] sm:$0xff]
      %v284 = vld [vmem:[%s234 + $0x18] sm:$0xf]
      %v285 = vld [vmem:[%s234 + $0x1c] sm:$0xff]
      %v286 = vld [vmem:[%s234 + $0x24] sm:$0xff]
      %v287 = vld [vmem:[%s234 + $0x2c] sm:$0xff]
      %v288 = vld [vmem:[%s234 + $0x34] sm:$0xf]
      %v289 = vld [vmem:[%s234 + $0x38] sm:$0xff]
      %v290 = vld [vmem:[%s234 + $0x40] sm:$0xff]
      %v291 = vld [vmem:[%s234 + $0x48] sm:$0xff]
      %v292 = vld [vmem:[%s234 + $0x50] sm:$0xf]
      %v293 = vld [vmem:[%s234 + $0x54] sm:$0xff]
      %v294 = vld [vmem:[%s234 + $0x5c] sm:$0xff]
      %v295 = vld [vmem:[%s234 + $0x64] sm:$0xff]
      %v296 = vld [vmem:[%s234 + $0x6c] sm:$0xf]
      %v297 = vld [vmem:[%s234 + $0x70] sm:$0xff]
      %v298 = vld [vmem:[%s234 + $0x78] sm:$0xff]
      %v299 = vld [vmem:[%s234 + $0x80] sm:$0xff]
      %v300 = vld [vmem:[%s234 + $0x88] sm:$0xf]
      %v301 = vld [vmem:[%s234 + $0x8c] sm:$0xff]
      %v302 = vld [vmem:[%s234 + $0x94] sm:$0xff]
      %v303 = vld [vmem:[%s234 + $0x9c] sm:$0xff]
      %v304 = vld [vmem:[%s234 + $0xa4] sm:$0xf]
      %v305 = vld [vmem:[%s234 + $0xa8] sm:$0xff]
      %v306 = vld [vmem:[%s234 + $0xb0] sm:$0xff]
      %v307 = vld [vmem:[%s234 + $0xb8] sm:$0xff]
      %v308 = vld [vmem:[%s234 + $0xc0] sm:$0xf]
      %v309 = vld [vmem:[%s234 + $0xc4] sm:$0xff]
      %v310 = vld [vmem:[%s234 + $0xcc] sm:$0xff]
      %v311 = vld [vmem:[%s234 + $0xd4] sm:$0xff]
      %v312 = vld [vmem:[%s234 + $0xdc] sm:$0xf]
      %v313 = vld [vmem:[%s234 + $0xe0] sm:$0xff]
      %v314 = vld [vmem:[%s234 + $0xe8] sm:$0xff]
      %v315 = vld [vmem:[%s234 + $0xf0] sm:$0xff]
      %v316 = vld [vmem:[%s234 + $0xf8] sm:$0xf]
      %v317 = vld [vmem:[%s234 + $0xfc] sm:$0xff]
      %v318 = vld [vmem:[%s234 + $0x104] sm:$0xff]
      %v319 = vld [vmem:[%s234 + $0x10c] sm:$0xff]
      %v320 = vld [vmem:[%s234 + $0x114] sm:$0xf]
      %v321 = vld [vmem:[%s234 + $0x118] sm:$0xff]
      %v322 = vld [vmem:[%s234 + $0x120] sm:$0xff]
      %v323 = vld [vmem:[%s234 + $0x128] sm:$0xff]
      %v324 = vld [vmem:[%s234 + $0x130] sm:$0xf]
      %v325 = vld [vmem:[%s234 + $0x134] sm:$0xff]
      %v326 = vld [vmem:[%s234 + $0x13c] sm:$0xff]
      %v327 = vld [vmem:[%s234 + $0x144] sm:$0xff]
      %v328 = vld [vmem:[%s234 + $0x14c] sm:$0xf]
      %v329 = vld [vmem:[%s234 + $0x150] sm:$0xff]
      %v330 = vld [vmem:[%s234 + $0x158] sm:$0xff]
      %v331 = vld [vmem:[%s234 + $0x160] sm:$0xff]
      %v332 = vld [vmem:[%s234 + $0x168] sm:$0xf]
      %v333 = vld [vmem:[%s234 + $0x16c] sm:$0xff]
      %v334 = vld [vmem:[%s234 + $0x174] sm:$0xff]
      %v335 = vld [vmem:[%s234 + $0x17c] sm:$0xff]
      %v336 = vld [vmem:[%s234 + $0x184] sm:$0xf]
      %v337 = vld [vmem:[%s234 + $0x188] sm:$0xff]
      %v338 = vld [vmem:[%s234 + $0x190] sm:$0xff]
      %v339 = vld [vmem:[%s234 + $0x198] sm:$0xff]
      %v340 = vld [vmem:[%s234 + $0x1a0] sm:$0xf]
      %v341 = vld [vmem:[%s234 + $0x1a4] sm:$0xff]
      %v342 = vld [vmem:[%s234 + $0x1ac] sm:$0xff]
      %v343 = vld [vmem:[%s234 + $0x1b4] sm:$0xff]
      %v344 = vld [vmem:[%s234 + $0x1bc] sm:$0xf]
      %v345 = vld [vmem:[%s234 + $0x1c0] sm:$0xff]
      %v346 = vld [vmem:[%s234 + $0x1c8] sm:$0xff]
      %v347 = vld [vmem:[%s234 + $0x1d0] sm:$0xff]
      %v348 = vld [vmem:[%s234 + $0x1d8] sm:$0xf]
      %v349 = vld [vmem:[%s234 + $0x1dc] sm:$0xff]
      %v350 = vld [vmem:[%s234 + $0x1e4] sm:$0xff]
      %v351 = vld [vmem:[%s234 + $0x1ec] sm:$0xff]
      %v352 = vld [vmem:[%s234 + $0x1f4] sm:$0xf]
      %v353 = vld [vmem:[%s234 + $0x1f8] sm:$0xff]
      %v354 = vld [vmem:[%s234 + $0x200] sm:$0xff]
      %v355 = vld [vmem:[%s234 + $0x208] sm:$0xff]
      %v356 = vld [vmem:[%s234 + $0x210] sm:$0xf]
      %v357 = vld [vmem:[%s234 + $0x214] sm:$0xff]
      %v358 = vld [vmem:[%s234 + $0x21c] sm:$0xff]
      %v359 = vld [vmem:[%s234 + $0x224] sm:$0xff]
      %v360 = vld [vmem:[%s234 + $0x22c] sm:$0xf]
      %v361 = vld [vmem:[%s234 + $0x230] sm:$0xff]
      %v362 = vld [vmem:[%s234 + $0x238] sm:$0xff]
      %v363 = vld [vmem:[%s234 + $0x240] sm:$0xff]
      %v364 = vld [vmem:[%s234 + $0x248] sm:$0xf]
      %v365 = vld [vmem:[%s234 + $0x24c] sm:$0xff]
      %v366 = vld [vmem:[%s234 + $0x254] sm:$0xff]
      %v367 = vld [vmem:[%s234 + $0x25c] sm:$0xff]
      %v368 = vld [vmem:[%s234 + $0x264] sm:$0xf]
      %v369 = vld [vmem:[%s234 + $0x268] sm:$0xff]
      %v370 = vld [vmem:[%s234 + $0x270] sm:$0xff]
      %v371 = vld [vmem:[%s234 + $0x278] sm:$0xff]
      %v372 = vld [vmem:[%s234 + $0x280] sm:$0xf]
      %v373 = vld [vmem:[%s234 + $0x284] sm:$0xff]
      %v374 = vld [vmem:[%s234 + $0x28c] sm:$0xff]
      %v375 = vld [vmem:[%s234 + $0x294] sm:$0xff]
      %v376 = vld [vmem:[%s234 + $0x29c] sm:$0xf]
      %v377 = vld [vmem:[%s234 + $0x2a0] sm:$0xff]
      %v378 = vld [vmem:[%s234 + $0x2a8] sm:$0xff]
      %v379 = vld [vmem:[%s234 + $0x2b0] sm:$0xff]
      %v380 = vld [vmem:[%s234 + $0x2b8] sm:$0xf]
      %v381 = vld [vmem:[%s234 + $0x2bc] sm:$0xff]
      %v382 = vld [vmem:[%s234 + $0x2c4] sm:$0xff]
      %v383 = vld [vmem:[%s234 + $0x2cc] sm:$0xff]
      %v384 = vld [vmem:[%s234 + $0x2d4] sm:$0xf]
      %v385 = vld [vmem:[%s234 + $0x2d8] sm:$0xff]
      %v386 = vld [vmem:[%s234 + $0x2e0] sm:$0xff]
      %v387 = vld [vmem:[%s234 + $0x2e8] sm:$0xff]
      %v388 = vld [vmem:[%s234 + $0x2f0] sm:$0xf]
      %v389 = vld [vmem:[%s234 + $0x2f4] sm:$0xff]
      %v390 = vld [vmem:[%s234 + $0x2fc] sm:$0xff]
      %v391 = vld [vmem:[%s234 + $0x304] sm:$0xff]
      %v392 = vld [vmem:[%s234 + $0x30c] sm:$0xf]
      %v393 = vld [vmem:[%s234 + $0x310] sm:$0xff]
      %v394 = vld [vmem:[%s234 + $0x318] sm:$0xff]
      %v395 = vld [vmem:[%s234 + $0x320] sm:$0xff]
      %v396 = vld [vmem:[%s234 + $0x328] sm:$0xf]
      %v397 = vld [vmem:[%s234 + $0x32c] sm:$0xff]
      %v398 = vld [vmem:[%s234 + $0x334] sm:$0xff]
      %v399 = vld [vmem:[%s234 + $0x33c] sm:$0xff]
      %v400 = vld [vmem:[%s234 + $0x344] sm:$0xf]
      %v401 = vld [vmem:[%s234 + $0x348] sm:$0xff]
      %v402 = vld [vmem:[%s234 + $0x350] sm:$0xff]
      %v403 = vld [vmem:[%s234 + $0x358] sm:$0xff]
      %v404 = vld [vmem:[%s234 + $0x360] sm:$0xf]
      %v405 = vld [vmem:[%s234 + $0x364] sm:$0xff]
      %v406 = vld [vmem:[%s234 + $0x36c] sm:$0xff]
      %v407 = vld [vmem:[%s234 + $0x374] sm:$0xff]
      %v408 = vld [vmem:[%s234 + $0x37c] sm:$0xf]
      %v409 = vld [vmem:[%s3] sm:$0xf]
      %v410 = vld [vmem:[%s3 + $0x4] sm:$0xf]
      %v411 = vld [vmem:[%s3 + $0x8] sm:$0xf]
      %v412 = vld [vmem:[%s3 + $0xc] sm:$0xf]
      %v413 = vld [vmem:[%s3 + $0x10] sm:$0xf]
      %v414 = vld [vmem:[%s3 + $0x14] sm:$0xf]
      %v415 = vld [vmem:[%s3 + $0x18] sm:$0xf]
      %v416 = vld [vmem:[%s3 + $0x1c] sm:$0xf]
      %v417 = vld [vmem:[%s3 + $0x20] sm:$0xf]
      %v418 = vld [vmem:[%s3 + $0x24] sm:$0xf]
      %v419 = vld [vmem:[%s3 + $0x28] sm:$0xf]
      %v420 = vld [vmem:[%s3 + $0x2c] sm:$0xf]
      %v421 = vld [vmem:[%s3 + $0x30] sm:$0xf]
      %v422 = vld [vmem:[%s3 + $0x34] sm:$0xf]
      %v423 = vld [vmem:[%s3 + $0x38] sm:$0xf]
      %v424 = vld [vmem:[%s3 + $0x3c] sm:$0xf]
      %v425 = vld [vmem:[%s3 + $0x40] sm:$0xf]
      %v426 = vld [vmem:[%s3 + $0x44] sm:$0xf]
      %v427 = vld [vmem:[%s3 + $0x48] sm:$0xf]
      %v428 = vld [vmem:[%s3 + $0x4c] sm:$0xf]
      %v429 = vld [vmem:[%s3 + $0x50] sm:$0xf]
      %v430 = vld [vmem:[%s3 + $0x54] sm:$0xf]
      %v431 = vld [vmem:[%s3 + $0x58] sm:$0xf]
      %v432 = vld [vmem:[%s3 + $0x5c] sm:$0xf]
      %v433 = vld [vmem:[%s3 + $0x60] sm:$0xf]
      %v434 = vld [vmem:[%s3 + $0x64] sm:$0xf]
      %v435 = vld [vmem:[%s3 + $0x68] sm:$0xf]
      %v436 = vld [vmem:[%s3 + $0x6c] sm:$0xf]
      %v437 = vld [vmem:[%s3 + $0x70] sm:$0xf]
      %v438 = vld [vmem:[%s3 + $0x74] sm:$0xf]
      %v439 = vld [vmem:[%s3 + $0x78] sm:$0xf]
      %v440 = vld [vmem:[%s3 + $0x7c] sm:$0xf]
      %v441 = vld [vmem:[%s3 + $0x80] sm:$0xf]
      %v442 = vld [vmem:[%s3 + $0x84] sm:$0xf]
      %v443 = vld [vmem:[%s3 + $0x88] sm:$0xf]
      %v444 = vld [vmem:[%s3 + $0x8c] sm:$0xf]
      %v445 = vld [vmem:[%s3 + $0x90] sm:$0xf]
      %v446 = vld [vmem:[%s3 + $0x94] sm:$0xf]
      %v447 = vld [vmem:[%s3 + $0x98] sm:$0xf]
      %v448 = vld [vmem:[%s3 + $0x9c] sm:$0xf]
      %v449 = vld [vmem:[%s3 + $0xa0] sm:$0xf]
      %v450 = vld [vmem:[%s3 + $0xa4] sm:$0xf]
      %v451 = vld [vmem:[%s3 + $0xa8] sm:$0xf]
      %v452 = vld [vmem:[%s3 + $0xac] sm:$0xf]
      %v453 = vld [vmem:[%s3 + $0xb0] sm:$0xf]
      %v454 = vld [vmem:[%s3 + $0xb4] sm:$0xf]
      %v455 = vld [vmem:[%s3 + $0xb8] sm:$0xf]
      %v456 = vld [vmem:[%s3 + $0xbc] sm:$0xf]
      %v457 = vld [vmem:[%s3 + $0xc0] sm:$0xf]
      %v458 = vld [vmem:[%s3 + $0xc4] sm:$0xf]
      %v459 = vld [vmem:[%s3 + $0xc8] sm:$0xf]
      %v460 = vld [vmem:[%s3 + $0xcc] sm:$0xf]
      %v461 = vld [vmem:[%s3 + $0xd0] sm:$0xf]
      %v462 = vld [vmem:[%s3 + $0xd4] sm:$0xf]
      %v463 = vld [vmem:[%s3 + $0xd8] sm:$0xf]
      %v464 = vld [vmem:[%s3 + $0xdc] sm:$0xf]
      %v465 = vld [vmem:[%s3 + $0xe0] sm:$0xf]
      %v466 = vld [vmem:[%s3 + $0xe4] sm:$0xf]
      %v467 = vld [vmem:[%s3 + $0xe8] sm:$0xf]
      %v468 = vld [vmem:[%s3 + $0xec] sm:$0xf]
      %v469 = vld [vmem:[%s3 + $0xf0] sm:$0xf]
      %v470 = vld [vmem:[%s3 + $0xf4] sm:$0xf]
      %v471 = vld [vmem:[%s3 + $0xf8] sm:$0xf]
      %v472 = vld [vmem:[%s3 + $0xfc] sm:$0xf]
      %v473 = vld [vmem:[%s3 + $0x100] sm:$0xf]
      %v474 = vld [vmem:[%s3 + $0x104] sm:$0xf]
      %v475 = vld [vmem:[%s3 + $0x108] sm:$0xf]
      %v476 = vld [vmem:[%s3 + $0x10c] sm:$0xf]
      %v477 = vld [vmem:[%s3 + $0x110] sm:$0xf]
      %v478 = vld [vmem:[%s3 + $0x114] sm:$0xf]
      %v479 = vld [vmem:[%s3 + $0x118] sm:$0xf]
      %v480 = vld [vmem:[%s3 + $0x11c] sm:$0xf]
      %v481 = vld [vmem:[%s3 + $0x120] sm:$0xf]
      %v482 = vld [vmem:[%s3 + $0x124] sm:$0xf]
      %v483 = vld [vmem:[%s3 + $0x128] sm:$0xf]
      %v484 = vld [vmem:[%s3 + $0x12c] sm:$0xf]
      %v485 = vld [vmem:[%s3 + $0x130] sm:$0xf]
      %v486 = vld [vmem:[%s3 + $0x134] sm:$0xf]
      %v487 = vld [vmem:[%s3 + $0x138] sm:$0xf]
      %v488 = vld [vmem:[%s3 + $0x13c] sm:$0xf]
      %v489 = vld [vmem:[%s3 + $0x140] sm:$0xf]
      %v490 = vld [vmem:[%s3 + $0x144] sm:$0xf]
      %v491 = vld [vmem:[%s3 + $0x148] sm:$0xf]
      %v492 = vld [vmem:[%s3 + $0x14c] sm:$0xf]
      %v493 = vld [vmem:[%s3 + $0x150] sm:$0xf]
      %v494 = vld [vmem:[%s3 + $0x154] sm:$0xf]
      %v495 = vld [vmem:[%s3 + $0x158] sm:$0xf]
      %v496 = vld [vmem:[%s3 + $0x15c] sm:$0xf]
      %v497 = vld [vmem:[%s3 + $0x160] sm:$0xf]
      %v498 = vld [vmem:[%s3 + $0x164] sm:$0xf]
      %v499 = vld [vmem:[%s3 + $0x168] sm:$0xf]
      %v500 = vld [vmem:[%s3 + $0x16c] sm:$0xf]
      %v501 = vld [vmem:[%s3 + $0x170] sm:$0xf]
      %v502 = vld [vmem:[%s3 + $0x174] sm:$0xf]
      %v503 = vld [vmem:[%s3 + $0x178] sm:$0xf]
      %v504 = vld [vmem:[%s3 + $0x17c] sm:$0xf]
      %v505 = vld [vmem:[%s3 + $0x180] sm:$0xf]
      %v506 = vld [vmem:[%s3 + $0x184] sm:$0xf]
      %v507 = vld [vmem:[%s3 + $0x188] sm:$0xf]
      %v508 = vld [vmem:[%s3 + $0x18c] sm:$0xf]
      %v509 = vld [vmem:[%s3 + $0x190] sm:$0xf]
      %v510 = vld [vmem:[%s3 + $0x194] sm:$0xf]
      %v511 = vld [vmem:[%s3 + $0x198] sm:$0xf]
      %v512 = vld [vmem:[%s3 + $0x19c] sm:$0xf]
      %v513 = vld [vmem:[%s3 + $0x1a0] sm:$0xf]
      %v514 = vld [vmem:[%s3 + $0x1a4] sm:$0xf]
      %v515 = vld [vmem:[%s3 + $0x1a8] sm:$0xf]
      %v516 = vld [vmem:[%s3 + $0x1ac] sm:$0xf]
      %v645 = vunpack.c.l.b16 %v281
      %v646 = vunpack.c.h.b16 %v281
      %v647 = vunpack.c.l.b16 %v282
      %v648 = vunpack.c.h.b16 %v282
      %v649 = vunpack.c.l.b16 %v283
      %v650 = vunpack.c.h.b16 %v283
      %v651 = vunpack.c.l.b16 %v284
      %v652 = vunpack.c.l.b16 %v285
      %v653 = vunpack.c.h.b16 %v285
      %v654 = vunpack.c.l.b16 %v286
      %v655 = vunpack.c.h.b16 %v286
      %v656 = vunpack.c.l.b16 %v287
      %v657 = vunpack.c.h.b16 %v287
      %v658 = vunpack.c.l.b16 %v288
      %v659 = vunpack.c.l.b16 %v289
      %v660 = vunpack.c.h.b16 %v289
      %v661 = vunpack.c.l.b16 %v290
      %v662 = vunpack.c.h.b16 %v290
      %v663 = vunpack.c.l.b16 %v291
      %v664 = vunpack.c.h.b16 %v291
      %v665 = vunpack.c.l.b16 %v292
      %v666 = vunpack.c.l.b16 %v293
      %v667 = vunpack.c.h.b16 %v293
      %v668 = vunpack.c.l.b16 %v294
      %v669 = vunpack.c.h.b16 %v294
      %v670 = vunpack.c.l.b16 %v295
      %v671 = vunpack.c.h.b16 %v295
      %v672 = vunpack.c.l.b16 %v296
      %v673 = vunpack.c.l.b16 %v297
      %v674 = vunpack.c.h.b16 %v297
      %v675 = vunpack.c.l.b16 %v298
      %v676 = vunpack.c.h.b16 %v298
      %v677 = vunpack.c.l.b16 %v299
      %v678 = vunpack.c.h.b16 %v299
      %v679 = vunpack.c.l.b16 %v300
      %v680 = vunpack.c.l.b16 %v301
      %v681 = vunpack.c.h.b16 %v301
      %v682 = vunpack.c.l.b16 %v302
      %v683 = vunpack.c.h.b16 %v302
      %v684 = vunpack.c.l.b16 %v303
      %v685 = vunpack.c.h.b16 %v303
      %v686 = vunpack.c.l.b16 %v304
      %v687 = vunpack.c.l.b16 %v305
      %v688 = vunpack.c.h.b16 %v305
      %v689 = vunpack.c.l.b16 %v306
      %v690 = vunpack.c.h.b16 %v306
      %v691 = vunpack.c.l.b16 %v307
      %v692 = vunpack.c.h.b16 %v307
      %v693 = vunpack.c.l.b16 %v308
      %v694 = vunpack.c.l.b16 %v309
      %v695 = vunpack.c.h.b16 %v309
      %v696 = vunpack.c.l.b16 %v310
      %v697 = vunpack.c.h.b16 %v310
      %v698 = vunpack.c.l.b16 %v311
      %v699 = vunpack.c.h.b16 %v311
      %v700 = vunpack.c.l.b16 %v312
      %v701 = vunpack.c.l.b16 %v313
      %v702 = vunpack.c.h.b16 %v313
      %v703 = vunpack.c.l.b16 %v314
      %v704 = vunpack.c.h.b16 %v314
      %v705 = vunpack.c.l.b16 %v315
      %v706 = vunpack.c.h.b16 %v315
      %v707 = vunpack.c.l.b16 %v316
      %v708 = vunpack.c.l.b16 %v317
      %v709 = vunpack.c.h.b16 %v317
      %v710 = vunpack.c.l.b16 %v318
      %v711 = vunpack.c.h.b16 %v318
      %v712 = vunpack.c.l.b16 %v319
      %v713 = vunpack.c.h.b16 %v319
      %v714 = vunpack.c.l.b16 %v320
      %v715 = vunpack.c.l.b16 %v321
      %v716 = vunpack.c.h.b16 %v321
      %v717 = vunpack.c.l.b16 %v322
      %v718 = vunpack.c.h.b16 %v322
      %v719 = vunpack.c.l.b16 %v323
      %v720 = vunpack.c.h.b16 %v323
      %v721 = vunpack.c.l.b16 %v324
      %v722 = vunpack.c.l.b16 %v325
      %v723 = vunpack.c.h.b16 %v325
      %v724 = vunpack.c.l.b16 %v326
      %v725 = vunpack.c.h.b16 %v326
      %v726 = vunpack.c.l.b16 %v327
      %v727 = vunpack.c.h.b16 %v327
      %v728 = vunpack.c.l.b16 %v328
      %v729 = vunpack.c.l.b16 %v329
      %v730 = vunpack.c.h.b16 %v329
      %v731 = vunpack.c.l.b16 %v330
      %v732 = vunpack.c.h.b16 %v330
      %v733 = vunpack.c.l.b16 %v331
      %v734 = vunpack.c.h.b16 %v331
      %v735 = vunpack.c.l.b16 %v332
      %v736 = vunpack.c.l.b16 %v333
      %v737 = vunpack.c.h.b16 %v333
      %v738 = vunpack.c.l.b16 %v334
      %v739 = vunpack.c.h.b16 %v334
      %v740 = vunpack.c.l.b16 %v335
      %v741 = vunpack.c.h.b16 %v335
      %v742 = vunpack.c.l.b16 %v336
      %v743 = vunpack.c.l.b16 %v337
      %v744 = vunpack.c.h.b16 %v337
      %v745 = vunpack.c.l.b16 %v338
      %v746 = vunpack.c.h.b16 %v338
      %v747 = vunpack.c.l.b16 %v339
      %v748 = vunpack.c.h.b16 %v339
      %v749 = vunpack.c.l.b16 %v340
      %v750 = vunpack.c.l.b16 %v341
      %v751 = vunpack.c.h.b16 %v341
      %v752 = vunpack.c.l.b16 %v342
      %v753 = vunpack.c.h.b16 %v342
      %v754 = vunpack.c.l.b16 %v343
      %v755 = vunpack.c.h.b16 %v343
      %v756 = vunpack.c.l.b16 %v344
      %v757 = vunpack.c.l.b16 %v345
      %v758 = vunpack.c.h.b16 %v345
      %v759 = vunpack.c.l.b16 %v346
      %v760 = vunpack.c.h.b16 %v346
      %v761 = vunpack.c.l.b16 %v347
      %v762 = vunpack.c.h.b16 %v347
      %v763 = vunpack.c.l.b16 %v348
      %v764 = vunpack.c.l.b16 %v349
      %v765 = vunpack.c.h.b16 %v349
      %v766 = vunpack.c.l.b16 %v350
      %v767 = vunpack.c.h.b16 %v350
      %v768 = vunpack.c.l.b16 %v351
      %v769 = vunpack.c.h.b16 %v351
      %v770 = vunpack.c.l.b16 %v352
      %v771 = vunpack.c.l.b16 %v353
      %v772 = vunpack.c.h.b16 %v353
      %v773 = vunpack.c.l.b16 %v354
      %v774 = vunpack.c.h.b16 %v354
      %v775 = vunpack.c.l.b16 %v355
      %v776 = vunpack.c.h.b16 %v355
      %v777 = vunpack.c.l.b16 %v356
      %v778 = vunpack.c.l.b16 %v357
      %v779 = vunpack.c.h.b16 %v357
      %v780 = vunpack.c.l.b16 %v358
      %v781 = vunpack.c.h.b16 %v358
      %v782 = vunpack.c.l.b16 %v359
      %v783 = vunpack.c.h.b16 %v359
      %v784 = vunpack.c.l.b16 %v360
      %v785 = vunpack.c.l.b16 %v361
      %v786 = vunpack.c.h.b16 %v361
      %v787 = vunpack.c.l.b16 %v362
      %v788 = vunpack.c.h.b16 %v362
      %v789 = vunpack.c.l.b16 %v363
      %v790 = vunpack.c.h.b16 %v363
      %v791 = vunpack.c.l.b16 %v364
      %v792 = vunpack.c.l.b16 %v365
      %v793 = vunpack.c.h.b16 %v365
      %v794 = vunpack.c.l.b16 %v366
      %v795 = vunpack.c.h.b16 %v366
      %v796 = vunpack.c.l.b16 %v367
      %v797 = vunpack.c.h.b16 %v367
      %v798 = vunpack.c.l.b16 %v368
      %v799 = vunpack.c.l.b16 %v369
      %v800 = vunpack.c.h.b16 %v369
      %v801 = vunpack.c.l.b16 %v370
      %v802 = vunpack.c.h.b16 %v370
      %v803 = vunpack.c.l.b16 %v371
      %v804 = vunpack.c.h.b16 %v371
      %v805 = vunpack.c.l.b16 %v372
      %v806 = vunpack.c.l.b16 %v373
      %v807 = vunpack.c.h.b16 %v373
      %v808 = vunpack.c.l.b16 %v374
      %v809 = vunpack.c.h.b16 %v374
      %v810 = vunpack.c.l.b16 %v375
      %v811 = vunpack.c.h.b16 %v375
      %v812 = vunpack.c.l.b16 %v376
      %v813 = vunpack.c.l.b16 %v377
      %v814 = vunpack.c.h.b16 %v377
      %v815 = vunpack.c.l.b16 %v378
      %v816 = vunpack.c.h.b16 %v378
      %v817 = vunpack.c.l.b16 %v379
      %v818 = vunpack.c.h.b16 %v379
      %v819 = vunpack.c.l.b16 %v380
      %v820 = vunpack.c.l.b16 %v381
      %v821 = vunpack.c.h.b16 %v381
      %v822 = vunpack.c.l.b16 %v382
      %v823 = vunpack.c.h.b16 %v382
      %v824 = vunpack.c.l.b16 %v383
      %v825 = vunpack.c.h.b16 %v383
      %v826 = vunpack.c.l.b16 %v384
      %v827 = vunpack.c.l.b16 %v385
      %v828 = vunpack.c.h.b16 %v385
      %v829 = vunpack.c.l.b16 %v386
      %v830 = vunpack.c.h.b16 %v386
      %v831 = vunpack.c.l.b16 %v387
      %v832 = vunpack.c.h.b16 %v387
      %v833 = vunpack.c.l.b16 %v388
      %v834 = vunpack.c.l.b16 %v389
      %v835 = vunpack.c.h.b16 %v389
      %v836 = vunpack.c.l.b16 %v390
      %v837 = vunpack.c.h.b16 %v390
      %v838 = vunpack.c.l.b16 %v391
      %v839 = vunpack.c.h.b16 %v391
      %v840 = vunpack.c.l.b16 %v392
      %v841 = vunpack.c.l.b16 %v393
      %v842 = vunpack.c.h.b16 %v393
      %v843 = vunpack.c.l.b16 %v394
      %v844 = vunpack.c.h.b16 %v394
      %v845 = vunpack.c.l.b16 %v395
      %v846 = vunpack.c.h.b16 %v395
      %v847 = vunpack.c.l.b16 %v396
      %v848 = vunpack.c.l.b16 %v397
      %v849 = vunpack.c.h.b16 %v397
      %v850 = vunpack.c.l.b16 %v398
      %v851 = vunpack.c.h.b16 %v398
      %v852 = vunpack.c.l.b16 %v399
      %v853 = vunpack.c.h.b16 %v399
      %v854 = vunpack.c.l.b16 %v400
      %v855 = vunpack.c.l.b16 %v401
      %v856 = vunpack.c.h.b16 %v401
      %v857 = vunpack.c.l.b16 %v402
      %v858 = vunpack.c.h.b16 %v402
      %v859 = vunpack.c.l.b16 %v403
      %v860 = vunpack.c.h.b16 %v403
      %v861 = vunpack.c.l.b16 %v404
      %v862 = vunpack.c.l.b16 %v405
      %v863 = vunpack.c.h.b16 %v405
      %v864 = vunpack.c.l.b16 %v406
      %v865 = vunpack.c.h.b16 %v406
      %v866 = vunpack.c.l.b16 %v407
      %v867 = vunpack.c.h.b16 %v407
      %v868 = vunpack.c.l.b16 %v408
      %v869 = vpack.c.b16 %v652, %v645
      %v870 = vpack.c.b16 %v653, %v646
      %v871 = vpack.c.b16 %v654, %v647
      %v872 = vpack.c.b16 %v655, %v648
      %v873 = vpack.c.b16 %v656, %v649
      %v874 = vpack.c.b16 %v657, %v650
      %v875 = vpack.c.b16 %v658, %v651
      %v876 = vpack.c.b16 %v666, %v659
      %v877 = vpack.c.b16 %v667, %v660
      %v878 = vpack.c.b16 %v668, %v661
      %v879 = vpack.c.b16 %v669, %v662
      %v880 = vpack.c.b16 %v670, %v663
      %v881 = vpack.c.b16 %v671, %v664
      %v882 = vpack.c.b16 %v672, %v665
      %v883 = vpack.c.b16 %v680, %v673
      %v884 = vpack.c.b16 %v681, %v674
      %v885 = vpack.c.b16 %v682, %v675
      %v886 = vpack.c.b16 %v683, %v676
      %v887 = vpack.c.b16 %v684, %v677
      %v888 = vpack.c.b16 %v685, %v678
      %v889 = vpack.c.b16 %v686, %v679
      %v890 = vpack.c.b16 %v694, %v687
      %v891 = vpack.c.b16 %v695, %v688
      %v892 = vpack.c.b16 %v696, %v689
      %v893 = vpack.c.b16 %v697, %v690
      %v894 = vpack.c.b16 %v698, %v691
      %v895 = vpack.c.b16 %v699, %v692
      %v896 = vpack.c.b16 %v700, %v693
      %v897 = vpack.c.b16 %v708, %v701
      %v898 = vpack.c.b16 %v709, %v702
      %v899 = vpack.c.b16 %v710, %v703
      %v900 = vpack.c.b16 %v711, %v704
      %v901 = vpack.c.b16 %v712, %v705
      %v902 = vpack.c.b16 %v713, %v706
      %v903 = vpack.c.b16 %v714, %v707
      %v904 = vpack.c.b16 %v722, %v715
      %v905 = vpack.c.b16 %v723, %v716
      %v906 = vpack.c.b16 %v724, %v717
      %v907 = vpack.c.b16 %v725, %v718
      %v908 = vpack.c.b16 %v726, %v719
      %v909 = vpack.c.b16 %v727, %v720
      %v910 = vpack.c.b16 %v728, %v721
      %v911 = vpack.c.b16 %v736, %v729
      %v912 = vpack.c.b16 %v737, %v730
      %v913 = vpack.c.b16 %v738, %v731
      %v914 = vpack.c.b16 %v739, %v732
      %v915 = vpack.c.b16 %v740, %v733
      %v916 = vpack.c.b16 %v741, %v734
      %v917 = vpack.c.b16 %v742, %v735
      %v918 = vpack.c.b16 %v750, %v743
      %v919 = vpack.c.b16 %v751, %v744
      %v920 = vpack.c.b16 %v752, %v745
      %v921 = vpack.c.b16 %v753, %v746
      %v922 = vpack.c.b16 %v754, %v747
      %v923 = vpack.c.b16 %v755, %v748
      %v924 = vpack.c.b16 %v756, %v749
      %v925 = vpack.c.b16 %v764, %v757
      %v926 = vpack.c.b16 %v765, %v758
      %v927 = vpack.c.b16 %v766, %v759
      %v928 = vpack.c.b16 %v767, %v760
      %v929 = vpack.c.b16 %v768, %v761
      %v930 = vpack.c.b16 %v769, %v762
      %v931 = vpack.c.b16 %v770, %v763
      %v932 = vpack.c.b16 %v778, %v771
      %v933 = vpack.c.b16 %v779, %v772
      %v934 = vpack.c.b16 %v780, %v773
      %v935 = vpack.c.b16 %v781, %v774
      %v936 = vpack.c.b16 %v782, %v775
      %v937 = vpack.c.b16 %v783, %v776
      %v938 = vpack.c.b16 %v784, %v777
      %v939 = vpack.c.b16 %v792, %v785
      %v940 = vpack.c.b16 %v793, %v786
      %v941 = vpack.c.b16 %v794, %v787
      %v942 = vpack.c.b16 %v795, %v788
      %v943 = vpack.c.b16 %v796, %v789
      %v944 = vpack.c.b16 %v797, %v790
      %v945 = vpack.c.b16 %v798, %v791
      %v946 = vpack.c.b16 %v806, %v799
      %v947 = vpack.c.b16 %v807, %v800
      %v948 = vpack.c.b16 %v808, %v801
      %v949 = vpack.c.b16 %v809, %v802
      %v950 = vpack.c.b16 %v810, %v803
      %v951 = vpack.c.b16 %v811, %v804
      %v952 = vpack.c.b16 %v812, %v805
      %v953 = vpack.c.b16 %v820, %v813
      %v954 = vpack.c.b16 %v821, %v814
      %v955 = vpack.c.b16 %v822, %v815
      %v956 = vpack.c.b16 %v823, %v816
      %v957 = vpack.c.b16 %v824, %v817
      %v958 = vpack.c.b16 %v825, %v818
      %v959 = vpack.c.b16 %v826, %v819
      %v960 = vpack.c.b16 %v834, %v827
      %v961 = vpack.c.b16 %v835, %v828
      %v962 = vpack.c.b16 %v836, %v829
      %v963 = vpack.c.b16 %v837, %v830
      %v964 = vpack.c.b16 %v838, %v831
      %v965 = vpack.c.b16 %v839, %v832
      %v966 = vpack.c.b16 %v840, %v833
      %v967 = vpack.c.b16 %v848, %v841
      %v968 = vpack.c.b16 %v849, %v842
      %v969 = vpack.c.b16 %v850, %v843
      %v970 = vpack.c.b16 %v851, %v844
      %v971 = vpack.c.b16 %v852, %v845
      %v972 = vpack.c.b16 %v853, %v846
      %v973 = vpack.c.b16 %v854, %v847
      %v974 = vpack.c.b16 %v862, %v855
      %v975 = vpack.c.b16 %v863, %v856
      %v976 = vpack.c.b16 %v864, %v857
      %v977 = vpack.c.b16 %v865, %v858
      %v978 = vpack.c.b16 %v866, %v859
      %v979 = vpack.c.b16 %v867, %v860
      %v980 = vpack.c.b16 %v868, %v861
      %v1185 = vunpack.c.l.b16 %v409
      %v1186 = vunpack.c.l.b16 %v410
      %v1187 = vunpack.c.l.b16 %v411
      %v1188 = vunpack.c.l.b16 %v412
      %v1189 = vunpack.c.l.b16 %v413
      %v1190 = vunpack.c.l.b16 %v414
      %v1191 = vunpack.c.l.b16 %v415
      %v1192 = vunpack.c.l.b16 %v416
      %v1193 = vunpack.c.l.b16 %v417
      %v1194 = vunpack.c.l.b16 %v418
      %v1195 = vunpack.c.l.b16 %v419
      %v1196 = vunpack.c.l.b16 %v420
      %v1197 = vunpack.c.l.b16 %v421
      %v1198 = vunpack.c.l.b16 %v422
      %v1199 = vunpack.c.l.b16 %v423
      %v1200 = vunpack.c.l.b16 %v424
      %v1201 = vunpack.c.l.b16 %v425
      %v1202 = vunpack.c.l.b16 %v426
      %v1203 = vunpack.c.l.b16 %v427
      %v1204 = vunpack.c.l.b16 %v428
      %v1205 = vunpack.c.l.b16 %v429
      %v1206 = vunpack.c.l.b16 %v430
      %v1207 = vunpack.c.l.b16 %v431
      %v1208 = vunpack.c.l.b16 %v432
      %v1209 = vunpack.c.l.b16 %v433
      %v1210 = vunpack.c.l.b16 %v434
      %v1211 = vunpack.c.l.b16 %v435
      %v1212 = vunpack.c.l.b16 %v436
      %v1213 = vunpack.c.l.b16 %v437
      %v1214 = vunpack.c.l.b16 %v438
      %v1215 = vunpack.c.l.b16 %v439
      %v1216 = vunpack.c.l.b16 %v440
      %v1217 = vunpack.c.l.b16 %v441
      %v1218 = vunpack.c.l.b16 %v442
      %v1219 = vunpack.c.l.b16 %v443
      %v1220 = vunpack.c.l.b16 %v444
      %v1221 = vunpack.c.l.b16 %v445
      %v1222 = vunpack.c.l.b16 %v446
      %v1223 = vunpack.c.l.b16 %v447
      %v1224 = vunpack.c.l.b16 %v448
      %v1225 = vunpack.c.l.b16 %v449
      %v1226 = vunpack.c.l.b16 %v450
      %v1227 = vunpack.c.l.b16 %v451
      %v1228 = vunpack.c.l.b16 %v452
      %v1229 = vunpack.c.l.b16 %v453
      %v1230 = vunpack.c.l.b16 %v454
      %v1231 = vunpack.c.l.b16 %v455
      %v1232 = vunpack.c.l.b16 %v456
      %v1233 = vunpack.c.l.b16 %v457
      %v1234 = vunpack.c.l.b16 %v458
      %v1235 = vunpack.c.l.b16 %v459
      %v1236 = vunpack.c.l.b16 %v460
      %v1237 = vunpack.c.l.b16 %v461
      %v1238 = vunpack.c.l.b16 %v462
      %v1239 = vunpack.c.l.b16 %v463
      %v1240 = vunpack.c.l.b16 %v464
      %v1241 = vunpack.c.l.b16 %v465
      %v1242 = vunpack.c.l.b16 %v466
      %v1243 = vunpack.c.l.b16 %v467
      %v1244 = vunpack.c.l.b16 %v468
      %v1245 = vunpack.c.l.b16 %v469
      %v1246 = vunpack.c.l.b16 %v470
      %v1247 = vunpack.c.l.b16 %v471
      %v1248 = vunpack.c.l.b16 %v472
      %v1249 = vunpack.c.l.b16 %v473
      %v1250 = vunpack.c.l.b16 %v474
      %v1251 = vunpack.c.l.b16 %v475
      %v1252 = vunpack.c.l.b16 %v476
      %v1253 = vunpack.c.l.b16 %v477
      %v1254 = vunpack.c.l.b16 %v478
      %v1255 = vunpack.c.l.b16 %v479
      %v1256 = vunpack.c.l.b16 %v480
      %v1257 = vunpack.c.l.b16 %v481
      %v1258 = vunpack.c.l.b16 %v482
      %v1259 = vunpack.c.l.b16 %v483
      %v1260 = vunpack.c.l.b16 %v484
      %v1261 = vunpack.c.l.b16 %v485
      %v1262 = vunpack.c.l.b16 %v486
      %v1263 = vunpack.c.l.b16 %v487
      %v1264 = vunpack.c.l.b16 %v488
      %v1265 = vunpack.c.l.b16 %v489
      %v1266 = vunpack.c.l.b16 %v490
      %v1267 = vunpack.c.l.b16 %v491
      %v1268 = vunpack.c.l.b16 %v492
      %v1269 = vunpack.c.l.b16 %v493
      %v1270 = vunpack.c.l.b16 %v494
      %v1271 = vunpack.c.l.b16 %v495
      %v1272 = vunpack.c.l.b16 %v496
      %v1273 = vunpack.c.l.b16 %v497
      %v1274 = vunpack.c.l.b16 %v498
      %v1275 = vunpack.c.l.b16 %v499
      %v1276 = vunpack.c.l.b16 %v500
      %v1277 = vunpack.c.l.b16 %v501
      %v1278 = vunpack.c.l.b16 %v502
      %v1279 = vunpack.c.l.b16 %v503
      %v1280 = vunpack.c.l.b16 %v504
      %v1281 = vunpack.c.l.b16 %v505
      %v1282 = vunpack.c.l.b16 %v506
      %v1283 = vunpack.c.l.b16 %v507
      %v1284 = vunpack.c.l.b16 %v508
      %v1285 = vunpack.c.l.b16 %v509
      %v1286 = vunpack.c.l.b16 %v510
      %v1287 = vunpack.c.l.b16 %v511
      %v1288 = vunpack.c.l.b16 %v512
      %v1289 = vunpack.c.l.b16 %v513
      %v1290 = vunpack.c.l.b16 %v514
      %v1291 = vunpack.c.l.b16 %v515
      %v1292 = vunpack.c.l.b16 %v516
      %v1293 = vpack.c.b16 %v1186, %v1185
      %v1294 = vpack.c.b16 %v1188, %v1187
      %v1295 = vpack.c.b16 %v1190, %v1189
      %v1296 = vpack.c.b16 %v1192, %v1191
      %v1297 = vpack.c.b16 %v1194, %v1193
      %v1298 = vpack.c.b16 %v1196, %v1195
      %v1299 = vpack.c.b16 %v1198, %v1197
      %v1300 = vpack.c.b16 %v1200, %v1199
      %v1301 = vpack.c.b16 %v1202, %v1201
      %v1302 = vpack.c.b16 %v1204, %v1203
      %v1303 = vpack.c.b16 %v1206, %v1205
      %v1304 = vpack.c.b16 %v1208, %v1207
      %v1305 = vpack.c.b16 %v1210, %v1209
      %v1306 = vpack.c.b16 %v1212, %v1211
      %v1307 = vpack.c.b16 %v1214, %v1213
      %v1308 = vpack.c.b16 %v1216, %v1215
      %v1309 = vpack.c.b16 %v1218, %v1217
      %v1310 = vpack.c.b16 %v1220, %v1219
      %v1311 = vpack.c.b16 %v1222, %v1221
      %v1312 = vpack.c.b16 %v1224, %v1223
      %v1313 = vpack.c.b16 %v1226, %v1225
      %v1314 = vpack.c.b16 %v1228, %v1227
      %v1315 = vpack.c.b16 %v1230, %v1229
      %v1316 = vpack.c.b16 %v1232, %v1231
      %v1317 = vpack.c.b16 %v1234, %v1233
      %v1318 = vpack.c.b16 %v1236, %v1235
      %v1319 = vpack.c.b16 %v1238, %v1237
      %v1320 = vpack.c.b16 %v1240, %v1239
      %v1321 = vpack.c.b16 %v1242, %v1241
      %v1322 = vpack.c.b16 %v1244, %v1243
      %v1323 = vpack.c.b16 %v1246, %v1245
      %v1324 = vpack.c.b16 %v1248, %v1247
      %v1325 = vpack.c.b16 %v1250, %v1249
      %v1326 = vpack.c.b16 %v1252, %v1251
      %v1327 = vpack.c.b16 %v1254, %v1253
      %v1328 = vpack.c.b16 %v1256, %v1255
      %v1329 = vpack.c.b16 %v1258, %v1257
      %v1330 = vpack.c.b16 %v1260, %v1259
      %v1331 = vpack.c.b16 %v1262, %v1261
      %v1332 = vpack.c.b16 %v1264, %v1263
      %v1333 = vpack.c.b16 %v1266, %v1265
      %v1334 = vpack.c.b16 %v1268, %v1267
      %v1335 = vpack.c.b16 %v1270, %v1269
      %v1336 = vpack.c.b16 %v1272, %v1271
      %v1337 = vpack.c.b16 %v1274, %v1273
      %v1338 = vpack.c.b16 %v1276, %v1275
      %v1339 = vpack.c.b16 %v1278, %v1277
      %v1340 = vpack.c.b16 %v1280, %v1279
      %v1341 = vpack.c.b16 %v1282, %v1281
      %v1342 = vpack.c.b16 %v1284, %v1283
      %v1343 = vpack.c.b16 %v1286, %v1285
      %v1344 = vpack.c.b16 %v1288, %v1287
      %v1345 = vpack.c.b16 %v1290, %v1289
      %v1346 = vpack.c.b16 %v1292, %v1291
      %vm1401 = vcmask 785408
      %v1403 = vsel %vm1401, %v875, 0
      %v1406 = vsel %vm1401, %v882, 0
      %v1409 = vsel %vm1401, %v889, 0
      %v1412 = vsel %vm1401, %v896, 0
      %v1415 = vsel %vm1401, %v903, 0
      %v1418 = vsel %vm1401, %v910, 0
      %v1421 = vsel %vm1401, %v917, 0
      %v1424 = vsel %vm1401, %v924, 0
      %v1427 = vsel %vm1401, %v931, 0
      %v1430 = vsel %vm1401, %v938, 0
      %v1433 = vsel %vm1401, %v945, 0
      %v1436 = vsel %vm1401, %v952, 0
      %v1439 = vsel %vm1401, %v959, 0
      %v1442 = vsel %vm1401, %v966, 0
      %v1445 = vsel %vm1401, %v973, 0
      %v1448 = vsel %vm1401, %v980, 0
      %1450 = vmatprep.subr.bf16.mxu0 0
      %1451 = vmatpush1.bf16.msra.mxu0 %v1293
      %1452 = vmatprep.subr.bf16.mxu0 0
      %1453 = vmatpush1.bf16.msra.mxu0 %v1294
      %1454 = vmatprep.subr.bf16.mxu0 0
      %1455 = vmatpush1.bf16.msra.mxu0 %v1295
      %1456 = vmatprep.subr.bf16.mxu0 0
      %1457 = vmatpush1.bf16.msra.mxu0 %v1296
      %1458 = vmatprep.subr.bf16.mxu0 0
      %1459 = vmatpush1.bf16.msra.mxu0 %v1297
      %1460 = vmatprep.subr.bf16.mxu0 0
      %1461 = vmatpush1.bf16.msra.mxu0 %v1298
      %1462 = vmatprep.subr.bf16.mxu0 0
      %1463 = vmatpush1.bf16.msra.mxu0 %v1299
      %1464 = vmatprep.subr.bf16.mxu0 0
      %1465 = vmatpush1.bf16.msra.mxu0 %v1300
      %1466 = vmatprep.subr.bf16.mxu0 0
      %1467 = vmatpush1.bf16.msra.mxu0 %v1301
      %1468 = vmatprep.subr.bf16.mxu0 0
      %1469 = vmatpush1.bf16.msra.mxu0 %v1302
      %1470 = vmatprep.subr.bf16.mxu0 0
      %1471 = vmatpush1.bf16.msra.mxu0 %v1303
      %1472 = vmatprep.subr.bf16.mxu0 0
      %1473 = vmatpush1.bf16.msra.mxu0 %v1304
      %1474 = vmatprep.subr.bf16.mxu0 0
      %1475 = vmatpush1.bf16.msra.mxu0 %v1305
      %1476 = vmatprep.subr.bf16.mxu0 0
      %1477 = vmatpush1.bf16.msra.mxu0 %v1306
      %1478 = vmatprep.subr.bf16.mxu0 0
      %1479 = vmatpush1.bf16.msra.mxu0 %v1307
      %1480 = vmatprep.subr.bf16.mxu0 0
      %1481 = vmatpush1.bf16.msra.mxu0 %v1308
      %1482 = vmatprep.mubr.bf16.mxu0 %v870
      %1483 = vmatmul.mubr.bf16.gmra.mrb[0].mxu0 %v869
      %v1484 = vpop.f32.mrb[0].mxu0
      %v1485 = vadd.f32 0.0, %v1484
      %v1486 = vpop.f32.mrb[0].mxu0
      %v1487 = vpop.f32.mrb[0].mxu0
      %v1488 = vadd.f32 0.0, %v1487
      %v1489 = vpop.f32.mrb[0].mxu0
      %1490 = vmatprep.mubr.bf16.mxu0 %v877
      %1491 = vmatmul.mubr.bf16.gmra.mrb[0].mxu0 %v876
      %v1492 = vpop.f32.mrb[0].mxu0
      %v1493 = vadd.f32 0.0, %v1492
      %v1494 = vpop.f32.mrb[0].mxu0
      %v1495 = vpop.f32.mrb[0].mxu0
      %v1496 = vadd.f32 0.0, %v1495
      %v1497 = vpop.f32.mrb[0].mxu0
      %1498 = vmatprep.mubr.bf16.mxu0 %v884
      %1499 = vmatmul.mubr.bf16.gmra.mrb[0].mxu0 %v883
      %v1500 = vpop.f32.mrb[0].mxu0
      %v1501 = vadd.f32 0.0, %v1500
      %v1502 = vpop.f32.mrb[0].mxu0
      %v1503 = vpop.f32.mrb[0].mxu0
      %v1504 = vadd.f32 0.0, %v1503
      %v1505 = vpop.f32.mrb[0].mxu0
      %1506 = vmatprep.mubr.bf16.mxu0 %v891
      %1507 = vmatmul.mubr.bf16.gmra.mrb[0].mxu0 %v890
      %v1508 = vpop.f32.mrb[0].mxu0
      %v1509 = vadd.f32 0.0, %v1508
      %v1510 = vpop.f32.mrb[0].mxu0
      %v1511 = vpop.f32.mrb[0].mxu0
      %v1512 = vadd.f32 0.0, %v1511
      %v1513 = vpop.f32.mrb[0].mxu0
      %1514 = vmatprep.mubr.bf16.mxu0 %v898
      %1515 = vmatmul.mubr.bf16.gmra.mrb[0].mxu0 %v897
      %v1516 = vpop.f32.mrb[0].mxu0
      %v1517 = vadd.f32 0.0, %v1516
      %v1518 = vpop.f32.mrb[0].mxu0
      %v1519 = vpop.f32.mrb[0].mxu0
      %v1520 = vadd.f32 0.0, %v1519
      %v1521 = vpop.f32.mrb[0].mxu0
      %1522 = vmatprep.mubr.bf16.mxu0 %v905
      %1523 = vmatmul.mubr.bf16.gmra.mrb[0].mxu0 %v904
      %v1524 = vpop.f32.mrb[0].mxu0
      %v1525 = vadd.f32 0.0, %v1524
      %v1526 = vpop.f32.mrb[0].mxu0
      %v1527 = vpop.f32.mrb[0].mxu0
      %v1528 = vadd.f32 0.0, %v1527
      %v1529 = vpop.f32.mrb[0].mxu0
      %1530 = vmatprep.mubr.bf16.mxu0 %v912
      %1531 = vmatmul.mubr.bf16.gmra.mrb[0].mxu0 %v911
      %v1532 = vpop.f32.mrb[0].mxu0
      %v1533 = vadd.f32 0.0, %v1532
      %v1534 = vpop.f32.mrb[0].mxu0
      %v1535 = vpop.f32.mrb[0].mxu0
      %v1536 = vadd.f32 0.0, %v1535
      %v1537 = vpop.f32.mrb[0].mxu0
      %1538 = vmatprep.mubr.bf16.mxu0 %v919
      %1539 = vmatmul.mubr.bf16.gmra.mrb[0].mxu0 %v918
      %v1540 = vpop.f32.mrb[0].mxu0
      %v1541 = vadd.f32 0.0, %v1540
      %v1542 = vpop.f32.mrb[0].mxu0
      %v1543 = vpop.f32.mrb[0].mxu0
      %v1544 = vadd.f32 0.0, %v1543
      %v1545 = vpop.f32.mrb[0].mxu0
      %1546 = vmatprep.mubr.bf16.mxu0 %v926
      %1547 = vmatmul.mubr.bf16.gmra.mrb[0].mxu0 %v925
      %v1548 = vpop.f32.mrb[0].mxu0
      %v1549 = vadd.f32 0.0, %v1548
      %v1550 = vpop.f32.mrb[0].mxu0
      %v1551 = vpop.f32.mrb[0].mxu0
      %v1552 = vadd.f32 0.0, %v1551
      %v1553 = vpop.f32.mrb[0].mxu0
      %1554 = vmatprep.mubr.bf16.mxu0 %v933
      %1555 = vmatmul.mubr.bf16.gmra.mrb[0].mxu0 %v932
      %v1556 = vpop.f32.mrb[0].mxu0
      %v1557 = vadd.f32 0.0, %v1556
      %v1558 = vpop.f32.mrb[0].mxu0
      %v1559 = vpop.f32.mrb[0].mxu0
      %v1560 = vadd.f32 0.0, %v1559
      %v1561 = vpop.f32.mrb[0].mxu0
      %1562 = vmatprep.mubr.bf16.mxu0 %v940
      %1563 = vmatmul.mubr.bf16.gmra.mrb[0].mxu0 %v939
      %v1564 = vpop.f32.mrb[0].mxu0
      %v1565 = vadd.f32 0.0, %v1564
      %v1566 = vpop.f32.mrb[0].mxu0
      %v1567 = vpop.f32.mrb[0].mxu0
      %v1568 = vadd.f32 0.0, %v1567
      %v1569 = vpop.f32.mrb[0].mxu0
      %1570 = vmatprep.mubr.bf16.mxu0 %v947
      %1571 = vmatmul.mubr.bf16.gmra.mrb[0].mxu0 %v946
      %v1572 = vpop.f32.mrb[0].mxu0
      %v1573 = vadd.f32 0.0, %v1572
      %v1574 = vpop.f32.mrb[0].mxu0
      %v1575 = vpop.f32.mrb[0].mxu0
      %v1576 = vadd.f32 0.0, %v1575
      %v1577 = vpop.f32.mrb[0].mxu0
      %1578 = vmatprep.mubr.bf16.mxu0 %v954
      %1579 = vmatmul.mubr.bf16.gmra.mrb[0].mxu0 %v953
      %v1580 = vpop.f32.mrb[0].mxu0
      %v1581 = vadd.f32 0.0, %v1580
      %v1582 = vpop.f32.mrb[0].mxu0
      %v1583 = vpop.f32.mrb[0].mxu0
      %v1584 = vadd.f32 0.0, %v1583
      %v1585 = vpop.f32.mrb[0].mxu0
      %1586 = vmatprep.mubr.bf16.mxu0 %v961
      %1587 = vmatmul.mubr.bf16.gmra.mrb[0].mxu0 %v960
      %v1588 = vpop.f32.mrb[0].mxu0
      %v1589 = vadd.f32 0.0, %v1588
      %v1590 = vpop.f32.mrb[0].mxu0
      %v1591 = vpop.f32.mrb[0].mxu0
      %v1592 = vadd.f32 0.0, %v1591
      %v1593 = vpop.f32.mrb[0].mxu0
      %1594 = vmatprep.mubr.bf16.mxu0 %v968
      %1595 = vmatmul.mubr.bf16.gmra.mrb[0].mxu0 %v967
      %v1596 = vpop.f32.mrb[0].mxu0
      %v1597 = vadd.f32 0.0, %v1596
      %v1598 = vpop.f32.mrb[0].mxu0
      %v1599 = vpop.f32.mrb[0].mxu0
      %v1600 = vadd.f32 0.0, %v1599
      %v1601 = vpop.f32.mrb[0].mxu0
      %1602 = vmatprep.mubr.bf16.mxu0 %v975
      %1603 = vmatmul.mubr.bf16.gmra.mrb[0].mxu0 %v974
      %v1604 = vpop.f32.mrb[0].mxu0
      %v1605 = vadd.f32 0.0, %v1604
      %v1606 = vpop.f32.mrb[0].mxu0
      %v1607 = vpop.f32.mrb[0].mxu0
      %v1608 = vadd.f32 0.0, %v1607
      %v1609 = vpop.f32.mrb[0].mxu0
      %1610 = vdwg.mxu0
      %1611 = vmatprep.subr.bf16.mxu0 0
      %1612 = vmatpush1.bf16.msra.mxu0 %v1309
      %1613 = vmatprep.subr.bf16.mxu0 0
      %1614 = vmatpush1.bf16.msra.mxu0 %v1310
      %1615 = vmatprep.subr.bf16.mxu0 0
      %1616 = vmatpush1.bf16.msra.mxu0 %v1311
      %1617 = vmatprep.subr.bf16.mxu0 0
      %1618 = vmatpush1.bf16.msra.mxu0 %v1312
      %1619 = vmatprep.subr.bf16.mxu0 0
      %1620 = vmatpush1.bf16.msra.mxu0 %v1313
      %1621 = vmatprep.subr.bf16.mxu0 0
      %1622 = vmatpush1.bf16.msra.mxu0 %v1314
      %1623 = vmatprep.subr.bf16.mxu0 0
      %1624 = vmatpush1.bf16.msra.mxu0 %v1315
      %1625 = vmatprep.subr.bf16.mxu0 0
      %1626 = vmatpush1.bf16.msra.mxu0 %v1316
      %1627 = vmatprep.subr.bf16.mxu0 0
      %1628 = vmatpush1.bf16.msra.mxu0 %v1317
      %1629 = vmatprep.subr.bf16.mxu0 0
      %1630 = vmatpush1.bf16.msra.mxu0 %v1318
      %1631 = vmatprep.subr.bf16.mxu0 0
      %1632 = vmatpush1.bf16.msra.mxu0 %v1319
      %1633 = vmatprep.subr.bf16.mxu0 0
      %1634 = vmatpush1.bf16.msra.mxu0 %v1320
      %1635 = vmatprep.subr.bf16.mxu0 0
      %1636 = vmatpush1.bf16.msra.mxu0 %v1321
      %1637 = vmatprep.subr.bf16.mxu0 0
      %1638 = vmatpush1.bf16.msra.mxu0 %v1322
      %1639 = vmatprep.subr.bf16.mxu0 0
      %1640 = vmatpush1.bf16.msra.mxu0 %v1323
      %1641 = vmatprep.subr.bf16.mxu0 0
      %1642 = vmatpush1.bf16.msra.mxu0 %v1324
      %1643 = vmatprep.mubr.bf16.mxu0 %v872
      %1644 = vmatmul.mubr.bf16.gmra.mrb[0].mxu0 %v871
      %v1645 = vpop.f32.mrb[0].mxu0
      %v1646 = vadd.f32 %v1485, %v1645
      %v1647 = vpop.f32.mrb[0].mxu0
      %v1648 = vpop.f32.mrb[0].mxu0
      %v1649 = vadd.f32 %v1488, %v1648
      %v1650 = vpop.f32.mrb[0].mxu0
      %1651 = vmatprep.mubr.bf16.mxu0 %v879
      %1652 = vmatmul.mubr.bf16.gmra.mrb[0].mxu0 %v878
      %v1653 = vpop.f32.mrb[0].mxu0
      %v1654 = vadd.f32 %v1493, %v1653
      %v1655 = vpop.f32.mrb[0].mxu0
      %v1656 = vpop.f32.mrb[0].mxu0
      %v1657 = vadd.f32 %v1496, %v1656
      %v1658 = vpop.f32.mrb[0].mxu0
      %1659 = vmatprep.mubr.bf16.mxu0 %v886
      %1660 = vmatmul.mubr.bf16.gmra.mrb[0].mxu0 %v885
      %v1661 = vpop.f32.mrb[0].mxu0
      %v1662 = vadd.f32 %v1501, %v1661
      %v1663 = vpop.f32.mrb[0].mxu0
      %v1664 = vpop.f32.mrb[0].mxu0
      %v1665 = vadd.f32 %v1504, %v1664
      %v1666 = vpop.f32.mrb[0].mxu0
      %1667 = vmatprep.mubr.bf16.mxu0 %v893
      %1668 = vmatmul.mubr.bf16.gmra.mrb[0].mxu0 %v892
      %v1669 = vpop.f32.mrb[0].mxu0
      %v1670 = vadd.f32 %v1509, %v1669
      %v1671 = vpop.f32.mrb[0].mxu0
      %v1672 = vpop.f32.mrb[0].mxu0
      %v1673 = vadd.f32 %v1512, %v1672
      %v1674 = vpop.f32.mrb[0].mxu0
      %1675 = vmatprep.mubr.bf16.mxu0 %v900
      %1676 = vmatmul.mubr.bf16.gmra.mrb[0].mxu0 %v899
      %v1677 = vpop.f32.mrb[0].mxu0
      %v1678 = vadd.f32 %v1517, %v1677
      %v1679 = vpop.f32.mrb[0].mxu0
      %v1680 = vpop.f32.mrb[0].mxu0
      %v1681 = vadd.f32 %v1520, %v1680
      %v1682 = vpop.f32.mrb[0].mxu0
      %1683 = vmatprep.mubr.bf16.mxu0 %v907
      %1684 = vmatmul.mubr.bf16.gmra.mrb[0].mxu0 %v906
      %v1685 = vpop.f32.mrb[0].mxu0
      %v1686 = vadd.f32 %v1525, %v1685
      %v1687 = vpop.f32.mrb[0].mxu0
      %v1688 = vpop.f32.mrb[0].mxu0
      %v1689 = vadd.f32 %v1528, %v1688
      %v1690 = vpop.f32.mrb[0].mxu0
      %1691 = vmatprep.mubr.bf16.mxu0 %v914
      %1692 = vmatmul.mubr.bf16.gmra.mrb[0].mxu0 %v913
      %v1693 = vpop.f32.mrb[0].mxu0
      %v1694 = vadd.f32 %v1533, %v1693
      %v1695 = vpop.f32.mrb[0].mxu0
      %v1696 = vpop.f32.mrb[0].mxu0
      %v1697 = vadd.f32 %v1536, %v1696
      %v1698 = vpop.f32.mrb[0].mxu0
      %1699 = vmatprep.mubr.bf16.mxu0 %v921
      %1700 = vmatmul.mubr.bf16.gmra.mrb[0].mxu0 %v920
      %v1701 = vpop.f32.mrb[0].mxu0
      %v1702 = vadd.f32 %v1541, %v1701
      %v1703 = vpop.f32.mrb[0].mxu0
      %v1704 = vpop.f32.mrb[0].mxu0
      %v1705 = vadd.f32 %v1544, %v1704
      %v1706 = vpop.f32.mrb[0].mxu0
      %1707 = vmatprep.mubr.bf16.mxu0 %v928
      %1708 = vmatmul.mubr.bf16.gmra.mrb[0].mxu0 %v927
      %v1709 = vpop.f32.mrb[0].mxu0
      %v1710 = vadd.f32 %v1549, %v1709
      %v1711 = vpop.f32.mrb[0].mxu0
      %v1712 = vpop.f32.mrb[0].mxu0
      %v1713 = vadd.f32 %v1552, %v1712
      %v1714 = vpop.f32.mrb[0].mxu0
      %1715 = vmatprep.mubr.bf16.mxu0 %v935
      %1716 = vmatmul.mubr.bf16.gmra.mrb[0].mxu0 %v934
      %v1717 = vpop.f32.mrb[0].mxu0
      %v1718 = vadd.f32 %v1557, %v1717
      %v1719 = vpop.f32.mrb[0].mxu0
      %v1720 = vpop.f32.mrb[0].mxu0
      %v1721 = vadd.f32 %v1560, %v1720
      %v1722 = vpop.f32.mrb[0].mxu0
      %1723 = vmatprep.mubr.bf16.mxu0 %v942
      %1724 = vmatmul.mubr.bf16.gmra.mrb[0].mxu0 %v941
      %v1725 = vpop.f32.mrb[0].mxu0
      %v1726 = vadd.f32 %v1565, %v1725
      %v1727 = vpop.f32.mrb[0].mxu0
      %v1728 = vpop.f32.mrb[0].mxu0
      %v1729 = vadd.f32 %v1568, %v1728
      %v1730 = vpop.f32.mrb[0].mxu0
      %1731 = vmatprep.mubr.bf16.mxu0 %v949
      %1732 = vmatmul.mubr.bf16.gmra.mrb[0].mxu0 %v948
      %v1733 = vpop.f32.mrb[0].mxu0
      %v1734 = vadd.f32 %v1573, %v1733
      %v1735 = vpop.f32.mrb[0].mxu0
      %v1736 = vpop.f32.mrb[0].mxu0
      %v1737 = vadd.f32 %v1576, %v1736
      %v1738 = vpop.f32.mrb[0].mxu0
      %1739 = vmatprep.mubr.bf16.mxu0 %v956
      %1740 = vmatmul.mubr.bf16.gmra.mrb[0].mxu0 %v955
      %v1741 = vpop.f32.mrb[0].mxu0
      %v1742 = vadd.f32 %v1581, %v1741
      %v1743 = vpop.f32.mrb[0].mxu0
      %v1744 = vpop.f32.mrb[0].mxu0
      %v1745 = vadd.f32 %v1584, %v1744
      %v1746 = vpop.f32.mrb[0].mxu0
      %1747 = vmatprep.mubr.bf16.mxu0 %v963
      %1748 = vmatmul.mubr.bf16.gmra.mrb[0].mxu0 %v962
      %v1749 = vpop.f32.mrb[0].mxu0
      %v1750 = vadd.f32 %v1589, %v1749
      %v1751 = vpop.f32.mrb[0].mxu0
      %v1752 = vpop.f32.mrb[0].mxu0
      %v1753 = vadd.f32 %v1592, %v1752
      %v1754 = vpop.f32.mrb[0].mxu0
      %1755 = vmatprep.mubr.bf16.mxu0 %v970
      %1756 = vmatmul.mubr.bf16.gmra.mrb[0].mxu0 %v969
      %v1757 = vpop.f32.mrb[0].mxu0
      %v1758 = vadd.f32 %v1597, %v1757
      %v1759 = vpop.f32.mrb[0].mxu0
      %v1760 = vpop.f32.mrb[0].mxu0
      %v1761 = vadd.f32 %v1600, %v1760
      %v1762 = vpop.f32.mrb[0].mxu0
      %1763 = vmatprep.mubr.bf16.mxu0 %v977
      %1764 = vmatmul.mubr.bf16.gmra.mrb[0].mxu0 %v976
      %v1765 = vpop.f32.mrb[0].mxu0
      %v1766 = vadd.f32 %v1605, %v1765
      %v1767 = vpop.f32.mrb[0].mxu0
      %v1768 = vpop.f32.mrb[0].mxu0
      %v1769 = vadd.f32 %v1608, %v1768
      %v1770 = vpop.f32.mrb[0].mxu0
      %1771 = vdwg.mxu0
      %1772 = vmatprep.subr.bf16.mxu0 0
      %1773 = vmatpush1.bf16.msra.mxu0 %v1325
      %1774 = vmatprep.subr.bf16.mxu0 0
      %1775 = vmatpush1.bf16.msra.mxu0 %v1326
      %1776 = vmatprep.subr.bf16.mxu0 0
      %1777 = vmatpush1.bf16.msra.mxu0 %v1327
      %1778 = vmatprep.subr.bf16.mxu0 0
      %1779 = vmatpush1.bf16.msra.mxu0 %v1328
      %1780 = vmatprep.subr.bf16.mxu0 0
      %1781 = vmatpush1.bf16.msra.mxu0 %v1329
      %1782 = vmatprep.subr.bf16.mxu0 0
      %1783 = vmatpush1.bf16.msra.mxu0 %v1330
      %1784 = vmatprep.subr.bf16.mxu0 0
      %1785 = vmatpush1.bf16.msra.mxu0 %v1331
      %1786 = vmatprep.subr.bf16.mxu0 0
      %1787 = vmatpush1.bf16.msra.mxu0 %v1332
      %1788 = vmatprep.subr.bf16.mxu0 0
      %1789 = vmatpush1.bf16.msra.mxu0 %v1333
      %1790 = vmatprep.subr.bf16.mxu0 0
      %1791 = vmatpush1.bf16.msra.mxu0 %v1334
      %1792 = vmatprep.subr.bf16.mxu0 0
      %1793 = vmatpush1.bf16.msra.mxu0 %v1335
      %1794 = vmatprep.subr.bf16.mxu0 0
      %1795 = vmatpush1.bf16.msra.mxu0 %v1336
      %1796 = vmatprep.subr.bf16.mxu0 0
      %1797 = vmatpush1.bf16.msra.mxu0 %v1337
      %1798 = vmatprep.subr.bf16.mxu0 0
      %1799 = vmatpush1.bf16.msra.mxu0 %v1338
      %1800 = vmatprep.subr.bf16.mxu0 0
      %1801 = vmatpush1.bf16.msra.mxu0 %v1339
      %1802 = vmatprep.subr.bf16.mxu0 0
      %1803 = vmatpush1.bf16.msra.mxu0 %v1340
      %1804 = vmatprep.mubr.bf16.mxu0 %v874
      %1805 = vmatmul.mubr.bf16.gmra.mrb[0].mxu0 %v873
      %v1806 = vpop.f32.mrb[0].mxu0
      %v1807 = vadd.f32 %v1646, %v1806
      %v1808 = vpop.f32.mrb[0].mxu0
      %v1809 = vpop.f32.mrb[0].mxu0
      %v1810 = vadd.f32 %v1649, %v1809
      %v1811 = vpop.f32.mrb[0].mxu0
      %1812 = vmatprep.mubr.bf16.mxu0 %v881
      %1813 = vmatmul.mubr.bf16.gmra.mrb[0].mxu0 %v880
      %v1814 = vpop.f32.mrb[0].mxu0
      %v1815 = vadd.f32 %v1654, %v1814
      %v1816 = vpop.f32.mrb[0].mxu0
      %v1817 = vpop.f32.mrb[0].mxu0
      %v1818 = vadd.f32 %v1657, %v1817
      %v1819 = vpop.f32.mrb[0].mxu0
      %1820 = vmatprep.mubr.bf16.mxu0 %v888
      %1821 = vmatmul.mubr.bf16.gmra.mrb[0].mxu0 %v887
      %v1822 = vpop.f32.mrb[0].mxu0
      %v1823 = vadd.f32 %v1662, %v1822
      %v1824 = vpop.f32.mrb[0].mxu0
      %v1825 = vpop.f32.mrb[0].mxu0
      %v1826 = vadd.f32 %v1665, %v1825
      %v1827 = vpop.f32.mrb[0].mxu0
      %1828 = vmatprep.mubr.bf16.mxu0 %v895
      %1829 = vmatmul.mubr.bf16.gmra.mrb[0].mxu0 %v894
      %v1830 = vpop.f32.mrb[0].mxu0
      %v1831 = vadd.f32 %v1670, %v1830
      %v1832 = vpop.f32.mrb[0].mxu0
      %v1833 = vpop.f32.mrb[0].mxu0
      %v1834 = vadd.f32 %v1673, %v1833
      %v1835 = vpop.f32.mrb[0].mxu0
      %1836 = vmatprep.mubr.bf16.mxu0 %v902
      %1837 = vmatmul.mubr.bf16.gmra.mrb[0].mxu0 %v901
      %v1838 = vpop.f32.mrb[0].mxu0
      %v1839 = vadd.f32 %v1678, %v1838
      %v1840 = vpop.f32.mrb[0].mxu0
      %v1841 = vpop.f32.mrb[0].mxu0
      %v1842 = vadd.f32 %v1681, %v1841
      %v1843 = vpop.f32.mrb[0].mxu0
      %1844 = vmatprep.mubr.bf16.mxu0 %v909
      %1845 = vmatmul.mubr.bf16.gmra.mrb[0].mxu0 %v908
      %v1846 = vpop.f32.mrb[0].mxu0
      %v1847 = vadd.f32 %v1686, %v1846
      %v1848 = vpop.f32.mrb[0].mxu0
      %v1849 = vpop.f32.mrb[0].mxu0
      %v1850 = vadd.f32 %v1689, %v1849
      %v1851 = vpop.f32.mrb[0].mxu0
      %1852 = vmatprep.mubr.bf16.mxu0 %v916
      %1853 = vmatmul.mubr.bf16.gmra.mrb[0].mxu0 %v915
      %v1854 = vpop.f32.mrb[0].mxu0
      %v1855 = vadd.f32 %v1694, %v1854
      %v1856 = vpop.f32.mrb[0].mxu0
      %v1857 = vpop.f32.mrb[0].mxu0
      %v1858 = vadd.f32 %v1697, %v1857
      %v1859 = vpop.f32.mrb[0].mxu0
      %1860 = vmatprep.mubr.bf16.mxu0 %v923
      %1861 = vmatmul.mubr.bf16.gmra.mrb[0].mxu0 %v922
      %v1862 = vpop.f32.mrb[0].mxu0
      %v1863 = vadd.f32 %v1702, %v1862
      %v1864 = vpop.f32.mrb[0].mxu0
      %v1865 = vpop.f32.mrb[0].mxu0
      %v1866 = vadd.f32 %v1705, %v1865
      %v1867 = vpop.f32.mrb[0].mxu0
      %1868 = vmatprep.mubr.bf16.mxu0 %v930
      %1869 = vmatmul.mubr.bf16.gmra.mrb[0].mxu0 %v929
      %v1870 = vpop.f32.mrb[0].mxu0
      %v1871 = vadd.f32 %v1710, %v1870
      %v1872 = vpop.f32.mrb[0].mxu0
      %v1873 = vpop.f32.mrb[0].mxu0
      %v1874 = vadd.f32 %v1713, %v1873
      %v1875 = vpop.f32.mrb[0].mxu0
      %1876 = vmatprep.mubr.bf16.mxu0 %v937
      %1877 = vmatmul.mubr.bf16.gmra.mrb[0].mxu0 %v936
      %v1878 = vpop.f32.mrb[0].mxu0
      %v1879 = vadd.f32 %v1718, %v1878
      %v1880 = vpop.f32.mrb[0].mxu0
      %v1881 = vpop.f32.mrb[0].mxu0
      %v1882 = vadd.f32 %v1721, %v1881
      %v1883 = vpop.f32.mrb[0].mxu0
      %1884 = vmatprep.mubr.bf16.mxu0 %v944
      %1885 = vmatmul.mubr.bf16.gmra.mrb[0].mxu0 %v943
      %v1886 = vpop.f32.mrb[0].mxu0
      %v1887 = vadd.f32 %v1726, %v1886
      %v1888 = vpop.f32.mrb[0].mxu0
      %v1889 = vpop.f32.mrb[0].mxu0
      %v1890 = vadd.f32 %v1729, %v1889
      %v1891 = vpop.f32.mrb[0].mxu0
      %1892 = vmatprep.mubr.bf16.mxu0 %v951
      %1893 = vmatmul.mubr.bf16.gmra.mrb[0].mxu0 %v950
      %v1894 = vpop.f32.mrb[0].mxu0
      %v1895 = vadd.f32 %v1734, %v1894
      %v1896 = vpop.f32.mrb[0].mxu0
      %v1897 = vpop.f32.mrb[0].mxu0
      %v1898 = vadd.f32 %v1737, %v1897
      %v1899 = vpop.f32.mrb[0].mxu0
      %1900 = vmatprep.mubr.bf16.mxu0 %v958
      %1901 = vmatmul.mubr.bf16.gmra.mrb[0].mxu0 %v957
      %v1902 = vpop.f32.mrb[0].mxu0
      %v1903 = vadd.f32 %v1742, %v1902
      %v1904 = vpop.f32.mrb[0].mxu0
      %v1905 = vpop.f32.mrb[0].mxu0
      %v1906 = vadd.f32 %v1745, %v1905
      %v1907 = vpop.f32.mrb[0].mxu0
      %1908 = vmatprep.mubr.bf16.mxu0 %v965
      %1909 = vmatmul.mubr.bf16.gmra.mrb[0].mxu0 %v964
      %v1910 = vpop.f32.mrb[0].mxu0
      %v1911 = vadd.f32 %v1750, %v1910
      %v1912 = vpop.f32.mrb[0].mxu0
      %v1913 = vpop.f32.mrb[0].mxu0
      %v1914 = vadd.f32 %v1753, %v1913
      %v1915 = vpop.f32.mrb[0].mxu0
      %1916 = vmatprep.mubr.bf16.mxu0 %v972
      %1917 = vmatmul.mubr.bf16.gmra.mrb[0].mxu0 %v971
      %v1918 = vpop.f32.mrb[0].mxu0
      %v1919 = vadd.f32 %v1758, %v1918
      %v1920 = vpop.f32.mrb[0].mxu0
      %v1921 = vpop.f32.mrb[0].mxu0
      %v1922 = vadd.f32 %v1761, %v1921
      %v1923 = vpop.f32.mrb[0].mxu0
      %1924 = vmatprep.mubr.bf16.mxu0 %v979
      %1925 = vmatmul.mubr.bf16.gmra.mrb[0].mxu0 %v978
      %v1926 = vpop.f32.mrb[0].mxu0
      %v1927 = vadd.f32 %v1766, %v1926
      %v1928 = vpop.f32.mrb[0].mxu0
      %v1929 = vpop.f32.mrb[0].mxu0
      %v1930 = vadd.f32 %v1769, %v1929
      %v1931 = vpop.f32.mrb[0].mxu0
      %1932 = vdwg.mxu0
      %1933 = vmatprep.subr.bf16.mxu0 0
      %1934 = vmatpush1.bf16.msra.mxu0 %v1341
      %1935 = vmatprep.subr.bf16.mxu0 0
      %1936 = vmatpush1.bf16.msra.mxu0 %v1342
      %1937 = vmatprep.subr.bf16.mxu0 0
      %1938 = vmatpush1.bf16.msra.mxu0 %v1343
      %1939 = vmatprep.subr.bf16.mxu0 0
      %1940 = vmatpush1.bf16.msra.mxu0 %v1344
      %1941 = vmatprep.subr.bf16.mxu0 0
      %1942 = vmatpush1.bf16.msra.mxu0 %v1345
      %1943 = vmatprep.subr.bf16.mxu0 0
      %1944 = vmatpush1.bf16.msra.mxu0 %v1346
      %1945 = vmatprep.subr.bf16.mxu0 0
      %1946 = vmatpush1.bf16.msra.mxu0 0
      %1947 = vmatprep.subr.bf16.mxu0 0
      %1948 = vmatpush1.bf16.msra.mxu0 0
      %1949 = vmatprep.subr.bf16.mxu0 0
      %1950 = vmatpush1.bf16.msra.mxu0 0
      %1951 = vmatprep.subr.bf16.mxu0 0
      %1952 = vmatpush1.bf16.msra.mxu0 0
      %1953 = vmatprep.subr.bf16.mxu0 0
      %1954 = vmatpush1.bf16.msra.mxu0 0
      %1955 = vmatprep.subr.bf16.mxu0 0
      %1956 = vmatpush1.bf16.msra.mxu0 0
      %1957 = vmatprep.subr.bf16.mxu0 0
      %1958 = vmatpush1.bf16.msra.mxu0 0
      %1959 = vmatprep.subr.bf16.mxu0 0
      %1960 = vmatpush1.bf16.msra.mxu0 0
      %1961 = vmatprep.subr.bf16.mxu0 0
      %1962 = vmatpush1.bf16.msra.mxu0 0
      %1963 = vmatprep.subr.bf16.mxu0 0
      %1964 = vmatpush1.bf16.msra.mxu0 0
      %1965 = vmatprep.mubr.bf16.mxu0 0
      %1966 = vmatmul.mubr.bf16.gmra.mrb[0].mxu0 %v1403
      %v1967 = vpop.f32.mrb[0].mxu0
      %v1968 = vadd.f32 %v1807, %v1967
      %v1969 = vpop.f32.mrb[0].mxu0
      %v1970 = vpop.f32.mrb[0].mxu0
      %v1971 = vadd.f32 %v1810, %v1970
      %v1972 = vpop.f32.mrb[0].mxu0
      %1973 = vmatprep.mubr.bf16.mxu0 0
      %1974 = vmatmul.mubr.bf16.gmra.mrb[0].mxu0 %v1406
      %v1975 = vpop.f32.mrb[0].mxu0
      %v1976 = vadd.f32 %v1815, %v1975
      %v1977 = vpop.f32.mrb[0].mxu0
      %v1978 = vpop.f32.mrb[0].mxu0
      %v1979 = vadd.f32 %v1818, %v1978
      %v1980 = vpop.f32.mrb[0].mxu0
      %1981 = vmatprep.mubr.bf16.mxu0 0
      %1982 = vmatmul.mubr.bf16.gmra.mrb[0].mxu0 %v1409
      %v1983 = vpop.f32.mrb[0].mxu0
      %v1984 = vadd.f32 %v1823, %v1983
      %v1985 = vpop.f32.mrb[0].mxu0
      %v1986 = vpop.f32.mrb[0].mxu0
      %v1987 = vadd.f32 %v1826, %v1986
      %v1988 = vpop.f32.mrb[0].mxu0
      %1989 = vmatprep.mubr.bf16.mxu0 0
      %1990 = vmatmul.mubr.bf16.gmra.mrb[0].mxu0 %v1412
      %v1991 = vpop.f32.mrb[0].mxu0
      %v1992 = vadd.f32 %v1831, %v1991
      %v1993 = vpop.f32.mrb[0].mxu0
      %v1994 = vpop.f32.mrb[0].mxu0
      %v1995 = vadd.f32 %v1834, %v1994
      %v1996 = vpop.f32.mrb[0].mxu0
      %1997 = vmatprep.mubr.bf16.mxu0 0
      %1998 = vmatmul.mubr.bf16.gmra.mrb[0].mxu0 %v1415
      %v1999 = vpop.f32.mrb[0].mxu0
      %v2000 = vadd.f32 %v1839, %v1999
      %v2001 = vpop.f32.mrb[0].mxu0
      %v2002 = vpop.f32.mrb[0].mxu0
      %v2003 = vadd.f32 %v1842, %v2002
      %v2004 = vpop.f32.mrb[0].mxu0
      %2005 = vmatprep.mubr.bf16.mxu0 0
      %2006 = vmatmul.mubr.bf16.gmra.mrb[0].mxu0 %v1418
      %v2007 = vpop.f32.mrb[0].mxu0
      %v2008 = vadd.f32 %v1847, %v2007
      %v2009 = vpop.f32.mrb[0].mxu0
      %v2010 = vpop.f32.mrb[0].mxu0
      %v2011 = vadd.f32 %v1850, %v2010
      %v2012 = vpop.f32.mrb[0].mxu0
      %2013 = vmatprep.mubr.bf16.mxu0 0
      %2014 = vmatmul.mubr.bf16.gmra.mrb[0].mxu0 %v1421
      %v2015 = vpop.f32.mrb[0].mxu0
      %v2016 = vadd.f32 %v1855, %v2015
      %v2017 = vpop.f32.mrb[0].mxu0
      %v2018 = vpop.f32.mrb[0].mxu0
      %v2019 = vadd.f32 %v1858, %v2018
      %v2020 = vpop.f32.mrb[0].mxu0
      %2021 = vmatprep.mubr.bf16.mxu0 0
      %2022 = vmatmul.mubr.bf16.gmra.mrb[0].mxu0 %v1424
      %v2023 = vpop.f32.mrb[0].mxu0
      %v2024 = vadd.f32 %v1863, %v2023
      %v2025 = vpop.f32.mrb[0].mxu0
      %v2026 = vpop.f32.mrb[0].mxu0
      %v2027 = vadd.f32 %v1866, %v2026
      %v2028 = vpop.f32.mrb[0].mxu0
      %2029 = vmatprep.mubr.bf16.mxu0 0
      %2030 = vmatmul.mubr.bf16.gmra.mrb[0].mxu0 %v1427
      %v2031 = vpop.f32.mrb[0].mxu0
      %v2032 = vadd.f32 %v1871, %v2031
      %v2033 = vpop.f32.mrb[0].mxu0
      %v2034 = vpop.f32.mrb[0].mxu0
      %v2035 = vadd.f32 %v1874, %v2034
      %v2036 = vpop.f32.mrb[0].mxu0
      %2037 = vmatprep.mubr.bf16.mxu0 0
      %2038 = vmatmul.mubr.bf16.gmra.mrb[0].mxu0 %v1430
      %v2039 = vpop.f32.mrb[0].mxu0
      %v2040 = vadd.f32 %v1879, %v2039
      %v2041 = vpop.f32.mrb[0].mxu0
      %v2042 = vpop.f32.mrb[0].mxu0
      %v2043 = vadd.f32 %v1882, %v2042
      %v2044 = vpop.f32.mrb[0].mxu0
      %2045 = vmatprep.mubr.bf16.mxu0 0
      %2046 = vmatmul.mubr.bf16.gmra.mrb[0].mxu0 %v1433
      %v2047 = vpop.f32.mrb[0].mxu0
      %v2048 = vadd.f32 %v1887, %v2047
      %v2049 = vpop.f32.mrb[0].mxu0
      %v2050 = vpop.f32.mrb[0].mxu0
      %v2051 = vadd.f32 %v1890, %v2050
      %v2052 = vpop.f32.mrb[0].mxu0
      %2053 = vmatprep.mubr.bf16.mxu0 0
      %2054 = vmatmul.mubr.bf16.gmra.mrb[0].mxu0 %v1436
      %v2055 = vpop.f32.mrb[0].mxu0
      %v2056 = vadd.f32 %v1895, %v2055
      %v2057 = vpop.f32.mrb[0].mxu0
      %v2058 = vpop.f32.mrb[0].mxu0
      %v2059 = vadd.f32 %v1898, %v2058
      %v2060 = vpop.f32.mrb[0].mxu0
      %2061 = vmatprep.mubr.bf16.mxu0 0
      %2062 = vmatmul.mubr.bf16.gmra.mrb[0].mxu0 %v1439
      %v2063 = vpop.f32.mrb[0].mxu0
      %v2064 = vadd.f32 %v1903, %v2063
      %v2065 = vpop.f32.mrb[0].mxu0
      %v2066 = vpop.f32.mrb[0].mxu0
      %v2067 = vadd.f32 %v1906, %v2066
      %v2068 = vpop.f32.mrb[0].mxu0
      %2069 = vmatprep.mubr.bf16.mxu0 0
      %2070 = vmatmul.mubr.bf16.gmra.mrb[0].mxu0 %v1442
      %v2071 = vpop.f32.mrb[0].mxu0
      %v2072 = vadd.f32 %v1911, %v2071
      %v2073 = vpop.f32.mrb[0].mxu0
      %v2074 = vpop.f32.mrb[0].mxu0
      %v2075 = vadd.f32 %v1914, %v2074
      %v2076 = vpop.f32.mrb[0].mxu0
      %2077 = vmatprep.mubr.bf16.mxu0 0
      %2078 = vmatmul.mubr.bf16.gmra.mrb[0].mxu0 %v1445
      %v2079 = vpop.f32.mrb[0].mxu0
      %v2080 = vadd.f32 %v1919, %v2079
      %v2081 = vpop.f32.mrb[0].mxu0
      %v2082 = vpop.f32.mrb[0].mxu0
      %v2083 = vadd.f32 %v1922, %v2082
      %v2084 = vpop.f32.mrb[0].mxu0
      %2085 = vmatprep.mubr.bf16.mxu0 0
      %2086 = vmatmul.mubr.bf16.gmra.mrb[0].mxu0 %v1448
      %v2087 = vpop.f32.mrb[0].mxu0
      %v2088 = vadd.f32 %v1927, %v2087
      %v2089 = vpop.f32.mrb[0].mxu0
      %v2090 = vpop.f32.mrb[0].mxu0
      %v2091 = vadd.f32 %v1930, %v2090
      %v2092 = vpop.f32.mrb[0].mxu0
      %2093 = vdwg.mxu0
      %v2094 = vadd.f32 %v249, %v1968
      %v2095 = vadd.f32 %v250, %v1971
      %v2096 = vadd.f32 %v251, %v1976
      %v2097 = vadd.f32 %v252, %v1979
      %v2098 = vadd.f32 %v253, %v1984
      %v2099 = vadd.f32 %v254, %v1987
      %v2100 = vadd.f32 %v255, %v1992
      %v2101 = vadd.f32 %v256, %v1995
      %v2102 = vadd.f32 %v257, %v2000
      %v2103 = vadd.f32 %v258, %v2003
      %v2104 = vadd.f32 %v259, %v2008
      %v2105 = vadd.f32 %v260, %v2011
      %v2106 = vadd.f32 %v261, %v2016
      %v2107 = vadd.f32 %v262, %v2019
      %v2108 = vadd.f32 %v263, %v2024
      %v2109 = vadd.f32 %v264, %v2027
      %v2110 = vadd.f32 %v265, %v2032
      %v2111 = vadd.f32 %v266, %v2035
      %v2112 = vadd.f32 %v267, %v2040
      %v2113 = vadd.f32 %v268, %v2043
      %v2114 = vadd.f32 %v269, %v2048
      %v2115 = vadd.f32 %v270, %v2051
      %v2116 = vadd.f32 %v271, %v2056
      %v2117 = vadd.f32 %v272, %v2059
      %v2118 = vadd.f32 %v273, %v2064
      %v2119 = vadd.f32 %v274, %v2067
      %v2120 = vadd.f32 %v275, %v2072
      %v2121 = vadd.f32 %v276, %v2075
      %v2122 = vadd.f32 %v277, %v2080
      %v2123 = vadd.f32 %v278, %v2083
      %v2124 = vadd.f32 %v279, %v2088
      %v2125 = vadd.f32 %v280, %v2091
      %v2126 = vxor.u32 %v2094, 2147483648
      %v2127 = vxor.u32 %v2095, 2147483648
      %v2128 = vxor.u32 %v2096, 2147483648
      %v2129 = vxor.u32 %v2097, 2147483648
      %v2130 = vxor.u32 %v2098, 2147483648
      %v2131 = vxor.u32 %v2099, 2147483648
      %v2132 = vxor.u32 %v2100, 2147483648
      %v2133 = vxor.u32 %v2101, 2147483648
      %v2134 = vxor.u32 %v2102, 2147483648
      %v2135 = vxor.u32 %v2103, 2147483648
      %v2136 = vxor.u32 %v2104, 2147483648
      %v2137 = vxor.u32 %v2105, 2147483648
      %v2138 = vxor.u32 %v2106, 2147483648
      %v2139 = vxor.u32 %v2107, 2147483648
      %v2140 = vxor.u32 %v2108, 2147483648
      %v2141 = vxor.u32 %v2109, 2147483648
      %v2142 = vxor.u32 %v2110, 2147483648
      %v2143 = vxor.u32 %v2111, 2147483648
      %v2144 = vxor.u32 %v2112, 2147483648
      %v2145 = vxor.u32 %v2113, 2147483648
      %v2146 = vxor.u32 %v2114, 2147483648
      %v2147 = vxor.u32 %v2115, 2147483648
      %v2148 = vxor.u32 %v2116, 2147483648
      %v2149 = vxor.u32 %v2117, 2147483648
      %v2150 = vxor.u32 %v2118, 2147483648
      %v2151 = vxor.u32 %v2119, 2147483648
      %v2152 = vxor.u32 %v2120, 2147483648
      %v2153 = vxor.u32 %v2121, 2147483648
      %v2154 = vxor.u32 %v2122, 2147483648
      %v2155 = vxor.u32 %v2123, 2147483648
      %v2156 = vxor.u32 %v2124, 2147483648
      %v2157 = vxor.u32 %v2125, 2147483648
      %v2158 = vmul.f32 %v2126, 1.442695
      %v2159 = vpow.pop %v2158
      %v2160 = vmul.f32 %v2127, 1.442695
      %v2161 = vpow.pop %v2160
      %v2162 = vmul.f32 %v2128, 1.442695
      %v2163 = vpow.pop %v2162
      %v2164 = vmul.f32 %v2129, 1.442695
      %v2165 = vpow.pop %v2164
      %v2166 = vmul.f32 %v2130, 1.442695
      %v2167 = vpow.pop %v2166
      %v2168 = vmul.f32 %v2131, 1.442695
      %v2169 = vpow.pop %v2168
      %v2170 = vmul.f32 %v2132, 1.442695
      %v2171 = vpow.pop %v2170
      %v2172 = vmul.f32 %v2133, 1.442695
      %v2173 = vpow.pop %v2172
      %v2174 = vmul.f32 %v2134, 1.442695
      %v2175 = vpow.pop %v2174
      %v2176 = vmul.f32 %v2135, 1.442695
      %v2177 = vpow.pop %v2176
      %v2178 = vmul.f32 %v2136, 1.442695
      %v2179 = vpow.pop %v2178
      %v2180 = vmul.f32 %v2137, 1.442695
      %v2181 = vpow.pop %v2180
      %v2182 = vmul.f32 %v2138, 1.442695
      %v2183 = vpow.pop %v2182
      %v2184 = vmul.f32 %v2139, 1.442695
      %v2185 = vpow.pop %v2184
      %v2186 = vmul.f32 %v2140, 1.442695
      %v2187 = vpow.pop %v2186
      %v2188 = vmul.f32 %v2141, 1.442695
      %v2189 = vpow.pop %v2188
      %v2190 = vmul.f32 %v2142, 1.442695
      %v2191 = vpow.pop %v2190
      %v2192 = vmul.f32 %v2143, 1.442695
      %v2193 = vpow.pop %v2192
      %v2194 = vmul.f32 %v2144, 1.442695
      %v2195 = vpow.pop %v2194
      %v2196 = vmul.f32 %v2145, 1.442695
      %v2197 = vpow.pop %v2196
      %v2198 = vmul.f32 %v2146, 1.442695
      %v2199 = vpow.pop %v2198
      %v2200 = vmul.f32 %v2147, 1.442695
      %v2201 = vpow.pop %v2200
      %v2202 = vmul.f32 %v2148, 1.442695
      %v2203 = vpow.pop %v2202
      %v2204 = vmul.f32 %v2149, 1.442695
      %v2205 = vpow.pop %v2204
      %v2206 = vmul.f32 %v2150, 1.442695
      %v2207 = vpow.pop %v2206
      %v2208 = vmul.f32 %v2151, 1.442695
      %v2209 = vpow.pop %v2208
      %v2210 = vmul.f32 %v2152, 1.442695
      %v2211 = vpow.pop %v2210
      %v2212 = vmul.f32 %v2153, 1.442695
      %v2213 = vpow.pop %v2212
      %v2214 = vmul.f32 %v2154, 1.442695
      %v2215 = vpow.pop %v2214
      %v2216 = vmul.f32 %v2155, 1.442695
      %v2217 = vpow.pop %v2216
      %v2218 = vmul.f32 %v2156, 1.442695
      %v2219 = vpow.pop %v2218
      %v2220 = vmul.f32 %v2157, 1.442695
      %v2221 = vpow.pop %v2220
      %v2222 = vadd.f32 %v2159, 1.0
      %v2223 = vadd.f32 %v2161, 1.0
      %v2224 = vadd.f32 %v2163, 1.0
      %v2225 = vadd.f32 %v2165, 1.0
      %v2226 = vadd.f32 %v2167, 1.0
      %v2227 = vadd.f32 %v2169, 1.0
      %v2228 = vadd.f32 %v2171, 1.0
      %v2229 = vadd.f32 %v2173, 1.0
      %v2230 = vadd.f32 %v2175, 1.0
      %v2231 = vadd.f32 %v2177, 1.0
      %v2232 = vadd.f32 %v2179, 1.0
      %v2233 = vadd.f32 %v2181, 1.0
      %v2234 = vadd.f32 %v2183, 1.0
      %v2235 = vadd.f32 %v2185, 1.0
      %v2236 = vadd.f32 %v2187, 1.0
      %v2237 = vadd.f32 %v2189, 1.0
      %v2238 = vadd.f32 %v2191, 1.0
      %v2239 = vadd.f32 %v2193, 1.0
      %v2240 = vadd.f32 %v2195, 1.0
      %v2241 = vadd.f32 %v2197, 1.0
      %v2242 = vadd.f32 %v2199, 1.0
      %v2243 = vadd.f32 %v2201, 1.0
      %v2244 = vadd.f32 %v2203, 1.0
      %v2245 = vadd.f32 %v2205, 1.0
      %v2246 = vadd.f32 %v2207, 1.0
      %v2247 = vadd.f32 %v2209, 1.0
      %v2248 = vadd.f32 %v2211, 1.0
      %v2249 = vadd.f32 %v2213, 1.0
      %v2250 = vadd.f32 %v2215, 1.0
      %v2251 = vadd.f32 %v2217, 1.0
      %v2252 = vadd.f32 %v2219, 1.0
      %v2253 = vadd.f32 %v2221, 1.0
      %v2254 = vrcp.pop %v2222
      %v2255 = vmul.f32 1.0, %v2254
      %v2256 = vrcp.pop %v2223
      %v2257 = vmul.f32 1.0, %v2256
      %v2258 = vrcp.pop %v2224
      %v2259 = vmul.f32 1.0, %v2258
      %v2260 = vrcp.pop %v2225
      %v2261 = vmul.f32 1.0, %v2260
      %v2262 = vrcp.pop %v2226
      %v2263 = vmul.f32 1.0, %v2262
      %v2264 = vrcp.pop %v2227
      %v2265 = vmul.f32 1.0, %v2264
      %v2266 = vrcp.pop %v2228
      %v2267 = vmul.f32 1.0, %v2266
      %v2268 = vrcp.pop %v2229
      %v2269 = vmul.f32 1.0, %v2268
      %v2270 = vrcp.pop %v2230
      %v2271 = vmul.f32 1.0, %v2270
      %v2272 = vrcp.pop %v2231
      %v2273 = vmul.f32 1.0, %v2272
      %v2274 = vrcp.pop %v2232
      %v2275 = vmul.f32 1.0, %v2274
      %v2276 = vrcp.pop %v2233
      %v2277 = vmul.f32 1.0, %v2276
      %v2278 = vrcp.pop %v2234
      %v2279 = vmul.f32 1.0, %v2278
      %v2280 = vrcp.pop %v2235
      %v2281 = vmul.f32 1.0, %v2280
      %v2282 = vrcp.pop %v2236
      %v2283 = vmul.f32 1.0, %v2282
      %v2284 = vrcp.pop %v2237
      %v2285 = vmul.f32 1.0, %v2284
      %v2286 = vrcp.pop %v2238
      %v2287 = vmul.f32 1.0, %v2286
      %v2288 = vrcp.pop %v2239
      %v2289 = vmul.f32 1.0, %v2288
      %v2290 = vrcp.pop %v2240
      %v2291 = vmul.f32 1.0, %v2290
      %v2292 = vrcp.pop %v2241
      %v2293 = vmul.f32 1.0, %v2292
      %v2294 = vrcp.pop %v2242
      %v2295 = vmul.f32 1.0, %v2294
      %v2296 = vrcp.pop %v2243
      %v2297 = vmul.f32 1.0, %v2296
      %v2298 = vrcp.pop %v2244
      %v2299 = vmul.f32 1.0, %v2298
      %v2300 = vrcp.pop %v2245
      %v2301 = vmul.f32 1.0, %v2300
      %v2302 = vrcp.pop %v2246
      %v2303 = vmul.f32 1.0, %v2302
      %v2304 = vrcp.pop %v2247
      %v2305 = vmul.f32 1.0, %v2304
      %v2306 = vrcp.pop %v2248
      %v2307 = vmul.f32 1.0, %v2306
      %v2308 = vrcp.pop %v2249
      %v2309 = vmul.f32 1.0, %v2308
      %v2310 = vrcp.pop %v2250
      %v2311 = vmul.f32 1.0, %v2310
      %v2312 = vrcp.pop %v2251
      %v2313 = vmul.f32 1.0, %v2312
      %v2314 = vrcp.pop %v2252
      %v2315 = vmul.f32 1.0, %v2314
      %v2316 = vrcp.pop %v2253
      %v2317 = vmul.f32 1.0, %v2316
      %v2318 = vtanh.pop %v2094
      %v2319 = vtanh.pop %v2095
      %v2320 = vtanh.pop %v2096
      %v2321 = vtanh.pop %v2097
      %v2322 = vtanh.pop %v2098
      %v2323 = vtanh.pop %v2099
      %v2324 = vtanh.pop %v2100
      %v2325 = vtanh.pop %v2101
      %v2326 = vtanh.pop %v2102
      %v2327 = vtanh.pop %v2103
      %v2328 = vtanh.pop %v2104
      %v2329 = vtanh.pop %v2105
      %v2330 = vtanh.pop %v2106
      %v2331 = vtanh.pop %v2107
      %v2332 = vtanh.pop %v2108
      %v2333 = vtanh.pop %v2109
      %v2334 = vtanh.pop %v2110
      %v2335 = vtanh.pop %v2111
      %v2336 = vtanh.pop %v2112
      %v2337 = vtanh.pop %v2113
      %v2338 = vtanh.pop %v2114
      %v2339 = vtanh.pop %v2115
      %v2340 = vtanh.pop %v2116
      %v2341 = vtanh.pop %v2117
      %v2342 = vtanh.pop %v2118
      %v2343 = vtanh.pop %v2119
      %v2344 = vtanh.pop %v2120
      %v2345 = vtanh.pop %v2121
      %v2346 = vtanh.pop %v2122
      %v2347 = vtanh.pop %v2123
      %v2348 = vtanh.pop %v2124
      %v2349 = vtanh.pop %v2125
      %v2350 = vld [vmem:[%s240] sm:$0xff]
      %v2351 = vld [vmem:[%s240 + $0x8] sm:$0xff]
      %v2352 = vld [vmem:[%s240 + $0x10] sm:$0xff]
      %v2353 = vld [vmem:[%s240 + $0x18] sm:$0xff]
      %v2354 = vld [vmem:[%s240 + $0x20] sm:$0xff]
      %v2355 = vld [vmem:[%s240 + $0x28] sm:$0xff]
      %v2356 = vld [vmem:[%s240 + $0x30] sm:$0xff]
      %v2357 = vld [vmem:[%s240 + $0x38] sm:$0xff]
      %v2358 = vld [vmem:[%s240 + $0x40] sm:$0xff]
      %v2359 = vld [vmem:[%s240 + $0x48] sm:$0xff]
      %v2360 = vld [vmem:[%s240 + $0x50] sm:$0xff]
      %v2361 = vld [vmem:[%s240 + $0x58] sm:$0xff]
      %v2362 = vld [vmem:[%s240 + $0x60] sm:$0xff]
      %v2363 = vld [vmem:[%s240 + $0x68] sm:$0xff]
      %v2364 = vld [vmem:[%s240 + $0x70] sm:$0xff]
      %v2365 = vld [vmem:[%s240 + $0x78] sm:$0xff]
      %v2366 = vld [vmem:[%s240 + $0x80] sm:$0xff]
      %v2367 = vld [vmem:[%s240 + $0x88] sm:$0xff]
      %v2368 = vld [vmem:[%s240 + $0x90] sm:$0xff]
      %v2369 = vld [vmem:[%s240 + $0x98] sm:$0xff]
      %v2370 = vld [vmem:[%s240 + $0xa0] sm:$0xff]
      %v2371 = vld [vmem:[%s240 + $0xa8] sm:$0xff]
      %v2372 = vld [vmem:[%s240 + $0xb0] sm:$0xff]
      %v2373 = vld [vmem:[%s240 + $0xb8] sm:$0xff]
      %v2374 = vld [vmem:[%s240 + $0xc0] sm:$0xff]
      %v2375 = vld [vmem:[%s240 + $0xc8] sm:$0xff]
      %v2376 = vld [vmem:[%s240 + $0xd0] sm:$0xff]
      %v2377 = vld [vmem:[%s240 + $0xd8] sm:$0xff]
      %v2378 = vld [vmem:[%s240 + $0xe0] sm:$0xff]
      %v2379 = vld [vmem:[%s240 + $0xe8] sm:$0xff]
      %v2380 = vld [vmem:[%s240 + $0xf0] sm:$0xff]
      %v2381 = vld [vmem:[%s240 + $0xf8] sm:$0xff]
      %2414 = vrot.lane.b32.xlu0 %v2350, 32
      %v2415 = vpop.permute.xlu0 %2414
      %2416 = vrot.lane.b32.xlu0 %v2351, 32
      %v2417 = vpop.permute.xlu0 %2416
      %2418 = vrot.lane.b32.xlu0 %v2352, 32
      %v2419 = vpop.permute.xlu0 %2418
      %2420 = vrot.lane.b32.xlu0 %v2353, 32
      %v2421 = vpop.permute.xlu0 %2420
      %2422 = vrot.lane.b32.xlu0 %v2354, 32
      %v2423 = vpop.permute.xlu0 %2422
      %2424 = vrot.lane.b32.xlu0 %v2355, 32
      %v2425 = vpop.permute.xlu0 %2424
      %2426 = vrot.lane.b32.xlu0 %v2356, 32
      %v2427 = vpop.permute.xlu0 %2426
      %2428 = vrot.lane.b32.xlu0 %v2357, 32
      %v2429 = vpop.permute.xlu0 %2428
      %2430 = vrot.lane.b32.xlu0 %v2358, 32
      %v2431 = vpop.permute.xlu0 %2430
      %2432 = vrot.lane.b32.xlu0 %v2359, 32
      %v2433 = vpop.permute.xlu0 %2432
      %2434 = vrot.lane.b32.xlu0 %v2360, 32
      %v2435 = vpop.permute.xlu0 %2434
      %2436 = vrot.lane.b32.xlu0 %v2361, 32
      %v2437 = vpop.permute.xlu0 %2436
      %2438 = vrot.lane.b32.xlu0 %v2362, 32
      %v2439 = vpop.permute.xlu0 %2438
      %2440 = vrot.lane.b32.xlu0 %v2363, 32
      %v2441 = vpop.permute.xlu0 %2440
      %2442 = vrot.lane.b32.xlu0 %v2364, 32
      %v2443 = vpop.permute.xlu0 %2442
      %2444 = vrot.lane.b32.xlu0 %v2365, 32
      %v2445 = vpop.permute.xlu0 %2444
      %2446 = vrot.lane.b32.xlu0 %v2366, 32
      %v2447 = vpop.permute.xlu0 %2446
      %2448 = vrot.lane.b32.xlu0 %v2367, 32
      %v2449 = vpop.permute.xlu0 %2448
      %2450 = vrot.lane.b32.xlu0 %v2368, 32
      %v2451 = vpop.permute.xlu0 %2450
      %2452 = vrot.lane.b32.xlu0 %v2369, 32
      %v2453 = vpop.permute.xlu0 %2452
      %2454 = vrot.lane.b32.xlu0 %v2370, 32
      %v2455 = vpop.permute.xlu0 %2454
      %2456 = vrot.lane.b32.xlu0 %v2371, 32
      %v2457 = vpop.permute.xlu0 %2456
      %2458 = vrot.lane.b32.xlu0 %v2372, 32
      %v2459 = vpop.permute.xlu0 %2458
      %2460 = vrot.lane.b32.xlu0 %v2373, 32
      %v2461 = vpop.permute.xlu0 %2460
      %2462 = vrot.lane.b32.xlu0 %v2374, 32
      %v2463 = vpop.permute.xlu0 %2462
      %2464 = vrot.lane.b32.xlu0 %v2375, 32
      %v2465 = vpop.permute.xlu0 %2464
      %2466 = vrot.lane.b32.xlu0 %v2376, 32
      %v2467 = vpop.permute.xlu0 %2466
      %2468 = vrot.lane.b32.xlu0 %v2377, 32
      %v2469 = vpop.permute.xlu0 %2468
      %2470 = vrot.lane.b32.xlu0 %v2378, 32
      %v2471 = vpop.permute.xlu0 %2470
      %2472 = vrot.lane.b32.xlu0 %v2379, 32
      %v2473 = vpop.permute.xlu0 %2472
      %2474 = vrot.lane.b32.xlu0 %v2380, 32
      %v2475 = vpop.permute.xlu0 %2474
      %2476 = vrot.lane.b32.xlu0 %v2381, 32
      %v2477 = vpop.permute.xlu0 %2476
      %v2510 = vmul.f32 %v2255, %v2415
      %v2511 = vmul.f32 %v2257, %v2417
      %v2512 = vmul.f32 %v2259, %v2419
      %v2513 = vmul.f32 %v2261, %v2421
      %v2514 = vmul.f32 %v2263, %v2423
      %v2515 = vmul.f32 %v2265, %v2425
      %v2516 = vmul.f32 %v2267, %v2427
      %v2517 = vmul.f32 %v2269, %v2429
      %v2518 = vmul.f32 %v2271, %v2431
      %v2519 = vmul.f32 %v2273, %v2433
      %v2520 = vmul.f32 %v2275, %v2435
      %v2521 = vmul.f32 %v2277, %v2437
      %v2522 = vmul.f32 %v2279, %v2439
      %v2523 = vmul.f32 %v2281, %v2441
      %v2524 = vmul.f32 %v2283, %v2443
      %v2525 = vmul.f32 %v2285, %v2445
      %v2526 = vmul.f32 %v2287, %v2447
      %v2527 = vmul.f32 %v2289, %v2449
      %v2528 = vmul.f32 %v2291, %v2451
      %v2529 = vmul.f32 %v2293, %v2453
      %v2530 = vmul.f32 %v2295, %v2455
      %v2531 = vmul.f32 %v2297, %v2457
      %v2532 = vmul.f32 %v2299, %v2459
      %v2533 = vmul.f32 %v2301, %v2461
      %v2534 = vmul.f32 %v2303, %v2463
      %v2535 = vmul.f32 %v2305, %v2465
      %v2536 = vmul.f32 %v2307, %v2467
      %v2537 = vmul.f32 %v2309, %v2469
      %v2538 = vmul.f32 %v2311, %v2471
      %v2539 = vmul.f32 %v2313, %v2473
      %v2540 = vmul.f32 %v2315, %v2475
      %v2541 = vmul.f32 %v2317, %v2477
      %2574 = vrot.lane.b32.xlu0 %v2318, 32
      %v2575 = vpop.permute.xlu0 %2574
      %2576 = vrot.lane.b32.xlu0 %v2319, 32
      %v2577 = vpop.permute.xlu0 %2576
      %2578 = vrot.lane.b32.xlu0 %v2320, 32
      %v2579 = vpop.permute.xlu0 %2578
      %2580 = vrot.lane.b32.xlu0 %v2321, 32
      %v2581 = vpop.permute.xlu0 %2580
      %2582 = vrot.lane.b32.xlu0 %v2322, 32
      %v2583 = vpop.permute.xlu0 %2582
      %2584 = vrot.lane.b32.xlu0 %v2323, 32
      %v2585 = vpop.permute.xlu0 %2584
      %2586 = vrot.lane.b32.xlu0 %v2324, 32
      %v2587 = vpop.permute.xlu0 %2586
      %2588 = vrot.lane.b32.xlu0 %v2325, 32
      %v2589 = vpop.permute.xlu0 %2588
      %2590 = vrot.lane.b32.xlu0 %v2326, 32
      %v2591 = vpop.permute.xlu0 %2590
      %2592 = vrot.lane.b32.xlu0 %v2327, 32
      %v2593 = vpop.permute.xlu0 %2592
      %2594 = vrot.lane.b32.xlu0 %v2328, 32
      %v2595 = vpop.permute.xlu0 %2594
      %2596 = vrot.lane.b32.xlu0 %v2329, 32
      %v2597 = vpop.permute.xlu0 %2596
      %2598 = vrot.lane.b32.xlu0 %v2330, 32
      %v2599 = vpop.permute.xlu0 %2598
      %2600 = vrot.lane.b32.xlu0 %v2331, 32
      %v2601 = vpop.permute.xlu0 %2600
      %2602 = vrot.lane.b32.xlu0 %v2332, 32
      %v2603 = vpop.permute.xlu0 %2602
      %2604 = vrot.lane.b32.xlu0 %v2333, 32
      %v2605 = vpop.permute.xlu0 %2604
      %2606 = vrot.lane.b32.xlu0 %v2334, 32
      %v2607 = vpop.permute.xlu0 %2606
      %2608 = vrot.lane.b32.xlu0 %v2335, 32
      %v2609 = vpop.permute.xlu0 %2608
      %2610 = vrot.lane.b32.xlu0 %v2336, 32
      %v2611 = vpop.permute.xlu0 %2610
      %2612 = vrot.lane.b32.xlu0 %v2337, 32
      %v2613 = vpop.permute.xlu0 %2612
      %2614 = vrot.lane.b32.xlu0 %v2338, 32
      %v2615 = vpop.permute.xlu0 %2614
      %2616 = vrot.lane.b32.xlu0 %v2339, 32
      %v2617 = vpop.permute.xlu0 %2616
      %2618 = vrot.lane.b32.xlu0 %v2340, 32
      %v2619 = vpop.permute.xlu0 %2618
      %2620 = vrot.lane.b32.xlu0 %v2341, 32
      %v2621 = vpop.permute.xlu0 %2620
      %2622 = vrot.lane.b32.xlu0 %v2342, 32
      %v2623 = vpop.permute.xlu0 %2622
      %2624 = vrot.lane.b32.xlu0 %v2343, 32
      %v2625 = vpop.permute.xlu0 %2624
      %2626 = vrot.lane.b32.xlu0 %v2344, 32
      %v2627 = vpop.permute.xlu0 %2626
      %2628 = vrot.lane.b32.xlu0 %v2345, 32
      %v2629 = vpop.permute.xlu0 %2628
      %2630 = vrot.lane.b32.xlu0 %v2346, 32
      %v2631 = vpop.permute.xlu0 %2630
      %2632 = vrot.lane.b32.xlu0 %v2347, 32
      %v2633 = vpop.permute.xlu0 %2632
      %2634 = vrot.lane.b32.xlu0 %v2348, 32
      %v2635 = vpop.permute.xlu0 %2634
      %2636 = vrot.lane.b32.xlu0 %v2349, 32
      %v2637 = vpop.permute.xlu0 %2636
      %v2670 = vmul.f32 %v2255, %v2575
      %v2671 = vmul.f32 %v2257, %v2577
      %v2672 = vmul.f32 %v2259, %v2579
      %v2673 = vmul.f32 %v2261, %v2581
      %v2674 = vmul.f32 %v2263, %v2583
      %v2675 = vmul.f32 %v2265, %v2585
      %v2676 = vmul.f32 %v2267, %v2587
      %v2677 = vmul.f32 %v2269, %v2589
      %v2678 = vmul.f32 %v2271, %v2591
      %v2679 = vmul.f32 %v2273, %v2593
      %v2680 = vmul.f32 %v2275, %v2595
      %v2681 = vmul.f32 %v2277, %v2597
      %v2682 = vmul.f32 %v2279, %v2599
      %v2683 = vmul.f32 %v2281, %v2601
      %v2684 = vmul.f32 %v2283, %v2603
      %v2685 = vmul.f32 %v2285, %v2605
      %v2686 = vmul.f32 %v2287, %v2607
      %v2687 = vmul.f32 %v2289, %v2609
      %v2688 = vmul.f32 %v2291, %v2611
      %v2689 = vmul.f32 %v2293, %v2613
      %v2690 = vmul.f32 %v2295, %v2615
      %v2691 = vmul.f32 %v2297, %v2617
      %v2692 = vmul.f32 %v2299, %v2619
      %v2693 = vmul.f32 %v2301, %v2621
      %v2694 = vmul.f32 %v2303, %v2623
      %v2695 = vmul.f32 %v2305, %v2625
      %v2696 = vmul.f32 %v2307, %v2627
      %v2697 = vmul.f32 %v2309, %v2629
      %v2698 = vmul.f32 %v2311, %v2631
      %v2699 = vmul.f32 %v2313, %v2633
      %v2700 = vmul.f32 %v2315, %v2635
      %v2701 = vmul.f32 %v2317, %v2637
      %2734 = vrot.lane.b32.xlu0 %v2670, 32
      %v2735 = vpop.permute.xlu0 %2734
      %2736 = vrot.lane.b32.xlu0 %v2671, 32
      %v2737 = vpop.permute.xlu0 %2736
      %2738 = vrot.lane.b32.xlu0 %v2672, 32
      %v2739 = vpop.permute.xlu0 %2738
      %2740 = vrot.lane.b32.xlu0 %v2673, 32
      %v2741 = vpop.permute.xlu0 %2740
      %2742 = vrot.lane.b32.xlu0 %v2674, 32
      %v2743 = vpop.permute.xlu0 %2742
      %2744 = vrot.lane.b32.xlu0 %v2675, 32
      %v2745 = vpop.permute.xlu0 %2744
      %2746 = vrot.lane.b32.xlu0 %v2676, 32
      %v2747 = vpop.permute.xlu0 %2746
      %2748 = vrot.lane.b32.xlu0 %v2677, 32
      %v2749 = vpop.permute.xlu0 %2748
      %2750 = vrot.lane.b32.xlu0 %v2678, 32
      %v2751 = vpop.permute.xlu0 %2750
      %2752 = vrot.lane.b32.xlu0 %v2679, 32
      %v2753 = vpop.permute.xlu0 %2752
      %2754 = vrot.lane.b32.xlu0 %v2680, 32
      %v2755 = vpop.permute.xlu0 %2754
      %2756 = vrot.lane.b32.xlu0 %v2681, 32
      %v2757 = vpop.permute.xlu0 %2756
      %2758 = vrot.lane.b32.xlu0 %v2682, 32
      %v2759 = vpop.permute.xlu0 %2758
      %2760 = vrot.lane.b32.xlu0 %v2683, 32
      %v2761 = vpop.permute.xlu0 %2760
      %2762 = vrot.lane.b32.xlu0 %v2684, 32
      %v2763 = vpop.permute.xlu0 %2762
      %2764 = vrot.lane.b32.xlu0 %v2685, 32
      %v2765 = vpop.permute.xlu0 %2764
      %2766 = vrot.lane.b32.xlu0 %v2686, 32
      %v2767 = vpop.permute.xlu0 %2766
      %2768 = vrot.lane.b32.xlu0 %v2687, 32
      %v2769 = vpop.permute.xlu0 %2768
      %2770 = vrot.lane.b32.xlu0 %v2688, 32
      %v2771 = vpop.permute.xlu0 %2770
      %2772 = vrot.lane.b32.xlu0 %v2689, 32
      %v2773 = vpop.permute.xlu0 %2772
      %2774 = vrot.lane.b32.xlu0 %v2690, 32
      %v2775 = vpop.permute.xlu0 %2774
      %2776 = vrot.lane.b32.xlu0 %v2691, 32
      %v2777 = vpop.permute.xlu0 %2776
      %2778 = vrot.lane.b32.xlu0 %v2692, 32
      %v2779 = vpop.permute.xlu0 %2778
      %2780 = vrot.lane.b32.xlu0 %v2693, 32
      %v2781 = vpop.permute.xlu0 %2780
      %2782 = vrot.lane.b32.xlu0 %v2694, 32
      %v2783 = vpop.permute.xlu0 %2782
      %2784 = vrot.lane.b32.xlu0 %v2695, 32
      %v2785 = vpop.permute.xlu0 %2784
      %2786 = vrot.lane.b32.xlu0 %v2696, 32
      %v2787 = vpop.permute.xlu0 %2786
      %2788 = vrot.lane.b32.xlu0 %v2697, 32
      %v2789 = vpop.permute.xlu0 %2788
      %2790 = vrot.lane.b32.xlu0 %v2698, 32
      %v2791 = vpop.permute.xlu0 %2790
      %2792 = vrot.lane.b32.xlu0 %v2699, 32
      %v2793 = vpop.permute.xlu0 %2792
      %2794 = vrot.lane.b32.xlu0 %v2700, 32
      %v2795 = vpop.permute.xlu0 %2794
      %2796 = vrot.lane.b32.xlu0 %v2701, 32
      %v2797 = vpop.permute.xlu0 %2796
      %v2830 = vadd.f32 %v2510, %v2735
      %v2831 = vadd.f32 %v2511, %v2737
      %v2832 = vadd.f32 %v2512, %v2739
      %v2833 = vadd.f32 %v2513, %v2741
      %v2834 = vadd.f32 %v2514, %v2743
      %v2835 = vadd.f32 %v2515, %v2745
      %v2836 = vadd.f32 %v2516, %v2747
      %v2837 = vadd.f32 %v2517, %v2749
      %v2838 = vadd.f32 %v2518, %v2751
      %v2839 = vadd.f32 %v2519, %v2753
      %v2840 = vadd.f32 %v2520, %v2755
      %v2841 = vadd.f32 %v2521, %v2757
      %v2842 = vadd.f32 %v2522, %v2759
      %v2843 = vadd.f32 %v2523, %v2761
      %v2844 = vadd.f32 %v2524, %v2763
      %v2845 = vadd.f32 %v2525, %v2765
      %v2846 = vadd.f32 %v2526, %v2767
      %v2847 = vadd.f32 %v2527, %v2769
      %v2848 = vadd.f32 %v2528, %v2771
      %v2849 = vadd.f32 %v2529, %v2773
      %v2850 = vadd.f32 %v2530, %v2775
      %v2851 = vadd.f32 %v2531, %v2777
      %v2852 = vadd.f32 %v2532, %v2779
      %v2853 = vadd.f32 %v2533, %v2781
      %v2854 = vadd.f32 %v2534, %v2783
      %v2855 = vadd.f32 %v2535, %v2785
      %v2856 = vadd.f32 %v2536, %v2787
      %v2857 = vadd.f32 %v2537, %v2789
      %v2858 = vadd.f32 %v2538, %v2791
      %v2859 = vadd.f32 %v2539, %v2793
      %v2860 = vadd.f32 %v2540, %v2795
      %v2861 = vadd.f32 %v2541, %v2797
      %v2862 = vtanh.pop %v2830
      %v2863 = vtanh.pop %v2831
      %v2864 = vtanh.pop %v2832
      %v2865 = vtanh.pop %v2833
      %v2866 = vtanh.pop %v2834
      %v2867 = vtanh.pop %v2835
      %v2868 = vtanh.pop %v2836
      %v2869 = vtanh.pop %v2837
      %v2870 = vtanh.pop %v2838
      %v2871 = vtanh.pop %v2839
      %v2872 = vtanh.pop %v2840
      %v2873 = vtanh.pop %v2841
      %v2874 = vtanh.pop %v2842
      %v2875 = vtanh.pop %v2843
      %v2876 = vtanh.pop %v2844
      %v2877 = vtanh.pop %v2845
      %v2878 = vtanh.pop %v2846
      %v2879 = vtanh.pop %v2847
      %v2880 = vtanh.pop %v2848
      %v2881 = vtanh.pop %v2849
      %v2882 = vtanh.pop %v2850
      %v2883 = vtanh.pop %v2851
      %v2884 = vtanh.pop %v2852
      %v2885 = vtanh.pop %v2853
      %v2886 = vtanh.pop %v2854
      %v2887 = vtanh.pop %v2855
      %v2888 = vtanh.pop %v2856
      %v2889 = vtanh.pop %v2857
      %v2890 = vtanh.pop %v2858
      %v2891 = vtanh.pop %v2859
      %v2892 = vtanh.pop %v2860
      %v2893 = vtanh.pop %v2861
      %2926 = vrot.lane.b32.xlu0 %v2862, 32
      %v2927 = vpop.permute.xlu0 %2926
      %2928 = vrot.lane.b32.xlu0 %v2863, 32
      %v2929 = vpop.permute.xlu0 %2928
      %2930 = vrot.lane.b32.xlu0 %v2864, 32
      %v2931 = vpop.permute.xlu0 %2930
      %2932 = vrot.lane.b32.xlu0 %v2865, 32
      %v2933 = vpop.permute.xlu0 %2932
      %2934 = vrot.lane.b32.xlu0 %v2866, 32
      %v2935 = vpop.permute.xlu0 %2934
      %2936 = vrot.lane.b32.xlu0 %v2867, 32
      %v2937 = vpop.permute.xlu0 %2936
      %2938 = vrot.lane.b32.xlu0 %v2868, 32
      %v2939 = vpop.permute.xlu0 %2938
      %2940 = vrot.lane.b32.xlu0 %v2869, 32
      %v2941 = vpop.permute.xlu0 %2940
      %2942 = vrot.lane.b32.xlu0 %v2870, 32
      %v2943 = vpop.permute.xlu0 %2942
      %2944 = vrot.lane.b32.xlu0 %v2871, 32
      %v2945 = vpop.permute.xlu0 %2944
      %2946 = vrot.lane.b32.xlu0 %v2872, 32
      %v2947 = vpop.permute.xlu0 %2946
      %2948 = vrot.lane.b32.xlu0 %v2873, 32
      %v2949 = vpop.permute.xlu0 %2948
      %2950 = vrot.lane.b32.xlu0 %v2874, 32
      %v2951 = vpop.permute.xlu0 %2950
      %2952 = vrot.lane.b32.xlu0 %v2875, 32
      %v2953 = vpop.permute.xlu0 %2952
      %2954 = vrot.lane.b32.xlu0 %v2876, 32
      %v2955 = vpop.permute.xlu0 %2954
      %2956 = vrot.lane.b32.xlu0 %v2877, 32
      %v2957 = vpop.permute.xlu0 %2956
      %2958 = vrot.lane.b32.xlu0 %v2878, 32
      %v2959 = vpop.permute.xlu0 %2958
      %2960 = vrot.lane.b32.xlu0 %v2879, 32
      %v2961 = vpop.permute.xlu0 %2960
      %2962 = vrot.lane.b32.xlu0 %v2880, 32
      %v2963 = vpop.permute.xlu0 %2962
      %2964 = vrot.lane.b32.xlu0 %v2881, 32
      %v2965 = vpop.permute.xlu0 %2964
      %2966 = vrot.lane.b32.xlu0 %v2882, 32
      %v2967 = vpop.permute.xlu0 %2966
      %2968 = vrot.lane.b32.xlu0 %v2883, 32
      %v2969 = vpop.permute.xlu0 %2968
      %2970 = vrot.lane.b32.xlu0 %v2884, 32
      %v2971 = vpop.permute.xlu0 %2970
      %2972 = vrot.lane.b32.xlu0 %v2885, 32
      %v2973 = vpop.permute.xlu0 %2972
      %2974 = vrot.lane.b32.xlu0 %v2886, 32
      %v2975 = vpop.permute.xlu0 %2974
      %2976 = vrot.lane.b32.xlu0 %v2887, 32
      %v2977 = vpop.permute.xlu0 %2976
      %2978 = vrot.lane.b32.xlu0 %v2888, 32
      %v2979 = vpop.permute.xlu0 %2978
      %2980 = vrot.lane.b32.xlu0 %v2889, 32
      %v2981 = vpop.permute.xlu0 %2980
      %2982 = vrot.lane.b32.xlu0 %v2890, 32
      %v2983 = vpop.permute.xlu0 %2982
      %2984 = vrot.lane.b32.xlu0 %v2891, 32
      %v2985 = vpop.permute.xlu0 %2984
      %2986 = vrot.lane.b32.xlu0 %v2892, 32
      %v2987 = vpop.permute.xlu0 %2986
      %2988 = vrot.lane.b32.xlu0 %v2893, 32
      %v2989 = vpop.permute.xlu0 %2988
      %v3022 = vmul.f32 %v2255, %v2927
      %v3023 = vmul.f32 %v2257, %v2929
      %v3024 = vmul.f32 %v2259, %v2931
      %v3025 = vmul.f32 %v2261, %v2933
      %v3026 = vmul.f32 %v2263, %v2935
      %v3027 = vmul.f32 %v2265, %v2937
      %v3028 = vmul.f32 %v2267, %v2939
      %v3029 = vmul.f32 %v2269, %v2941
      %v3030 = vmul.f32 %v2271, %v2943
      %v3031 = vmul.f32 %v2273, %v2945
      %v3032 = vmul.f32 %v2275, %v2947
      %v3033 = vmul.f32 %v2277, %v2949
      %v3034 = vmul.f32 %v2279, %v2951
      %v3035 = vmul.f32 %v2281, %v2953
      %v3036 = vmul.f32 %v2283, %v2955
      %v3037 = vmul.f32 %v2285, %v2957
      %v3038 = vmul.f32 %v2287, %v2959
      %v3039 = vmul.f32 %v2289, %v2961
      %v3040 = vmul.f32 %v2291, %v2963
      %v3041 = vmul.f32 %v2293, %v2965
      %v3042 = vmul.f32 %v2295, %v2967
      %v3043 = vmul.f32 %v2297, %v2969
      %v3044 = vmul.f32 %v2299, %v2971
      %v3045 = vmul.f32 %v2301, %v2973
      %v3046 = vmul.f32 %v2303, %v2975
      %v3047 = vmul.f32 %v2305, %v2977
      %v3048 = vmul.f32 %v2307, %v2979
      %v3049 = vmul.f32 %v2309, %v2981
      %v3050 = vmul.f32 %v2311, %v2983
      %v3051 = vmul.f32 %v2313, %v2985
      %v3052 = vmul.f32 %v2315, %v2987
      %v3053 = vmul.f32 %v2317, %v2989
      %3086 = vrot.lane.b32.xlu0 %v3022, 64
      %v3087 = vpop.permute.xlu0 %3086
      %3088 = vrot.lane.b32.xlu0 %v3023, 64
      %v3089 = vpop.permute.xlu0 %3088
      %3090 = vrot.lane.b32.xlu0 %v3024, 64
      %v3091 = vpop.permute.xlu0 %3090
      %3092 = vrot.lane.b32.xlu0 %v3025, 64
      %v3093 = vpop.permute.xlu0 %3092
      %3094 = vrot.lane.b32.xlu0 %v3026, 64
      %v3095 = vpop.permute.xlu0 %3094
      %3096 = vrot.lane.b32.xlu0 %v3027, 64
      %v3097 = vpop.permute.xlu0 %3096
      %3098 = vrot.lane.b32.xlu0 %v3028, 64
      %v3099 = vpop.permute.xlu0 %3098
      %3100 = vrot.lane.b32.xlu0 %v3029, 64
      %v3101 = vpop.permute.xlu0 %3100
      %3102 = vrot.lane.b32.xlu0 %v3030, 64
      %v3103 = vpop.permute.xlu0 %3102
      %3104 = vrot.lane.b32.xlu0 %v3031, 64
      %v3105 = vpop.permute.xlu0 %3104
      %3106 = vrot.lane.b32.xlu0 %v3032, 64
      %v3107 = vpop.permute.xlu0 %3106
      %3108 = vrot.lane.b32.xlu0 %v3033, 64
      %v3109 = vpop.permute.xlu0 %3108
      %3110 = vrot.lane.b32.xlu0 %v3034, 64
      %v3111 = vpop.permute.xlu0 %3110
      %3112 = vrot.lane.b32.xlu0 %v3035, 64
      %v3113 = vpop.permute.xlu0 %3112
      %3114 = vrot.lane.b32.xlu0 %v3036, 64
      %v3115 = vpop.permute.xlu0 %3114
      %3116 = vrot.lane.b32.xlu0 %v3037, 64
      %v3117 = vpop.permute.xlu0 %3116
      %3118 = vrot.lane.b32.xlu0 %v3038, 64
      %v3119 = vpop.permute.xlu0 %3118
      %3120 = vrot.lane.b32.xlu0 %v3039, 64
      %v3121 = vpop.permute.xlu0 %3120
      %3122 = vrot.lane.b32.xlu0 %v3040, 64
      %v3123 = vpop.permute.xlu0 %3122
      %3124 = vrot.lane.b32.xlu0 %v3041, 64
      %v3125 = vpop.permute.xlu0 %3124
      %3126 = vrot.lane.b32.xlu0 %v3042, 64
      %v3127 = vpop.permute.xlu0 %3126
      %3128 = vrot.lane.b32.xlu0 %v3043, 64
      %v3129 = vpop.permute.xlu0 %3128
      %3130 = vrot.lane.b32.xlu0 %v3044, 64
      %v3131 = vpop.permute.xlu0 %3130
      %3132 = vrot.lane.b32.xlu0 %v3045, 64
      %v3133 = vpop.permute.xlu0 %3132
      %3134 = vrot.lane.b32.xlu0 %v3046, 64
      %v3135 = vpop.permute.xlu0 %3134
      %3136 = vrot.lane.b32.xlu0 %v3047, 64
      %v3137 = vpop.permute.xlu0 %3136
      %3138 = vrot.lane.b32.xlu0 %v3048, 64
      %v3139 = vpop.permute.xlu0 %3138
      %3140 = vrot.lane.b32.xlu0 %v3049, 64
      %v3141 = vpop.permute.xlu0 %3140
      %3142 = vrot.lane.b32.xlu0 %v3050, 64
      %v3143 = vpop.permute.xlu0 %3142
      %3144 = vrot.lane.b32.xlu0 %v3051, 64
      %v3145 = vpop.permute.xlu0 %3144
      %3146 = vrot.lane.b32.xlu0 %v3052, 64
      %v3147 = vpop.permute.xlu0 %3146
      %3148 = vrot.lane.b32.xlu0 %v3053, 64
      %v3149 = vpop.permute.xlu0 %3148
      %vm3182 = vcmask 261120
      %v3183 = vsel %vm3182, %v3087, %v2830
      %v3184 = vsel %vm3182, %v3089, %v2831
      %v3185 = vsel %vm3182, %v3091, %v2832
      %v3186 = vsel %vm3182, %v3093, %v2833
      %v3187 = vsel %vm3182, %v3095, %v2834
      %v3188 = vsel %vm3182, %v3097, %v2835
      %v3189 = vsel %vm3182, %v3099, %v2836
      %v3190 = vsel %vm3182, %v3101, %v2837
      %v3191 = vsel %vm3182, %v3103, %v2838
      %v3192 = vsel %vm3182, %v3105, %v2839
      %v3193 = vsel %vm3182, %v3107, %v2840
      %v3194 = vsel %vm3182, %v3109, %v2841
      %v3195 = vsel %vm3182, %v3111, %v2842
      %v3196 = vsel %vm3182, %v3113, %v2843
      %v3197 = vsel %vm3182, %v3115, %v2844
      %v3198 = vsel %vm3182, %v3117, %v2845
      %v3199 = vsel %vm3182, %v3119, %v2846
      %v3200 = vsel %vm3182, %v3121, %v2847
      %v3201 = vsel %vm3182, %v3123, %v2848
      %v3202 = vsel %vm3182, %v3125, %v2849
      %v3203 = vsel %vm3182, %v3127, %v2850
      %v3204 = vsel %vm3182, %v3129, %v2851
      %v3205 = vsel %vm3182, %v3131, %v2852
      %v3206 = vsel %vm3182, %v3133, %v2853
      %v3207 = vsel %vm3182, %v3135, %v2854
      %v3208 = vsel %vm3182, %v3137, %v2855
      %v3209 = vsel %vm3182, %v3139, %v2856
      %v3210 = vsel %vm3182, %v3141, %v2857
      %v3211 = vsel %vm3182, %v3143, %v2858
      %v3212 = vsel %vm3182, %v3145, %v2859
      %v3213 = vsel %vm3182, %v3147, %v2860
      %v3214 = vsel %vm3182, %v3149, %v2861
      %vm3215 = vcmask 523264
      %3216 = vst.msk [vmem:[%s246] sm:$0xff] %vm3215, %v3183
      %3217 = vst.msk [vmem:[%s246 + $0x8] sm:$0xff] %vm3215, %v3184
      %3218 = vst.msk [vmem:[%s246 + $0x10] sm:$0xff] %vm3215, %v3185
      %3219 = vst.msk [vmem:[%s246 + $0x18] sm:$0xff] %vm3215, %v3186
      %3220 = vst.msk [vmem:[%s246 + $0x20] sm:$0xff] %vm3215, %v3187
      %3221 = vst.msk [vmem:[%s246 + $0x28] sm:$0xff] %vm3215, %v3188
      %3222 = vst.msk [vmem:[%s246 + $0x30] sm:$0xff] %vm3215, %v3189
      %3223 = vst.msk [vmem:[%s246 + $0x38] sm:$0xff] %vm3215, %v3190
      %3224 = vst.msk [vmem:[%s246 + $0x40] sm:$0xff] %vm3215, %v3191
      %3225 = vst.msk [vmem:[%s246 + $0x48] sm:$0xff] %vm3215, %v3192
      %3226 = vst.msk [vmem:[%s246 + $0x50] sm:$0xff] %vm3215, %v3193
      %3227 = vst.msk [vmem:[%s246 + $0x58] sm:$0xff] %vm3215, %v3194
      %3228 = vst.msk [vmem:[%s246 + $0x60] sm:$0xff] %vm3215, %v3195
      %3229 = vst.msk [vmem:[%s246 + $0x68] sm:$0xff] %vm3215, %v3196
      %3230 = vst.msk [vmem:[%s246 + $0x70] sm:$0xff] %vm3215, %v3197
      %3231 = vst.msk [vmem:[%s246 + $0x78] sm:$0xff] %vm3215, %v3198
      %3232 = vst.msk [vmem:[%s246 + $0x80] sm:$0xff] %vm3215, %v3199
      %3233 = vst.msk [vmem:[%s246 + $0x88] sm:$0xff] %vm3215, %v3200
      %3234 = vst.msk [vmem:[%s246 + $0x90] sm:$0xff] %vm3215, %v3201
      %3235 = vst.msk [vmem:[%s246 + $0x98] sm:$0xff] %vm3215, %v3202
      %3236 = vst.msk [vmem:[%s246 + $0xa0] sm:$0xff] %vm3215, %v3203
      %3237 = vst.msk [vmem:[%s246 + $0xa8] sm:$0xff] %vm3215, %v3204
      %3238 = vst.msk [vmem:[%s246 + $0xb0] sm:$0xff] %vm3215, %v3205
      %3239 = vst.msk [vmem:[%s246 + $0xb8] sm:$0xff] %vm3215, %v3206
      %3240 = vst.msk [vmem:[%s246 + $0xc0] sm:$0xff] %vm3215, %v3207
      %3241 = vst.msk [vmem:[%s246 + $0xc8] sm:$0xff] %vm3215, %v3208
      %3242 = vst.msk [vmem:[%s246 + $0xd0] sm:$0xff] %vm3215, %v3209
      %3243 = vst.msk [vmem:[%s246 + $0xd8] sm:$0xff] %vm3215, %v3210
      %3244 = vst.msk [vmem:[%s246 + $0xe0] sm:$0xff] %vm3215, %v3211
      %3245 = vst.msk [vmem:[%s246 + $0xe8] sm:$0xff] %vm3215, %v3212
      %3246 = vst.msk [vmem:[%s246 + $0xf0] sm:$0xff] %vm3215, %v3213
      %3247 = vst.msk [vmem:[%s246 + $0xf8] sm:$0xff] %vm3215, %v3214
      %s3248 = smul.u32 32, %s15
      %p3249 = scmp.lt.s32.totalorder %s3248, 63
      %s3250 = scalar_select %p3249, %s3248, 63
      %s3251 = smul.addr %s3250, 8
      %s3252 = scalar_lea.vmem %s4, %s3251
      // Predicated region
      $region37: #{closed_call.20} parent=35 // pred_check
        %p3253 = pneg %p132
      $region38: #{closed_call.20} parent=35 // pred_check_branch
        %3255 = sbr.rel (%p3253) target = $region40
      $region39: #{closed_call.20} parent=35 // pred_region
        %s3256 = smul.u32 32, %s15
      $region40: #{closed_call.20} parent=35 // pred_fallthru
        _
    $region36: #{closed_call.20} parent=5 // pred_fallthru
      _
    %p3257 = scmp.le.s32.totalorder 2, %s10
    // Predicated region
    $region41: #{closed_call.20} parent=5 // pred_check
      %p3258 = pneg %p3257
    $region42: #{closed_call.20} parent=5 // pred_check_branch
      %3260 = sbr.rel (%p3258) target = $region44
    $region43: #{closed_call.20} parent=5 // pred_region
      %s3261 = ssub.s32 %s10, 2
      // Predicated region
      $region45: #{closed_call.20} parent=43 // pred_check
        %p3262 = pneg %p138
      $region46: #{closed_call.20} parent=43 // pred_check_branch
        %3264 = sbr.rel (%p3262) target = $region48
      $region47: #{closed_call.20} parent=43 // pred_region
        %s3265 = smul.u32 32, %s16
        %p3266 = scmp.lt.s32.totalorder %s3265, 63
        %s3267 = scalar_select %p3266, %s3265, 63
        %s3268 = smul.addr %s3267, 8
        %s3269 = scalar_lea.vmem %s4, %s3268
      $region48: #{closed_call.20} parent=43 // pred_fallthru
        _
    $region44: #{closed_call.20} parent=5 // pred_fallthru
      _
  $region6: #{closed_call.20} parent=0 // loop_footer
    %s14 = sadd.s32 1, %s10
  $region7: #{closed_call.20} parent=0 // loop_footer_branch
    %9 = sbr.rel target = $region3
  $region8: #{closed_call.20} parent=0 // loop_exit
    _

// kernel: custom-call.1
$region0: #{custom-call.1}
  %s0 = inlined_call_operand.hbm [shape: f32[8,2,4,8,8,32], index: 0, kind: output, shape index: {}]

// kernel: convlstm3d_forward.3
$region0: #{convlstm3d_forward.3}
  #allocation0 [shape = 'u32[]', space=smem, size = 0x4, offset = 0x4, fixed_abs, tag = 'smem constant byte address 0x4 - core index']
  #allocation1 [shape = 'u32[144,128]{1,0:T(1,128)}', space=vmem, size = 0x12000, scoped, tag = 'internal scratch']
  %s0 = inlined_call_operand.vmem [shape: bf16[4096,864], index: 0, kind: input, shape index: {}]
  %s1 = inlined_call_operand.vmem [shape: bf16[864,128], index: 1, kind: input, shape index: {}]
  %s2 = inlined_call_operand.vmem [shape: f32[1,128], index: 2, kind: input, shape index: {}]
  %s3 = inlined_call_operand.vmem [shape: f32[4096,128], index: 3, kind: output, shape index: {}]
  %s4 = sld [smem:[#allocation0]]
  $region45: #{convlstm3d_forward.3} parent=0
    _
  %s6 = ssub.s32 1, %s4
  %s7 = scalar_select 0, %s6, %s4
  loop: start=0, step=1, limit=10
  $region2: #{convlstm3d_forward.3} parent=0 // loop_pre_header
    _
  $region3: #{convlstm3d_forward.3} parent=0 // loop_header
    %s9 = sphi 0, %s13
    %p10 = scmp.ge.s32.totalorder %s9, 10
    %s19 = sphi 0, %s21
    %s22 = sphi 0, %s19
    %s23 = sphi 0, %s22
    %s39 = sphi 0, %s23
    %s43 = sphi 0, %s43
    %s45 = sphi 0, %s43
    %s46 = sphi 0, %s45
    %s60 = sphi 0, %s46
    %s64 = sphi 0, %s64
    %s66 = sphi 0, %s64
    %s67 = sphi 0, %s66
    %s81 = sphi 0, %s67
    %s87 = sphi 0, %s89
    %s90 = sphi 0, %s87
    %s91 = sphi 0, %s90
    %s107 = sphi 0, %s91
  $region4: #{convlstm3d_forward.3} parent=0 // loop_header_branch
    %12 = sbr.rel (%p10) target = $region8
  $region5: #{convlstm3d_forward.3} parent=0 // loop_body
    %s14 = ssub.s32 %s9, 1
    %s15 = ssub.s32 %s9, 2
    %s16 = sadd.s32 %s9, 1
    %s17 = ssub.s32 %s9, %s16
    %p18 = scmp.eq.s32.totalorder %s17, 0
    %s20 = sadd.s32 %s19, 1
    %s21 = scalar_select %p18, %s19, %s20
    %p24 = pneg %p18
    %p25 = scmp.eq.s32.totalorder %s9, 7
    %p26 = por %p24, %p25
    %p27 = scmp.ne.s32.totalorder %s19, %s22
    %p28 = scmp.eq.s32.totalorder %s9, 0
    %p29 = por %p27, %p28
    %p30 = scmp.ne.s32.totalorder %s19, %s22
    %p31 = scmp.eq.s32.totalorder %s14, 7
    %p32 = por %p30, %p31
    %p33 = scmp.ne.s32.totalorder %s22, %s23
    %p34 = scmp.eq.s32.totalorder %s14, 0
    %p35 = por %p33, %p34
    %p36 = scmp.ne.s32.totalorder %s22, %s23
    %p37 = scmp.eq.s32.totalorder %s15, 7
    %p38 = por %p36, %p37
    %p40 = scmp.ne.s32.totalorder %s23, %s39
    %p41 = scmp.eq.s32.totalorder %s15, 0
    %p42 = por %p40, %p41
    %s44 = sadd.s32 %s43, 1
    %p47 = scmp.eq.s32.totalorder %s9, 7
    %p48 = scmp.ne.s32.totalorder %s43, %s45
    %p49 = scmp.eq.s32.totalorder %s9, 0
    %p50 = por %p48, %p49
    %p51 = scmp.ne.s32.totalorder %s43, %s45
    %p52 = scmp.eq.s32.totalorder %s14, 7
    %p53 = por %p51, %p52
    %p54 = scmp.ne.s32.totalorder %s45, %s46
    %p55 = scmp.eq.s32.totalorder %s14, 0
    %p56 = por %p54, %p55
    %p57 = scmp.ne.s32.totalorder %s45, %s46
    %p58 = scmp.eq.s32.totalorder %s15, 7
    %p59 = por %p57, %p58
    %p61 = scmp.ne.s32.totalorder %s46, %s60
    %p62 = scmp.eq.s32.totalorder %s15, 0
    %p63 = por %p61, %p62
    %s65 = sadd.s32 %s64, 1
    %p68 = scmp.eq.s32.totalorder %s9, 7
    %p69 = scmp.ne.s32.totalorder %s64, %s66
    %p70 = scmp.eq.s32.totalorder %s9, 0
    %p71 = por %p69, %p70
    %p72 = scmp.ne.s32.totalorder %s64, %s66
    %p73 = scmp.eq.s32.totalorder %s14, 7
    %p74 = por %p72, %p73
    %p75 = scmp.ne.s32.totalorder %s66, %s67
    %p76 = scmp.eq.s32.totalorder %s14, 0
    %p77 = por %p75, %p76
    %p78 = scmp.ne.s32.totalorder %s66, %s67
    %p79 = scmp.eq.s32.totalorder %s15, 7
    %p80 = por %p78, %p79
    %p82 = scmp.ne.s32.totalorder %s67, %s81
    %p83 = scmp.eq.s32.totalorder %s15, 0
    %p84 = por %p82, %p83
    %s85 = ssub.s32 %s9, %s16
    %p86 = scmp.eq.s32.totalorder %s85, 0
    %s88 = sadd.s32 %s87, 1
    %s89 = scalar_select %p86, %s87, %s88
    %p92 = pneg %p86
    %p93 = scmp.eq.s32.totalorder %s9, 7
    %p94 = por %p92, %p93
    %p95 = scmp.ne.s32.totalorder %s87, %s90
    %p96 = scmp.eq.s32.totalorder %s9, 0
    %p97 = por %p95, %p96
    %p98 = scmp.ne.s32.totalorder %s87, %s90
    %p99 = scmp.eq.s32.totalorder %s14, 7
    %p100 = por %p98, %p99
    %p101 = scmp.ne.s32.totalorder %s90, %s91
    %p102 = scmp.eq.s32.totalorder %s14, 0
    %p103 = por %p101, %p102
    %p104 = scmp.ne.s32.totalorder %s90, %s91
    %p105 = scmp.eq.s32.totalorder %s15, 7
    %p106 = por %p104, %p105
    %p108 = scmp.ne.s32.totalorder %s91, %s107
    %p109 = scmp.eq.s32.totalorder %s15, 0
    %p110 = por %p108, %p109
    %p111 = scmp.le.s32.totalorder 1, %s9
    %p112 = scmp.lt.s32.totalorder %s9, 9
    %p113 = pnand %p111, %p112
    %p114 = pneg %p113
    // Predicated region
    $region9: #{convlstm3d_forward.3} parent=5 // pred_check
      _
    $region10: #{convlstm3d_forward.3} parent=5 // pred_check_branch
      %116 = sbr.rel (%p113) target = $region12
    $region11: #{convlstm3d_forward.3} parent=5 // pred_region
      %s117 = ssub.s32 %s9, 1
      // Predicated region
      $region13: #{convlstm3d_forward.3} parent=11 // pred_check
        %p118 = pneg %p56
      $region14: #{convlstm3d_forward.3} parent=11 // pred_check_branch
        %120 = sbr.rel (%p118) target = $region16
      $region15: #{convlstm3d_forward.3} parent=11 // pred_region
        _
      $region16: #{convlstm3d_forward.3} parent=11 // pred_fallthru
        _
      // Predicated region
      $region17: #{convlstm3d_forward.3} parent=11 // pred_check
        %p121 = pneg %p77
      $region18: #{convlstm3d_forward.3} parent=11 // pred_check_branch
        %123 = sbr.rel (%p121) target = $region20
      $region19: #{convlstm3d_forward.3} parent=11 // pred_region
        _
      $region20: #{convlstm3d_forward.3} parent=11 // pred_fallthru
        _
    $region12: #{convlstm3d_forward.3} parent=5 // pred_fallthru
      _
    %p124 = scmp.lt.s32.totalorder %s9, 8
    // Predicated region
    $region21: #{convlstm3d_forward.3} parent=5 // pred_check
      %p125 = pneg %p124
    $region22: #{convlstm3d_forward.3} parent=5 // pred_check_branch
      %127 = sbr.rel (%p125) target = $region24
    $region23: #{convlstm3d_forward.3} parent=5 // pred_region
      // Predicated region
      $region25: #{convlstm3d_forward.3} parent=23 // pred_check
        %p128 = pneg %p29
      $region26: #{convlstm3d_forward.3} parent=23 // pred_check_branch
        %130 = sbr.rel (%p128) target = $region28
      $region27: #{convlstm3d_forward.3} parent=23 // pred_region
        %s131 = smul.u32 64, %s9
        %p132 = scmp.lt.s32.totalorder %s131, 511
        %s133 = scalar_select %p132, %s131, 511
        %s134 = smul.addr %s133, 7
        %s135 = smul.addr %s134, 4
        %s136 = scalar_lea.vmem %s0, %s135
        %s137 = smul.u32 64, %s9
      $region28: #{convlstm3d_forward.3} parent=23 // pred_fallthru
        _
    $region24: #{convlstm3d_forward.3} parent=5 // pred_fallthru
      _
    %p138 = scmp.le.s32.totalorder 1, %s9
    %p139 = scmp.lt.s32.totalorder %s9, 9
    %p140 = pnand %p138, %p139
    %p141 = pneg %p140
    // Predicated region
    $region29: #{convlstm3d_forward.3} parent=5 // pred_check
      _
    $region30: #{convlstm3d_forward.3} parent=5 // pred_check_branch
      %143 = sbr.rel (%p140) target = $region32
    $region31: #{convlstm3d_forward.3} parent=5 // pred_region
      %s144 = ssub.s32 %s9, 1
      %s145 = smul.u32 64, %s14
      %p146 = scmp.lt.s32.totalorder %s145, 511
      %s147 = scalar_select %p146, %s145, 511
      %s148 = smul.addr %s147, 7
      %s149 = smul.addr %s148, 4
      %s150 = scalar_lea.vmem %s0, %s149
      %p151 = pneg %p35
      %p152 = pneg %p32
      %p153 = pneg %p56
      %p154 = pneg %p53
      %p155 = pneg %p77
      %p156 = pneg %p74
      %p157 = pneg %p103
      %p158 = pneg %p100
      %s159 = smul.u32 64, %s14
      %p160 = scmp.lt.s32.totalorder %s159, 511
      %s161 = scalar_select %p160, %s159, 511
      %s162 = smul.addr %s161, 8
      %s163 = scalar_lea.vmem %s3, %s162
      %s164 = smul.u32 64, %s14
      %p165 = scmp.lt.s32.totalorder %s164, 511
      %s166 = scalar_select %p165, %s164, 511
      %s167 = smul.addr %s166, 7
      %s168 = smul.addr %s167, 4
      %s169 = scalar_lea.vmem %s0, %s168
      %s170 = smul.u32 64, %s14
      %s171 = smul.u32 64, %s14
      %p172 = scmp.lt.s32.totalorder %s171, 511
      %s173 = scalar_select %p172, %s171, 511
      %s174 = smul.addr %s173, 8
      %s175 = scalar_lea.vmem %s3, %s174
      %s176 = smul.u32 64, %s14
      %v178 = vld [vmem:[%s169] sm:$0xff]
      %v179 = vld [vmem:[%s169 + $0x8] sm:$0xff]
      %v180 = vld [vmem:[%s169 + $0x10] sm:$0xff]
      %v181 = vld [vmem:[%s169 + $0x18] sm:$0xf]
      %v182 = vld [vmem:[%s169 + $0x1c] sm:$0xff]
      %v183 = vld [vmem:[%s169 + $0x24] sm:$0xff]
      %v184 = vld [vmem:[%s169 + $0x2c] sm:$0xff]
      %v185 = vld [vmem:[%s169 + $0x34] sm:$0xf]
      %v186 = vld [vmem:[%s169 + $0x38] sm:$0xff]
      %v187 = vld [vmem:[%s169 + $0x40] sm:$0xff]
      %v188 = vld [vmem:[%s169 + $0x48] sm:$0xff]
      %v189 = vld [vmem:[%s169 + $0x50] sm:$0xf]
      %v190 = vld [vmem:[%s169 + $0x54] sm:$0xff]
      %v191 = vld [vmem:[%s169 + $0x5c] sm:$0xff]
      %v192 = vld [vmem:[%s169 + $0x64] sm:$0xff]
      %v193 = vld [vmem:[%s169 + $0x6c] sm:$0xf]
      %v194 = vld [vmem:[%s169 + $0x70] sm:$0xff]
      %v195 = vld [vmem:[%s169 + $0x78] sm:$0xff]
      %v196 = vld [vmem:[%s169 + $0x80] sm:$0xff]
      %v197 = vld [vmem:[%s169 + $0x88] sm:$0xf]
      %v198 = vld [vmem:[%s169 + $0x8c] sm:$0xff]
      %v199 = vld [vmem:[%s169 + $0x94] sm:$0xff]
      %v200 = vld [vmem:[%s169 + $0x9c] sm:$0xff]
      %v201 = vld [vmem:[%s169 + $0xa4] sm:$0xf]
      %v202 = vld [vmem:[%s169 + $0xa8] sm:$0xff]
      %v203 = vld [vmem:[%s169 + $0xb0] sm:$0xff]
      %v204 = vld [vmem:[%s169 + $0xb8] sm:$0xff]
      %v205 = vld [vmem:[%s169 + $0xc0] sm:$0xf]
      %v206 = vld [vmem:[%s169 + $0xc4] sm:$0xff]
      %v207 = vld [vmem:[%s169 + $0xcc] sm:$0xff]
      %v208 = vld [vmem:[%s169 + $0xd4] sm:$0xff]
      %v209 = vld [vmem:[%s169 + $0xdc] sm:$0xf]
      %v210 = vld [vmem:[%s169 + $0xe0] sm:$0xff]
      %v211 = vld [vmem:[%s169 + $0xe8] sm:$0xff]
      %v212 = vld [vmem:[%s169 + $0xf0] sm:$0xff]
      %v213 = vld [vmem:[%s169 + $0xf8] sm:$0xf]
      %v214 = vld [vmem:[%s169 + $0xfc] sm:$0xff]
      %v215 = vld [vmem:[%s169 + $0x104] sm:$0xff]
      %v216 = vld [vmem:[%s169 + $0x10c] sm:$0xff]
      %v217 = vld [vmem:[%s169 + $0x114] sm:$0xf]
      %v218 = vld [vmem:[%s169 + $0x118] sm:$0xff]
      %v219 = vld [vmem:[%s169 + $0x120] sm:$0xff]
      %v220 = vld [vmem:[%s169 + $0x128] sm:$0xff]
      %v221 = vld [vmem:[%s169 + $0x130] sm:$0xf]
      %v222 = vld [vmem:[%s169 + $0x134] sm:$0xff]
      %v223 = vld [vmem:[%s169 + $0x13c] sm:$0xff]
      %v224 = vld [vmem:[%s169 + $0x144] sm:$0xff]
      %v225 = vld [vmem:[%s169 + $0x14c] sm:$0xf]
      %v226 = vld [vmem:[%s169 + $0x150] sm:$0xff]
      %v227 = vld [vmem:[%s169 + $0x158] sm:$0xff]
      %v228 = vld [vmem:[%s169 + $0x160] sm:$0xff]
      %v229 = vld [vmem:[%s169 + $0x168] sm:$0xf]
      %v230 = vld [vmem:[%s169 + $0x16c] sm:$0xff]
      %v231 = vld [vmem:[%s169 + $0x174] sm:$0xff]
      %v232 = vld [vmem:[%s169 + $0x17c] sm:$0xff]
      %v233 = vld [vmem:[%s169 + $0x184] sm:$0xf]
      %v234 = vld [vmem:[%s169 + $0x188] sm:$0xff]
      %v235 = vld [vmem:[%s169 + $0x190] sm:$0xff]
      %v236 = vld [vmem:[%s169 + $0x198] sm:$0xff]
      %v237 = vld [vmem:[%s169 + $0x1a0] sm:$0xf]
      %v238 = vld [vmem:[%s169 + $0x1a4] sm:$0xff]
      %v239 = vld [vmem:[%s169 + $0x1ac] sm:$0xff]
      %v240 = vld [vmem:[%s169 + $0x1b4] sm:$0xff]
      %v241 = vld [vmem:[%s169 + $0x1bc] sm:$0xf]
      %v242 = vld [vmem:[%s169 + $0x1c0] sm:$0xff]
      %v243 = vld [vmem:[%s169 + $0x1c8] sm:$0xff]
      %v244 = vld [vmem:[%s169 + $0x1d0] sm:$0xff]
      %v245 = vld [vmem:[%s169 + $0x1d8] sm:$0xf]
      %v246 = vld [vmem:[%s169 + $0x1dc] sm:$0xff]
      %v247 = vld [vmem:[%s169 + $0x1e4] sm:$0xff]
      %v248 = vld [vmem:[%s169 + $0x1ec] sm:$0xff]
      %v249 = vld [vmem:[%s169 + $0x1f4] sm:$0xf]
      %v250 = vld [vmem:[%s169 + $0x1f8] sm:$0xff]
      %v251 = vld [vmem:[%s169 + $0x200] sm:$0xff]
      %v252 = vld [vmem:[%s169 + $0x208] sm:$0xff]
      %v253 = vld [vmem:[%s169 + $0x210] sm:$0xf]
      %v254 = vld [vmem:[%s169 + $0x214] sm:$0xff]
      %v255 = vld [vmem:[%s169 + $0x21c] sm:$0xff]
      %v256 = vld [vmem:[%s169 + $0x224] sm:$0xff]
      %v257 = vld [vmem:[%s169 + $0x22c] sm:$0xf]
      %v258 = vld [vmem:[%s169 + $0x230] sm:$0xff]
      %v259 = vld [vmem:[%s169 + $0x238] sm:$0xff]
      %v260 = vld [vmem:[%s169 + $0x240] sm:$0xff]
      %v261 = vld [vmem:[%s169 + $0x248] sm:$0xf]
      %v262 = vld [vmem:[%s169 + $0x24c] sm:$0xff]
      %v263 = vld [vmem:[%s169 + $0x254] sm:$0xff]
      %v264 = vld [vmem:[%s169 + $0x25c] sm:$0xff]
      %v265 = vld [vmem:[%s169 + $0x264] sm:$0xf]
      %v266 = vld [vmem:[%s169 + $0x268] sm:$0xff]
      %v267 = vld [vmem:[%s169 + $0x270] sm:$0xff]
      %v268 = vld [vmem:[%s169 + $0x278] sm:$0xff]
      %v269 = vld [vmem:[%s169 + $0x280] sm:$0xf]
      %v270 = vld [vmem:[%s169 + $0x284] sm:$0xff]
      %v271 = vld [vmem:[%s169 + $0x28c] sm:$0xff]
      %v272 = vld [vmem:[%s169 + $0x294] sm:$0xff]
      %v273 = vld [vmem:[%s169 + $0x29c] sm:$0xf]
      %v274 = vld [vmem:[%s169 + $0x2a0] sm:$0xff]
      %v275 = vld [vmem:[%s169 + $0x2a8] sm:$0xff]
      %v276 = vld [vmem:[%s169 + $0x2b0] sm:$0xff]
      %v277 = vld [vmem:[%s169 + $0x2b8] sm:$0xf]
      %v278 = vld [vmem:[%s169 + $0x2bc] sm:$0xff]
      %v279 = vld [vmem:[%s169 + $0x2c4] sm:$0xff]
      %v280 = vld [vmem:[%s169 + $0x2cc] sm:$0xff]
      %v281 = vld [vmem:[%s169 + $0x2d4] sm:$0xf]
      %v282 = vld [vmem:[%s169 + $0x2d8] sm:$0xff]
      %v283 = vld [vmem:[%s169 + $0x2e0] sm:$0xff]
      %v284 = vld [vmem:[%s169 + $0x2e8] sm:$0xff]
      %v285 = vld [vmem:[%s169 + $0x2f0] sm:$0xf]
      %v286 = vld [vmem:[%s169 + $0x2f4] sm:$0xff]
      %v287 = vld [vmem:[%s169 + $0x2fc] sm:$0xff]
      %v288 = vld [vmem:[%s169 + $0x304] sm:$0xff]
      %v289 = vld [vmem:[%s169 + $0x30c] sm:$0xf]
      %v290 = vld [vmem:[%s169 + $0x310] sm:$0xff]
      %v291 = vld [vmem:[%s169 + $0x318] sm:$0xff]
      %v292 = vld [vmem:[%s169 + $0x320] sm:$0xff]
      %v293 = vld [vmem:[%s169 + $0x328] sm:$0xf]
      %v294 = vld [vmem:[%s169 + $0x32c] sm:$0xff]
      %v295 = vld [vmem:[%s169 + $0x334] sm:$0xff]
      %v296 = vld [vmem:[%s169 + $0x33c] sm:$0xff]
      %v297 = vld [vmem:[%s169 + $0x344] sm:$0xf]
      %v298 = vld [vmem:[%s169 + $0x348] sm:$0xff]
      %v299 = vld [vmem:[%s169 + $0x350] sm:$0xff]
      %v300 = vld [vmem:[%s169 + $0x358] sm:$0xff]
      %v301 = vld [vmem:[%s169 + $0x360] sm:$0xf]
      %v302 = vld [vmem:[%s169 + $0x364] sm:$0xff]
      %v303 = vld [vmem:[%s169 + $0x36c] sm:$0xff]
      %v304 = vld [vmem:[%s169 + $0x374] sm:$0xff]
      %v305 = vld [vmem:[%s169 + $0x37c] sm:$0xf]
      %v306 = vld [vmem:[%s169 + $0x380] sm:$0xff]
      %v307 = vld [vmem:[%s169 + $0x388] sm:$0xff]
      %v308 = vld [vmem:[%s169 + $0x390] sm:$0xff]
      %v309 = vld [vmem:[%s169 + $0x398] sm:$0xf]
      %v310 = vld [vmem:[%s169 + $0x39c] sm:$0xff]
      %v311 = vld [vmem:[%s169 + $0x3a4] sm:$0xff]
      %v312 = vld [vmem:[%s169 + $0x3ac] sm:$0xff]
      %v313 = vld [vmem:[%s169 + $0x3b4] sm:$0xf]
      %v314 = vld [vmem:[%s169 + $0x3b8] sm:$0xff]
      %v315 = vld [vmem:[%s169 + $0x3c0] sm:$0xff]
      %v316 = vld [vmem:[%s169 + $0x3c8] sm:$0xff]
      %v317 = vld [vmem:[%s169 + $0x3d0] sm:$0xf]
      %v318 = vld [vmem:[%s169 + $0x3d4] sm:$0xff]
      %v319 = vld [vmem:[%s169 + $0x3dc] sm:$0xff]
      %v320 = vld [vmem:[%s169 + $0x3e4] sm:$0xff]
      %v321 = vld [vmem:[%s169 + $0x3ec] sm:$0xf]
      %v322 = vld [vmem:[%s169 + $0x3f0] sm:$0xff]
      %v323 = vld [vmem:[%s169 + $0x3f8] sm:$0xff]
      %v324 = vld [vmem:[%s169 + $0x400] sm:$0xff]
      %v325 = vld [vmem:[%s169 + $0x408] sm:$0xf]
      %v326 = vld [vmem:[%s169 + $0x40c] sm:$0xff]
      %v327 = vld [vmem:[%s169 + $0x414] sm:$0xff]
      %v328 = vld [vmem:[%s169 + $0x41c] sm:$0xff]
      %v329 = vld [vmem:[%s169 + $0x424] sm:$0xf]
      %v330 = vld [vmem:[%s169 + $0x428] sm:$0xff]
      %v331 = vld [vmem:[%s169 + $0x430] sm:$0xff]
      %v332 = vld [vmem:[%s169 + $0x438] sm:$0xff]
      %v333 = vld [vmem:[%s169 + $0x440] sm:$0xf]
      %v334 = vld [vmem:[%s169 + $0x444] sm:$0xff]
      %v335 = vld [vmem:[%s169 + $0x44c] sm:$0xff]
      %v336 = vld [vmem:[%s169 + $0x454] sm:$0xff]
      %v337 = vld [vmem:[%s169 + $0x45c] sm:$0xf]
      %v338 = vld [vmem:[%s169 + $0x460] sm:$0xff]
      %v339 = vld [vmem:[%s169 + $0x468] sm:$0xff]
      %v340 = vld [vmem:[%s169 + $0x470] sm:$0xff]
      %v341 = vld [vmem:[%s169 + $0x478] sm:$0xf]
      %v342 = vld [vmem:[%s169 + $0x47c] sm:$0xff]
      %v343 = vld [vmem:[%s169 + $0x484] sm:$0xff]
      %v344 = vld [vmem:[%s169 + $0x48c] sm:$0xff]
      %v345 = vld [vmem:[%s169 + $0x494] sm:$0xf]
      %v346 = vld [vmem:[%s169 + $0x498] sm:$0xff]
      %v347 = vld [vmem:[%s169 + $0x4a0] sm:$0xff]
      %v348 = vld [vmem:[%s169 + $0x4a8] sm:$0xff]
      %v349 = vld [vmem:[%s169 + $0x4b0] sm:$0xf]
      %v350 = vld [vmem:[%s169 + $0x4b4] sm:$0xff]
      %v351 = vld [vmem:[%s169 + $0x4bc] sm:$0xff]
      %v352 = vld [vmem:[%s169 + $0x4c4] sm:$0xff]
      %v353 = vld [vmem:[%s169 + $0x4cc] sm:$0xf]
      %v354 = vld [vmem:[%s169 + $0x4d0] sm:$0xff]
      %v355 = vld [vmem:[%s169 + $0x4d8] sm:$0xff]
      %v356 = vld [vmem:[%s169 + $0x4e0] sm:$0xff]
      %v357 = vld [vmem:[%s169 + $0x4e8] sm:$0xf]
      %v358 = vld [vmem:[%s169 + $0x4ec] sm:$0xff]
      %v359 = vld [vmem:[%s169 + $0x4f4] sm:$0xff]
      %v360 = vld [vmem:[%s169 + $0x4fc] sm:$0xff]
      %v361 = vld [vmem:[%s169 + $0x504] sm:$0xf]
      %v362 = vld [vmem:[%s169 + $0x508] sm:$0xff]
      %v363 = vld [vmem:[%s169 + $0x510] sm:$0xff]
      %v364 = vld [vmem:[%s169 + $0x518] sm:$0xff]
      %v365 = vld [vmem:[%s169 + $0x520] sm:$0xf]
      %v366 = vld [vmem:[%s169 + $0x524] sm:$0xff]
      %v367 = vld [vmem:[%s169 + $0x52c] sm:$0xff]
      %v368 = vld [vmem:[%s169 + $0x534] sm:$0xff]
      %v369 = vld [vmem:[%s169 + $0x53c] sm:$0xf]
      %v370 = vld [vmem:[%s169 + $0x540] sm:$0xff]
      %v371 = vld [vmem:[%s169 + $0x548] sm:$0xff]
      %v372 = vld [vmem:[%s169 + $0x550] sm:$0xff]
      %v373 = vld [vmem:[%s169 + $0x558] sm:$0xf]
      %v374 = vld [vmem:[%s169 + $0x55c] sm:$0xff]
      %v375 = vld [vmem:[%s169 + $0x564] sm:$0xff]
      %v376 = vld [vmem:[%s169 + $0x56c] sm:$0xff]
      %v377 = vld [vmem:[%s169 + $0x574] sm:$0xf]
      %v378 = vld [vmem:[%s169 + $0x578] sm:$0xff]
      %v379 = vld [vmem:[%s169 + $0x580] sm:$0xff]
      %v380 = vld [vmem:[%s169 + $0x588] sm:$0xff]
      %v381 = vld [vmem:[%s169 + $0x590] sm:$0xf]
      %v382 = vld [vmem:[%s169 + $0x594] sm:$0xff]
      %v383 = vld [vmem:[%s169 + $0x59c] sm:$0xff]
      %v384 = vld [vmem:[%s169 + $0x5a4] sm:$0xff]
      %v385 = vld [vmem:[%s169 + $0x5ac] sm:$0xf]
      %v386 = vld [vmem:[%s169 + $0x5b0] sm:$0xff]
      %v387 = vld [vmem:[%s169 + $0x5b8] sm:$0xff]
      %v388 = vld [vmem:[%s169 + $0x5c0] sm:$0xff]
      %v389 = vld [vmem:[%s169 + $0x5c8] sm:$0xf]
      %v390 = vld [vmem:[%s169 + $0x5cc] sm:$0xff]
      %v391 = vld [vmem:[%s169 + $0x5d4] sm:$0xff]
      %v392 = vld [vmem:[%s169 + $0x5dc] sm:$0xff]
      %v393 = vld [vmem:[%s169 + $0x5e4] sm:$0xf]
      %v394 = vld [vmem:[%s169 + $0x5e8] sm:$0xff]
      %v395 = vld [vmem:[%s169 + $0x5f0] sm:$0xff]
      %v396 = vld [vmem:[%s169 + $0x5f8] sm:$0xff]
      %v397 = vld [vmem:[%s169 + $0x600] sm:$0xf]
      %v398 = vld [vmem:[%s169 + $0x604] sm:$0xff]
      %v399 = vld [vmem:[%s169 + $0x60c] sm:$0xff]
      %v400 = vld [vmem:[%s169 + $0x614] sm:$0xff]
      %v401 = vld [vmem:[%s169 + $0x61c] sm:$0xf]
      %v402 = vld [vmem:[%s169 + $0x620] sm:$0xff]
      %v403 = vld [vmem:[%s169 + $0x628] sm:$0xff]
      %v404 = vld [vmem:[%s169 + $0x630] sm:$0xff]
      %v405 = vld [vmem:[%s169 + $0x638] sm:$0xf]
      %v406 = vld [vmem:[%s169 + $0x63c] sm:$0xff]
      %v407 = vld [vmem:[%s169 + $0x644] sm:$0xff]
      %v408 = vld [vmem:[%s169 + $0x64c] sm:$0xff]
      %v409 = vld [vmem:[%s169 + $0x654] sm:$0xf]
      %v410 = vld [vmem:[%s169 + $0x658] sm:$0xff]
      %v411 = vld [vmem:[%s169 + $0x660] sm:$0xff]
      %v412 = vld [vmem:[%s169 + $0x668] sm:$0xff]
      %v413 = vld [vmem:[%s169 + $0x670] sm:$0xf]
      %v414 = vld [vmem:[%s169 + $0x674] sm:$0xff]
      %v415 = vld [vmem:[%s169 + $0x67c] sm:$0xff]
      %v416 = vld [vmem:[%s169 + $0x684] sm:$0xff]
      %v417 = vld [vmem:[%s169 + $0x68c] sm:$0xf]
      %v418 = vld [vmem:[%s169 + $0x690] sm:$0xff]
      %v419 = vld [vmem:[%s169 + $0x698] sm:$0xff]
      %v420 = vld [vmem:[%s169 + $0x6a0] sm:$0xff]
      %v421 = vld [vmem:[%s169 + $0x6a8] sm:$0xf]
      %v422 = vld [vmem:[%s169 + $0x6ac] sm:$0xff]
      %v423 = vld [vmem:[%s169 + $0x6b4] sm:$0xff]
      %v424 = vld [vmem:[%s169 + $0x6bc] sm:$0xff]
      %v425 = vld [vmem:[%s169 + $0x6c4] sm:$0xf]
      %v426 = vld [vmem:[%s169 + $0x6c8] sm:$0xff]
      %v427 = vld [vmem:[%s169 + $0x6d0] sm:$0xff]
      %v428 = vld [vmem:[%s169 + $0x6d8] sm:$0xff]
      %v429 = vld [vmem:[%s169 + $0x6e0] sm:$0xf]
      %v430 = vld [vmem:[%s169 + $0x6e4] sm:$0xff]
      %v431 = vld [vmem:[%s169 + $0x6ec] sm:$0xff]
      %v432 = vld [vmem:[%s169 + $0x6f4] sm:$0xff]
      %v433 = vld [vmem:[%s169 + $0x6fc] sm:$0xf]
      %v434 = vld [vmem:[%s1] sm:$0xf]
      %v435 = vld [vmem:[%s1 + $0x4] sm:$0xf]
      %v436 = vld [vmem:[%s1 + $0x8] sm:$0xf]
      %v437 = vld [vmem:[%s1 + $0xc] sm:$0xf]
      %v438 = vld [vmem:[%s1 + $0x10] sm:$0xf]
      %v439 = vld [vmem:[%s1 + $0x14] sm:$0xf]
      %v440 = vld [vmem:[%s1 + $0x18] sm:$0xf]
      %v441 = vld [vmem:[%s1 + $0x1c] sm:$0xf]
      %v442 = vld [vmem:[%s1 + $0x20] sm:$0xf]
      %v443 = vld [vmem:[%s1 + $0x24] sm:$0xf]
      %v444 = vld [vmem:[%s1 + $0x28] sm:$0xf]
      %v445 = vld [vmem:[%s1 + $0x2c] sm:$0xf]
      %v446 = vld [vmem:[%s1 + $0x30] sm:$0xf]
      %v447 = vld [vmem:[%s1 + $0x34] sm:$0xf]
      %v448 = vld [vmem:[%s1 + $0x38] sm:$0xf]
      %v449 = vld [vmem:[%s1 + $0x3c] sm:$0xf]
      %v450 = vld [vmem:[%s1 + $0x40] sm:$0xf]
      %v451 = vld [vmem:[%s1 + $0x44] sm:$0xf]
      %v452 = vld [vmem:[%s1 + $0x48] sm:$0xf]
      %v453 = vld [vmem:[%s1 + $0x4c] sm:$0xf]
      %v454 = vld [vmem:[%s1 + $0x50] sm:$0xf]
      %v455 = vld [vmem:[%s1 + $0x54] sm:$0xf]
      %v456 = vld [vmem:[%s1 + $0x58] sm:$0xf]
      %v457 = vld [vmem:[%s1 + $0x5c] sm:$0xf]
      %v458 = vld [vmem:[%s1 + $0x60] sm:$0xf]
      %v459 = vld [vmem:[%s1 + $0x64] sm:$0xf]
      %v460 = vld [vmem:[%s1 + $0x68] sm:$0xf]
      %v461 = vld [vmem:[%s1 + $0x6c] sm:$0xf]
      %v462 = vld [vmem:[%s1 + $0x70] sm:$0xf]
      %v463 = vld [vmem:[%s1 + $0x74] sm:$0xf]
      %v464 = vld [vmem:[%s1 + $0x78] sm:$0xf]
      %v465 = vld [vmem:[%s1 + $0x7c] sm:$0xf]
      %v466 = vld [vmem:[%s1 + $0x80] sm:$0xf]
      %v467 = vld [vmem:[%s1 + $0x84] sm:$0xf]
      %v468 = vld [vmem:[%s1 + $0x88] sm:$0xf]
      %v469 = vld [vmem:[%s1 + $0x8c] sm:$0xf]
      %v470 = vld [vmem:[%s1 + $0x90] sm:$0xf]
      %v471 = vld [vmem:[%s1 + $0x94] sm:$0xf]
      %v472 = vld [vmem:[%s1 + $0x98] sm:$0xf]
      %v473 = vld [vmem:[%s1 + $0x9c] sm:$0xf]
      %v474 = vld [vmem:[%s1 + $0xa0] sm:$0xf]
      %v475 = vld [vmem:[%s1 + $0xa4] sm:$0xf]
      %v476 = vld [vmem:[%s1 + $0xa8] sm:$0xf]
      %v477 = vld [vmem:[%s1 + $0xac] sm:$0xf]
      %v478 = vld [vmem:[%s1 + $0xb0] sm:$0xf]
      %v479 = vld [vmem:[%s1 + $0xb4] sm:$0xf]
      %v480 = vld [vmem:[%s1 + $0xb8] sm:$0xf]
      %v481 = vld [vmem:[%s1 + $0xbc] sm:$0xf]
      %v482 = vld [vmem:[%s1 + $0xc0] sm:$0xf]
      %v483 = vld [vmem:[%s1 + $0xc4] sm:$0xf]
      %v484 = vld [vmem:[%s1 + $0xc8] sm:$0xf]
      %v485 = vld [vmem:[%s1 + $0xcc] sm:$0xf]
      %v486 = vld [vmem:[%s1 + $0xd0] sm:$0xf]
      %v487 = vld [vmem:[%s1 + $0xd4] sm:$0xf]
      %v488 = vld [vmem:[%s1 + $0xd8] sm:$0xf]
      %v489 = vld [vmem:[%s1 + $0xdc] sm:$0xf]
      %v490 = vld [vmem:[%s1 + $0xe0] sm:$0xf]
      %v491 = vld [vmem:[%s1 + $0xe4] sm:$0xf]
      %v492 = vld [vmem:[%s1 + $0xe8] sm:$0xf]
      %v493 = vld [vmem:[%s1 + $0xec] sm:$0xf]
      %v494 = vld [vmem:[%s1 + $0xf0] sm:$0xf]
      %v495 = vld [vmem:[%s1 + $0xf4] sm:$0xf]
      %v496 = vld [vmem:[%s1 + $0xf8] sm:$0xf]
      %v497 = vld [vmem:[%s1 + $0xfc] sm:$0xf]
      %v498 = vld [vmem:[%s1 + $0x100] sm:$0xf]
      %v499 = vld [vmem:[%s1 + $0x104] sm:$0xf]
      %v500 = vld [vmem:[%s1 + $0x108] sm:$0xf]
      %v501 = vld [vmem:[%s1 + $0x10c] sm:$0xf]
      %v502 = vld [vmem:[%s1 + $0x110] sm:$0xf]
      %v503 = vld [vmem:[%s1 + $0x114] sm:$0xf]
      %v504 = vld [vmem:[%s1 + $0x118] sm:$0xf]
      %v505 = vld [vmem:[%s1 + $0x11c] sm:$0xf]
      %v506 = vld [vmem:[%s1 + $0x120] sm:$0xf]
      %v507 = vld [vmem:[%s1 + $0x124] sm:$0xf]
      %v508 = vld [vmem:[%s1 + $0x128] sm:$0xf]
      %v509 = vld [vmem:[%s1 + $0x12c] sm:$0xf]
      %v510 = vld [vmem:[%s1 + $0x130] sm:$0xf]
      %v511 = vld [vmem:[%s1 + $0x134] sm:$0xf]
      %v512 = vld [vmem:[%s1 + $0x138] sm:$0xf]
      %v513 = vld [vmem:[%s1 + $0x13c] sm:$0xf]
      %v514 = vld [vmem:[%s1 + $0x140] sm:$0xf]
      %v515 = vld [vmem:[%s1 + $0x144] sm:$0xf]
      %v516 = vld [vmem:[%s1 + $0x148] sm:$0xf]
      %v517 = vld [vmem:[%s1 + $0x14c] sm:$0xf]
      %v518 = vld [vmem:[%s1 + $0x150] sm:$0xf]
      %v519 = vld [vmem:[%s1 + $0x154] sm:$0xf]
      %v520 = vld [vmem:[%s1 + $0x158] sm:$0xf]
      %v521 = vld [vmem:[%s1 + $0x15c] sm:$0xf]
      %v522 = vld [vmem:[%s1 + $0x160] sm:$0xf]
      %v523 = vld [vmem:[%s1 + $0x164] sm:$0xf]
      %v524 = vld [vmem:[%s1 + $0x168] sm:$0xf]
      %v525 = vld [vmem:[%s1 + $0x16c] sm:$0xf]
      %v526 = vld [vmem:[%s1 + $0x170] sm:$0xf]
      %v527 = vld [vmem:[%s1 + $0x174] sm:$0xf]
      %v528 = vld [vmem:[%s1 + $0x178] sm:$0xf]
      %v529 = vld [vmem:[%s1 + $0x17c] sm:$0xf]
      %v530 = vld [vmem:[%s1 + $0x180] sm:$0xf]
      %v531 = vld [vmem:[%s1 + $0x184] sm:$0xf]
      %v532 = vld [vmem:[%s1 + $0x188] sm:$0xf]
      %v533 = vld [vmem:[%s1 + $0x18c] sm:$0xf]
      %v534 = vld [vmem:[%s1 + $0x190] sm:$0xf]
      %v535 = vld [vmem:[%s1 + $0x194] sm:$0xf]
      %v536 = vld [vmem:[%s1 + $0x198] sm:$0xf]
      %v537 = vld [vmem:[%s1 + $0x19c] sm:$0xf]
      %v538 = vld [vmem:[%s1 + $0x1a0] sm:$0xf]
      %v539 = vld [vmem:[%s1 + $0x1a4] sm:$0xf]
      %v540 = vld [vmem:[%s1 + $0x1a8] sm:$0xf]
      %v541 = vld [vmem:[%s1 + $0x1ac] sm:$0xf]
      %v542 = vld [vmem:[%s2] sm:$0x1]
      %v544 = vlaneseq
      %v545 = vshrl.u32 %v544, 7
      %v546 = vsub.s32 0, %v545
      %v547 = vrot.slane %v542, %v546
      %v805 = vunpack.c.l.b16 %v178
      %v806 = vunpack.c.h.b16 %v178
      %v807 = vunpack.c.l.b16 %v179
      %v808 = vunpack.c.h.b16 %v179
      %v809 = vunpack.c.l.b16 %v180
      %v810 = vunpack.c.h.b16 %v180
      %v811 = vunpack.c.l.b16 %v181
      %v812 = vunpack.c.l.b16 %v182
      %v813 = vunpack.c.h.b16 %v182
      %v814 = vunpack.c.l.b16 %v183
      %v815 = vunpack.c.h.b16 %v183
      %v816 = vunpack.c.l.b16 %v184
      %v817 = vunpack.c.h.b16 %v184
      %v818 = vunpack.c.l.b16 %v185
      %v819 = vunpack.c.l.b16 %v186
      %v820 = vunpack.c.h.b16 %v186
      %v821 = vunpack.c.l.b16 %v187
      %v822 = vunpack.c.h.b16 %v187
      %v823 = vunpack.c.l.b16 %v188
      %v824 = vunpack.c.h.b16 %v188
      %v825 = vunpack.c.l.b16 %v189
      %v826 = vunpack.c.l.b16 %v190
      %v827 = vunpack.c.h.b16 %v190
      %v828 = vunpack.c.l.b16 %v191
      %v829 = vunpack.c.h.b16 %v191
      %v830 = vunpack.c.l.b16 %v192
      %v831 = vunpack.c.h.b16 %v192
      %v832 = vunpack.c.l.b16 %v193
      %v833 = vunpack.c.l.b16 %v194
      %v834 = vunpack.c.h.b16 %v194
      %v835 = vunpack.c.l.b16 %v195
      %v836 = vunpack.c.h.b16 %v195
      %v837 = vunpack.c.l.b16 %v196
      %v838 = vunpack.c.h.b16 %v196
      %v839 = vunpack.c.l.b16 %v197
      %v840 = vunpack.c.l.b16 %v198
      %v841 = vunpack.c.h.b16 %v198
      %v842 = vunpack.c.l.b16 %v199
      %v843 = vunpack.c.h.b16 %v199
      %v844 = vunpack.c.l.b16 %v200
      %v845 = vunpack.c.h.b16 %v200
      %v846 = vunpack.c.l.b16 %v201
      %v847 = vunpack.c.l.b16 %v202
      %v848 = vunpack.c.h.b16 %v202
      %v849 = vunpack.c.l.b16 %v203
      %v850 = vunpack.c.h.b16 %v203
      %v851 = vunpack.c.l.b16 %v204
      %v852 = vunpack.c.h.b16 %v204
      %v853 = vunpack.c.l.b16 %v205
      %v854 = vunpack.c.l.b16 %v206
      %v855 = vunpack.c.h.b16 %v206
      %v856 = vunpack.c.l.b16 %v207
      %v857 = vunpack.c.h.b16 %v207
      %v858 = vunpack.c.l.b16 %v208
      %v859 = vunpack.c.h.b16 %v208
      %v860 = vunpack.c.l.b16 %v209
      %v861 = vunpack.c.l.b16 %v210
      %v862 = vunpack.c.h.b16 %v210
      %v863 = vunpack.c.l.b16 %v211
      %v864 = vunpack.c.h.b16 %v211
      %v865 = vunpack.c.l.b16 %v212
      %v866 = vunpack.c.h.b16 %v212
      %v867 = vunpack.c.l.b16 %v213
      %v868 = vunpack.c.l.b16 %v214
      %v869 = vunpack.c.h.b16 %v214
      %v870 = vunpack.c.l.b16 %v215
      %v871 = vunpack.c.h.b16 %v215
      %v872 = vunpack.c.l.b16 %v216
      %v873 = vunpack.c.h.b16 %v216
      %v874 = vunpack.c.l.b16 %v217
      %v875 = vunpack.c.l.b16 %v218
      %v876 = vunpack.c.h.b16 %v218
      %v877 = vunpack.c.l.b16 %v219
      %v878 = vunpack.c.h.b16 %v219
      %v879 = vunpack.c.l.b16 %v220
      %v880 = vunpack.c.h.b16 %v220
      %v881 = vunpack.c.l.b16 %v221
      %v882 = vunpack.c.l.b16 %v222
      %v883 = vunpack.c.h.b16 %v222
      %v884 = vunpack.c.l.b16 %v223
      %v885 = vunpack.c.h.b16 %v223
      %v886 = vunpack.c.l.b16 %v224
      %v887 = vunpack.c.h.b16 %v224
      %v888 = vunpack.c.l.b16 %v225
      %v889 = vunpack.c.l.b16 %v226
      %v890 = vunpack.c.h.b16 %v226
      %v891 = vunpack.c.l.b16 %v227
      %v892 = vunpack.c.h.b16 %v227
      %v893 = vunpack.c.l.b16 %v228
      %v894 = vunpack.c.h.b16 %v228
      %v895 = vunpack.c.l.b16 %v229
      %v896 = vunpack.c.l.b16 %v230
      %v897 = vunpack.c.h.b16 %v230
      %v898 = vunpack.c.l.b16 %v231
      %v899 = vunpack.c.h.b16 %v231
      %v900 = vunpack.c.l.b16 %v232
      %v901 = vunpack.c.h.b16 %v232
      %v902 = vunpack.c.l.b16 %v233
      %v903 = vunpack.c.l.b16 %v234
      %v904 = vunpack.c.h.b16 %v234
      %v905 = vunpack.c.l.b16 %v235
      %v906 = vunpack.c.h.b16 %v235
      %v907 = vunpack.c.l.b16 %v236
      %v908 = vunpack.c.h.b16 %v236
      %v909 = vunpack.c.l.b16 %v237
      %v910 = vunpack.c.l.b16 %v238
      %v911 = vunpack.c.h.b16 %v238
      %v912 = vunpack.c.l.b16 %v239
      %v913 = vunpack.c.h.b16 %v239
      %v914 = vunpack.c.l.b16 %v240
      %v915 = vunpack.c.h.b16 %v240
      %v916 = vunpack.c.l.b16 %v241
      %v917 = vunpack.c.l.b16 %v242
      %v918 = vunpack.c.h.b16 %v242
      %v919 = vunpack.c.l.b16 %v243
      %v920 = vunpack.c.h.b16 %v243
      %v921 = vunpack.c.l.b16 %v244
      %v922 = vunpack.c.h.b16 %v244
      %v923 = vunpack.c.l.b16 %v245
      %v924 = vunpack.c.l.b16 %v246
      %v925 = vunpack.c.h.b16 %v246
      %v926 = vunpack.c.l.b16 %v247
      %v927 = vunpack.c.h.b16 %v247
      %v928 = vunpack.c.l.b16 %v248
      %v929 = vunpack.c.h.b16 %v248
      %v930 = vunpack.c.l.b16 %v249
      %v931 = vunpack.c.l.b16 %v250
      %v932 = vunpack.c.h.b16 %v250
      %v933 = vunpack.c.l.b16 %v251
      %v934 = vunpack.c.h.b16 %v251
      %v935 = vunpack.c.l.b16 %v252
      %v936 = vunpack.c.h.b16 %v252
      %v937 = vunpack.c.l.b16 %v253
      %v938 = vunpack.c.l.b16 %v254
      %v939 = vunpack.c.h.b16 %v254
      %v940 = vunpack.c.l.b16 %v255
      %v941 = vunpack.c.h.b16 %v255
      %v942 = vunpack.c.l.b16 %v256
      %v943 = vunpack.c.h.b16 %v256
      %v944 = vunpack.c.l.b16 %v257
      %v945 = vunpack.c.l.b16 %v258
      %v946 = vunpack.c.h.b16 %v258
      %v947 = vunpack.c.l.b16 %v259
      %v948 = vunpack.c.h.b16 %v259
      %v949 = vunpack.c.l.b16 %v260
      %v950 = vunpack.c.h.b16 %v260
      %v951 = vunpack.c.l.b16 %v261
      %v952 = vunpack.c.l.b16 %v262
      %v953 = vunpack.c.h.b16 %v262
      %v954 = vunpack.c.l.b16 %v263
      %v955 = vunpack.c.h.b16 %v263
      %v956 = vunpack.c.l.b16 %v264
      %v957 = vunpack.c.h.b16 %v264
      %v958 = vunpack.c.l.b16 %v265
      %v959 = vunpack.c.l.b16 %v266
      %v960 = vunpack.c.h.b16 %v266
      %v961 = vunpack.c.l.b16 %v267
      %v962 = vunpack.c.h.b16 %v267
      %v963 = vunpack.c.l.b16 %v268
      %v964 = vunpack.c.h.b16 %v268
      %v965 = vunpack.c.l.b16 %v269
      %v966 = vunpack.c.l.b16 %v270
      %v967 = vunpack.c.h.b16 %v270
      %v968 = vunpack.c.l.b16 %v271
      %v969 = vunpack.c.h.b16 %v271
      %v970 = vunpack.c.l.b16 %v272
      %v971 = vunpack.c.h.b16 %v272
      %v972 = vunpack.c.l.b16 %v273
      %v973 = vunpack.c.l.b16 %v274
      %v974 = vunpack.c.h.b16 %v274
      %v975 = vunpack.c.l.b16 %v275
      %v976 = vunpack.c.h.b16 %v275
      %v977 = vunpack.c.l.b16 %v276
      %v978 = vunpack.c.h.b16 %v276
      %v979 = vunpack.c.l.b16 %v277
      %v980 = vunpack.c.l.b16 %v278
      %v981 = vunpack.c.h.b16 %v278
      %v982 = vunpack.c.l.b16 %v279
      %v983 = vunpack.c.h.b16 %v279
      %v984 = vunpack.c.l.b16 %v280
      %v985 = vunpack.c.h.b16 %v280
      %v986 = vunpack.c.l.b16 %v281
      %v987 = vunpack.c.l.b16 %v282
      %v988 = vunpack.c.h.b16 %v282
      %v989 = vunpack.c.l.b16 %v283
      %v990 = vunpack.c.h.b16 %v283
      %v991 = vunpack.c.l.b16 %v284
      %v992 = vunpack.c.h.b16 %v284
      %v993 = vunpack.c.l.b16 %v285
      %v994 = vunpack.c.l.b16 %v286
      %v995 = vunpack.c.h.b16 %v286
      %v996 = vunpack.c.l.b16 %v287
      %v997 = vunpack.c.h.b16 %v287
      %v998 = vunpack.c.l.b16 %v288
      %v999 = vunpack.c.h.b16 %v288
      %v1000 = vunpack.c.l.b16 %v289
      %v1001 = vunpack.c.l.b16 %v290
      %v1002 = vunpack.c.h.b16 %v290
      %v1003 = vunpack.c.l.b16 %v291
      %v1004 = vunpack.c.h.b16 %v291
      %v1005 = vunpack.c.l.b16 %v292
      %v1006 = vunpack.c.h.b16 %v292
      %v1007 = vunpack.c.l.b16 %v293
      %v1008 = vunpack.c.l.b16 %v294
      %v1009 = vunpack.c.h.b16 %v294
      %v1010 = vunpack.c.l.b16 %v295
      %v1011 = vunpack.c.h.b16 %v295
      %v1012 = vunpack.c.l.b16 %v296
      %v1013 = vunpack.c.h.b16 %v296
      %v1014 = vunpack.c.l.b16 %v297
      %v1015 = vunpack.c.l.b16 %v298
      %v1016 = vunpack.c.h.b16 %v298
      %v1017 = vunpack.c.l.b16 %v299
      %v1018 = vunpack.c.h.b16 %v299
      %v1019 = vunpack.c.l.b16 %v300
      %v1020 = vunpack.c.h.b16 %v300
      %v1021 = vunpack.c.l.b16 %v301
      %v1022 = vunpack.c.l.b16 %v302
      %v1023 = vunpack.c.h.b16 %v302
      %v1024 = vunpack.c.l.b16 %v303
      %v1025 = vunpack.c.h.b16 %v303
      %v1026 = vunpack.c.l.b16 %v304
      %v1027 = vunpack.c.h.b16 %v304
      %v1028 = vunpack.c.l.b16 %v305
      %v1029 = vunpack.c.l.b16 %v306
      %v1030 = vunpack.c.h.b16 %v306
      %v1031 = vunpack.c.l.b16 %v307
      %v1032 = vunpack.c.h.b16 %v307
      %v1033 = vunpack.c.l.b16 %v308
      %v1034 = vunpack.c.h.b16 %v308
      %v1035 = vunpack.c.l.b16 %v309
      %v1036 = vunpack.c.l.b16 %v310
      %v1037 = vunpack.c.h.b16 %v310
      %v1038 = vunpack.c.l.b16 %v311
      %v1039 = vunpack.c.h.b16 %v311
      %v1040 = vunpack.c.l.b16 %v312
      %v1041 = vunpack.c.h.b16 %v312
      %v1042 = vunpack.c.l.b16 %v313
      %v1043 = vunpack.c.l.b16 %v314
      %v1044 = vunpack.c.h.b16 %v314
      %v1045 = vunpack.c.l.b16 %v315
      %v1046 = vunpack.c.h.b16 %v315
      %v1047 = vunpack.c.l.b16 %v316
      %v1048 = vunpack.c.h.b16 %v316
      %v1049 = vunpack.c.l.b16 %v317
      %v1050 = vunpack.c.l.b16 %v318
      %v1051 = vunpack.c.h.b16 %v318
      %v1052 = vunpack.c.l.b16 %v319
      %v1053 = vunpack.c.h.b16 %v319
      %v1054 = vunpack.c.l.b16 %v320
      %v1055 = vunpack.c.h.b16 %v320
      %v1056 = vunpack.c.l.b16 %v321
      %v1057 = vunpack.c.l.b16 %v322
      %v1058 = vunpack.c.h.b16 %v322
      %v1059 = vunpack.c.l.b16 %v323
      %v1060 = vunpack.c.h.b16 %v323
      %v1061 = vunpack.c.l.b16 %v324
      %v1062 = vunpack.c.h.b16 %v324
      %v1063 = vunpack.c.l.b16 %v325
      %v1064 = vunpack.c.l.b16 %v326
      %v1065 = vunpack.c.h.b16 %v326
      %v1066 = vunpack.c.l.b16 %v327
      %v1067 = vunpack.c.h.b16 %v327
      %v1068 = vunpack.c.l.b16 %v328
      %v1069 = vunpack.c.h.b16 %v328
      %v1070 = vunpack.c.l.b16 %v329
      %v1071 = vunpack.c.l.b16 %v330
      %v1072 = vunpack.c.h.b16 %v330
      %v1073 = vunpack.c.l.b16 %v331
      %v1074 = vunpack.c.h.b16 %v331
      %v1075 = vunpack.c.l.b16 %v332
      %v1076 = vunpack.c.h.b16 %v332
      %v1077 = vunpack.c.l.b16 %v333
      %v1078 = vunpack.c.l.b16 %v334
      %v1079 = vunpack.c.h.b16 %v334
      %v1080 = vunpack.c.l.b16 %v335
      %v1081 = vunpack.c.h.b16 %v335
      %v1082 = vunpack.c.l.b16 %v336
      %v1083 = vunpack.c.h.b16 %v336
      %v1084 = vunpack.c.l.b16 %v337
      %v1085 = vunpack.c.l.b16 %v338
      %v1086 = vunpack.c.h.b16 %v338
      %v1087 = vunpack.c.l.b16 %v339
      %v1088 = vunpack.c.h.b16 %v339
      %v1089 = vunpack.c.l.b16 %v340
      %v1090 = vunpack.c.h.b16 %v340
      %v1091 = vunpack.c.l.b16 %v341
      %v1092 = vunpack.c.l.b16 %v342
      %v1093 = vunpack.c.h.b16 %v342
      %v1094 = vunpack.c.l.b16 %v343
      %v1095 = vunpack.c.h.b16 %v343
      %v1096 = vunpack.c.l.b16 %v344
      %v1097 = vunpack.c.h.b16 %v344
      %v1098 = vunpack.c.l.b16 %v345
      %v1099 = vunpack.c.l.b16 %v346
      %v1100 = vunpack.c.h.b16 %v346
      %v1101 = vunpack.c.l.b16 %v347
      %v1102 = vunpack.c.h.b16 %v347
      %v1103 = vunpack.c.l.b16 %v348
      %v1104 = vunpack.c.h.b16 %v348
      %v1105 = vunpack.c.l.b16 %v349
      %v1106 = vunpack.c.l.b16 %v350
      %v1107 = vunpack.c.h.b16 %v350
      %v1108 = vunpack.c.l.b16 %v351
      %v1109 = vunpack.c.h.b16 %v351
      %v1110 = vunpack.c.l.b16 %v352
      %v1111 = vunpack.c.h.b16 %v352
      %v1112 = vunpack.c.l.b16 %v353
      %v1113 = vunpack.c.l.b16 %v354
      %v1114 = vunpack.c.h.b16 %v354
      %v1115 = vunpack.c.l.b16 %v355
      %v1116 = vunpack.c.h.b16 %v355
      %v1117 = vunpack.c.l.b16 %v356
      %v1118 = vunpack.c.h.b16 %v356
      %v1119 = vunpack.c.l.b16 %v357
      %v1120 = vunpack.c.l.b16 %v358
      %v1121 = vunpack.c.h.b16 %v358
      %v1122 = vunpack.c.l.b16 %v359
      %v1123 = vunpack.c.h.b16 %v359
      %v1124 = vunpack.c.l.b16 %v360
      %v1125 = vunpack.c.h.b16 %v360
      %v1126 = vunpack.c.l.b16 %v361
      %v1127 = vunpack.c.l.b16 %v362
      %v1128 = vunpack.c.h.b16 %v362
      %v1129 = vunpack.c.l.b16 %v363
      %v1130 = vunpack.c.h.b16 %v363
      %v1131 = vunpack.c.l.b16 %v364
      %v1132 = vunpack.c.h.b16 %v364
      %v1133 = vunpack.c.l.b16 %v365
      %v1134 = vunpack.c.l.b16 %v366
      %v1135 = vunpack.c.h.b16 %v366
      %v1136 = vunpack.c.l.b16 %v367
      %v1137 = vunpack.c.h.b16 %v367
      %v1138 = vunpack.c.l.b16 %v368
      %v1139 = vunpack.c.h.b16 %v368
      %v1140 = vunpack.c.l.b16 %v369
      %v1141 = vunpack.c.l.b16 %v370
      %v1142 = vunpack.c.h.b16 %v370
      %v1143 = vunpack.c.l.b16 %v371
      %v1144 = vunpack.c.h.b16 %v371
      %v1145 = vunpack.c.l.b16 %v372
      %v1146 = vunpack.c.h.b16 %v372
      %v1147 = vunpack.c.l.b16 %v373
      %v1148 = vunpack.c.l.b16 %v374
      %v1149 = vunpack.c.h.b16 %v374
      %v1150 = vunpack.c.l.b16 %v375
      %v1151 = vunpack.c.h.b16 %v375
      %v1152 = vunpack.c.l.b16 %v376
      %v1153 = vunpack.c.h.b16 %v376
      %v1154 = vunpack.c.l.b16 %v377
      %v1155 = vunpack.c.l.b16 %v378
      %v1156 = vunpack.c.h.b16 %v378
      %v1157 = vunpack.c.l.b16 %v379
      %v1158 = vunpack.c.h.b16 %v379
      %v1159 = vunpack.c.l.b16 %v380
      %v1160 = vunpack.c.h.b16 %v380
      %v1161 = vunpack.c.l.b16 %v381
      %v1162 = vunpack.c.l.b16 %v382
      %v1163 = vunpack.c.h.b16 %v382
      %v1164 = vunpack.c.l.b16 %v383
      %v1165 = vunpack.c.h.b16 %v383
      %v1166 = vunpack.c.l.b16 %v384
      %v1167 = vunpack.c.h.b16 %v384
      %v1168 = vunpack.c.l.b16 %v385
      %v1169 = vunpack.c.l.b16 %v386
      %v1170 = vunpack.c.h.b16 %v386
      %v1171 = vunpack.c.l.b16 %v387
      %v1172 = vunpack.c.h.b16 %v387
      %v1173 = vunpack.c.l.b16 %v388
      %v1174 = vunpack.c.h.b16 %v388
      %v1175 = vunpack.c.l.b16 %v389
      %v1176 = vunpack.c.l.b16 %v390
      %v1177 = vunpack.c.h.b16 %v390
      %v1178 = vunpack.c.l.b16 %v391
      %v1179 = vunpack.c.h.b16 %v391
      %v1180 = vunpack.c.l.b16 %v392
      %v1181 = vunpack.c.h.b16 %v392
      %v1182 = vunpack.c.l.b16 %v393
      %v1183 = vunpack.c.l.b16 %v394
      %v1184 = vunpack.c.h.b16 %v394
      %v1185 = vunpack.c.l.b16 %v395
      %v1186 = vunpack.c.h.b16 %v395
      %v1187 = vunpack.c.l.b16 %v396
      %v1188 = vunpack.c.h.b16 %v396
      %v1189 = vunpack.c.l.b16 %v397
      %v1190 = vunpack.c.l.b16 %v398
      %v1191 = vunpack.c.h.b16 %v398
      %v1192 = vunpack.c.l.b16 %v399
      %v1193 = vunpack.c.h.b16 %v399
      %v1194 = vunpack.c.l.b16 %v400
      %v1195 = vunpack.c.h.b16 %v400
      %v1196 = vunpack.c.l.b16 %v401
      %v1197 = vunpack.c.l.b16 %v402
      %v1198 = vunpack.c.h.b16 %v402
      %v1199 = vunpack.c.l.b16 %v403
      %v1200 = vunpack.c.h.b16 %v403
      %v1201 = vunpack.c.l.b16 %v404
      %v1202 = vunpack.c.h.b16 %v404
      %v1203 = vunpack.c.l.b16 %v405
      %v1204 = vunpack.c.l.b16 %v406
      %v1205 = vunpack.c.h.b16 %v406
      %v1206 = vunpack.c.l.b16 %v407
      %v1207 = vunpack.c.h.b16 %v407
      %v1208 = vunpack.c.l.b16 %v408
      %v1209 = vunpack.c.h.b16 %v408
      %v1210 = vunpack.c.l.b16 %v409
      %v1211 = vunpack.c.l.b16 %v410
      %v1212 = vunpack.c.h.b16 %v410
      %v1213 = vunpack.c.l.b16 %v411
      %v1214 = vunpack.c.h.b16 %v411
      %v1215 = vunpack.c.l.b16 %v412
      %v1216 = vunpack.c.h.b16 %v412
      %v1217 = vunpack.c.l.b16 %v413
      %v1218 = vunpack.c.l.b16 %v414
      %v1219 = vunpack.c.h.b16 %v414
      %v1220 = vunpack.c.l.b16 %v415
      %v1221 = vunpack.c.h.b16 %v415
      %v1222 = vunpack.c.l.b16 %v416
      %v1223 = vunpack.c.h.b16 %v416
      %v1224 = vunpack.c.l.b16 %v417
      %v1225 = vunpack.c.l.b16 %v418
      %v1226 = vunpack.c.h.b16 %v418
      %v1227 = vunpack.c.l.b16 %v419
      %v1228 = vunpack.c.h.b16 %v419
      %v1229 = vunpack.c.l.b16 %v420
      %v1230 = vunpack.c.h.b16 %v420
      %v1231 = vunpack.c.l.b16 %v421
      %v1232 = vunpack.c.l.b16 %v422
      %v1233 = vunpack.c.h.b16 %v422
      %v1234 = vunpack.c.l.b16 %v423
      %v1235 = vunpack.c.h.b16 %v423
      %v1236 = vunpack.c.l.b16 %v424
      %v1237 = vunpack.c.h.b16 %v424
      %v1238 = vunpack.c.l.b16 %v425
      %v1239 = vunpack.c.l.b16 %v426
      %v1240 = vunpack.c.h.b16 %v426
      %v1241 = vunpack.c.l.b16 %v427
      %v1242 = vunpack.c.h.b16 %v427
      %v1243 = vunpack.c.l.b16 %v428
      %v1244 = vunpack.c.h.b16 %v428
      %v1245 = vunpack.c.l.b16 %v429
      %v1246 = vunpack.c.l.b16 %v430
      %v1247 = vunpack.c.h.b16 %v430
      %v1248 = vunpack.c.l.b16 %v431
      %v1249 = vunpack.c.h.b16 %v431
      %v1250 = vunpack.c.l.b16 %v432
      %v1251 = vunpack.c.h.b16 %v432
      %v1252 = vunpack.c.l.b16 %v433
      %v1253 = vpack.c.b16 %v812, %v805
      %v1254 = vpack.c.b16 %v813, %v806
      %v1255 = vpack.c.b16 %v814, %v807
      %v1256 = vpack.c.b16 %v815, %v808
      %v1257 = vpack.c.b16 %v816, %v809
      %v1258 = vpack.c.b16 %v817, %v810
      %v1259 = vpack.c.b16 %v818, %v811
      %v1260 = vpack.c.b16 %v826, %v819
      %v1261 = vpack.c.b16 %v827, %v820
      %v1262 = vpack.c.b16 %v828, %v821
      %v1263 = vpack.c.b16 %v829, %v822
      %v1264 = vpack.c.b16 %v830, %v823
      %v1265 = vpack.c.b16 %v831, %v824
      %v1266 = vpack.c.b16 %v832, %v825
      %v1267 = vpack.c.b16 %v840, %v833
      %v1268 = vpack.c.b16 %v841, %v834
      %v1269 = vpack.c.b16 %v842, %v835
      %v1270 = vpack.c.b16 %v843, %v836
      %v1271 = vpack.c.b16 %v844, %v837
      %v1272 = vpack.c.b16 %v845, %v838
      %v1273 = vpack.c.b16 %v846, %v839
      %v1274 = vpack.c.b16 %v854, %v847
      %v1275 = vpack.c.b16 %v855, %v848
      %v1276 = vpack.c.b16 %v856, %v849
      %v1277 = vpack.c.b16 %v857, %v850
      %v1278 = vpack.c.b16 %v858, %v851
      %v1279 = vpack.c.b16 %v859, %v852
      %v1280 = vpack.c.b16 %v860, %v853
      %v1281 = vpack.c.b16 %v868, %v861
      %v1282 = vpack.c.b16 %v869, %v862
      %v1283 = vpack.c.b16 %v870, %v863
      %v1284 = vpack.c.b16 %v871, %v864
      %v1285 = vpack.c.b16 %v872, %v865
      %v1286 = vpack.c.b16 %v873, %v866
      %v1287 = vpack.c.b16 %v874, %v867
      %v1288 = vpack.c.b16 %v882, %v875
      %v1289 = vpack.c.b16 %v883, %v876
      %v1290 = vpack.c.b16 %v884, %v877
      %v1291 = vpack.c.b16 %v885, %v878
      %v1292 = vpack.c.b16 %v886, %v879
      %v1293 = vpack.c.b16 %v887, %v880
      %v1294 = vpack.c.b16 %v888, %v881
      %v1295 = vpack.c.b16 %v896, %v889
      %v1296 = vpack.c.b16 %v897, %v890
      %v1297 = vpack.c.b16 %v898, %v891
      %v1298 = vpack.c.b16 %v899, %v892
      %v1299 = vpack.c.b16 %v900, %v893
      %v1300 = vpack.c.b16 %v901, %v894
      %v1301 = vpack.c.b16 %v902, %v895
      %v1302 = vpack.c.b16 %v910, %v903
      %v1303 = vpack.c.b16 %v911, %v904
      %v1304 = vpack.c.b16 %v912, %v905
      %v1305 = vpack.c.b16 %v913, %v906
      %v1306 = vpack.c.b16 %v914, %v907
      %v1307 = vpack.c.b16 %v915, %v908
      %v1308 = vpack.c.b16 %v916, %v909
      %v1309 = vpack.c.b16 %v924, %v917
      %v1310 = vpack.c.b16 %v925, %v918
      %v1311 = vpack.c.b16 %v926, %v919
      %v1312 = vpack.c.b16 %v927, %v920
      %v1313 = vpack.c.b16 %v928, %v921
      %v1314 = vpack.c.b16 %v929, %v922
      %v1315 = vpack.c.b16 %v930, %v923
      %v1316 = vpack.c.b16 %v938, %v931
      %v1317 = vpack.c.b16 %v939, %v932
      %v1318 = vpack.c.b16 %v940, %v933
      %v1319 = vpack.c.b16 %v941, %v934
      %v1320 = vpack.c.b16 %v942, %v935
      %v1321 = vpack.c.b16 %v943, %v936
      %v1322 = vpack.c.b16 %v944, %v937
      %v1323 = vpack.c.b16 %v952, %v945
      %v1324 = vpack.c.b16 %v953, %v946
      %v1325 = vpack.c.b16 %v954, %v947
      %v1326 = vpack.c.b16 %v955, %v948
      %v1327 = vpack.c.b16 %v956, %v949
      %v1328 = vpack.c.b16 %v957, %v950
      %v1329 = vpack.c.b16 %v958, %v951
      %v1330 = vpack.c.b16 %v966, %v959
      %v1331 = vpack.c.b16 %v967, %v960
      %v1332 = vpack.c.b16 %v968, %v961
      %v1333 = vpack.c.b16 %v969, %v962
      %v1334 = vpack.c.b16 %v970, %v963
      %v1335 = vpack.c.b16 %v971, %v964
      %v1336 = vpack.c.b16 %v972, %v965
      %v1337 = vpack.c.b16 %v980, %v973
      %v1338 = vpack.c.b16 %v981, %v974
      %v1339 = vpack.c.b16 %v982, %v975
      %v1340 = vpack.c.b16 %v983, %v976
      %v1341 = vpack.c.b16 %v984, %v977
      %v1342 = vpack.c.b16 %v985, %v978
      %v1343 = vpack.c.b16 %v986, %v979
      %v1344 = vpack.c.b16 %v994, %v987
      %v1345 = vpack.c.b16 %v995, %v988
      %v1346 = vpack.c.b16 %v996, %v989
      %v1347 = vpack.c.b16 %v997, %v990
      %v1348 = vpack.c.b16 %v998, %v991
      %v1349 = vpack.c.b16 %v999, %v992
      %v1350 = vpack.c.b16 %v1000, %v993
      %v1351 = vpack.c.b16 %v1008, %v1001
      %v1352 = vpack.c.b16 %v1009, %v1002
      %v1353 = vpack.c.b16 %v1010, %v1003
      %v1354 = vpack.c.b16 %v1011, %v1004
      %v1355 = vpack.c.b16 %v1012, %v1005
      %v1356 = vpack.c.b16 %v1013, %v1006
      %v1357 = vpack.c.b16 %v1014, %v1007
      %v1358 = vpack.c.b16 %v1022, %v1015
      %v1359 = vpack.c.b16 %v1023, %v1016
      %v1360 = vpack.c.b16 %v1024, %v1017
      %v1361 = vpack.c.b16 %v1025, %v1018
      %v1362 = vpack.c.b16 %v1026, %v1019
      %v1363 = vpack.c.b16 %v1027, %v1020
      %v1364 = vpack.c.b16 %v1028, %v1021
      %v1365 = vpack.c.b16 %v1036, %v1029
      %v1366 = vpack.c.b16 %v1037, %v1030
      %v1367 = vpack.c.b16 %v1038, %v1031
      %v1368 = vpack.c.b16 %v1039, %v1032
      %v1369 = vpack.c.b16 %v1040, %v1033
      %v1370 = vpack.c.b16 %v1041, %v1034
      %v1371 = vpack.c.b16 %v1042, %v1035
      %v1372 = vpack.c.b16 %v1050, %v1043
      %v1373 = vpack.c.b16 %v1051, %v1044
      %v1374 = vpack.c.b16 %v1052, %v1045
      %v1375 = vpack.c.b16 %v1053, %v1046
      %v1376 = vpack.c.b16 %v1054, %v1047
      %v1377 = vpack.c.b16 %v1055, %v1048
      %v1378 = vpack.c.b16 %v1056, %v1049
      %v1379 = vpack.c.b16 %v1064, %v1057
      %v1380 = vpack.c.b16 %v1065, %v1058
      %v1381 = vpack.c.b16 %v1066, %v1059
      %v1382 = vpack.c.b16 %v1067, %v1060
      %v1383 = vpack.c.b16 %v1068, %v1061
      %v1384 = vpack.c.b16 %v1069, %v1062
      %v1385 = vpack.c.b16 %v1070, %v1063
      %v1386 = vpack.c.b16 %v1078, %v1071
      %v1387 = vpack.c.b16 %v1079, %v1072
      %v1388 = vpack.c.b16 %v1080, %v1073
      %v1389 = vpack.c.b16 %v1081, %v1074
      %v1390 = vpack.c.b16 %v1082, %v1075
      %v1391 = vpack.c.b16 %v1083, %v1076
      %v1392 = vpack.c.b16 %v1084, %v1077
      %v1393 = vpack.c.b16 %v1092, %v1085
      %v1394 = vpack.c.b16 %v1093, %v1086
      %v1395 = vpack.c.b16 %v1094, %v1087
      %v1396 = vpack.c.b16 %v1095, %v1088
      %v1397 = vpack.c.b16 %v1096, %v1089
      %v1398 = vpack.c.b16 %v1097, %v1090
      %v1399 = vpack.c.b16 %v1098, %v1091
      %v1400 = vpack.c.b16 %v1106, %v1099
      %v1401 = vpack.c.b16 %v1107, %v1100
      %v1402 = vpack.c.b16 %v1108, %v1101
      %v1403 = vpack.c.b16 %v1109, %v1102
      %v1404 = vpack.c.b16 %v1110, %v1103
      %v1405 = vpack.c.b16 %v1111, %v1104
      %v1406 = vpack.c.b16 %v1112, %v1105
      %v1407 = vpack.c.b16 %v1120, %v1113
      %v1408 = vpack.c.b16 %v1121, %v1114
      %v1409 = vpack.c.b16 %v1122, %v1115
      %v1410 = vpack.c.b16 %v1123, %v1116
      %v1411 = vpack.c.b16 %v1124, %v1117
      %v1412 = vpack.c.b16 %v1125, %v1118
      %v1413 = vpack.c.b16 %v1126, %v1119
      %v1414 = vpack.c.b16 %v1134, %v1127
      %v1415 = vpack.c.b16 %v1135, %v1128
      %v1416 = vpack.c.b16 %v1136, %v1129
      %v1417 = vpack.c.b16 %v1137, %v1130
      %v1418 = vpack.c.b16 %v1138, %v1131
      %v1419 = vpack.c.b16 %v1139, %v1132
      %v1420 = vpack.c.b16 %v1140, %v1133
      %v1421 = vpack.c.b16 %v1148, %v1141
      %v1422 = vpack.c.b16 %v1149, %v1142
      %v1423 = vpack.c.b16 %v1150, %v1143
      %v1424 = vpack.c.b16 %v1151, %v1144
      %v1425 = vpack.c.b16 %v1152, %v1145
      %v1426 = vpack.c.b16 %v1153, %v1146
      %v1427 = vpack.c.b16 %v1154, %v1147
      %v1428 = vpack.c.b16 %v1162, %v1155
      %v1429 = vpack.c.b16 %v1163, %v1156
      %v1430 = vpack.c.b16 %v1164, %v1157
      %v1431 = vpack.c.b16 %v1165, %v1158
      %v1432 = vpack.c.b16 %v1166, %v1159
      %v1433 = vpack.c.b16 %v1167, %v1160
      %v1434 = vpack.c.b16 %v1168, %v1161
      %v1435 = vpack.c.b16 %v1176, %v1169
      %v1436 = vpack.c.b16 %v1177, %v1170
      %v1437 = vpack.c.b16 %v1178, %v1171
      %v1438 = vpack.c.b16 %v1179, %v1172
      %v1439 = vpack.c.b16 %v1180, %v1173
      %v1440 = vpack.c.b16 %v1181, %v1174
      %v1441 = vpack.c.b16 %v1182, %v1175
      %v1442 = vpack.c.b16 %v1190, %v1183
      %v1443 = vpack.c.b16 %v1191, %v1184
      %v1444 = vpack.c.b16 %v1192, %v1185
      %v1445 = vpack.c.b16 %v1193, %v1186
      %v1446 = vpack.c.b16 %v1194, %v1187
      %v1447 = vpack.c.b16 %v1195, %v1188
      %v1448 = vpack.c.b16 %v1196, %v1189
      %v1449 = vpack.c.b16 %v1204, %v1197
      %v1450 = vpack.c.b16 %v1205, %v1198
      %v1451 = vpack.c.b16 %v1206, %v1199
      %v1452 = vpack.c.b16 %v1207, %v1200
      %v1453 = vpack.c.b16 %v1208, %v1201
      %v1454 = vpack.c.b16 %v1209, %v1202
      %v1455 = vpack.c.b16 %v1210, %v1203
      %v1456 = vpack.c.b16 %v1218, %v1211
      %v1457 = vpack.c.b16 %v1219, %v1212
      %v1458 = vpack.c.b16 %v1220, %v1213
      %v1459 = vpack.c.b16 %v1221, %v1214
      %v1460 = vpack.c.b16 %v1222, %v1215
      %v1461 = vpack.c.b16 %v1223, %v1216
      %v1462 = vpack.c.b16 %v1224, %v1217
      %v1463 = vpack.c.b16 %v1232, %v1225
      %v1464 = vpack.c.b16 %v1233, %v1226
      %v1465 = vpack.c.b16 %v1234, %v1227
      %v1466 = vpack.c.b16 %v1235, %v1228
      %v1467 = vpack.c.b16 %v1236, %v1229
      %v1468 = vpack.c.b16 %v1237, %v1230
      %v1469 = vpack.c.b16 %v1238, %v1231
      %v1470 = vpack.c.b16 %v1246, %v1239
      %v1471 = vpack.c.b16 %v1247, %v1240
      %v1472 = vpack.c.b16 %v1248, %v1241
      %v1473 = vpack.c.b16 %v1249, %v1242
      %v1474 = vpack.c.b16 %v1250, %v1243
      %v1475 = vpack.c.b16 %v1251, %v1244
      %v1476 = vpack.c.b16 %v1252, %v1245
      %v1777 = vunpack.c.l.b16 %v434
      %v1778 = vunpack.c.l.b16 %v435
      %v1779 = vunpack.c.l.b16 %v436
      %v1780 = vunpack.c.l.b16 %v437
      %v1781 = vunpack.c.l.b16 %v438
      %v1782 = vunpack.c.l.b16 %v439
      %v1783 = vunpack.c.l.b16 %v440
      %v1784 = vunpack.c.l.b16 %v441
      %v1785 = vunpack.c.l.b16 %v442
      %v1786 = vunpack.c.l.b16 %v443
      %v1787 = vunpack.c.l.b16 %v444
      %v1788 = vunpack.c.l.b16 %v445
      %v1789 = vunpack.c.l.b16 %v446
      %v1790 = vunpack.c.l.b16 %v447
      %v1791 = vunpack.c.l.b16 %v448
      %v1792 = vunpack.c.l.b16 %v449
      %v1793 = vunpack.c.l.b16 %v450
      %v1794 = vunpack.c.l.b16 %v451
      %v1795 = vunpack.c.l.b16 %v452
      %v1796 = vunpack.c.l.b16 %v453
      %v1797 = vunpack.c.l.b16 %v454
      %v1798 = vunpack.c.l.b16 %v455
      %v1799 = vunpack.c.l.b16 %v456
      %v1800 = vunpack.c.l.b16 %v457
      %v1801 = vunpack.c.l.b16 %v458
      %v1802 = vunpack.c.l.b16 %v459
      %v1803 = vunpack.c.l.b16 %v460
      %v1804 = vunpack.c.l.b16 %v461
      %v1805 = vunpack.c.l.b16 %v462
      %v1806 = vunpack.c.l.b16 %v463
      %v1807 = vunpack.c.l.b16 %v464
      %v1808 = vunpack.c.l.b16 %v465
      %v1809 = vunpack.c.l.b16 %v466
      %v1810 = vunpack.c.l.b16 %v467
      %v1811 = vunpack.c.l.b16 %v468
      %v1812 = vunpack.c.l.b16 %v469
      %v1813 = vunpack.c.l.b16 %v470
      %v1814 = vunpack.c.l.b16 %v471
      %v1815 = vunpack.c.l.b16 %v472
      %v1816 = vunpack.c.l.b16 %v473
      %v1817 = vunpack.c.l.b16 %v474
      %v1818 = vunpack.c.l.b16 %v475
      %v1819 = vunpack.c.l.b16 %v476
      %v1820 = vunpack.c.l.b16 %v477
      %v1821 = vunpack.c.l.b16 %v478
      %v1822 = vunpack.c.l.b16 %v479
      %v1823 = vunpack.c.l.b16 %v480
      %v1824 = vunpack.c.l.b16 %v481
      %v1825 = vunpack.c.l.b16 %v482
      %v1826 = vunpack.c.l.b16 %v483
      %v1827 = vunpack.c.l.b16 %v484
      %v1828 = vunpack.c.l.b16 %v485
      %v1829 = vunpack.c.l.b16 %v486
      %v1830 = vunpack.c.l.b16 %v487
      %v1831 = vunpack.c.l.b16 %v488
      %v1832 = vunpack.c.l.b16 %v489
      %v1833 = vunpack.c.l.b16 %v490
      %v1834 = vunpack.c.l.b16 %v491
      %v1835 = vunpack.c.l.b16 %v492
      %v1836 = vunpack.c.l.b16 %v493
      %v1837 = vunpack.c.l.b16 %v494
      %v1838 = vunpack.c.l.b16 %v495
      %v1839 = vunpack.c.l.b16 %v496
      %v1840 = vunpack.c.l.b16 %v497
      %v1841 = vunpack.c.l.b16 %v498
      %v1842 = vunpack.c.l.b16 %v499
      %v1843 = vunpack.c.l.b16 %v500
      %v1844 = vunpack.c.l.b16 %v501
      %v1845 = vunpack.c.l.b16 %v502
      %v1846 = vunpack.c.l.b16 %v503
      %v1847 = vunpack.c.l.b16 %v504
      %v1848 = vunpack.c.l.b16 %v505
      %v1849 = vunpack.c.l.b16 %v506
      %v1850 = vunpack.c.l.b16 %v507
      %v1851 = vunpack.c.l.b16 %v508
      %v1852 = vunpack.c.l.b16 %v509
      %v1853 = vunpack.c.l.b16 %v510
      %v1854 = vunpack.c.l.b16 %v511
      %v1855 = vunpack.c.l.b16 %v512
      %v1856 = vunpack.c.l.b16 %v513
      %v1857 = vunpack.c.l.b16 %v514
      %v1858 = vunpack.c.l.b16 %v515
      %v1859 = vunpack.c.l.b16 %v516
      %v1860 = vunpack.c.l.b16 %v517
      %v1861 = vunpack.c.l.b16 %v518
      %v1862 = vunpack.c.l.b16 %v519
      %v1863 = vunpack.c.l.b16 %v520
      %v1864 = vunpack.c.l.b16 %v521
      %v1865 = vunpack.c.l.b16 %v522
      %v1866 = vunpack.c.l.b16 %v523
      %v1867 = vunpack.c.l.b16 %v524
      %v1868 = vunpack.c.l.b16 %v525
      %v1869 = vunpack.c.l.b16 %v526
      %v1870 = vunpack.c.l.b16 %v527
      %v1871 = vunpack.c.l.b16 %v528
      %v1872 = vunpack.c.l.b16 %v529
      %v1873 = vunpack.c.l.b16 %v530
      %v1874 = vunpack.c.l.b16 %v531
      %v1875 = vunpack.c.l.b16 %v532
      %v1876 = vunpack.c.l.b16 %v533
      %v1877 = vunpack.c.l.b16 %v534
      %v1878 = vunpack.c.l.b16 %v535
      %v1879 = vunpack.c.l.b16 %v536
      %v1880 = vunpack.c.l.b16 %v537
      %v1881 = vunpack.c.l.b16 %v538
      %v1882 = vunpack.c.l.b16 %v539
      %v1883 = vunpack.c.l.b16 %v540
      %v1884 = vunpack.c.l.b16 %v541
      %v1885 = vpack.c.b16 %v1778, %v1777
      %v1886 = vpack.c.b16 %v1780, %v1779
      %v1887 = vpack.c.b16 %v1782, %v1781
      %v1888 = vpack.c.b16 %v1784, %v1783
      %v1889 = vpack.c.b16 %v1786, %v1785
      %v1890 = vpack.c.b16 %v1788, %v1787
      %v1891 = vpack.c.b16 %v1790, %v1789
      %v1892 = vpack.c.b16 %v1792, %v1791
      %v1893 = vpack.c.b16 %v1794, %v1793
      %v1894 = vpack.c.b16 %v1796, %v1795
      %v1895 = vpack.c.b16 %v1798, %v1797
      %v1896 = vpack.c.b16 %v1800, %v1799
      %v1897 = vpack.c.b16 %v1802, %v1801
      %v1898 = vpack.c.b16 %v1804, %v1803
      %v1899 = vpack.c.b16 %v1806, %v1805
      %v1900 = vpack.c.b16 %v1808, %v1807
      %v1901 = vpack.c.b16 %v1810, %v1809
      %v1902 = vpack.c.b16 %v1812, %v1811
      %v1903 = vpack.c.b16 %v1814, %v1813
      %v1904 = vpack.c.b16 %v1816, %v1815
      %v1905 = vpack.c.b16 %v1818, %v1817
      %v1906 = vpack.c.b16 %v1820, %v1819
      %v1907 = vpack.c.b16 %v1822, %v1821
      %v1908 = vpack.c.b16 %v1824, %v1823
      %v1909 = vpack.c.b16 %v1826, %v1825
      %v1910 = vpack.c.b16 %v1828, %v1827
      %v1911 = vpack.c.b16 %v1830, %v1829
      %v1912 = vpack.c.b16 %v1832, %v1831
      %v1913 = vpack.c.b16 %v1834, %v1833
      %v1914 = vpack.c.b16 %v1836, %v1835
      %v1915 = vpack.c.b16 %v1838, %v1837
      %v1916 = vpack.c.b16 %v1840, %v1839
      %v1917 = vpack.c.b16 %v1842, %v1841
      %v1918 = vpack.c.b16 %v1844, %v1843
      %v1919 = vpack.c.b16 %v1846, %v1845
      %v1920 = vpack.c.b16 %v1848, %v1847
      %v1921 = vpack.c.b16 %v1850, %v1849
      %v1922 = vpack.c.b16 %v1852, %v1851
      %v1923 = vpack.c.b16 %v1854, %v1853
      %v1924 = vpack.c.b16 %v1856, %v1855
      %v1925 = vpack.c.b16 %v1858, %v1857
      %v1926 = vpack.c.b16 %v1860, %v1859
      %v1927 = vpack.c.b16 %v1862, %v1861
      %v1928 = vpack.c.b16 %v1864, %v1863
      %v1929 = vpack.c.b16 %v1866, %v1865
      %v1930 = vpack.c.b16 %v1868, %v1867
      %v1931 = vpack.c.b16 %v1870, %v1869
      %v1932 = vpack.c.b16 %v1872, %v1871
      %v1933 = vpack.c.b16 %v1874, %v1873
      %v1934 = vpack.c.b16 %v1876, %v1875
      %v1935 = vpack.c.b16 %v1878, %v1877
      %v1936 = vpack.c.b16 %v1880, %v1879
      %v1937 = vpack.c.b16 %v1882, %v1881
      %v1938 = vpack.c.b16 %v1884, %v1883
      %vm1993 = vcmask 785408
      %v1995 = vsel %vm1993, %v1259, 0
      %v1998 = vsel %vm1993, %v1266, 0
      %v2001 = vsel %vm1993, %v1273, 0
      %v2004 = vsel %vm1993, %v1280, 0
      %v2007 = vsel %vm1993, %v1287, 0
      %v2010 = vsel %vm1993, %v1294, 0
      %v2013 = vsel %vm1993, %v1301, 0
      %v2016 = vsel %vm1993, %v1308, 0
      %v2019 = vsel %vm1993, %v1315, 0
      %v2022 = vsel %vm1993, %v1322, 0
      %v2025 = vsel %vm1993, %v1329, 0
      %v2028 = vsel %vm1993, %v1336, 0
      %v2031 = vsel %vm1993, %v1343, 0
      %v2034 = vsel %vm1993, %v1350, 0
      %v2037 = vsel %vm1993, %v1357, 0
      %v2040 = vsel %vm1993, %v1364, 0
      %v2043 = vsel %vm1993, %v1371, 0
      %v2046 = vsel %vm1993, %v1378, 0
      %v2049 = vsel %vm1993, %v1385, 0
      %v2052 = vsel %vm1993, %v1392, 0
      %v2055 = vsel %vm1993, %v1399, 0
      %v2058 = vsel %vm1993, %v1406, 0
      %v2061 = vsel %vm1993, %v1413, 0
      %v2064 = vsel %vm1993, %v1420, 0
      %v2067 = vsel %vm1993, %v1427, 0
      %v2070 = vsel %vm1993, %v1434, 0
      %v2073 = vsel %vm1993, %v1441, 0
      %v2076 = vsel %vm1993, %v1448, 0
      %v2079 = vsel %vm1993, %v1455, 0
      %v2082 = vsel %vm1993, %v1462, 0
      %v2085 = vsel %vm1993, %v1469, 0
      %v2088 = vsel %vm1993, %v1476, 0
      %2090 = vmatprep.subr.bf16.mxu0 0
      %2091 = vmatpush1.bf16.msra.mxu0 %v1885
      %2092 = vmatprep.subr.bf16.mxu0 0
      %2093 = vmatpush1.bf16.msra.mxu0 %v1886
      %2094 = vmatprep.subr.bf16.mxu0 0
      %2095 = vmatpush1.bf16.msra.mxu0 %v1887
      %2096 = vmatprep.subr.bf16.mxu0 0
      %2097 = vmatpush1.bf16.msra.mxu0 %v1888
      %2098 = vmatprep.subr.bf16.mxu0 0
      %2099 = vmatpush1.bf16.msra.mxu0 %v1889
      %2100 = vmatprep.subr.bf16.mxu0 0
      %2101 = vmatpush1.bf16.msra.mxu0 %v1890
      %2102 = vmatprep.subr.bf16.mxu0 0
      %2103 = vmatpush1.bf16.msra.mxu0 %v1891
      %2104 = vmatprep.subr.bf16.mxu0 0
      %2105 = vmatpush1.bf16.msra.mxu0 %v1892
      %2106 = vmatprep.subr.bf16.mxu0 0
      %2107 = vmatpush1.bf16.msra.mxu0 %v1893
      %2108 = vmatprep.subr.bf16.mxu0 0
      %2109 = vmatpush1.bf16.msra.mxu0 %v1894
      %2110 = vmatprep.subr.bf16.mxu0 0
      %2111 = vmatpush1.bf16.msra.mxu0 %v1895
      %2112 = vmatprep.subr.bf16.mxu0 0
      %2113 = vmatpush1.bf16.msra.mxu0 %v1896
      %2114 = vmatprep.subr.bf16.mxu0 0
      %2115 = vmatpush1.bf16.msra.mxu0 %v1897
      %2116 = vmatprep.subr.bf16.mxu0 0
      %2117 = vmatpush1.bf16.msra.mxu0 %v1898
      %2118 = vmatprep.subr.bf16.mxu0 0
      %2119 = vmatpush1.bf16.msra.mxu0 %v1899
      %2120 = vmatprep.subr.bf16.mxu0 0
      %2121 = vmatpush1.bf16.msra.mxu0 %v1900
      %2122 = vmatprep.mubr.bf16.mxu0 %v1254
      %2123 = vmatmul.mubr.bf16.gmra.mrb[0].mxu0 %v1253
      %v2124 = vpop.f32.mrb[0].mxu0
      %v2125 = vadd.f32 %v547, %v2124
      %v2126 = vpop.f32.mrb[0].mxu0
      %v2127 = vpop.f32.mrb[0].mxu0
      %v2128 = vadd.f32 %v547, %v2127
      %v2129 = vpop.f32.mrb[0].mxu0
      %2130 = vmatprep.mubr.bf16.mxu0 %v1261
      %2131 = vmatmul.mubr.bf16.gmra.mrb[0].mxu0 %v1260
      %v2132 = vpop.f32.mrb[0].mxu0
      %v2133 = vadd.f32 %v547, %v2132
      %v2134 = vpop.f32.mrb[0].mxu0
      %v2135 = vpop.f32.mrb[0].mxu0
      %v2136 = vadd.f32 %v547, %v2135
      %v2137 = vpop.f32.mrb[0].mxu0
      %2138 = vmatprep.mubr.bf16.mxu0 %v1268
      %2139 = vmatmul.mubr.bf16.gmra.mrb[0].mxu0 %v1267
      %v2140 = vpop.f32.mrb[0].mxu0
      %v2141 = vadd.f32 %v547, %v2140
      %v2142 = vpop.f32.mrb[0].mxu0
      %v2143 = vpop.f32.mrb[0].mxu0
      %v2144 = vadd.f32 %v547, %v2143
      %v2145 = vpop.f32.mrb[0].mxu0
      %2146 = vmatprep.mubr.bf16.mxu0 %v1275
      %2147 = vmatmul.mubr.bf16.gmra.mrb[0].mxu0 %v1274
      %v2148 = vpop.f32.mrb[0].mxu0
      %v2149 = vadd.f32 %v547, %v2148
      %v2150 = vpop.f32.mrb[0].mxu0
      %v2151 = vpop.f32.mrb[0].mxu0
      %v2152 = vadd.f32 %v547, %v2151
      %v2153 = vpop.f32.mrb[0].mxu0
      %2154 = vmatprep.mubr.bf16.mxu0 %v1282
      %2155 = vmatmul.mubr.bf16.gmra.mrb[0].mxu0 %v1281
      %v2156 = vpop.f32.mrb[0].mxu0
      %v2157 = vadd.f32 %v547, %v2156
      %v2158 = vpop.f32.mrb[0].mxu0
      %v2159 = vpop.f32.mrb[0].mxu0
      %v2160 = vadd.f32 %v547, %v2159
      %v2161 = vpop.f32.mrb[0].mxu0
      %2162 = vmatprep.mubr.bf16.mxu0 %v1289
      %2163 = vmatmul.mubr.bf16.gmra.mrb[0].mxu0 %v1288
      %v2164 = vpop.f32.mrb[0].mxu0
      %v2165 = vadd.f32 %v547, %v2164
      %v2166 = vpop.f32.mrb[0].mxu0
      %v2167 = vpop.f32.mrb[0].mxu0
      %v2168 = vadd.f32 %v547, %v2167
      %v2169 = vpop.f32.mrb[0].mxu0
      %2170 = vmatprep.mubr.bf16.mxu0 %v1296
      %2171 = vmatmul.mubr.bf16.gmra.mrb[0].mxu0 %v1295
      %v2172 = vpop.f32.mrb[0].mxu0
      %v2173 = vadd.f32 %v547, %v2172
      %v2174 = vpop.f32.mrb[0].mxu0
      %v2175 = vpop.f32.mrb[0].mxu0
      %v2176 = vadd.f32 %v547, %v2175
      %v2177 = vpop.f32.mrb[0].mxu0
      %2178 = vmatprep.mubr.bf16.mxu0 %v1303
      %2179 = vmatmul.mubr.bf16.gmra.mrb[0].mxu0 %v1302
      %v2180 = vpop.f32.mrb[0].mxu0
      %v2181 = vadd.f32 %v547, %v2180
      %v2182 = vpop.f32.mrb[0].mxu0
      %v2183 = vpop.f32.mrb[0].mxu0
      %v2184 = vadd.f32 %v547, %v2183
      %v2185 = vpop.f32.mrb[0].mxu0
      %2186 = vmatprep.mubr.bf16.mxu0 %v1310
      %2187 = vmatmul.mubr.bf16.gmra.mrb[0].mxu0 %v1309
      %v2188 = vpop.f32.mrb[0].mxu0
      %v2189 = vadd.f32 %v547, %v2188
      %v2190 = vpop.f32.mrb[0].mxu0
      %v2191 = vpop.f32.mrb[0].mxu0
      %v2192 = vadd.f32 %v547, %v2191
      %v2193 = vpop.f32.mrb[0].mxu0
      %2194 = vmatprep.mubr.bf16.mxu0 %v1317
      %2195 = vmatmul.mubr.bf16.gmra.mrb[0].mxu0 %v1316
      %v2196 = vpop.f32.mrb[0].mxu0
      %v2197 = vadd.f32 %v547, %v2196
      %v2198 = vpop.f32.mrb[0].mxu0
      %v2199 = vpop.f32.mrb[0].mxu0
      %v2200 = vadd.f32 %v547, %v2199
      %v2201 = vpop.f32.mrb[0].mxu0
      %2202 = vmatprep.mubr.bf16.mxu0 %v1324
      %2203 = vmatmul.mubr.bf16.gmra.mrb[0].mxu0 %v1323
      %v2204 = vpop.f32.mrb[0].mxu0
      %v2205 = vadd.f32 %v547, %v2204
      %v2206 = vpop.f32.mrb[0].mxu0
      %v2207 = vpop.f32.mrb[0].mxu0
      %v2208 = vadd.f32 %v547, %v2207
      %v2209 = vpop.f32.mrb[0].mxu0
      %2210 = vmatprep.mubr.bf16.mxu0 %v1331
      %2211 = vmatmul.mubr.bf16.gmra.mrb[0].mxu0 %v1330
      %v2212 = vpop.f32.mrb[0].mxu0
      %v2213 = vadd.f32 %v547, %v2212
      %v2214 = vpop.f32.mrb[0].mxu0
      %v2215 = vpop.f32.mrb[0].mxu0
      %v2216 = vadd.f32 %v547, %v2215
      %v2217 = vpop.f32.mrb[0].mxu0
      %2218 = vmatprep.mubr.bf16.mxu0 %v1338
      %2219 = vmatmul.mubr.bf16.gmra.mrb[0].mxu0 %v1337
      %v2220 = vpop.f32.mrb[0].mxu0
      %v2221 = vadd.f32 %v547, %v2220
      %v2222 = vpop.f32.mrb[0].mxu0
      %v2223 = vpop.f32.mrb[0].mxu0
      %v2224 = vadd.f32 %v547, %v2223
      %v2225 = vpop.f32.mrb[0].mxu0
      %2226 = vmatprep.mubr.bf16.mxu0 %v1345
      %2227 = vmatmul.mubr.bf16.gmra.mrb[0].mxu0 %v1344
      %v2228 = vpop.f32.mrb[0].mxu0
      %v2229 = vadd.f32 %v547, %v2228
      %v2230 = vpop.f32.mrb[0].mxu0
      %v2231 = vpop.f32.mrb[0].mxu0
      %v2232 = vadd.f32 %v547, %v2231
      %v2233 = vpop.f32.mrb[0].mxu0
      %2234 = vmatprep.mubr.bf16.mxu0 %v1352
      %2235 = vmatmul.mubr.bf16.gmra.mrb[0].mxu0 %v1351
      %v2236 = vpop.f32.mrb[0].mxu0
      %v2237 = vadd.f32 %v547, %v2236
      %v2238 = vpop.f32.mrb[0].mxu0
      %v2239 = vpop.f32.mrb[0].mxu0
      %v2240 = vadd.f32 %v547, %v2239
      %v2241 = vpop.f32.mrb[0].mxu0
      %2242 = vmatprep.mubr.bf16.mxu0 %v1359
      %2243 = vmatmul.mubr.bf16.gmra.mrb[0].mxu0 %v1358
      %v2244 = vpop.f32.mrb[0].mxu0
      %v2245 = vadd.f32 %v547, %v2244
      %v2246 = vpop.f32.mrb[0].mxu0
      %v2247 = vpop.f32.mrb[0].mxu0
      %v2248 = vadd.f32 %v547, %v2247
      %v2249 = vpop.f32.mrb[0].mxu0
      %2250 = vmatprep.mubr.bf16.mxu0 %v1366
      %2251 = vmatmul.mubr.bf16.gmra.mrb[0].mxu0 %v1365
      %v2252 = vpop.f32.mrb[0].mxu0
      %v2253 = vadd.f32 %v547, %v2252
      %v2254 = vpop.f32.mrb[0].mxu0
      %v2255 = vpop.f32.mrb[0].mxu0
      %v2256 = vadd.f32 %v547, %v2255
      %v2257 = vpop.f32.mrb[0].mxu0
      %2258 = vmatprep.mubr.bf16.mxu0 %v1373
      %2259 = vmatmul.mubr.bf16.gmra.mrb[0].mxu0 %v1372
      %v2260 = vpop.f32.mrb[0].mxu0
      %v2261 = vadd.f32 %v547, %v2260
      %v2262 = vpop.f32.mrb[0].mxu0
      %v2263 = vpop.f32.mrb[0].mxu0
      %v2264 = vadd.f32 %v547, %v2263
      %v2265 = vpop.f32.mrb[0].mxu0
      %2266 = vmatprep.mubr.bf16.mxu0 %v1380
      %2267 = vmatmul.mubr.bf16.gmra.mrb[0].mxu0 %v1379
      %v2268 = vpop.f32.mrb[0].mxu0
      %v2269 = vadd.f32 %v547, %v2268
      %v2270 = vpop.f32.mrb[0].mxu0
      %v2271 = vpop.f32.mrb[0].mxu0
      %v2272 = vadd.f32 %v547, %v2271
      %v2273 = vpop.f32.mrb[0].mxu0
      %2274 = vmatprep.mubr.bf16.mxu0 %v1387
      %2275 = vmatmul.mubr.bf16.gmra.mrb[0].mxu0 %v1386
      %v2276 = vpop.f32.mrb[0].mxu0
      %v2277 = vadd.f32 %v547, %v2276
      %v2278 = vpop.f32.mrb[0].mxu0
      %v2279 = vpop.f32.mrb[0].mxu0
      %v2280 = vadd.f32 %v547, %v2279
      %v2281 = vpop.f32.mrb[0].mxu0
      %2282 = vmatprep.mubr.bf16.mxu0 %v1394
      %2283 = vmatmul.mubr.bf16.gmra.mrb[0].mxu0 %v1393
      %v2284 = vpop.f32.mrb[0].mxu0
      %v2285 = vadd.f32 %v547, %v2284
      %v2286 = vpop.f32.mrb[0].mxu0
      %v2287 = vpop.f32.mrb[0].mxu0
      %v2288 = vadd.f32 %v547, %v2287
      %v2289 = vpop.f32.mrb[0].mxu0
      %2290 = vmatprep.mubr.bf16.mxu0 %v1401
      %2291 = vmatmul.mubr.bf16.gmra.mrb[0].mxu0 %v1400
      %v2292 = vpop.f32.mrb[0].mxu0
      %v2293 = vadd.f32 %v547, %v2292
      %v2294 = vpop.f32.mrb[0].mxu0
      %v2295 = vpop.f32.mrb[0].mxu0
      %v2296 = vadd.f32 %v547, %v2295
      %v2297 = vpop.f32.mrb[0].mxu0
      %2298 = vmatprep.mubr.bf16.mxu0 %v1408
      %2299 = vmatmul.mubr.bf16.gmra.mrb[0].mxu0 %v1407
      %v2300 = vpop.f32.mrb[0].mxu0
      %v2301 = vadd.f32 %v547, %v2300
      %v2302 = vpop.f32.mrb[0].mxu0
      %v2303 = vpop.f32.mrb[0].mxu0
      %v2304 = vadd.f32 %v547, %v2303
      %v2305 = vpop.f32.mrb[0].mxu0
      %2306 = vmatprep.mubr.bf16.mxu0 %v1415
      %2307 = vmatmul.mubr.bf16.gmra.mrb[0].mxu0 %v1414
      %v2308 = vpop.f32.mrb[0].mxu0
      %v2309 = vadd.f32 %v547, %v2308
      %v2310 = vpop.f32.mrb[0].mxu0
      %v2311 = vpop.f32.mrb[0].mxu0
      %v2312 = vadd.f32 %v547, %v2311
      %v2313 = vpop.f32.mrb[0].mxu0
      %2314 = vmatprep.mubr.bf16.mxu0 %v1422
      %2315 = vmatmul.mubr.bf16.gmra.mrb[0].mxu0 %v1421
      %v2316 = vpop.f32.mrb[0].mxu0
      %v2317 = vadd.f32 %v547, %v2316
      %v2318 = vpop.f32.mrb[0].mxu0
      %v2319 = vpop.f32.mrb[0].mxu0
      %v2320 = vadd.f32 %v547, %v2319
      %v2321 = vpop.f32.mrb[0].mxu0
      %2322 = vmatprep.mubr.bf16.mxu0 %v1429
      %2323 = vmatmul.mubr.bf16.gmra.mrb[0].mxu0 %v1428
      %v2324 = vpop.f32.mrb[0].mxu0
      %v2325 = vadd.f32 %v547, %v2324
      %v2326 = vpop.f32.mrb[0].mxu0
      %v2327 = vpop.f32.mrb[0].mxu0
      %v2328 = vadd.f32 %v547, %v2327
      %v2329 = vpop.f32.mrb[0].mxu0
      %2330 = vmatprep.mubr.bf16.mxu0 %v1436
      %2331 = vmatmul.mubr.bf16.gmra.mrb[0].mxu0 %v1435
      %v2332 = vpop.f32.mrb[0].mxu0
      %v2333 = vadd.f32 %v547, %v2332
      %v2334 = vpop.f32.mrb[0].mxu0
      %v2335 = vpop.f32.mrb[0].mxu0
      %v2336 = vadd.f32 %v547, %v2335
      %v2337 = vpop.f32.mrb[0].mxu0
      %2338 = vmatprep.mubr.bf16.mxu0 %v1443
      %2339 = vmatmul.mubr.bf16.gmra.mrb[0].mxu0 %v1442
      %v2340 = vpop.f32.mrb[0].mxu0
      %v2341 = vadd.f32 %v547, %v2340
      %v2342 = vpop.f32.mrb[0].mxu0
      %v2343 = vpop.f32.mrb[0].mxu0
      %v2344 = vadd.f32 %v547, %v2343
      %v2345 = vpop.f32.mrb[0].mxu0
      %2346 = vmatprep.mubr.bf16.mxu0 %v1450
      %2347 = vmatmul.mubr.bf16.gmra.mrb[0].mxu0 %v1449
      %v2348 = vpop.f32.mrb[0].mxu0
      %v2349 = vadd.f32 %v547, %v2348
      %v2350 = vpop.f32.mrb[0].mxu0
      %v2351 = vpop.f32.mrb[0].mxu0
      %v2352 = vadd.f32 %v547, %v2351
      %v2353 = vpop.f32.mrb[0].mxu0
      %2354 = vmatprep.mubr.bf16.mxu0 %v1457
      %2355 = vmatmul.mubr.bf16.gmra.mrb[0].mxu0 %v1456
      %v2356 = vpop.f32.mrb[0].mxu0
      %v2357 = vadd.f32 %v547, %v2356
      %v2358 = vpop.f32.mrb[0].mxu0
      %v2359 = vpop.f32.mrb[0].mxu0
      %v2360 = vadd.f32 %v547, %v2359
      %v2361 = vpop.f32.mrb[0].mxu0
      %2362 = vmatprep.mubr.bf16.mxu0 %v1464
      %2363 = vmatmul.mubr.bf16.gmra.mrb[0].mxu0 %v1463
      %v2364 = vpop.f32.mrb[0].mxu0
      %v2365 = vadd.f32 %v547, %v2364
      %v2366 = vpop.f32.mrb[0].mxu0
      %v2367 = vpop.f32.mrb[0].mxu0
      %v2368 = vadd.f32 %v547, %v2367
      %v2369 = vpop.f32.mrb[0].mxu0
      %2370 = vmatprep.mubr.bf16.mxu0 %v1471
      %2371 = vmatmul.mubr.bf16.gmra.mrb[0].mxu0 %v1470
      %v2372 = vpop.f32.mrb[0].mxu0
      %v2373 = vadd.f32 %v547, %v2372
      %v2374 = vpop.f32.mrb[0].mxu0
      %v2375 = vpop.f32.mrb[0].mxu0
      %v2376 = vadd.f32 %v547, %v2375
      %v2377 = vpop.f32.mrb[0].mxu0
      %2378 = vdwg.mxu0
      %2379 = vmatprep.subr.bf16.mxu0 0
      %2380 = vmatpush1.bf16.msra.mxu0 %v1901
      %2381 = vmatprep.subr.bf16.mxu0 0
      %2382 = vmatpush1.bf16.msra.mxu0 %v1902
      %2383 = vmatprep.subr.bf16.mxu0 0
      %2384 = vmatpush1.bf16.msra.mxu0 %v1903
      %2385 = vmatprep.subr.bf16.mxu0 0
      %2386 = vmatpush1.bf16.msra.mxu0 %v1904
      %2387 = vmatprep.subr.bf16.mxu0 0
      %2388 = vmatpush1.bf16.msra.mxu0 %v1905
      %2389 = vmatprep.subr.bf16.mxu0 0
      %2390 = vmatpush1.bf16.msra.mxu0 %v1906
      %2391 = vmatprep.subr.bf16.mxu0 0
      %2392 = vmatpush1.bf16.msra.mxu0 %v1907
      %2393 = vmatprep.subr.bf16.mxu0 0
      %2394 = vmatpush1.bf16.msra.mxu0 %v1908
      %2395 = vmatprep.subr.bf16.mxu0 0
      %2396 = vmatpush1.bf16.msra.mxu0 %v1909
      %2397 = vmatprep.subr.bf16.mxu0 0
      %2398 = vmatpush1.bf16.msra.mxu0 %v1910
      %2399 = vmatprep.subr.bf16.mxu0 0
      %2400 = vmatpush1.bf16.msra.mxu0 %v1911
      %2401 = vmatprep.subr.bf16.mxu0 0
      %2402 = vmatpush1.bf16.msra.mxu0 %v1912
      %2403 = vmatprep.subr.bf16.mxu0 0
      %2404 = vmatpush1.bf16.msra.mxu0 %v1913
      %2405 = vmatprep.subr.bf16.mxu0 0
      %2406 = vmatpush1.bf16.msra.mxu0 %v1914
      %2407 = vmatprep.subr.bf16.mxu0 0
      %2408 = vmatpush1.bf16.msra.mxu0 %v1915
      %2409 = vmatprep.subr.bf16.mxu0 0
      %2410 = vmatpush1.bf16.msra.mxu0 %v1916
      %2411 = vmatprep.mubr.bf16.mxu0 %v1256
      %2412 = vmatmul.mubr.bf16.gmra.mrb[0].mxu0 %v1255
      %v2413 = vpop.f32.mrb[0].mxu0
      %v2414 = vadd.f32 %v2125, %v2413
      %v2415 = vpop.f32.mrb[0].mxu0
      %v2416 = vpop.f32.mrb[0].mxu0
      %v2417 = vadd.f32 %v2128, %v2416
      %v2418 = vpop.f32.mrb[0].mxu0
      %2419 = vmatprep.mubr.bf16.mxu0 %v1263
      %2420 = vmatmul.mubr.bf16.gmra.mrb[0].mxu0 %v1262
      %v2421 = vpop.f32.mrb[0].mxu0
      %v2422 = vadd.f32 %v2133, %v2421
      %v2423 = vpop.f32.mrb[0].mxu0
      %v2424 = vpop.f32.mrb[0].mxu0
      %v2425 = vadd.f32 %v2136, %v2424
      %v2426 = vpop.f32.mrb[0].mxu0
      %2427 = vmatprep.mubr.bf16.mxu0 %v1270
      %2428 = vmatmul.mubr.bf16.gmra.mrb[0].mxu0 %v1269
      %v2429 = vpop.f32.mrb[0].mxu0
      %v2430 = vadd.f32 %v2141, %v2429
      %v2431 = vpop.f32.mrb[0].mxu0
      %v2432 = vpop.f32.mrb[0].mxu0
      %v2433 = vadd.f32 %v2144, %v2432
      %v2434 = vpop.f32.mrb[0].mxu0
      %2435 = vmatprep.mubr.bf16.mxu0 %v1277
      %2436 = vmatmul.mubr.bf16.gmra.mrb[0].mxu0 %v1276
      %v2437 = vpop.f32.mrb[0].mxu0
      %v2438 = vadd.f32 %v2149, %v2437
      %v2439 = vpop.f32.mrb[0].mxu0
      %v2440 = vpop.f32.mrb[0].mxu0
      %v2441 = vadd.f32 %v2152, %v2440
      %v2442 = vpop.f32.mrb[0].mxu0
      %2443 = vmatprep.mubr.bf16.mxu0 %v1284
      %2444 = vmatmul.mubr.bf16.gmra.mrb[0].mxu0 %v1283
      %v2445 = vpop.f32.mrb[0].mxu0
      %v2446 = vadd.f32 %v2157, %v2445
      %v2447 = vpop.f32.mrb[0].mxu0
      %v2448 = vpop.f32.mrb[0].mxu0
      %v2449 = vadd.f32 %v2160, %v2448
      %v2450 = vpop.f32.mrb[0].mxu0
      %2451 = vmatprep.mubr.bf16.mxu0 %v1291
      %2452 = vmatmul.mubr.bf16.gmra.mrb[0].mxu0 %v1290
      %v2453 = vpop.f32.mrb[0].mxu0
      %v2454 = vadd.f32 %v2165, %v2453
      %v2455 = vpop.f32.mrb[0].mxu0
      %v2456 = vpop.f32.mrb[0].mxu0
      %v2457 = vadd.f32 %v2168, %v2456
      %v2458 = vpop.f32.mrb[0].mxu0
      %2459 = vmatprep.mubr.bf16.mxu0 %v1298
      %2460 = vmatmul.mubr.bf16.gmra.mrb[0].mxu0 %v1297
      %v2461 = vpop.f32.mrb[0].mxu0
      %v2462 = vadd.f32 %v2173, %v2461
      %v2463 = vpop.f32.mrb[0].mxu0
      %v2464 = vpop.f32.mrb[0].mxu0
      %v2465 = vadd.f32 %v2176, %v2464
      %v2466 = vpop.f32.mrb[0].mxu0
      %2467 = vmatprep.mubr.bf16.mxu0 %v1305
      %2468 = vmatmul.mubr.bf16.gmra.mrb[0].mxu0 %v1304
      %v2469 = vpop.f32.mrb[0].mxu0
      %v2470 = vadd.f32 %v2181, %v2469
      %v2471 = vpop.f32.mrb[0].mxu0
      %v2472 = vpop.f32.mrb[0].mxu0
      %v2473 = vadd.f32 %v2184, %v2472
      %v2474 = vpop.f32.mrb[0].mxu0
      %2475 = vmatprep.mubr.bf16.mxu0 %v1312
      %2476 = vmatmul.mubr.bf16.gmra.mrb[0].mxu0 %v1311
      %v2477 = vpop.f32.mrb[0].mxu0
      %v2478 = vadd.f32 %v2189, %v2477
      %v2479 = vpop.f32.mrb[0].mxu0
      %v2480 = vpop.f32.mrb[0].mxu0
      %v2481 = vadd.f32 %v2192, %v2480
      %v2482 = vpop.f32.mrb[0].mxu0
      %2483 = vmatprep.mubr.bf16.mxu0 %v1319
      %2484 = vmatmul.mubr.bf16.gmra.mrb[0].mxu0 %v1318
      %v2485 = vpop.f32.mrb[0].mxu0
      %v2486 = vadd.f32 %v2197, %v2485
      %v2487 = vpop.f32.mrb[0].mxu0
      %v2488 = vpop.f32.mrb[0].mxu0
      %v2489 = vadd.f32 %v2200, %v2488
      %v2490 = vpop.f32.mrb[0].mxu0
      %2491 = vmatprep.mubr.bf16.mxu0 %v1326
      %2492 = vmatmul.mubr.bf16.gmra.mrb[0].mxu0 %v1325
      %v2493 = vpop.f32.mrb[0].mxu0
      %v2494 = vadd.f32 %v2205, %v2493
      %v2495 = vpop.f32.mrb[0].mxu0
      %v2496 = vpop.f32.mrb[0].mxu0
      %v2497 = vadd.f32 %v2208, %v2496
      %v2498 = vpop.f32.mrb[0].mxu0
      %2499 = vmatprep.mubr.bf16.mxu0 %v1333
      %2500 = vmatmul.mubr.bf16.gmra.mrb[0].mxu0 %v1332
      %v2501 = vpop.f32.mrb[0].mxu0
      %v2502 = vadd.f32 %v2213, %v2501
      %v2503 = vpop.f32.mrb[0].mxu0
      %v2504 = vpop.f32.mrb[0].mxu0
      %v2505 = vadd.f32 %v2216, %v2504
      %v2506 = vpop.f32.mrb[0].mxu0
      %2507 = vmatprep.mubr.bf16.mxu0 %v1340
      %2508 = vmatmul.mubr.bf16.gmra.mrb[0].mxu0 %v1339
      %v2509 = vpop.f32.mrb[0].mxu0
      %v2510 = vadd.f32 %v2221, %v2509
      %v2511 = vpop.f32.mrb[0].mxu0
      %v2512 = vpop.f32.mrb[0].mxu0
      %v2513 = vadd.f32 %v2224, %v2512
      %v2514 = vpop.f32.mrb[0].mxu0
      %2515 = vmatprep.mubr.bf16.mxu0 %v1347
      %2516 = vmatmul.mubr.bf16.gmra.mrb[0].mxu0 %v1346
      %v2517 = vpop.f32.mrb[0].mxu0
      %v2518 = vadd.f32 %v2229, %v2517
      %v2519 = vpop.f32.mrb[0].mxu0
      %v2520 = vpop.f32.mrb[0].mxu0
      %v2521 = vadd.f32 %v2232, %v2520
      %v2522 = vpop.f32.mrb[0].mxu0
      %2523 = vmatprep.mubr.bf16.mxu0 %v1354
      %2524 = vmatmul.mubr.bf16.gmra.mrb[0].mxu0 %v1353
      %v2525 = vpop.f32.mrb[0].mxu0
      %v2526 = vadd.f32 %v2237, %v2525
      %v2527 = vpop.f32.mrb[0].mxu0
      %v2528 = vpop.f32.mrb[0].mxu0
      %v2529 = vadd.f32 %v2240, %v2528
      %v2530 = vpop.f32.mrb[0].mxu0
      %2531 = vmatprep.mubr.bf16.mxu0 %v1361
      %2532 = vmatmul.mubr.bf16.gmra.mrb[0].mxu0 %v1360
      %v2533 = vpop.f32.mrb[0].mxu0
      %v2534 = vadd.f32 %v2245, %v2533
      %v2535 = vpop.f32.mrb[0].mxu0
      %v2536 = vpop.f32.mrb[0].mxu0
      %v2537 = vadd.f32 %v2248, %v2536
      %v2538 = vpop.f32.mrb[0].mxu0
      %2539 = vmatprep.mubr.bf16.mxu0 %v1368
      %2540 = vmatmul.mubr.bf16.gmra.mrb[0].mxu0 %v1367
      %v2541 = vpop.f32.mrb[0].mxu0
      %v2542 = vadd.f32 %v2253, %v2541
      %v2543 = vpop.f32.mrb[0].mxu0
      %v2544 = vpop.f32.mrb[0].mxu0
      %v2545 = vadd.f32 %v2256, %v2544
      %v2546 = vpop.f32.mrb[0].mxu0
      %2547 = vmatprep.mubr.bf16.mxu0 %v1375
      %2548 = vmatmul.mubr.bf16.gmra.mrb[0].mxu0 %v1374
      %v2549 = vpop.f32.mrb[0].mxu0
      %v2550 = vadd.f32 %v2261, %v2549
      %v2551 = vpop.f32.mrb[0].mxu0
      %v2552 = vpop.f32.mrb[0].mxu0
      %v2553 = vadd.f32 %v2264, %v2552
      %v2554 = vpop.f32.mrb[0].mxu0
      %2555 = vmatprep.mubr.bf16.mxu0 %v1382
      %2556 = vmatmul.mubr.bf16.gmra.mrb[0].mxu0 %v1381
      %v2557 = vpop.f32.mrb[0].mxu0
      %v2558 = vadd.f32 %v2269, %v2557
      %v2559 = vpop.f32.mrb[0].mxu0
      %v2560 = vpop.f32.mrb[0].mxu0
      %v2561 = vadd.f32 %v2272, %v2560
      %v2562 = vpop.f32.mrb[0].mxu0
      %2563 = vmatprep.mubr.bf16.mxu0 %v1389
      %2564 = vmatmul.mubr.bf16.gmra.mrb[0].mxu0 %v1388
      %v2565 = vpop.f32.mrb[0].mxu0
      %v2566 = vadd.f32 %v2277, %v2565
      %v2567 = vpop.f32.mrb[0].mxu0
      %v2568 = vpop.f32.mrb[0].mxu0
      %v2569 = vadd.f32 %v2280, %v2568
      %v2570 = vpop.f32.mrb[0].mxu0
      %2571 = vmatprep.mubr.bf16.mxu0 %v1396
      %2572 = vmatmul.mubr.bf16.gmra.mrb[0].mxu0 %v1395
      %v2573 = vpop.f32.mrb[0].mxu0
      %v2574 = vadd.f32 %v2285, %v2573
      %v2575 = vpop.f32.mrb[0].mxu0
      %v2576 = vpop.f32.mrb[0].mxu0
      %v2577 = vadd.f32 %v2288, %v2576
      %v2578 = vpop.f32.mrb[0].mxu0
      %2579 = vmatprep.mubr.bf16.mxu0 %v1403
      %2580 = vmatmul.mubr.bf16.gmra.mrb[0].mxu0 %v1402
      %v2581 = vpop.f32.mrb[0].mxu0
      %v2582 = vadd.f32 %v2293, %v2581
      %v2583 = vpop.f32.mrb[0].mxu0
      %v2584 = vpop.f32.mrb[0].mxu0
      %v2585 = vadd.f32 %v2296, %v2584
      %v2586 = vpop.f32.mrb[0].mxu0
      %2587 = vmatprep.mubr.bf16.mxu0 %v1410
      %2588 = vmatmul.mubr.bf16.gmra.mrb[0].mxu0 %v1409
      %v2589 = vpop.f32.mrb[0].mxu0
      %v2590 = vadd.f32 %v2301, %v2589
      %v2591 = vpop.f32.mrb[0].mxu0
      %v2592 = vpop.f32.mrb[0].mxu0
      %v2593 = vadd.f32 %v2304, %v2592
      %v2594 = vpop.f32.mrb[0].mxu0
      %2595 = vmatprep.mubr.bf16.mxu0 %v1417
      %2596 = vmatmul.mubr.bf16.gmra.mrb[0].mxu0 %v1416
      %v2597 = vpop.f32.mrb[0].mxu0
      %v2598 = vadd.f32 %v2309, %v2597
      %v2599 = vpop.f32.mrb[0].mxu0
      %v2600 = vpop.f32.mrb[0].mxu0
      %v2601 = vadd.f32 %v2312, %v2600
      %v2602 = vpop.f32.mrb[0].mxu0
      %2603 = vmatprep.mubr.bf16.mxu0 %v1424
      %2604 = vmatmul.mubr.bf16.gmra.mrb[0].mxu0 %v1423
      %v2605 = vpop.f32.mrb[0].mxu0
      %v2606 = vadd.f32 %v2317, %v2605
      %v2607 = vpop.f32.mrb[0].mxu0
      %v2608 = vpop.f32.mrb[0].mxu0
      %v2609 = vadd.f32 %v2320, %v2608
      %v2610 = vpop.f32.mrb[0].mxu0
      %2611 = vmatprep.mubr.bf16.mxu0 %v1431
      %2612 = vmatmul.mubr.bf16.gmra.mrb[0].mxu0 %v1430
      %v2613 = vpop.f32.mrb[0].mxu0
      %v2614 = vadd.f32 %v2325, %v2613
      %v2615 = vpop.f32.mrb[0].mxu0
      %v2616 = vpop.f32.mrb[0].mxu0
      %v2617 = vadd.f32 %v2328, %v2616
      %v2618 = vpop.f32.mrb[0].mxu0
      %2619 = vmatprep.mubr.bf16.mxu0 %v1438
      %2620 = vmatmul.mubr.bf16.gmra.mrb[0].mxu0 %v1437
      %v2621 = vpop.f32.mrb[0].mxu0
      %v2622 = vadd.f32 %v2333, %v2621
      %v2623 = vpop.f32.mrb[0].mxu0
      %v2624 = vpop.f32.mrb[0].mxu0
      %v2625 = vadd.f32 %v2336, %v2624
      %v2626 = vpop.f32.mrb[0].mxu0
      %2627 = vmatprep.mubr.bf16.mxu0 %v1445
      %2628 = vmatmul.mubr.bf16.gmra.mrb[0].mxu0 %v1444
      %v2629 = vpop.f32.mrb[0].mxu0
      %v2630 = vadd.f32 %v2341, %v2629
      %v2631 = vpop.f32.mrb[0].mxu0
      %v2632 = vpop.f32.mrb[0].mxu0
      %v2633 = vadd.f32 %v2344, %v2632
      %v2634 = vpop.f32.mrb[0].mxu0
      %2635 = vmatprep.mubr.bf16.mxu0 %v1452
      %2636 = vmatmul.mubr.bf16.gmra.mrb[0].mxu0 %v1451
      %v2637 = vpop.f32.mrb[0].mxu0
      %v2638 = vadd.f32 %v2349, %v2637
      %v2639 = vpop.f32.mrb[0].mxu0
      %v2640 = vpop.f32.mrb[0].mxu0
      %v2641 = vadd.f32 %v2352, %v2640
      %v2642 = vpop.f32.mrb[0].mxu0
      %2643 = vmatprep.mubr.bf16.mxu0 %v1459
      %2644 = vmatmul.mubr.bf16.gmra.mrb[0].mxu0 %v1458
      %v2645 = vpop.f32.mrb[0].mxu0
      %v2646 = vadd.f32 %v2357, %v2645
      %v2647 = vpop.f32.mrb[0].mxu0
      %v2648 = vpop.f32.mrb[0].mxu0
      %v2649 = vadd.f32 %v2360, %v2648
      %v2650 = vpop.f32.mrb[0].mxu0
      %2651 = vmatprep.mubr.bf16.mxu0 %v1466
      %2652 = vmatmul.mubr.bf16.gmra.mrb[0].mxu0 %v1465
      %v2653 = vpop.f32.mrb[0].mxu0
      %v2654 = vadd.f32 %v2365, %v2653
      %v2655 = vpop.f32.mrb[0].mxu0
      %v2656 = vpop.f32.mrb[0].mxu0
      %v2657 = vadd.f32 %v2368, %v2656
      %v2658 = vpop.f32.mrb[0].mxu0
      %2659 = vmatprep.mubr.bf16.mxu0 %v1473
      %2660 = vmatmul.mubr.bf16.gmra.mrb[0].mxu0 %v1472
      %v2661 = vpop.f32.mrb[0].mxu0
      %v2662 = vadd.f32 %v2373, %v2661
      %v2663 = vpop.f32.mrb[0].mxu0
      %v2664 = vpop.f32.mrb[0].mxu0
      %v2665 = vadd.f32 %v2376, %v2664
      %v2666 = vpop.f32.mrb[0].mxu0
      %2667 = vdwg.mxu0
      %2668 = vmatprep.subr.bf16.mxu0 0
      %2669 = vmatpush1.bf16.msra.mxu0 %v1917
      %2670 = vmatprep.subr.bf16.mxu0 0
      %2671 = vmatpush1.bf16.msra.mxu0 %v1918
      %2672 = vmatprep.subr.bf16.mxu0 0
      %2673 = vmatpush1.bf16.msra.mxu0 %v1919
      %2674 = vmatprep.subr.bf16.mxu0 0
      %2675 = vmatpush1.bf16.msra.mxu0 %v1920
      %2676 = vmatprep.subr.bf16.mxu0 0
      %2677 = vmatpush1.bf16.msra.mxu0 %v1921
      %2678 = vmatprep.subr.bf16.mxu0 0
      %2679 = vmatpush1.bf16.msra.mxu0 %v1922
      %2680 = vmatprep.subr.bf16.mxu0 0
      %2681 = vmatpush1.bf16.msra.mxu0 %v1923
      %2682 = vmatprep.subr.bf16.mxu0 0
      %2683 = vmatpush1.bf16.msra.mxu0 %v1924
      %2684 = vmatprep.subr.bf16.mxu0 0
      %2685 = vmatpush1.bf16.msra.mxu0 %v1925
      %2686 = vmatprep.subr.bf16.mxu0 0
      %2687 = vmatpush1.bf16.msra.mxu0 %v1926
      %2688 = vmatprep.subr.bf16.mxu0 0
      %2689 = vmatpush1.bf16.msra.mxu0 %v1927
      %2690 = vmatprep.subr.bf16.mxu0 0
      %2691 = vmatpush1.bf16.msra.mxu0 %v1928
      %2692 = vmatprep.subr.bf16.mxu0 0
      %2693 = vmatpush1.bf16.msra.mxu0 %v1929
      %2694 = vmatprep.subr.bf16.mxu0 0
      %2695 = vmatpush1.bf16.msra.mxu0 %v1930
      %2696 = vmatprep.subr.bf16.mxu0 0
      %2697 = vmatpush1.bf16.msra.mxu0 %v1931
      %2698 = vmatprep.subr.bf16.mxu0 0
      %2699 = vmatpush1.bf16.msra.mxu0 %v1932
      %2700 = vmatprep.mubr.bf16.mxu0 %v1258
      %2701 = vmatmul.mubr.bf16.gmra.mrb[0].mxu0 %v1257
      %v2702 = vpop.f32.mrb[0].mxu0
      %v2703 = vadd.f32 %v2414, %v2702
      %v2704 = vpop.f32.mrb[0].mxu0
      %v2705 = vpop.f32.mrb[0].mxu0
      %v2706 = vadd.f32 %v2417, %v2705
      %v2707 = vpop.f32.mrb[0].mxu0
      %2708 = vmatprep.mubr.bf16.mxu0 %v1265
      %2709 = vmatmul.mubr.bf16.gmra.mrb[0].mxu0 %v1264
      %v2710 = vpop.f32.mrb[0].mxu0
      %v2711 = vadd.f32 %v2422, %v2710
      %v2712 = vpop.f32.mrb[0].mxu0
      %v2713 = vpop.f32.mrb[0].mxu0
      %v2714 = vadd.f32 %v2425, %v2713
      %v2715 = vpop.f32.mrb[0].mxu0
      %2716 = vmatprep.mubr.bf16.mxu0 %v1272
      %2717 = vmatmul.mubr.bf16.gmra.mrb[0].mxu0 %v1271
      %v2718 = vpop.f32.mrb[0].mxu0
      %v2719 = vadd.f32 %v2430, %v2718
      %v2720 = vpop.f32.mrb[0].mxu0
      %v2721 = vpop.f32.mrb[0].mxu0
      %v2722 = vadd.f32 %v2433, %v2721
      %v2723 = vpop.f32.mrb[0].mxu0
      %2724 = vmatprep.mubr.bf16.mxu0 %v1279
      %2725 = vmatmul.mubr.bf16.gmra.mrb[0].mxu0 %v1278
      %v2726 = vpop.f32.mrb[0].mxu0
      %v2727 = vadd.f32 %v2438, %v2726
      %v2728 = vpop.f32.mrb[0].mxu0
      %v2729 = vpop.f32.mrb[0].mxu0
      %v2730 = vadd.f32 %v2441, %v2729
      %v2731 = vpop.f32.mrb[0].mxu0
      %2732 = vmatprep.mubr.bf16.mxu0 %v1286
      %2733 = vmatmul.mubr.bf16.gmra.mrb[0].mxu0 %v1285
      %v2734 = vpop.f32.mrb[0].mxu0
      %v2735 = vadd.f32 %v2446, %v2734
      %v2736 = vpop.f32.mrb[0].mxu0
      %v2737 = vpop.f32.mrb[0].mxu0
      %v2738 = vadd.f32 %v2449, %v2737
      %v2739 = vpop.f32.mrb[0].mxu0
      %2740 = vmatprep.mubr.bf16.mxu0 %v1293
      %2741 = vmatmul.mubr.bf16.gmra.mrb[0].mxu0 %v1292
      %v2742 = vpop.f32.mrb[0].mxu0
      %v2743 = vadd.f32 %v2454, %v2742
      %v2744 = vpop.f32.mrb[0].mxu0
      %v2745 = vpop.f32.mrb[0].mxu0
      %v2746 = vadd.f32 %v2457, %v2745
      %v2747 = vpop.f32.mrb[0].mxu0
      %2748 = vmatprep.mubr.bf16.mxu0 %v1300
      %2749 = vmatmul.mubr.bf16.gmra.mrb[0].mxu0 %v1299
      %v2750 = vpop.f32.mrb[0].mxu0
      %v2751 = vadd.f32 %v2462, %v2750
      %v2752 = vpop.f32.mrb[0].mxu0
      %v2753 = vpop.f32.mrb[0].mxu0
      %v2754 = vadd.f32 %v2465, %v2753
      %v2755 = vpop.f32.mrb[0].mxu0
      %2756 = vmatprep.mubr.bf16.mxu0 %v1307
      %2757 = vmatmul.mubr.bf16.gmra.mrb[0].mxu0 %v1306
      %v2758 = vpop.f32.mrb[0].mxu0
      %v2759 = vadd.f32 %v2470, %v2758
      %v2760 = vpop.f32.mrb[0].mxu0
      %v2761 = vpop.f32.mrb[0].mxu0
      %v2762 = vadd.f32 %v2473, %v2761
      %v2763 = vpop.f32.mrb[0].mxu0
      %2764 = vmatprep.mubr.bf16.mxu0 %v1314
      %2765 = vmatmul.mubr.bf16.gmra.mrb[0].mxu0 %v1313
      %v2766 = vpop.f32.mrb[0].mxu0
      %v2767 = vadd.f32 %v2478, %v2766
      %v2768 = vpop.f32.mrb[0].mxu0
      %v2769 = vpop.f32.mrb[0].mxu0
      %v2770 = vadd.f32 %v2481, %v2769
      %v2771 = vpop.f32.mrb[0].mxu0
      %2772 = vmatprep.mubr.bf16.mxu0 %v1321
      %2773 = vmatmul.mubr.bf16.gmra.mrb[0].mxu0 %v1320
      %v2774 = vpop.f32.mrb[0].mxu0
      %v2775 = vadd.f32 %v2486, %v2774
      %v2776 = vpop.f32.mrb[0].mxu0
      %v2777 = vpop.f32.mrb[0].mxu0
      %v2778 = vadd.f32 %v2489, %v2777
      %v2779 = vpop.f32.mrb[0].mxu0
      %2780 = vmatprep.mubr.bf16.mxu0 %v1328
      %2781 = vmatmul.mubr.bf16.gmra.mrb[0].mxu0 %v1327
      %v2782 = vpop.f32.mrb[0].mxu0
      %v2783 = vadd.f32 %v2494, %v2782
      %v2784 = vpop.f32.mrb[0].mxu0
      %v2785 = vpop.f32.mrb[0].mxu0
      %v2786 = vadd.f32 %v2497, %v2785
      %v2787 = vpop.f32.mrb[0].mxu0
      %2788 = vmatprep.mubr.bf16.mxu0 %v1335
      %2789 = vmatmul.mubr.bf16.gmra.mrb[0].mxu0 %v1334
      %v2790 = vpop.f32.mrb[0].mxu0
      %v2791 = vadd.f32 %v2502, %v2790
      %v2792 = vpop.f32.mrb[0].mxu0
      %v2793 = vpop.f32.mrb[0].mxu0
      %v2794 = vadd.f32 %v2505, %v2793
      %v2795 = vpop.f32.mrb[0].mxu0
      %2796 = vmatprep.mubr.bf16.mxu0 %v1342
      %2797 = vmatmul.mubr.bf16.gmra.mrb[0].mxu0 %v1341
      %v2798 = vpop.f32.mrb[0].mxu0
      %v2799 = vadd.f32 %v2510, %v2798
      %v2800 = vpop.f32.mrb[0].mxu0
      %v2801 = vpop.f32.mrb[0].mxu0
      %v2802 = vadd.f32 %v2513, %v2801
      %v2803 = vpop.f32.mrb[0].mxu0
      %2804 = vmatprep.mubr.bf16.mxu0 %v1349
      %2805 = vmatmul.mubr.bf16.gmra.mrb[0].mxu0 %v1348
      %v2806 = vpop.f32.mrb[0].mxu0
      %v2807 = vadd.f32 %v2518, %v2806
      %v2808 = vpop.f32.mrb[0].mxu0
      %v2809 = vpop.f32.mrb[0].mxu0
      %v2810 = vadd.f32 %v2521, %v2809
      %v2811 = vpop.f32.mrb[0].mxu0
      %2812 = vmatprep.mubr.bf16.mxu0 %v1356
      %2813 = vmatmul.mubr.bf16.gmra.mrb[0].mxu0 %v1355
      %v2814 = vpop.f32.mrb[0].mxu0
      %v2815 = vadd.f32 %v2526, %v2814
      %v2816 = vpop.f32.mrb[0].mxu0
      %v2817 = vpop.f32.mrb[0].mxu0
      %v2818 = vadd.f32 %v2529, %v2817
      %v2819 = vpop.f32.mrb[0].mxu0
      %2820 = vmatprep.mubr.bf16.mxu0 %v1363
      %2821 = vmatmul.mubr.bf16.gmra.mrb[0].mxu0 %v1362
      %v2822 = vpop.f32.mrb[0].mxu0
      %v2823 = vadd.f32 %v2534, %v2822
      %v2824 = vpop.f32.mrb[0].mxu0
      %v2825 = vpop.f32.mrb[0].mxu0
      %v2826 = vadd.f32 %v2537, %v2825
      %v2827 = vpop.f32.mrb[0].mxu0
      %2828 = vmatprep.mubr.bf16.mxu0 %v1370
      %2829 = vmatmul.mubr.bf16.gmra.mrb[0].mxu0 %v1369
      %v2830 = vpop.f32.mrb[0].mxu0
      %v2831 = vadd.f32 %v2542, %v2830
      %v2832 = vpop.f32.mrb[0].mxu0
      %v2833 = vpop.f32.mrb[0].mxu0
      %v2834 = vadd.f32 %v2545, %v2833
      %v2835 = vpop.f32.mrb[0].mxu0
      %2836 = vmatprep.mubr.bf16.mxu0 %v1377
      %2837 = vmatmul.mubr.bf16.gmra.mrb[0].mxu0 %v1376
      %v2838 = vpop.f32.mrb[0].mxu0
      %v2839 = vadd.f32 %v2550, %v2838
      %v2840 = vpop.f32.mrb[0].mxu0
      %v2841 = vpop.f32.mrb[0].mxu0
      %v2842 = vadd.f32 %v2553, %v2841
      %v2843 = vpop.f32.mrb[0].mxu0
      %2844 = vmatprep.mubr.bf16.mxu0 %v1384
      %2845 = vmatmul.mubr.bf16.gmra.mrb[0].mxu0 %v1383
      %v2846 = vpop.f32.mrb[0].mxu0
      %v2847 = vadd.f32 %v2558, %v2846
      %v2848 = vpop.f32.mrb[0].mxu0
      %v2849 = vpop.f32.mrb[0].mxu0
      %v2850 = vadd.f32 %v2561, %v2849
      %v2851 = vpop.f32.mrb[0].mxu0
      %2852 = vmatprep.mubr.bf16.mxu0 %v1391
      %2853 = vmatmul.mubr.bf16.gmra.mrb[0].mxu0 %v1390
      %v2854 = vpop.f32.mrb[0].mxu0
      %v2855 = vadd.f32 %v2566, %v2854
      %v2856 = vpop.f32.mrb[0].mxu0
      %v2857 = vpop.f32.mrb[0].mxu0
      %v2858 = vadd.f32 %v2569, %v2857
      %v2859 = vpop.f32.mrb[0].mxu0
      %2860 = vmatprep.mubr.bf16.mxu0 %v1398
      %2861 = vmatmul.mubr.bf16.gmra.mrb[0].mxu0 %v1397
      %v2862 = vpop.f32.mrb[0].mxu0
      %v2863 = vadd.f32 %v2574, %v2862
      %v2864 = vpop.f32.mrb[0].mxu0
      %v2865 = vpop.f32.mrb[0].mxu0
      %v2866 = vadd.f32 %v2577, %v2865
      %v2867 = vpop.f32.mrb[0].mxu0
      %2868 = vmatprep.mubr.bf16.mxu0 %v1405
      %2869 = vmatmul.mubr.bf16.gmra.mrb[0].mxu0 %v1404
      %v2870 = vpop.f32.mrb[0].mxu0
      %v2871 = vadd.f32 %v2582, %v2870
      %v2872 = vpop.f32.mrb[0].mxu0
      %v2873 = vpop.f32.mrb[0].mxu0
      %v2874 = vadd.f32 %v2585, %v2873
      %v2875 = vpop.f32.mrb[0].mxu0
      %2876 = vmatprep.mubr.bf16.mxu0 %v1412
      %2877 = vmatmul.mubr.bf16.gmra.mrb[0].mxu0 %v1411
      %v2878 = vpop.f32.mrb[0].mxu0
      %v2879 = vadd.f32 %v2590, %v2878
      %v2880 = vpop.f32.mrb[0].mxu0
      %v2881 = vpop.f32.mrb[0].mxu0
      %v2882 = vadd.f32 %v2593, %v2881
      %v2883 = vpop.f32.mrb[0].mxu0
      %2884 = vmatprep.mubr.bf16.mxu0 %v1419
      %2885 = vmatmul.mubr.bf16.gmra.mrb[0].mxu0 %v1418
      %v2886 = vpop.f32.mrb[0].mxu0
      %v2887 = vadd.f32 %v2598, %v2886
      %v2888 = vpop.f32.mrb[0].mxu0
      %v2889 = vpop.f32.mrb[0].mxu0
      %v2890 = vadd.f32 %v2601, %v2889
      %v2891 = vpop.f32.mrb[0].mxu0
      %2892 = vmatprep.mubr.bf16.mxu0 %v1426
      %2893 = vmatmul.mubr.bf16.gmra.mrb[0].mxu0 %v1425
      %v2894 = vpop.f32.mrb[0].mxu0
      %v2895 = vadd.f32 %v2606, %v2894
      %v2896 = vpop.f32.mrb[0].mxu0
      %v2897 = vpop.f32.mrb[0].mxu0
      %v2898 = vadd.f32 %v2609, %v2897
      %v2899 = vpop.f32.mrb[0].mxu0
      %2900 = vmatprep.mubr.bf16.mxu0 %v1433
      %2901 = vmatmul.mubr.bf16.gmra.mrb[0].mxu0 %v1432
      %v2902 = vpop.f32.mrb[0].mxu0
      %v2903 = vadd.f32 %v2614, %v2902
      %v2904 = vpop.f32.mrb[0].mxu0
      %v2905 = vpop.f32.mrb[0].mxu0
      %v2906 = vadd.f32 %v2617, %v2905
      %v2907 = vpop.f32.mrb[0].mxu0
      %2908 = vmatprep.mubr.bf16.mxu0 %v1440
      %2909 = vmatmul.mubr.bf16.gmra.mrb[0].mxu0 %v1439
      %v2910 = vpop.f32.mrb[0].mxu0
      %v2911 = vadd.f32 %v2622, %v2910
      %v2912 = vpop.f32.mrb[0].mxu0
      %v2913 = vpop.f32.mrb[0].mxu0
      %v2914 = vadd.f32 %v2625, %v2913
      %v2915 = vpop.f32.mrb[0].mxu0
      %2916 = vmatprep.mubr.bf16.mxu0 %v1447
      %2917 = vmatmul.mubr.bf16.gmra.mrb[0].mxu0 %v1446
      %v2918 = vpop.f32.mrb[0].mxu0
      %v2919 = vadd.f32 %v2630, %v2918
      %v2920 = vpop.f32.mrb[0].mxu0
      %v2921 = vpop.f32.mrb[0].mxu0
      %v2922 = vadd.f32 %v2633, %v2921
      %v2923 = vpop.f32.mrb[0].mxu0
      %2924 = vmatprep.mubr.bf16.mxu0 %v1454
      %2925 = vmatmul.mubr.bf16.gmra.mrb[0].mxu0 %v1453
      %v2926 = vpop.f32.mrb[0].mxu0
      %v2927 = vadd.f32 %v2638, %v2926
      %v2928 = vpop.f32.mrb[0].mxu0
      %v2929 = vpop.f32.mrb[0].mxu0
      %v2930 = vadd.f32 %v2641, %v2929
      %v2931 = vpop.f32.mrb[0].mxu0
      %2932 = vmatprep.mubr.bf16.mxu0 %v1461
      %2933 = vmatmul.mubr.bf16.gmra.mrb[0].mxu0 %v1460
      %v2934 = vpop.f32.mrb[0].mxu0
      %v2935 = vadd.f32 %v2646, %v2934
      %v2936 = vpop.f32.mrb[0].mxu0
      %v2937 = vpop.f32.mrb[0].mxu0
      %v2938 = vadd.f32 %v2649, %v2937
      %v2939 = vpop.f32.mrb[0].mxu0
      %2940 = vmatprep.mubr.bf16.mxu0 %v1468
      %2941 = vmatmul.mubr.bf16.gmra.mrb[0].mxu0 %v1467
      %v2942 = vpop.f32.mrb[0].mxu0
      %v2943 = vadd.f32 %v2654, %v2942
      %v2944 = vpop.f32.mrb[0].mxu0
      %v2945 = vpop.f32.mrb[0].mxu0
      %v2946 = vadd.f32 %v2657, %v2945
      %v2947 = vpop.f32.mrb[0].mxu0
      %2948 = vmatprep.mubr.bf16.mxu0 %v1475
      %2949 = vmatmul.mubr.bf16.gmra.mrb[0].mxu0 %v1474
      %v2950 = vpop.f32.mrb[0].mxu0
      %v2951 = vadd.f32 %v2662, %v2950
      %v2952 = vpop.f32.mrb[0].mxu0
      %v2953 = vpop.f32.mrb[0].mxu0
      %v2954 = vadd.f32 %v2665, %v2953
      %v2955 = vpop.f32.mrb[0].mxu0
      %2956 = vdwg.mxu0
      %2957 = vmatprep.subr.bf16.mxu0 0
      %2958 = vmatpush1.bf16.msra.mxu0 %v1933
      %2959 = vmatprep.subr.bf16.mxu0 0
      %2960 = vmatpush1.bf16.msra.mxu0 %v1934
      %2961 = vmatprep.subr.bf16.mxu0 0
      %2962 = vmatpush1.bf16.msra.mxu0 %v1935
      %2963 = vmatprep.subr.bf16.mxu0 0
      %2964 = vmatpush1.bf16.msra.mxu0 %v1936
      %2965 = vmatprep.subr.bf16.mxu0 0
      %2966 = vmatpush1.bf16.msra.mxu0 %v1937
      %2967 = vmatprep.subr.bf16.mxu0 0
      %2968 = vmatpush1.bf16.msra.mxu0 %v1938
      %2969 = vmatprep.subr.bf16.mxu0 0
      %2970 = vmatpush1.bf16.msra.mxu0 0
      %2971 = vmatprep.subr.bf16.mxu0 0
      %2972 = vmatpush1.bf16.msra.mxu0 0
      %2973 = vmatprep.subr.bf16.mxu0 0
      %2974 = vmatpush1.bf16.msra.mxu0 0
      %2975 = vmatprep.subr.bf16.mxu0 0
      %2976 = vmatpush1.bf16.msra.mxu0 0
      %2977 = vmatprep.subr.bf16.mxu0 0
      %2978 = vmatpush1.bf16.msra.mxu0 0
      %2979 = vmatprep.subr.bf16.mxu0 0
      %2980 = vmatpush1.bf16.msra.mxu0 0
      %2981 = vmatprep.subr.bf16.mxu0 0
      %2982 = vmatpush1.bf16.msra.mxu0 0
      %2983 = vmatprep.subr.bf16.mxu0 0
      %2984 = vmatpush1.bf16.msra.mxu0 0
      %2985 = vmatprep.subr.bf16.mxu0 0
      %2986 = vmatpush1.bf16.msra.mxu0 0
      %2987 = vmatprep.subr.bf16.mxu0 0
      %2988 = vmatpush1.bf16.msra.mxu0 0
      %2989 = vmatprep.mubr.bf16.mxu0 0
      %2990 = vmatmul.mubr.bf16.gmra.mrb[0].mxu0 %v1995
      %v2991 = vpop.f32.mrb[0].mxu0
      %v2992 = vadd.f32 %v2703, %v2991
      %v2993 = vpop.f32.mrb[0].mxu0
      %v2994 = vpop.f32.mrb[0].mxu0
      %v2995 = vadd.f32 %v2706, %v2994
      %v2996 = vpop.f32.mrb[0].mxu0
      %2997 = vmatprep.mubr.bf16.mxu0 0
      %2998 = vmatmul.mubr.bf16.gmra.mrb[0].mxu0 %v1998
      %v2999 = vpop.f32.mrb[0].mxu0
      %v3000 = vadd.f32 %v2711, %v2999
      %v3001 = vpop.f32.mrb[0].mxu0
      %v3002 = vpop.f32.mrb[0].mxu0
      %v3003 = vadd.f32 %v2714, %v3002
      %v3004 = vpop.f32.mrb[0].mxu0
      %3005 = vmatprep.mubr.bf16.mxu0 0
      %3006 = vmatmul.mubr.bf16.gmra.mrb[0].mxu0 %v2001
      %v3007 = vpop.f32.mrb[0].mxu0
      %v3008 = vadd.f32 %v2719, %v3007
      %v3009 = vpop.f32.mrb[0].mxu0
      %v3010 = vpop.f32.mrb[0].mxu0
      %v3011 = vadd.f32 %v2722, %v3010
      %v3012 = vpop.f32.mrb[0].mxu0
      %3013 = vmatprep.mubr.bf16.mxu0 0
      %3014 = vmatmul.mubr.bf16.gmra.mrb[0].mxu0 %v2004
      %v3015 = vpop.f32.mrb[0].mxu0
      %v3016 = vadd.f32 %v2727, %v3015
      %v3017 = vpop.f32.mrb[0].mxu0
      %v3018 = vpop.f32.mrb[0].mxu0
      %v3019 = vadd.f32 %v2730, %v3018
      %v3020 = vpop.f32.mrb[0].mxu0
      %3021 = vmatprep.mubr.bf16.mxu0 0
      %3022 = vmatmul.mubr.bf16.gmra.mrb[0].mxu0 %v2007
      %v3023 = vpop.f32.mrb[0].mxu0
      %v3024 = vadd.f32 %v2735, %v3023
      %v3025 = vpop.f32.mrb[0].mxu0
      %v3026 = vpop.f32.mrb[0].mxu0
      %v3027 = vadd.f32 %v2738, %v3026
      %v3028 = vpop.f32.mrb[0].mxu0
      %3029 = vmatprep.mubr.bf16.mxu0 0
      %3030 = vmatmul.mubr.bf16.gmra.mrb[0].mxu0 %v2010
      %v3031 = vpop.f32.mrb[0].mxu0
      %v3032 = vadd.f32 %v2743, %v3031
      %v3033 = vpop.f32.mrb[0].mxu0
      %v3034 = vpop.f32.mrb[0].mxu0
      %v3035 = vadd.f32 %v2746, %v3034
      %v3036 = vpop.f32.mrb[0].mxu0
      %3037 = vmatprep.mubr.bf16.mxu0 0
      %3038 = vmatmul.mubr.bf16.gmra.mrb[0].mxu0 %v2013
      %v3039 = vpop.f32.mrb[0].mxu0
      %v3040 = vadd.f32 %v2751, %v3039
      %v3041 = vpop.f32.mrb[0].mxu0
      %v3042 = vpop.f32.mrb[0].mxu0
      %v3043 = vadd.f32 %v2754, %v3042
      %v3044 = vpop.f32.mrb[0].mxu0
      %3045 = vmatprep.mubr.bf16.mxu0 0
      %3046 = vmatmul.mubr.bf16.gmra.mrb[0].mxu0 %v2016
      %v3047 = vpop.f32.mrb[0].mxu0
      %v3048 = vadd.f32 %v2759, %v3047
      %v3049 = vpop.f32.mrb[0].mxu0
      %v3050 = vpop.f32.mrb[0].mxu0
      %v3051 = vadd.f32 %v2762, %v3050
      %v3052 = vpop.f32.mrb[0].mxu0
      %3053 = vmatprep.mubr.bf16.mxu0 0
      %3054 = vmatmul.mubr.bf16.gmra.mrb[0].mxu0 %v2019
      %v3055 = vpop.f32.mrb[0].mxu0
      %v3056 = vadd.f32 %v2767, %v3055
      %v3057 = vpop.f32.mrb[0].mxu0
      %v3058 = vpop.f32.mrb[0].mxu0
      %v3059 = vadd.f32 %v2770, %v3058
      %v3060 = vpop.f32.mrb[0].mxu0
      %3061 = vmatprep.mubr.bf16.mxu0 0
      %3062 = vmatmul.mubr.bf16.gmra.mrb[0].mxu0 %v2022
      %v3063 = vpop.f32.mrb[0].mxu0
      %v3064 = vadd.f32 %v2775, %v3063
      %v3065 = vpop.f32.mrb[0].mxu0
      %v3066 = vpop.f32.mrb[0].mxu0
      %v3067 = vadd.f32 %v2778, %v3066
      %v3068 = vpop.f32.mrb[0].mxu0
      %3069 = vmatprep.mubr.bf16.mxu0 0
      %3070 = vmatmul.mubr.bf16.gmra.mrb[0].mxu0 %v2025
      %v3071 = vpop.f32.mrb[0].mxu0
      %v3072 = vadd.f32 %v2783, %v3071
      %v3073 = vpop.f32.mrb[0].mxu0
      %v3074 = vpop.f32.mrb[0].mxu0
      %v3075 = vadd.f32 %v2786, %v3074
      %v3076 = vpop.f32.mrb[0].mxu0
      %3077 = vmatprep.mubr.bf16.mxu0 0
      %3078 = vmatmul.mubr.bf16.gmra.mrb[0].mxu0 %v2028
      %v3079 = vpop.f32.mrb[0].mxu0
      %v3080 = vadd.f32 %v2791, %v3079
      %v3081 = vpop.f32.mrb[0].mxu0
      %v3082 = vpop.f32.mrb[0].mxu0
      %v3083 = vadd.f32 %v2794, %v3082
      %v3084 = vpop.f32.mrb[0].mxu0
      %3085 = vmatprep.mubr.bf16.mxu0 0
      %3086 = vmatmul.mubr.bf16.gmra.mrb[0].mxu0 %v2031
      %v3087 = vpop.f32.mrb[0].mxu0
      %v3088 = vadd.f32 %v2799, %v3087
      %v3089 = vpop.f32.mrb[0].mxu0
      %v3090 = vpop.f32.mrb[0].mxu0
      %v3091 = vadd.f32 %v2802, %v3090
      %v3092 = vpop.f32.mrb[0].mxu0
      %3093 = vmatprep.mubr.bf16.mxu0 0
      %3094 = vmatmul.mubr.bf16.gmra.mrb[0].mxu0 %v2034
      %v3095 = vpop.f32.mrb[0].mxu0
      %v3096 = vadd.f32 %v2807, %v3095
      %v3097 = vpop.f32.mrb[0].mxu0
      %v3098 = vpop.f32.mrb[0].mxu0
      %v3099 = vadd.f32 %v2810, %v3098
      %v3100 = vpop.f32.mrb[0].mxu0
      %3101 = vmatprep.mubr.bf16.mxu0 0
      %3102 = vmatmul.mubr.bf16.gmra.mrb[0].mxu0 %v2037
      %v3103 = vpop.f32.mrb[0].mxu0
      %v3104 = vadd.f32 %v2815, %v3103
      %v3105 = vpop.f32.mrb[0].mxu0
      %v3106 = vpop.f32.mrb[0].mxu0
      %v3107 = vadd.f32 %v2818, %v3106
      %v3108 = vpop.f32.mrb[0].mxu0
      %3109 = vmatprep.mubr.bf16.mxu0 0
      %3110 = vmatmul.mubr.bf16.gmra.mrb[0].mxu0 %v2040
      %v3111 = vpop.f32.mrb[0].mxu0
      %v3112 = vadd.f32 %v2823, %v3111
      %v3113 = vpop.f32.mrb[0].mxu0
      %v3114 = vpop.f32.mrb[0].mxu0
      %v3115 = vadd.f32 %v2826, %v3114
      %v3116 = vpop.f32.mrb[0].mxu0
      %3117 = vmatprep.mubr.bf16.mxu0 0
      %3118 = vmatmul.mubr.bf16.gmra.mrb[0].mxu0 %v2043
      %v3119 = vpop.f32.mrb[0].mxu0
      %v3120 = vadd.f32 %v2831, %v3119
      %v3121 = vpop.f32.mrb[0].mxu0
      %v3122 = vpop.f32.mrb[0].mxu0
      %v3123 = vadd.f32 %v2834, %v3122
      %v3124 = vpop.f32.mrb[0].mxu0
      %3125 = vmatprep.mubr.bf16.mxu0 0
      %3126 = vmatmul.mubr.bf16.gmra.mrb[0].mxu0 %v2046
      %v3127 = vpop.f32.mrb[0].mxu0
      %v3128 = vadd.f32 %v2839, %v3127
      %v3129 = vpop.f32.mrb[0].mxu0
      %v3130 = vpop.f32.mrb[0].mxu0
      %v3131 = vadd.f32 %v2842, %v3130
      %v3132 = vpop.f32.mrb[0].mxu0
      %3133 = vmatprep.mubr.bf16.mxu0 0
      %3134 = vmatmul.mubr.bf16.gmra.mrb[0].mxu0 %v2049
      %v3135 = vpop.f32.mrb[0].mxu0
      %v3136 = vadd.f32 %v2847, %v3135
      %v3137 = vpop.f32.mrb[0].mxu0
      %v3138 = vpop.f32.mrb[0].mxu0
      %v3139 = vadd.f32 %v2850, %v3138
      %v3140 = vpop.f32.mrb[0].mxu0
      %3141 = vmatprep.mubr.bf16.mxu0 0
      %3142 = vmatmul.mubr.bf16.gmra.mrb[0].mxu0 %v2052
      %v3143 = vpop.f32.mrb[0].mxu0
      %v3144 = vadd.f32 %v2855, %v3143
      %v3145 = vpop.f32.mrb[0].mxu0
      %v3146 = vpop.f32.mrb[0].mxu0
      %v3147 = vadd.f32 %v2858, %v3146
      %v3148 = vpop.f32.mrb[0].mxu0
      %3149 = vmatprep.mubr.bf16.mxu0 0
      %3150 = vmatmul.mubr.bf16.gmra.mrb[0].mxu0 %v2055
      %v3151 = vpop.f32.mrb[0].mxu0
      %v3152 = vadd.f32 %v2863, %v3151
      %v3153 = vpop.f32.mrb[0].mxu0
      %v3154 = vpop.f32.mrb[0].mxu0
      %v3155 = vadd.f32 %v2866, %v3154
      %v3156 = vpop.f32.mrb[0].mxu0
      %3157 = vmatprep.mubr.bf16.mxu0 0
      %3158 = vmatmul.mubr.bf16.gmra.mrb[0].mxu0 %v2058
      %v3159 = vpop.f32.mrb[0].mxu0
      %v3160 = vadd.f32 %v2871, %v3159
      %v3161 = vpop.f32.mrb[0].mxu0
      %v3162 = vpop.f32.mrb[0].mxu0
      %v3163 = vadd.f32 %v2874, %v3162
      %v3164 = vpop.f32.mrb[0].mxu0
      %3165 = vmatprep.mubr.bf16.mxu0 0
      %3166 = vmatmul.mubr.bf16.gmra.mrb[0].mxu0 %v2061
      %v3167 = vpop.f32.mrb[0].mxu0
      %v3168 = vadd.f32 %v2879, %v3167
      %v3169 = vpop.f32.mrb[0].mxu0
      %v3170 = vpop.f32.mrb[0].mxu0
      %v3171 = vadd.f32 %v2882, %v3170
      %v3172 = vpop.f32.mrb[0].mxu0
      %3173 = vmatprep.mubr.bf16.mxu0 0
      %3174 = vmatmul.mubr.bf16.gmra.mrb[0].mxu0 %v2064
      %v3175 = vpop.f32.mrb[0].mxu0
      %v3176 = vadd.f32 %v2887, %v3175
      %v3177 = vpop.f32.mrb[0].mxu0
      %v3178 = vpop.f32.mrb[0].mxu0
      %v3179 = vadd.f32 %v2890, %v3178
      %v3180 = vpop.f32.mrb[0].mxu0
      %3181 = vmatprep.mubr.bf16.mxu0 0
      %3182 = vmatmul.mubr.bf16.gmra.mrb[0].mxu0 %v2067
      %v3183 = vpop.f32.mrb[0].mxu0
      %v3184 = vadd.f32 %v2895, %v3183
      %v3185 = vpop.f32.mrb[0].mxu0
      %v3186 = vpop.f32.mrb[0].mxu0
      %v3187 = vadd.f32 %v2898, %v3186
      %v3188 = vpop.f32.mrb[0].mxu0
      %3189 = vmatprep.mubr.bf16.mxu0 0
      %3190 = vmatmul.mubr.bf16.gmra.mrb[0].mxu0 %v2070
      %v3191 = vpop.f32.mrb[0].mxu0
      %v3192 = vadd.f32 %v2903, %v3191
      %v3193 = vpop.f32.mrb[0].mxu0
      %v3194 = vpop.f32.mrb[0].mxu0
      %v3195 = vadd.f32 %v2906, %v3194
      %v3196 = vpop.f32.mrb[0].mxu0
      %3197 = vmatprep.mubr.bf16.mxu0 0
      %3198 = vmatmul.mubr.bf16.gmra.mrb[0].mxu0 %v2073
      %v3199 = vpop.f32.mrb[0].mxu0
      %v3200 = vadd.f32 %v2911, %v3199
      %v3201 = vpop.f32.mrb[0].mxu0
      %v3202 = vpop.f32.mrb[0].mxu0
      %v3203 = vadd.f32 %v2914, %v3202
      %v3204 = vpop.f32.mrb[0].mxu0
      %3205 = vmatprep.mubr.bf16.mxu0 0
      %3206 = vmatmul.mubr.bf16.gmra.mrb[0].mxu0 %v2076
      %v3207 = vpop.f32.mrb[0].mxu0
      %v3208 = vadd.f32 %v2919, %v3207
      %v3209 = vpop.f32.mrb[0].mxu0
      %v3210 = vpop.f32.mrb[0].mxu0
      %v3211 = vadd.f32 %v2922, %v3210
      %v3212 = vpop.f32.mrb[0].mxu0
      %3213 = vmatprep.mubr.bf16.mxu0 0
      %3214 = vmatmul.mubr.bf16.gmra.mrb[0].mxu0 %v2079
      %v3215 = vpop.f32.mrb[0].mxu0
      %v3216 = vadd.f32 %v2927, %v3215
      %v3217 = vpop.f32.mrb[0].mxu0
      %v3218 = vpop.f32.mrb[0].mxu0
      %v3219 = vadd.f32 %v2930, %v3218
      %v3220 = vpop.f32.mrb[0].mxu0
      %3221 = vmatprep.mubr.bf16.mxu0 0
      %3222 = vmatmul.mubr.bf16.gmra.mrb[0].mxu0 %v2082
      %v3223 = vpop.f32.mrb[0].mxu0
      %v3224 = vadd.f32 %v2935, %v3223
      %v3225 = vpop.f32.mrb[0].mxu0
      %v3226 = vpop.f32.mrb[0].mxu0
      %v3227 = vadd.f32 %v2938, %v3226
      %v3228 = vpop.f32.mrb[0].mxu0
      %3229 = vmatprep.mubr.bf16.mxu0 0
      %3230 = vmatmul.mubr.bf16.gmra.mrb[0].mxu0 %v2085
      %v3231 = vpop.f32.mrb[0].mxu0
      %v3232 = vadd.f32 %v2943, %v3231
      %v3233 = vpop.f32.mrb[0].mxu0
      %v3234 = vpop.f32.mrb[0].mxu0
      %v3235 = vadd.f32 %v2946, %v3234
      %v3236 = vpop.f32.mrb[0].mxu0
      %3237 = vmatprep.mubr.bf16.mxu0 0
      %3238 = vmatmul.mubr.bf16.gmra.mrb[0].mxu0 %v2088
      %v3239 = vpop.f32.mrb[0].mxu0
      %v3240 = vadd.f32 %v2951, %v3239
      %v3241 = vpop.f32.mrb[0].mxu0
      %v3242 = vpop.f32.mrb[0].mxu0
      %v3243 = vadd.f32 %v2954, %v3242
      %v3244 = vpop.f32.mrb[0].mxu0
      %3245 = vdwg.mxu0
      %3246 = vst [vmem:[%s175] sm:$0xff] %v2992
      %3247 = vst [vmem:[%s175 + $0x8] sm:$0xff] %v2995
      %3248 = vst [vmem:[%s175 + $0x10] sm:$0xff] %v3000
      %3249 = vst [vmem:[%s175 + $0x18] sm:$0xff] %v3003
      %3250 = vst [vmem:[%s175 + $0x20] sm:$0xff] %v3008
      %3251 = vst [vmem:[%s175 + $0x28] sm:$0xff] %v3011
      %3252 = vst [vmem:[%s175 + $0x30] sm:$0xff] %v3016
      %3253 = vst [vmem:[%s175 + $0x38] sm:$0xff] %v3019
      %3254 = vst [vmem:[%s175 + $0x40] sm:$0xff] %v3024
      %3255 = vst [vmem:[%s175 + $0x48] sm:$0xff] %v3027
      %3256 = vst [vmem:[%s175 + $0x50] sm:$0xff] %v3032
      %3257 = vst [vmem:[%s175 + $0x58] sm:$0xff] %v3035
      %3258 = vst [vmem:[%s175 + $0x60] sm:$0xff] %v3040
      %3259 = vst [vmem:[%s175 + $0x68] sm:$0xff] %v3043
      %3260 = vst [vmem:[%s175 + $0x70] sm:$0xff] %v3048
      %3261 = vst [vmem:[%s175 + $0x78] sm:$0xff] %v3051
      %3262 = vst [vmem:[%s175 + $0x80] sm:$0xff] %v3056
      %3263 = vst [vmem:[%s175 + $0x88] sm:$0xff] %v3059
      %3264 = vst [vmem:[%s175 + $0x90] sm:$0xff] %v3064
      %3265 = vst [vmem:[%s175 + $0x98] sm:$0xff] %v3067
      %3266 = vst [vmem:[%s175 + $0xa0] sm:$0xff] %v3072
      %3267 = vst [vmem:[%s175 + $0xa8] sm:$0xff] %v3075
      %3268 = vst [vmem:[%s175 + $0xb0] sm:$0xff] %v3080
      %3269 = vst [vmem:[%s175 + $0xb8] sm:$0xff] %v3083
      %3270 = vst [vmem:[%s175 + $0xc0] sm:$0xff] %v3088
      %3271 = vst [vmem:[%s175 + $0xc8] sm:$0xff] %v3091
      %3272 = vst [vmem:[%s175 + $0xd0] sm:$0xff] %v3096
      %3273 = vst [vmem:[%s175 + $0xd8] sm:$0xff] %v3099
      %3274 = vst [vmem:[%s175 + $0xe0] sm:$0xff] %v3104
      %3275 = vst [vmem:[%s175 + $0xe8] sm:$0xff] %v3107
      %3276 = vst [vmem:[%s175 + $0xf0] sm:$0xff] %v3112
      %3277 = vst [vmem:[%s175 + $0xf8] sm:$0xff] %v3115
      %3278 = vst [vmem:[%s175 + $0x100] sm:$0xff] %v3120
      %3279 = vst [vmem:[%s175 + $0x108] sm:$0xff] %v3123
      %3280 = vst [vmem:[%s175 + $0x110] sm:$0xff] %v3128
      %3281 = vst [vmem:[%s175 + $0x118] sm:$0xff] %v3131
      %3282 = vst [vmem:[%s175 + $0x120] sm:$0xff] %v3136
      %3283 = vst [vmem:[%s175 + $0x128] sm:$0xff] %v3139
      %3284 = vst [vmem:[%s175 + $0x130] sm:$0xff] %v3144
      %3285 = vst [vmem:[%s175 + $0x138] sm:$0xff] %v3147
      %3286 = vst [vmem:[%s175 + $0x140] sm:$0xff] %v3152
      %3287 = vst [vmem:[%s175 + $0x148] sm:$0xff] %v3155
      %3288 = vst [vmem:[%s175 + $0x150] sm:$0xff] %v3160
      %3289 = vst [vmem:[%s175 + $0x158] sm:$0xff] %v3163
      %3290 = vst [vmem:[%s175 + $0x160] sm:$0xff] %v3168
      %3291 = vst [vmem:[%s175 + $0x168] sm:$0xff] %v3171
      %3292 = vst [vmem:[%s175 + $0x170] sm:$0xff] %v3176
      %3293 = vst [vmem:[%s175 + $0x178] sm:$0xff] %v3179
      %3294 = vst [vmem:[%s175 + $0x180] sm:$0xff] %v3184
      %3295 = vst [vmem:[%s175 + $0x188] sm:$0xff] %v3187
      %3296 = vst [vmem:[%s175 + $0x190] sm:$0xff] %v3192
      %3297 = vst [vmem:[%s175 + $0x198] sm:$0xff] %v3195
      %3298 = vst [vmem:[%s175 + $0x1a0] sm:$0xff] %v3200
      %3299 = vst [vmem:[%s175 + $0x1a8] sm:$0xff] %v3203
      %3300 = vst [vmem:[%s175 + $0x1b0] sm:$0xff] %v3208
      %3301 = vst [vmem:[%s175 + $0x1b8] sm:$0xff] %v3211
      %3302 = vst [vmem:[%s175 + $0x1c0] sm:$0xff] %v3216
      %3303 = vst [vmem:[%s175 + $0x1c8] sm:$0xff] %v3219
      %3304 = vst [vmem:[%s175 + $0x1d0] sm:$0xff] %v3224
      %3305 = vst [vmem:[%s175 + $0x1d8] sm:$0xff] %v3227
      %3306 = vst [vmem:[%s175 + $0x1e0] sm:$0xff] %v3232
      %3307 = vst [vmem:[%s175 + $0x1e8] sm:$0xff] %v3235
      %3308 = vst [vmem:[%s175 + $0x1f0] sm:$0xff] %v3240
      %3309 = vst [vmem:[%s175 + $0x1f8] sm:$0xff] %v3243
      %s3310 = smul.u32 64, %s14
      %p3311 = scmp.lt.s32.totalorder %s3310, 511
      %s3312 = scalar_select %p3311, %s3310, 511
      %s3313 = smul.addr %s3312, 8
      %s3314 = scalar_lea.vmem %s3, %s3313
      // Predicated region
      $region33: #{convlstm3d_forward.3} parent=31 // pred_check
        %p3315 = pneg %p100
      $region34: #{convlstm3d_forward.3} parent=31 // pred_check_branch
        %3317 = sbr.rel (%p3315) target = $region36
      $region35: #{convlstm3d_forward.3} parent=31 // pred_region
        %s3318 = smul.u32 64, %s14
      $region36: #{convlstm3d_forward.3} parent=31 // pred_fallthru
        _
    $region32: #{convlstm3d_forward.3} parent=5 // pred_fallthru
      _
    %p3319 = scmp.le.s32.totalorder 2, %s9
    // Predicated region
    $region37: #{convlstm3d_forward.3} parent=5 // pred_check
      %p3320 = pneg %p3319
    $region38: #{convlstm3d_forward.3} parent=5 // pred_check_branch
      %3322 = sbr.rel (%p3320) target = $region40
    $region39: #{convlstm3d_forward.3} parent=5 // pred_region
      %s3323 = ssub.s32 %s9, 2
      // Predicated region
      $region41: #{convlstm3d_forward.3} parent=39 // pred_check
        %p3324 = pneg %p106
      $region42: #{convlstm3d_forward.3} parent=39 // pred_check_branch
        %3326 = sbr.rel (%p3324) target = $region44
      $region43: #{convlstm3d_forward.3} parent=39 // pred_region
        %s3327 = smul.u32 64, %s15
        %p3328 = scmp.lt.s32.totalorder %s3327, 511
        %s3329 = scalar_select %p3328, %s3327, 511
        %s3330 = smul.addr %s3329, 8
        %s3331 = scalar_lea.vmem %s3, %s3330
      $region44: #{convlstm3d_forward.3} parent=39 // pred_fallthru
        _
    $region40: #{convlstm3d_forward.3} parent=5 // pred_fallthru
      _
  $region6: #{convlstm3d_forward.3} parent=0 // loop_footer
    %s13 = sadd.s32 1, %s9
  $region7: #{convlstm3d_forward.3} parent=0 // loop_footer_branch
    %8 = sbr.rel target = $region3
  $region8: #{convlstm3d_forward.3} parent=0 // loop_exit
    _

</llo_original>
